<compile_context>
chip_gen: v7x
topology: tpu7x:2x2x1
jax: 0.10.0
libtpu: 0.0.40
codegen_flags: <defaults>
</compile_context>

<pallas_src>
import jax
import jax.numpy as jnp
import numpy as np
from jax import lax
from jax.experimental import pallas as pl
from jax.experimental.pallas import tpu as pltpu


_LANES1 = 256  # conv1 output lanes, padded from 39*6 = 234 up to a multiple of 128


# --------------------- host-built lane-mixing weight matrices --------------------- #

def _conv1_mats(w1):
    """Two (120, 256) matrices (one per kernel row dh).

    M[dh][(w+dw)*3 + ci, w*6 + co] = w1[co, ci, dh, dw], w in [0, 39).
    Columns 234..255 are zero padding.
    """
    dw, ci, co, w = np.meshgrid(np.arange(2), np.arange(3), np.arange(6),
                                np.arange(39), indexing="ij")
    rows = ((w + dw) * 3 + ci).ravel()
    cols = (w * 6 + co).ravel()
    mats = []
    for dh in range(2):
        vals = w1[co.ravel(), ci.ravel(), dh, dw.ravel()]
        mats.append(jnp.zeros((120, _LANES1), jnp.float32).at[rows, cols].set(vals))
    return jnp.stack(mats)                                      # (2, 120, 256)


def _conv2_mats(w2):
    """Two (256, 216) matrices with pool1's even-column (stride-2 W) selection folded in.

    M[dh][(2*(w+dw))*6 + ci, w*12 + co] = w2[co, ci, dh, dw], w in [0, 18).
    Rows for odd / out-of-range pooled columns stay zero.
    """
    dw, ci, co, w = np.meshgrid(np.arange(2), np.arange(6), np.arange(12),
                                np.arange(18), indexing="ij")
    rows = (2 * (w + dw) * 6 + ci).ravel()
    cols = (w * 12 + co).ravel()
    mats = []
    for dh in range(2):
        vals = w2[co.ravel(), ci.ravel(), dh, dw.ravel()]
        mats.append(jnp.zeros((_LANES1, 216), jnp.float32).at[rows, cols].set(vals))
    return jnp.stack(mats)                                      # (2, 256, 216)


def _conv3_mat(w3):
    """(216, 27) 1x1-conv matrix with pool2's even-column selection folded in.

    M[(2*w)*12 + ci, w*3 + co] = w3[co, ci, 0, 0], w in [0, 9).
    """
    ci, co, w = np.meshgrid(np.arange(12), np.arange(3), np.arange(9), indexing="ij")
    rows = (2 * w * 12 + ci).ravel()
    cols = (w * 3 + co).ravel()
    vals = w3[co.ravel(), ci.ravel(), 0, 0]
    return jnp.zeros((216, 27), jnp.float32).at[rows, cols].set(vals)


def _fc1_blocks(fc1_w):
    """(9, 27, 120): block h3, row (w3*3 + c) == fc1_w row (c*81 + h3*9 + w3).

    Folds torch's NCHW flatten order into per-output-row weight blocks.
    """
    h3 = np.arange(9)[:, None, None]
    w3 = np.arange(9)[None, :, None]
    c = np.arange(3)[None, None, :]
    perm = (c * 81 + h3 * 9 + w3).reshape(9, 27)
    return fc1_w[perm]                                          # (9, 27, 120)


# --------------------------------- Pallas kernel ---------------------------------- #

def _covnet_kernel(x_ref, m1_ref, b1_ref, m2_ref, b2_ref, m3_ref, b3_ref,
                   wf1_ref, bf1_ref, wf2_ref, bf2_ref, o_ref):
    def dot(a, b):
        return jnp.dot(a, b, preferred_element_type=jnp.float32)

    def rows_ahead(v, k):   # out[r, :] = v[r + k, :] (wrap only ever hits garbage rows)
        return pltpu.roll(v, v.shape[0] - k, axis=0)

    def lanes_ahead(v, k):  # out[:, l] = v[:, l + k]
        return pltpu.roll(v, v.shape[1] - k, axis=1)

    x = x_ref[...]                                              # (B*40, 120)

    # conv1 (2x2, 3->6) + ReLU.  Output lanes: w*6 + co (234 used, padded to 256).
    y1 = jnp.maximum(
        dot(x, m1_ref[0]) + dot(rows_ahead(x, 1), m1_ref[1]) + b1_ref[...], 0.0)

    # pool1 (2x2, stride 2): 2x2 window max via roll + max (XLU/VPU); the stride-2
    # row selection is deferred, the stride-2 column selection is folded into m2.
    q = jnp.maximum(y1, rows_ahead(y1, 1))
    r = jnp.maximum(q, lanes_ahead(q, 6))

    # conv2 (2x2, 6->12) + ReLU.  Valid outputs live at rows h = 2*h2 of each image.
    y2 = jnp.maximum(
        dot(r, m2_ref[0]) + dot(rows_ahead(r, 2), m2_ref[1]) + b2_ref[...], 0.0)

    # pool2 (1x1 kernel, stride 2) + conv3 (1x1, 12->3) + ReLU.  Valid rows: h = 4*h3.
    y3 = jnp.maximum(dot(y2, m3_ref[...]) + b3_ref[...], 0.0)   # (B*40, 27)

    # NCHW flatten + fc1 + fc2: gather the 9 valid rows per image (h = 4*h3) and
    # contract each with its (27, 120) block of the permuted fc1 weight.
    bsz = o_ref.shape[0]
    y3i = y3.reshape(bsz, 40, 27)
    row_id = lax.broadcasted_iota(jnp.int32, (1, 40, 1), 1)
    acc = jnp.zeros((bsz, 120), jnp.float32)
    for h3 in range(9):                       # 9 tiny independent accumulating matmuls
        pick = (row_id == 4 * h3).astype(jnp.float32)           # (1, 40, 1)
        sel = jnp.sum(y3i * pick, axis=1)                       # (B, 27)
        acc = acc + dot(sel, wf1_ref[h3])
    h1 = acc + bf1_ref[...]                                     # (B, 120)
    o_ref[...] = dot(h1, wf2_ref[...]) + bf2_ref[...]           # (B, 3)


def _const_spec(shape):
    zeros = (0,) * len(shape)
    return pl.BlockSpec(shape, lambda i: zeros)


def covnet_forward(x_nchw, params, *, block_b=32):
    n = x_nchw.shape[0]
    assert x_nchw.shape[1:] == (3, 40, 40), x_nchw.shape  # fc1 in_features=243 => 40x40 RGB
    b = max(8, ((min(block_b, max(n, 1)) + 7) // 8) * 8)   # images per grid step
    n_pad = ((n + b - 1) // b) * b
    grid = (n_pad // b,)

    # NHWC with lanes = W*C, row-stacked over (image, H): (n_pad*40, 120).
    xf = jnp.transpose(x_nchw, (0, 2, 3, 1)).astype(jnp.float32)
    if n_pad != n:
        xf = jnp.concatenate(
            [xf, jnp.zeros((n_pad - n, 40, 40, 3), jnp.float32)], axis=0)
    xf = xf.reshape(n_pad * 40, 120)

    m1 = _conv1_mats(params["conv1_w"])                         # (2, 120, 256)
    b1 = jnp.concatenate(
        [jnp.tile(params["conv1_b"], 39),
         jnp.zeros((_LANES1 - 234,), jnp.float32)])[None, :]    # (1, 256)
    m2 = _conv2_mats(params["conv2_w"])                         # (2, 256, 216)
    b2 = jnp.tile(params["conv2_b"], 18)[None, :]               # (1, 216)
    m3 = _conv3_mat(params["conv3_w"])                          # (216, 27)
    b3 = jnp.tile(params["conv3_b"], 9)[None, :]                # (1, 27)
    wf1 = _fc1_blocks(params["fc1_w"])                          # (9, 27, 120)
    bf1 = params["fc1_b"][None, :]                              # (1, 120)
    wf2 = params["fc2_w"]                                       # (120, 3)
    bf2 = params["fc2_b"][None, :]                              # (1, 3)

    out = pl.pallas_call(
        _covnet_kernel,
        out_shape=jax.ShapeDtypeStruct((n_pad, 3), jnp.float32),
        grid=grid,
        in_specs=[
            pl.BlockSpec((b * 40, 120), lambda i: (i, 0)),
            _const_spec((2, 120, _LANES1)), _const_spec((1, _LANES1)),
            _const_spec((2, _LANES1, 216)), _const_spec((1, 216)),
            _const_spec((216, 27)), _const_spec((1, 27)),
            _const_spec((9, 27, 120)), _const_spec((1, 120)),
            _const_spec((120, 3)), _const_spec((1, 3)),
        ],
        out_specs=pl.BlockSpec((b, 3), lambda i: (i, 0)),
        compiler_params=pltpu.CompilerParams(
            dimension_semantics=("parallel",),
            vmem_limit_bytes=48 * 1024 * 1024),
    )(xf, m1, b1, m2, b2, m3, b3, wf1, bf1, wf2, bf2)
    return out[:n]


# ------------------------------ pure-JAX reference ------------------------------ #

def covnet_reference(x_nchw, p):
    hi = lax.Precision.HIGHEST

    def conv(x, w, b):
        y = lax.conv_general_dilated(
            x, w, (1, 1), "VALID",
            dimension_numbers=("NCHW", "OIHW", "NCHW"), precision=hi)
        return y + b.reshape(1, -1, 1, 1)

    def maxpool(x, k, s):
        return lax.reduce_window(
            x, -jnp.inf, lax.max, (1, 1, k, k), (1, 1, s, s), "VALID")

    x = maxpool(jax.nn.relu(conv(x_nchw, p["conv1_w"], p["conv1_b"])), 2, 2)
    x = maxpool(jax.nn.relu(conv(x, p["conv2_w"], p["conv2_b"])), 1, 2)
    x = jax.nn.relu(conv(x, p["conv3_w"], p["conv3_b"]))
    x = x.reshape(x.shape[0], -1)
    x = jnp.dot(x, p["fc1_w"], precision=hi) + p["fc1_b"]
    return jnp.dot(x, p["fc2_w"], precision=hi) + p["fc2_b"]


if __name__ == "__main__":
    key = jax.random.PRNGKey(0)
    keys = jax.random.split(key, 11)

    # Deterministic synthetic parameters (fc weights stored as torch W.T).
    params = {
        "conv1_w": 0.1 * jax.random.normal(keys[0], (6, 3, 2, 2), jnp.float32),
        "conv1_b": 0.1 * jax.random.normal(keys[1], (6,), jnp.float32),
        "conv2_w": 0.1 * jax.random.normal(keys[2], (12, 6, 2, 2), jnp.float32),
        "conv2_b": 0.1 * jax.random.normal(keys[3], (12,), jnp.float32),
        "conv3_w": 0.1 * jax.random.normal(keys[4], (3, 12, 1, 1), jnp.float32),
        "conv3_b": 0.1 * jax.random.normal(keys[5], (3,), jnp.float32),
        "fc1_w": 0.1 * jax.random.normal(keys[6], (243, 120), jnp.float32),
        "fc1_b": 0.1 * jax.random.normal(keys[7], (120,), jnp.float32),
        "fc2_w": 0.1 * jax.random.normal(keys[8], (120, 3), jnp.float32),
        "fc2_b": 0.1 * jax.random.normal(keys[9], (3,), jnp.float32),
    }

    # Input spatial size 40 is what fc1's in_features = 243 (= 3*9*9) implies.
    x = jax.random.normal(keys[10], (10, 3, 40, 40), jnp.float32)

    fwd = jax.jit(covnet_forward, static_argnames=("block_b",))
    # block_b=8 -> batch padded 10 -> 16, 2 grid steps (exercises batching + padding).
    out = jax.block_until_ready(fwd(x, params, block_b=8))
    ref = jax.block_until_ready(covnet_reference(x, params))

    assert out.shape == (10, 3), out.shape
    np.testing.assert_allclose(np.asarray(out), np.asarray(ref), rtol=1e-3, atol=1e-3)
    print("KERNEL_OK")
</pallas_src>

<mosaic_0001>
module attributes {stable_mosaic.version = 11 : i64} {
  func.func @_covnet_kernel(%arg0: i32, %arg1: memref<320x120xf32, #tpu.memory_space<vmem>>, %arg2: memref<2x120x256xf32, #tpu.memory_space<vmem>>, %arg3: memref<1x256xf32, #tpu.memory_space<vmem>>, %arg4: memref<2x256x216xf32, #tpu.memory_space<vmem>>, %arg5: memref<1x216xf32, #tpu.memory_space<vmem>>, %arg6: memref<216x27xf32, #tpu.memory_space<vmem>>, %arg7: memref<1x27xf32, #tpu.memory_space<vmem>>, %arg8: memref<9x27x120xf32, #tpu.memory_space<vmem>>, %arg9: memref<1x120xf32, #tpu.memory_space<vmem>>, %arg10: memref<120x3xf32, #tpu.memory_space<vmem>>, %arg11: memref<1x3xf32, #tpu.memory_space<vmem>>, %arg12: memref<8x3xf32, #tpu.memory_space<vmem>>) attributes {dimension_semantics = [#tpu.dimension_semantics<parallel>], iteration_bounds = array<i64: 2>, scalar_prefetch = 0 : i64, scratch_operands = 0 : i64, tpu.core_type = #tpu.core_type<tc>, window_params = [{transform_indices = @transform_0, window_bounds = array<i64: 320, 120>}, {pipeline_mode = #tpu.pipeline_mode<synchronous>, transform_indices = @transform_1, window_bounds = array<i64: 2, 120, 256>}, {pipeline_mode = #tpu.pipeline_mode<synchronous>, transform_indices = @transform_2, window_bounds = array<i64: 1, 256>}, {pipeline_mode = #tpu.pipeline_mode<synchronous>, transform_indices = @transform_3, window_bounds = array<i64: 2, 256, 216>}, {pipeline_mode = #tpu.pipeline_mode<synchronous>, transform_indices = @transform_4, window_bounds = array<i64: 1, 216>}, {pipeline_mode = #tpu.pipeline_mode<synchronous>, transform_indices = @transform_5, window_bounds = array<i64: 216, 27>}, {pipeline_mode = #tpu.pipeline_mode<synchronous>, transform_indices = @transform_6, window_bounds = array<i64: 1, 27>}, {pipeline_mode = #tpu.pipeline_mode<synchronous>, transform_indices = @transform_7, window_bounds = array<i64: 9, 27, 120>}, {pipeline_mode = #tpu.pipeline_mode<synchronous>, transform_indices = @transform_8, window_bounds = array<i64: 1, 120>}, {pipeline_mode = #tpu.pipeline_mode<synchronous>, transform_indices = @transform_9, window_bounds = array<i64: 120, 3>}, {pipeline_mode = #tpu.pipeline_mode<synchronous>, transform_indices = @transform_10, window_bounds = array<i64: 1, 3>}, {transform_indices = @transform_11, window_bounds = array<i64: 8, 3>}]} {
    %c0 = arith.constant 0 : index
    %c0_0 = arith.constant 0 : index
    %0 = vector.load %arg1[%c0, %c0_0] : memref<320x120xf32, #tpu.memory_space<vmem>>, vector<320x120xf32>
    %c0_1 = arith.constant 0 : index
    %c0_2 = arith.constant 0 : index
    %c0_3 = arith.constant 0 : index
    %1 = vector.load %arg2[%c0_1, %c0_2, %c0_3] : memref<2x120x256xf32, #tpu.memory_space<vmem>>, vector<1x120x256xf32>
    %2 = vector.shape_cast %1 : vector<1x120x256xf32> to vector<120x256xf32>
    %cst = arith.constant dense<0.000000e+00> : vector<320x256xf32>
    %3 = tpu.matmul %0, %2, %cst {dimension_numbers = #tpu.dot_dimension_numbers<[1], [0], [0], [1], [0, 0, 1, 1], [], []>} : vector<320x120xf32>, vector<120x256xf32>, vector<320x256xf32> -> vector<320x256xf32>
    %c319_i32 = arith.constant 319 : i32
    %4 = tpu.dynamic_rotate %0 by %c319_i32 dim 0 : vector<320x120xf32>, i32 -> vector<320x120xf32>
    %c1 = arith.constant 1 : index
    %c0_4 = arith.constant 0 : index
    %c0_5 = arith.constant 0 : index
    %5 = vector.load %arg2[%c1, %c0_4, %c0_5] : memref<2x120x256xf32, #tpu.memory_space<vmem>>, vector<1x120x256xf32>
    %6 = vector.shape_cast %5 : vector<1x120x256xf32> to vector<120x256xf32>
    %cst_6 = arith.constant dense<0.000000e+00> : vector<320x256xf32>
    %7 = tpu.matmul %4, %6, %cst_6 {dimension_numbers = #tpu.dot_dimension_numbers<[1], [0], [0], [1], [0, 0, 1, 1], [], []>} : vector<320x120xf32>, vector<120x256xf32>, vector<320x256xf32> -> vector<320x256xf32>
    %8 = arith.addf %3, %7 : vector<320x256xf32>
    %c0_7 = arith.constant 0 : index
    %c0_8 = arith.constant 0 : index
    %9 = vector.load %arg3[%c0_7, %c0_8] : memref<1x256xf32, #tpu.memory_space<vmem>>, vector<1x256xf32>
    %10 = vector.broadcast %9 : vector<1x256xf32> to vector<320x256xf32>
    %11 = arith.addf %8, %10 : vector<320x256xf32>
    %cst_9 = arith.constant 0.000000e+00 : f32
    %12 = vector.broadcast %cst_9 : f32 to vector<320x256xf32>
    %13 = arith.maximumf %11, %12 : vector<320x256xf32>
    %c319_i32_10 = arith.constant 319 : i32
    %14 = tpu.dynamic_rotate %13 by %c319_i32_10 dim 0 : vector<320x256xf32>, i32 -> vector<320x256xf32>
    %15 = arith.maximumf %13, %14 : vector<320x256xf32>
    %c250_i32 = arith.constant 250 : i32
    %16 = tpu.dynamic_rotate %15 by %c250_i32 dim 1 : vector<320x256xf32>, i32 -> vector<320x256xf32>
    %17 = arith.maximumf %15, %16 : vector<320x256xf32>
    %c0_11 = arith.constant 0 : index
    %c0_12 = arith.constant 0 : index
    %c0_13 = arith.constant 0 : index
    %18 = vector.load %arg4[%c0_11, %c0_12, %c0_13] : memref<2x256x216xf32, #tpu.memory_space<vmem>>, vector<1x256x216xf32>
    %19 = vector.shape_cast %18 : vector<1x256x216xf32> to vector<256x216xf32>
    %cst_14 = arith.constant dense<0.000000e+00> : vector<320x216xf32>
    %20 = tpu.matmul %17, %19, %cst_14 {dimension_numbers = #tpu.dot_dimension_numbers<[1], [0], [0], [1], [0, 0, 1, 1], [], []>} : vector<320x256xf32>, vector<256x216xf32>, vector<320x216xf32> -> vector<320x216xf32>
    %c318_i32 = arith.constant 318 : i32
    %21 = tpu.dynamic_rotate %17 by %c318_i32 dim 0 : vector<320x256xf32>, i32 -> vector<320x256xf32>
    %c1_15 = arith.constant 1 : index
    %c0_16 = arith.constant 0 : index
    %c0_17 = arith.constant 0 : index
    %22 = vector.load %arg4[%c1_15, %c0_16, %c0_17] : memref<2x256x216xf32, #tpu.memory_space<vmem>>, vector<1x256x216xf32>
    %23 = vector.shape_cast %22 : vector<1x256x216xf32> to vector<256x216xf32>
    %cst_18 = arith.constant dense<0.000000e+00> : vector<320x216xf32>
    %24 = tpu.matmul %21, %23, %cst_18 {dimension_numbers = #tpu.dot_dimension_numbers<[1], [0], [0], [1], [0, 0, 1, 1], [], []>} : vector<320x256xf32>, vector<256x216xf32>, vector<320x216xf32> -> vector<320x216xf32>
    %25 = arith.addf %20, %24 : vector<320x216xf32>
    %c0_19 = arith.constant 0 : index
    %c0_20 = arith.constant 0 : index
    %26 = vector.load %arg5[%c0_19, %c0_20] : memref<1x216xf32, #tpu.memory_space<vmem>>, vector<1x216xf32>
    %27 = vector.broadcast %26 : vector<1x216xf32> to vector<320x216xf32>
    %28 = arith.addf %25, %27 : vector<320x216xf32>
    %cst_21 = arith.constant 0.000000e+00 : f32
    %29 = vector.broadcast %cst_21 : f32 to vector<320x216xf32>
    %30 = arith.maximumf %28, %29 : vector<320x216xf32>
    %c0_22 = arith.constant 0 : index
    %c0_23 = arith.constant 0 : index
    %31 = vector.load %arg6[%c0_22, %c0_23] : memref<216x27xf32, #tpu.memory_space<vmem>>, vector<216x27xf32>
    %cst_24 = arith.constant dense<0.000000e+00> : vector<320x27xf32>
    %32 = tpu.matmul %30, %31, %cst_24 {dimension_numbers = #tpu.dot_dimension_numbers<[1], [0], [0], [1], [0, 0, 1, 1], [], []>} : vector<320x216xf32>, vector<216x27xf32>, vector<320x27xf32> -> vector<320x27xf32>
    %c0_25 = arith.constant 0 : index
    %c0_26 = arith.constant 0 : index
    %33 = vector.load %arg7[%c0_25, %c0_26] : memref<1x27xf32, #tpu.memory_space<vmem>>, vector<1x27xf32>
    %34 = vector.broadcast %33 : vector<1x27xf32> to vector<320x27xf32>
    %35 = arith.addf %32, %34 : vector<320x27xf32>
    %cst_27 = arith.constant 0.000000e+00 : f32
    %36 = vector.broadcast %cst_27 : f32 to vector<320x27xf32>
    %37 = arith.maximumf %35, %36 : vector<320x27xf32>
    %38 = vector.shape_cast %37 : vector<320x27xf32> to vector<8x40x27xf32>
    %39 = tpu.iota {dimensions = array<i32: 1>} : vector<1x40x1xi32>
    %cst_28 = arith.constant 0.000000e+00 : f32
    %40 = vector.broadcast %cst_28 : f32 to vector<8x120xf32>
    %c0_i32 = arith.constant 0 : i32
    %41 = vector.broadcast %c0_i32 : i32 to vector<1x40x1xi32>
    %42 = arith.cmpi eq, %39, %41 : vector<1x40x1xi32>
    %43 = arith.extui %42 : vector<1x40x1xi1> to vector<1x40x1xi32>
    %44 = arith.sitofp %43 : vector<1x40x1xi32> to vector<1x40x1xf32>
    %45 = vector.broadcast %44 : vector<1x40x1xf32> to vector<8x40x27xf32>
    %46 = arith.mulf %38, %45 : vector<8x40x27xf32>
    %cst_29 = arith.constant dense<0.000000e+00> : vector<8x27xf32>
    %47 = vector.multi_reduction <add>, %46, %cst_29 [1] : vector<8x40x27xf32> to vector<8x27xf32>
    %c0_30 = arith.constant 0 : index
    %c0_31 = arith.constant 0 : index
    %c0_32 = arith.constant 0 : index
    %48 = vector.load %arg8[%c0_30, %c0_31, %c0_32] : memref<9x27x120xf32, #tpu.memory_space<vmem>>, vector<1x27x120xf32>
    %49 = vector.shape_cast %48 : vector<1x27x120xf32> to vector<27x120xf32>
    %cst_33 = arith.constant dense<0.000000e+00> : vector<8x120xf32>
    %50 = tpu.matmul %47, %49, %cst_33 {dimension_numbers = #tpu.dot_dimension_numbers<[1], [0], [0], [1], [0, 0, 1, 1], [], []>} : vector<8x27xf32>, vector<27x120xf32>, vector<8x120xf32> -> vector<8x120xf32>
    %51 = arith.addf %40, %50 : vector<8x120xf32>
    %c4_i32 = arith.constant 4 : i32
    %52 = vector.broadcast %c4_i32 : i32 to vector<1x40x1xi32>
    %53 = arith.cmpi eq, %39, %52 : vector<1x40x1xi32>
    %54 = arith.extui %53 : vector<1x40x1xi1> to vector<1x40x1xi32>
    %55 = arith.sitofp %54 : vector<1x40x1xi32> to vector<1x40x1xf32>
    %56 = vector.broadcast %55 : vector<1x40x1xf32> to vector<8x40x27xf32>
    %57 = arith.mulf %38, %56 : vector<8x40x27xf32>
    %cst_34 = arith.constant dense<0.000000e+00> : vector<8x27xf32>
    %58 = vector.multi_reduction <add>, %57, %cst_34 [1] : vector<8x40x27xf32> to vector<8x27xf32>
    %c1_35 = arith.constant 1 : index
    %c0_36 = arith.constant 0 : index
    %c0_37 = arith.constant 0 : index
    %59 = vector.load %arg8[%c1_35, %c0_36, %c0_37] : memref<9x27x120xf32, #tpu.memory_space<vmem>>, vector<1x27x120xf32>
    %60 = vector.shape_cast %59 : vector<1x27x120xf32> to vector<27x120xf32>
    %cst_38 = arith.constant dense<0.000000e+00> : vector<8x120xf32>
    %61 = tpu.matmul %58, %60, %cst_38 {dimension_numbers = #tpu.dot_dimension_numbers<[1], [0], [0], [1], [0, 0, 1, 1], [], []>} : vector<8x27xf32>, vector<27x120xf32>, vector<8x120xf32> -> vector<8x120xf32>
    %62 = arith.addf %51, %61 : vector<8x120xf32>
    %c8_i32 = arith.constant 8 : i32
    %63 = vector.broadcast %c8_i32 : i32 to vector<1x40x1xi32>
    %64 = arith.cmpi eq, %39, %63 : vector<1x40x1xi32>
    %65 = arith.extui %64 : vector<1x40x1xi1> to vector<1x40x1xi32>
    %66 = arith.sitofp %65 : vector<1x40x1xi32> to vector<1x40x1xf32>
    %67 = vector.broadcast %66 : vector<1x40x1xf32> to vector<8x40x27xf32>
    %68 = arith.mulf %38, %67 : vector<8x40x27xf32>
    %cst_39 = arith.constant dense<0.000000e+00> : vector<8x27xf32>
    %69 = vector.multi_reduction <add>, %68, %cst_39 [1] : vector<8x40x27xf32> to vector<8x27xf32>
    %c2 = arith.constant 2 : index
    %c0_40 = arith.constant 0 : index
    %c0_41 = arith.constant 0 : index
    %70 = vector.load %arg8[%c2, %c0_40, %c0_41] : memref<9x27x120xf32, #tpu.memory_space<vmem>>, vector<1x27x120xf32>
    %71 = vector.shape_cast %70 : vector<1x27x120xf32> to vector<27x120xf32>
    %cst_42 = arith.constant dense<0.000000e+00> : vector<8x120xf32>
    %72 = tpu.matmul %69, %71, %cst_42 {dimension_numbers = #tpu.dot_dimension_numbers<[1], [0], [0], [1], [0, 0, 1, 1], [], []>} : vector<8x27xf32>, vector<27x120xf32>, vector<8x120xf32> -> vector<8x120xf32>
    %73 = arith.addf %62, %72 : vector<8x120xf32>
    %c12_i32 = arith.constant 12 : i32
    %74 = vector.broadcast %c12_i32 : i32 to vector<1x40x1xi32>
    %75 = arith.cmpi eq, %39, %74 : vector<1x40x1xi32>
    %76 = arith.extui %75 : vector<1x40x1xi1> to vector<1x40x1xi32>
    %77 = arith.sitofp %76 : vector<1x40x1xi32> to vector<1x40x1xf32>
    %78 = vector.broadcast %77 : vector<1x40x1xf32> to vector<8x40x27xf32>
    %79 = arith.mulf %38, %78 : vector<8x40x27xf32>
    %cst_43 = arith.constant dense<0.000000e+00> : vector<8x27xf32>
    %80 = vector.multi_reduction <add>, %79, %cst_43 [1] : vector<8x40x27xf32> to vector<8x27xf32>
    %c3 = arith.constant 3 : index
    %c0_44 = arith.constant 0 : index
    %c0_45 = arith.constant 0 : index
    %81 = vector.load %arg8[%c3, %c0_44, %c0_45] : memref<9x27x120xf32, #tpu.memory_space<vmem>>, vector<1x27x120xf32>
    %82 = vector.shape_cast %81 : vector<1x27x120xf32> to vector<27x120xf32>
    %cst_46 = arith.constant dense<0.000000e+00> : vector<8x120xf32>
    %83 = tpu.matmul %80, %82, %cst_46 {dimension_numbers = #tpu.dot_dimension_numbers<[1], [0], [0], [1], [0, 0, 1, 1], [], []>} : vector<8x27xf32>, vector<27x120xf32>, vector<8x120xf32> -> vector<8x120xf32>
    %84 = arith.addf %73, %83 : vector<8x120xf32>
    %c16_i32 = arith.constant 16 : i32
    %85 = vector.broadcast %c16_i32 : i32 to vector<1x40x1xi32>
    %86 = arith.cmpi eq, %39, %85 : vector<1x40x1xi32>
    %87 = arith.extui %86 : vector<1x40x1xi1> to vector<1x40x1xi32>
    %88 = arith.sitofp %87 : vector<1x40x1xi32> to vector<1x40x1xf32>
    %89 = vector.broadcast %88 : vector<1x40x1xf32> to vector<8x40x27xf32>
    %90 = arith.mulf %38, %89 : vector<8x40x27xf32>
    %cst_47 = arith.constant dense<0.000000e+00> : vector<8x27xf32>
    %91 = vector.multi_reduction <add>, %90, %cst_47 [1] : vector<8x40x27xf32> to vector<8x27xf32>
    %c4 = arith.constant 4 : index
    %c0_48 = arith.constant 0 : index
    %c0_49 = arith.constant 0 : index
    %92 = vector.load %arg8[%c4, %c0_48, %c0_49] : memref<9x27x120xf32, #tpu.memory_space<vmem>>, vector<1x27x120xf32>
    %93 = vector.shape_cast %92 : vector<1x27x120xf32> to vector<27x120xf32>
    %cst_50 = arith.constant dense<0.000000e+00> : vector<8x120xf32>
    %94 = tpu.matmul %91, %93, %cst_50 {dimension_numbers = #tpu.dot_dimension_numbers<[1], [0], [0], [1], [0, 0, 1, 1], [], []>} : vector<8x27xf32>, vector<27x120xf32>, vector<8x120xf32> -> vector<8x120xf32>
    %95 = arith.addf %84, %94 : vector<8x120xf32>
    %c20_i32 = arith.constant 20 : i32
    %96 = vector.broadcast %c20_i32 : i32 to vector<1x40x1xi32>
    %97 = arith.cmpi eq, %39, %96 : vector<1x40x1xi32>
    %98 = arith.extui %97 : vector<1x40x1xi1> to vector<1x40x1xi32>
    %99 = arith.sitofp %98 : vector<1x40x1xi32> to vector<1x40x1xf32>
    %100 = vector.broadcast %99 : vector<1x40x1xf32> to vector<8x40x27xf32>
    %101 = arith.mulf %38, %100 : vector<8x40x27xf32>
    %cst_51 = arith.constant dense<0.000000e+00> : vector<8x27xf32>
    %102 = vector.multi_reduction <add>, %101, %cst_51 [1] : vector<8x40x27xf32> to vector<8x27xf32>
    %c5 = arith.constant 5 : index
    %c0_52 = arith.constant 0 : index
    %c0_53 = arith.constant 0 : index
    %103 = vector.load %arg8[%c5, %c0_52, %c0_53] : memref<9x27x120xf32, #tpu.memory_space<vmem>>, vector<1x27x120xf32>
    %104 = vector.shape_cast %103 : vector<1x27x120xf32> to vector<27x120xf32>
    %cst_54 = arith.constant dense<0.000000e+00> : vector<8x120xf32>
    %105 = tpu.matmul %102, %104, %cst_54 {dimension_numbers = #tpu.dot_dimension_numbers<[1], [0], [0], [1], [0, 0, 1, 1], [], []>} : vector<8x27xf32>, vector<27x120xf32>, vector<8x120xf32> -> vector<8x120xf32>
    %106 = arith.addf %95, %105 : vector<8x120xf32>
    %c24_i32 = arith.constant 24 : i32
    %107 = vector.broadcast %c24_i32 : i32 to vector<1x40x1xi32>
    %108 = arith.cmpi eq, %39, %107 : vector<1x40x1xi32>
    %109 = arith.extui %108 : vector<1x40x1xi1> to vector<1x40x1xi32>
    %110 = arith.sitofp %109 : vector<1x40x1xi32> to vector<1x40x1xf32>
    %111 = vector.broadcast %110 : vector<1x40x1xf32> to vector<8x40x27xf32>
    %112 = arith.mulf %38, %111 : vector<8x40x27xf32>
    %cst_55 = arith.constant dense<0.000000e+00> : vector<8x27xf32>
    %113 = vector.multi_reduction <add>, %112, %cst_55 [1] : vector<8x40x27xf32> to vector<8x27xf32>
    %c6 = arith.constant 6 : index
    %c0_56 = arith.constant 0 : index
    %c0_57 = arith.constant 0 : index
    %114 = vector.load %arg8[%c6, %c0_56, %c0_57] : memref<9x27x120xf32, #tpu.memory_space<vmem>>, vector<1x27x120xf32>
    %115 = vector.shape_cast %114 : vector<1x27x120xf32> to vector<27x120xf32>
    %cst_58 = arith.constant dense<0.000000e+00> : vector<8x120xf32>
    %116 = tpu.matmul %113, %115, %cst_58 {dimension_numbers = #tpu.dot_dimension_numbers<[1], [0], [0], [1], [0, 0, 1, 1], [], []>} : vector<8x27xf32>, vector<27x120xf32>, vector<8x120xf32> -> vector<8x120xf32>
    %117 = arith.addf %106, %116 : vector<8x120xf32>
    %c28_i32 = arith.constant 28 : i32
    %118 = vector.broadcast %c28_i32 : i32 to vector<1x40x1xi32>
    %119 = arith.cmpi eq, %39, %118 : vector<1x40x1xi32>
    %120 = arith.extui %119 : vector<1x40x1xi1> to vector<1x40x1xi32>
    %121 = arith.sitofp %120 : vector<1x40x1xi32> to vector<1x40x1xf32>
    %122 = vector.broadcast %121 : vector<1x40x1xf32> to vector<8x40x27xf32>
    %123 = arith.mulf %38, %122 : vector<8x40x27xf32>
    %cst_59 = arith.constant dense<0.000000e+00> : vector<8x27xf32>
    %124 = vector.multi_reduction <add>, %123, %cst_59 [1] : vector<8x40x27xf32> to vector<8x27xf32>
    %c7 = arith.constant 7 : index
    %c0_60 = arith.constant 0 : index
    %c0_61 = arith.constant 0 : index
    %125 = vector.load %arg8[%c7, %c0_60, %c0_61] : memref<9x27x120xf32, #tpu.memory_space<vmem>>, vector<1x27x120xf32>
    %126 = vector.shape_cast %125 : vector<1x27x120xf32> to vector<27x120xf32>
    %cst_62 = arith.constant dense<0.000000e+00> : vector<8x120xf32>
    %127 = tpu.matmul %124, %126, %cst_62 {dimension_numbers = #tpu.dot_dimension_numbers<[1], [0], [0], [1], [0, 0, 1, 1], [], []>} : vector<8x27xf32>, vector<27x120xf32>, vector<8x120xf32> -> vector<8x120xf32>
    %128 = arith.addf %117, %127 : vector<8x120xf32>
    %c32_i32 = arith.constant 32 : i32
    %129 = vector.broadcast %c32_i32 : i32 to vector<1x40x1xi32>
    %130 = arith.cmpi eq, %39, %129 : vector<1x40x1xi32>
    %131 = arith.extui %130 : vector<1x40x1xi1> to vector<1x40x1xi32>
    %132 = arith.sitofp %131 : vector<1x40x1xi32> to vector<1x40x1xf32>
    %133 = vector.broadcast %132 : vector<1x40x1xf32> to vector<8x40x27xf32>
    %134 = arith.mulf %38, %133 : vector<8x40x27xf32>
    %cst_63 = arith.constant dense<0.000000e+00> : vector<8x27xf32>
    %135 = vector.multi_reduction <add>, %134, %cst_63 [1] : vector<8x40x27xf32> to vector<8x27xf32>
    %c8 = arith.constant 8 : index
    %c0_64 = arith.constant 0 : index
    %c0_65 = arith.constant 0 : index
    %136 = vector.load %arg8[%c8, %c0_64, %c0_65] : memref<9x27x120xf32, #tpu.memory_space<vmem>>, vector<1x27x120xf32>
    %137 = vector.shape_cast %136 : vector<1x27x120xf32> to vector<27x120xf32>
    %cst_66 = arith.constant dense<0.000000e+00> : vector<8x120xf32>
    %138 = tpu.matmul %135, %137, %cst_66 {dimension_numbers = #tpu.dot_dimension_numbers<[1], [0], [0], [1], [0, 0, 1, 1], [], []>} : vector<8x27xf32>, vector<27x120xf32>, vector<8x120xf32> -> vector<8x120xf32>
    %139 = arith.addf %128, %138 : vector<8x120xf32>
    %c0_67 = arith.constant 0 : index
    %c0_68 = arith.constant 0 : index
    %140 = vector.load %arg9[%c0_67, %c0_68] : memref<1x120xf32, #tpu.memory_space<vmem>>, vector<1x120xf32>
    %141 = vector.broadcast %140 : vector<1x120xf32> to vector<8x120xf32>
    %142 = arith.addf %139, %141 : vector<8x120xf32>
    %c0_69 = arith.constant 0 : index
    %c0_70 = arith.constant 0 : index
    %143 = vector.load %arg10[%c0_69, %c0_70] : memref<120x3xf32, #tpu.memory_space<vmem>>, vector<120x3xf32>
    %cst_71 = arith.constant dense<0.000000e+00> : vector<8x3xf32>
    %144 = tpu.matmul %142, %143, %cst_71 {dimension_numbers = #tpu.dot_dimension_numbers<[1], [0], [0], [1], [0, 0, 1, 1], [], []>} : vector<8x120xf32>, vector<120x3xf32>, vector<8x3xf32> -> vector<8x3xf32>
    %c0_72 = arith.constant 0 : index
    %c0_73 = arith.constant 0 : index
    %145 = vector.load %arg11[%c0_72, %c0_73] : memref<1x3xf32, #tpu.memory_space<vmem>>, vector<1x3xf32>
    %146 = vector.broadcast %145 : vector<1x3xf32> to vector<8x3xf32>
    %147 = arith.addf %144, %146 : vector<8x3xf32>
    %c0_74 = arith.constant 0 : index
    %c0_75 = arith.constant 0 : index
    %148 = vector.load %arg12[%c0_74, %c0_75] : memref<8x3xf32, #tpu.memory_space<vmem>>, vector<8x3xf32>
    tpu.vector_store %arg12[%c0_74, %c0_75], %147 {strides = array<i32>} : memref<8x3xf32, #tpu.memory_space<vmem>>, vector<8x3xf32>,
    return
  }
  func.func @transform_0(%arg0: i32) -> (i32, i32) {
    %c0_i32 = arith.constant 0 : i32
    %c0_i32_0 = arith.constant 0 : i32
    return %arg0, %c0_i32 : i32, i32
  }
  func.func @transform_1(%arg0: i32) -> (i32, i32, i32) {
    %c0_i32 = arith.constant 0 : i32
    %c0_i32_0 = arith.constant 0 : i32
    %c0_i32_1 = arith.constant 0 : i32
    %c0_i32_2 = arith.constant 0 : i32
    return %c0_i32, %c0_i32_0, %c0_i32_1 : i32, i32, i32
  }
  func.func @transform_2(%arg0: i32) -> (i32, i32) {
    %c0_i32 = arith.constant 0 : i32
    %c0_i32_0 = arith.constant 0 : i32
    %c0_i32_1 = arith.constant 0 : i32
    return %c0_i32, %c0_i32_0 : i32, i32
  }
  func.func @transform_3(%arg0: i32) -> (i32, i32, i32) {
    %c0_i32 = arith.constant 0 : i32
    %c0_i32_0 = arith.constant 0 : i32
    %c0_i32_1 = arith.constant 0 : i32
    %c0_i32_2 = arith.constant 0 : i32
    return %c0_i32, %c0_i32_0, %c0_i32_1 : i32, i32, i32
  }
  func.func @transform_4(%arg0: i32) -> (i32, i32) {
    %c0_i32 = arith.constant 0 : i32
    %c0_i32_0 = arith.constant 0 : i32
    %c0_i32_1 = arith.constant 0 : i32
    return %c0_i32, %c0_i32_0 : i32, i32
  }
  func.func @transform_5(%arg0: i32) -> (i32, i32) {
    %c0_i32 = arith.constant 0 : i32
    %c0_i32_0 = arith.constant 0 : i32
    %c0_i32_1 = arith.constant 0 : i32
    return %c0_i32, %c0_i32_0 : i32, i32
  }
  func.func @transform_6(%arg0: i32) -> (i32, i32) {
    %c0_i32 = arith.constant 0 : i32
    %c0_i32_0 = arith.constant 0 : i32
    %c0_i32_1 = arith.constant 0 : i32
    return %c0_i32, %c0_i32_0 : i32, i32
  }
  func.func @transform_7(%arg0: i32) -> (i32, i32, i32) {
    %c0_i32 = arith.constant 0 : i32
    %c0_i32_0 = arith.constant 0 : i32
    %c0_i32_1 = arith.constant 0 : i32
    %c0_i32_2 = arith.constant 0 : i32
    return %c0_i32, %c0_i32_0, %c0_i32_1 : i32, i32, i32
  }
  func.func @transform_8(%arg0: i32) -> (i32, i32) {
    %c0_i32 = arith.constant 0 : i32
    %c0_i32_0 = arith.constant 0 : i32
    %c0_i32_1 = arith.constant 0 : i32
    return %c0_i32, %c0_i32_0 : i32, i32
  }
  func.func @transform_9(%arg0: i32) -> (i32, i32) {
    %c0_i32 = arith.constant 0 : i32
    %c0_i32_0 = arith.constant 0 : i32
    %c0_i32_1 = arith.constant 0 : i32
    return %c0_i32, %c0_i32_0 : i32, i32
  }
  func.func @transform_10(%arg0: i32) -> (i32, i32) {
    %c0_i32 = arith.constant 0 : i32
    %c0_i32_0 = arith.constant 0 : i32
    %c0_i32_1 = arith.constant 0 : i32
    return %c0_i32, %c0_i32_0 : i32, i32
  }
  func.func @transform_11(%arg0: i32) -> (i32, i32) {
    %c0_i32 = arith.constant 0 : i32
    %c0_i32_0 = arith.constant 0 : i32
    return %arg0, %c0_i32 : i32, i32
  }
}

</mosaic_0001>

<llo_original>
// kernel: tile.18
$region0: #{tile.18}
  #allocation0 [shape = 's32[1]{0}', space=sflag, size = 0x4, scoped, tag = 'scoped memory for tile.18']
  %s0 = inlined_call_operand.vmem [shape: f32[6], index: 0, kind: input, shape index: {}]
  %s1 = inlined_call_operand.vmem [shape: f32[39,6], index: 1, kind: output, shape index: {}]
  // Predicated region
  $region2: #{tile.18} parent=0 // pred_check
    _
  $region3: #{tile.18} parent=0 // pred_check_branch
    %3 = sbr.rel (0) target = $region5
  $region4: #{tile.18} parent=0 // pred_region
    _
  $region5: #{tile.18} parent=0 // pred_fallthru
    _
  %v4 = vld [vmem:[%s0] ss:$0 sm:$0xff]
  %5 = vst [vmem:[%s1] sm:$0xff] %v4
  %s6 = scalar_lea.vmem %s1, 8
  %7 = vst [vmem:[%s6] sm:$0xff] %v4
  %s8 = scalar_lea.vmem %s1, 16
  %9 = vst [vmem:[%s8] sm:$0xff] %v4
  %s10 = scalar_lea.vmem %s1, 24
  %11 = vst [vmem:[%s10] sm:$0xff] %v4
  %s12 = scalar_lea.vmem %s1, 32
  %13 = vst [vmem:[%s12] sm:$0xff] %v4

// kernel: tile.19
$region0: #{tile.19}
  %s0 = inlined_call_operand.vmem [shape: f32[39,6], index: 0, kind: input, shape index: {}]
  %s1 = inlined_call_operand.vmem [shape: f32[234], index: 1, kind: output, shape index: {}]
  $region1: #{tile.19} parent=0
    #allocation0 [shape = 'u8[4096]{0}', space=vmem, size = 0x1000, scoped, tag = 'scoped mem for output reshape']
    %v2 = vld [vmem:[%s0] sm:$0x1]
    %vm3 = vcmask 48128
    %4 = vst.msk [vmem:[#allocation0] sm:$0x1] %vm3, %v2
    %s5 = scalar_lea.vmem %s0, 21
    %v6 = vld [vmem:[%s5] sm:$0x1]
    %s7 = scalar_lea.vmem %s0, 21
    %v8 = vld [vmem:[%s7] sm:$0x1]
    %vm9 = vcmask 15360
    %v10 = vsel %vm9, %v8, %v6
    %11 = vrot.lane.b32.xlu0 %v10, 126
    %v12 = vpop.permute.xlu0 %11
    %vm13 = vcmask 31744
    %s14 = scalar_lea.vmem [#allocation0], 1
    %15 = vst.msk [vmem:[%s14] sm:$0x1] %vm13, %v12
    %vm16 = vcmask 1048560
    %17 = vst.msk [vmem:[#allocation0] sm:$0x1] %vm16, %v12
    %s18 = scalar_lea.vmem %s0, 20
    %v19 = vld [vmem:[%s18] sm:$0x1]
    %20 = vrot.lane.b32.xlu0 %v19, 120
    %v21 = vpop.permute.xlu0 %20
    %vm22 = vcmask 1032128
    %23 = vst.msk [vmem:[#allocation0] sm:$0x1] %vm22, %v21
    %s24 = scalar_lea.vmem %s0, 19
    %v25 = vld [vmem:[%s24] sm:$0x1]
    %26 = vrot.lane.b32.xlu0 %v25, 114
    %v27 = vpop.permute.xlu0 %26
    %vm28 = vcmask 982928
    %29 = vst.msk [vmem:[#allocation0] sm:$0x1] %vm28, %v27
    %s30 = scalar_lea.vmem %s0, 18
    %v31 = vld [vmem:[%s30] sm:$0x1]
    %32 = vrot.lane.b32.xlu0 %v31, 108
    %v33 = vpop.permute.xlu0 %32
    %vm34 = vcmask 933728
    %35 = vst.msk [vmem:[#allocation0] sm:$0x1] %vm34, %v33
    %s36 = scalar_lea.vmem %s0, 17
    %v37 = vld [vmem:[%s36] sm:$0x1]
    %38 = vrot.lane.b32.xlu0 %v37, 102
    %v39 = vpop.permute.xlu0 %38
    %vm40 = vcmask 884528
    %41 = vst.msk [vmem:[#allocation0] sm:$0x1] %vm40, %v39
    %s42 = scalar_lea.vmem %s0, 38
    %v43 = vld [vmem:[%s42] sm:$0x1]
    %44 = vrot.lane.b32.xlu0 %v43, 100
    %v45 = vpop.permute.xlu0 %44
    %vm46 = vcmask 868128
    %s47 = scalar_lea.vmem [#allocation0], 1
    %48 = vst.msk [vmem:[%s47] sm:$0x1] %vm46, %v45
    %s49 = scalar_lea.vmem %s0, 16
    %v50 = vld [vmem:[%s49] sm:$0x1]
    %51 = vrot.lane.b32.xlu0 %v50, 96
    %v52 = vpop.permute.xlu0 %51
    %vm53 = vcmask 835328
    %54 = vst.msk [vmem:[#allocation0] sm:$0x1] %vm53, %v52
    %s55 = scalar_lea.vmem %s0, 37
    %v56 = vld [vmem:[%s55] sm:$0x1]
    %57 = vrot.lane.b32.xlu0 %v56, 94
    %v58 = vpop.permute.xlu0 %57
    %vm59 = vcmask 818928
    %s60 = scalar_lea.vmem [#allocation0], 1
    %61 = vst.msk [vmem:[%s60] sm:$0x1] %vm59, %v58
    %s62 = scalar_lea.vmem %s0, 15
    %v63 = vld [vmem:[%s62] sm:$0x1]
    %64 = vrot.lane.b32.xlu0 %v63, 90
    %v65 = vpop.permute.xlu0 %64
    %vm66 = vcmask 786128
    %67 = vst.msk [vmem:[#allocation0] sm:$0x1] %vm66, %v65
    %s68 = scalar_lea.vmem %s0, 36
    %v69 = vld [vmem:[%s68] sm:$0x1]
    %70 = vrot.lane.b32.xlu0 %v69, 88
    %v71 = vpop.permute.xlu0 %70
    %vm72 = vcmask 769728
    %s73 = scalar_lea.vmem [#allocation0], 1
    %74 = vst.msk [vmem:[%s73] sm:$0x1] %vm72, %v71
    %s75 = scalar_lea.vmem %s0, 14
    %v76 = vld [vmem:[%s75] sm:$0x1]
    %77 = vrot.lane.b32.xlu0 %v76, 84
    %v78 = vpop.permute.xlu0 %77
    %vm79 = vcmask 736928
    %80 = vst.msk [vmem:[#allocation0] sm:$0x1] %vm79, %v78
    %s81 = scalar_lea.vmem %s0, 35
    %v82 = vld [vmem:[%s81] sm:$0x1]
    %83 = vrot.lane.b32.xlu0 %v82, 82
    %v84 = vpop.permute.xlu0 %83
    %vm85 = vcmask 720528
    %s86 = scalar_lea.vmem [#allocation0], 1
    %87 = vst.msk [vmem:[%s86] sm:$0x1] %vm85, %v84
    %s88 = scalar_lea.vmem %s0, 13
    %v89 = vld [vmem:[%s88] sm:$0x1]
    %90 = vrot.lane.b32.xlu0 %v89, 78
    %v91 = vpop.permute.xlu0 %90
    %vm92 = vcmask 687728
    %93 = vst.msk [vmem:[#allocation0] sm:$0x1] %vm92, %v91
    %s94 = scalar_lea.vmem %s0, 34
    %v95 = vld [vmem:[%s94] sm:$0x1]
    %96 = vrot.lane.b32.xlu0 %v95, 76
    %v97 = vpop.permute.xlu0 %96
    %vm98 = vcmask 671328
    %s99 = scalar_lea.vmem [#allocation0], 1
    %100 = vst.msk [vmem:[%s99] sm:$0x1] %vm98, %v97
    %s101 = scalar_lea.vmem %s0, 12
    %v102 = vld [vmem:[%s101] sm:$0x1]
    %103 = vrot.lane.b32.xlu0 %v102, 72
    %v104 = vpop.permute.xlu0 %103
    %vm105 = vcmask 638528
    %106 = vst.msk [vmem:[#allocation0] sm:$0x1] %vm105, %v104
    %s107 = scalar_lea.vmem %s0, 33
    %v108 = vld [vmem:[%s107] sm:$0x1]
    %109 = vrot.lane.b32.xlu0 %v108, 70
    %v110 = vpop.permute.xlu0 %109
    %vm111 = vcmask 622128
    %s112 = scalar_lea.vmem [#allocation0], 1
    %113 = vst.msk [vmem:[%s112] sm:$0x1] %vm111, %v110
    %s114 = scalar_lea.vmem %s0, 11
    %v115 = vld [vmem:[%s114] sm:$0x1]
    %116 = vrot.lane.b32.xlu0 %v115, 66
    %v117 = vpop.permute.xlu0 %116
    %vm118 = vcmask 589328
    %119 = vst.msk [vmem:[#allocation0] sm:$0x1] %vm118, %v117
    %s120 = scalar_lea.vmem %s0, 32
    %v121 = vld [vmem:[%s120] sm:$0x1]
    %122 = vrot.lane.b32.xlu0 %v121, 64
    %v123 = vpop.permute.xlu0 %122
    %vm124 = vcmask 572928
    %s125 = scalar_lea.vmem [#allocation0], 1
    %126 = vst.msk [vmem:[%s125] sm:$0x1] %vm124, %v123
    %s127 = scalar_lea.vmem %s0, 10
    %v128 = vld [vmem:[%s127] sm:$0x1]
    %129 = vrot.lane.b32.xlu0 %v128, 60
    %v130 = vpop.permute.xlu0 %129
    %vm131 = vcmask 540128
    %132 = vst.msk [vmem:[#allocation0] sm:$0x1] %vm131, %v130
    %s133 = scalar_lea.vmem %s0, 31
    %v134 = vld [vmem:[%s133] sm:$0x1]
    %135 = vrot.lane.b32.xlu0 %v134, 58
    %v136 = vpop.permute.xlu0 %135
    %vm137 = vcmask 523728
    %s138 = scalar_lea.vmem [#allocation0], 1
    %139 = vst.msk [vmem:[%s138] sm:$0x1] %vm137, %v136
    %s140 = scalar_lea.vmem %s0, 9
    %v141 = vld [vmem:[%s140] sm:$0x1]
    %142 = vrot.lane.b32.xlu0 %v141, 54
    %v143 = vpop.permute.xlu0 %142
    %vm144 = vcmask 490928
    %145 = vst.msk [vmem:[#allocation0] sm:$0x1] %vm144, %v143
    %s146 = scalar_lea.vmem %s0, 30
    %v147 = vld [vmem:[%s146] sm:$0x1]
    %148 = vrot.lane.b32.xlu0 %v147, 52
    %v149 = vpop.permute.xlu0 %148
    %vm150 = vcmask 474528
    %s151 = scalar_lea.vmem [#allocation0], 1
    %152 = vst.msk [vmem:[%s151] sm:$0x1] %vm150, %v149
    %s153 = scalar_lea.vmem %s0, 8
    %v154 = vld [vmem:[%s153] sm:$0x1]
    %155 = vrot.lane.b32.xlu0 %v154, 48
    %v156 = vpop.permute.xlu0 %155
    %vm157 = vcmask 441728
    %158 = vst.msk [vmem:[#allocation0] sm:$0x1] %vm157, %v156
    %s159 = scalar_lea.vmem %s0, 29
    %v160 = vld [vmem:[%s159] sm:$0x1]
    %161 = vrot.lane.b32.xlu0 %v160, 46
    %v162 = vpop.permute.xlu0 %161
    %vm163 = vcmask 425328
    %s164 = scalar_lea.vmem [#allocation0], 1
    %165 = vst.msk [vmem:[%s164] sm:$0x1] %vm163, %v162
    %s166 = scalar_lea.vmem %s0, 7
    %v167 = vld [vmem:[%s166] sm:$0x1]
    %168 = vrot.lane.b32.xlu0 %v167, 42
    %v169 = vpop.permute.xlu0 %168
    %vm170 = vcmask 392528
    %171 = vst.msk [vmem:[#allocation0] sm:$0x1] %vm170, %v169
    %s172 = scalar_lea.vmem %s0, 28
    %v173 = vld [vmem:[%s172] sm:$0x1]
    %174 = vrot.lane.b32.xlu0 %v173, 40
    %v175 = vpop.permute.xlu0 %174
    %vm176 = vcmask 376128
    %s177 = scalar_lea.vmem [#allocation0], 1
    %178 = vst.msk [vmem:[%s177] sm:$0x1] %vm176, %v175
    %s179 = scalar_lea.vmem %s0, 6
    %v180 = vld [vmem:[%s179] sm:$0x1]
    %181 = vrot.lane.b32.xlu0 %v180, 36
    %v182 = vpop.permute.xlu0 %181
    %vm183 = vcmask 343328
    %184 = vst.msk [vmem:[#allocation0] sm:$0x1] %vm183, %v182
    %s185 = scalar_lea.vmem %s0, 27
    %v186 = vld [vmem:[%s185] sm:$0x1]
    %187 = vrot.lane.b32.xlu0 %v186, 34
    %v188 = vpop.permute.xlu0 %187
    %vm189 = vcmask 326928
    %s190 = scalar_lea.vmem [#allocation0], 1
    %191 = vst.msk [vmem:[%s190] sm:$0x1] %vm189, %v188
    %s192 = scalar_lea.vmem %s0, 5
    %v193 = vld [vmem:[%s192] sm:$0x1]
    %194 = vrot.lane.b32.xlu0 %v193, 30
    %v195 = vpop.permute.xlu0 %194
    %vm196 = vcmask 294128
    %197 = vst.msk [vmem:[#allocation0] sm:$0x1] %vm196, %v195
    %s198 = scalar_lea.vmem %s0, 26
    %v199 = vld [vmem:[%s198] sm:$0x1]
    %200 = vrot.lane.b32.xlu0 %v199, 28
    %v201 = vpop.permute.xlu0 %200
    %vm202 = vcmask 277728
    %s203 = scalar_lea.vmem [#allocation0], 1
    %204 = vst.msk [vmem:[%s203] sm:$0x1] %vm202, %v201
    %s205 = scalar_lea.vmem %s0, 4
    %v206 = vld [vmem:[%s205] sm:$0x1]
    %207 = vrot.lane.b32.xlu0 %v206, 24
    %v208 = vpop.permute.xlu0 %207
    %vm209 = vcmask 244928
    %210 = vst.msk [vmem:[#allocation0] sm:$0x1] %vm209, %v208
    %s211 = scalar_lea.vmem %s0, 25
    %v212 = vld [vmem:[%s211] sm:$0x1]
    %213 = vrot.lane.b32.xlu0 %v212, 22
    %v214 = vpop.permute.xlu0 %213
    %vm215 = vcmask 228528
    %s216 = scalar_lea.vmem [#allocation0], 1
    %217 = vst.msk [vmem:[%s216] sm:$0x1] %vm215, %v214
    %s218 = scalar_lea.vmem %s0, 3
    %v219 = vld [vmem:[%s218] sm:$0x1]
    %220 = vrot.lane.b32.xlu0 %v219, 18
    %v221 = vpop.permute.xlu0 %220
    %vm222 = vcmask 195728
    %223 = vst.msk [vmem:[#allocation0] sm:$0x1] %vm222, %v221
    %s224 = scalar_lea.vmem %s0, 24
    %v225 = vld [vmem:[%s224] sm:$0x1]
    %226 = vrot.lane.b32.xlu0 %v225, 16
    %v227 = vpop.permute.xlu0 %226
    %vm228 = vcmask 179328
    %s229 = scalar_lea.vmem [#allocation0], 1
    %230 = vst.msk [vmem:[%s229] sm:$0x1] %vm228, %v227
    %s231 = scalar_lea.vmem %s0, 2
    %v232 = vld [vmem:[%s231] sm:$0x1]
    %233 = vrot.lane.b32.xlu0 %v232, 12
    %v234 = vpop.permute.xlu0 %233
    %vm235 = vcmask 146528
    %236 = vst.msk [vmem:[#allocation0] sm:$0x1] %vm235, %v234
    %s237 = scalar_lea.vmem %s0, 23
    %v238 = vld [vmem:[%s237] sm:$0x1]
    %239 = vrot.lane.b32.xlu0 %v238, 10
    %v240 = vpop.permute.xlu0 %239
    %vm241 = vcmask 130128
    %s242 = scalar_lea.vmem [#allocation0], 1
    %243 = vst.msk [vmem:[%s242] sm:$0x1] %vm241, %v240
    %s244 = scalar_lea.vmem %s0, 1
    %v245 = vld [vmem:[%s244] sm:$0x1]
    %246 = vrot.lane.b32.xlu0 %v245, 6
    %v247 = vpop.permute.xlu0 %246
    %vm248 = vcmask 97328
    %249 = vst.msk [vmem:[#allocation0] sm:$0x1] %vm248, %v247
    %s250 = scalar_lea.vmem %s0, 22
    %v251 = vld [vmem:[%s250] sm:$0x1]
    %252 = vrot.lane.b32.xlu0 %v251, 4
    %v253 = vpop.permute.xlu0 %252
    %vm254 = vcmask 80928
    %s255 = scalar_lea.vmem [#allocation0], 1
    %256 = vst.msk [vmem:[%s255] sm:$0x1] %vm254, %v253
    %s258 = sshllo.u32 0, 2
    %v260 = vld [vmem:[#allocation0] sm:%s258]
    %s261 = sshllo.u32 0, 2
    %262 = vst [vmem:[%s1] sm:%s261] %v260

// kernel: tile.23
$region0: #{tile.23}
  #allocation0 [shape = 's32[1]{0}', space=sflag, size = 0x4, scoped, tag = 'scoped memory for tile.23']
  %s0 = inlined_call_operand.vmem [shape: f32[12], index: 0, kind: input, shape index: {}]
  %s1 = inlined_call_operand.vmem [shape: f32[18,12], index: 1, kind: output, shape index: {}]
  // Predicated region
  $region2: #{tile.23} parent=0 // pred_check
    _
  $region3: #{tile.23} parent=0 // pred_check_branch
    %3 = sbr.rel (0) target = $region5
  $region4: #{tile.23} parent=0 // pred_region
    _
  $region5: #{tile.23} parent=0 // pred_fallthru
    _
  %v4 = vld [vmem:[%s0] ss:$0 sm:$0xff]
  %5 = vst [vmem:[%s1] sm:$0xff] %v4
  %s6 = scalar_lea.vmem %s1, 8
  %7 = vst [vmem:[%s6] sm:$0xff] %v4
  %s8 = scalar_lea.vmem %s1, 16
  %9 = vst [vmem:[%s8] sm:$0xff] %v4

// kernel: tile.24
$region0: #{tile.24}
  %s0 = inlined_call_operand.vmem [shape: f32[18,12], index: 0, kind: input, shape index: {}]
  %s1 = inlined_call_operand.vmem [shape: f32[1,216], index: 1, kind: output, shape index: {}]
  $region1: #{tile.24} parent=0
    #allocation0 [shape = 'u8[8192]{0}', space=vmem, size = 0x2000, scoped, tag = 'scoped mem for output reshape']
    %v2 = vld [vmem:[%s0] sm:$0x1]
    %vm3 = vcmask 97280
    %4 = vst.msk [vmem:[#allocation0] sm:$0x1] %vm3, %v2
    %s5 = scalar_lea.vmem %s0, 10
    %v6 = vld [vmem:[%s5] sm:$0x1]
    %s7 = scalar_lea.vmem %s0, 10
    %v8 = vld [vmem:[%s7] sm:$0x1]
    %vm9 = vcmask 64512
    %v10 = vsel %vm9, %v8, %v6
    %11 = vrot.lane.b32.xlu0 %v10, 120
    %v12 = vpop.permute.xlu0 %11
    %vm13 = vcmask 31744
    %s14 = scalar_lea.vmem [#allocation0], 8
    %15 = vst.msk [vmem:[%s14] sm:$0x1] %vm13, %v12
    %vm16 = vcmask 1048512
    %17 = vst.msk [vmem:[#allocation0] sm:$0x1] %vm16, %v12
    %s18 = scalar_lea.vmem %s0, 9
    %v19 = vld [vmem:[%s18] sm:$0x1]
    %20 = vrot.lane.b32.xlu0 %v19, 108
    %v21 = vpop.permute.xlu0 %20
    %vm22 = vcmask 982880
    %23 = vst.msk [vmem:[#allocation0] sm:$0x1] %vm22, %v21
    %s24 = scalar_lea.vmem %s0, 8
    %v25 = vld [vmem:[%s24] sm:$0x1]
    %26 = vrot.lane.b32.xlu0 %v25, 96
    %v27 = vpop.permute.xlu0 %26
    %vm28 = vcmask 884480
    %29 = vst.msk [vmem:[#allocation0] sm:$0x1] %vm28, %v27
    %s30 = scalar_lea.vmem %s0, 7
    %v31 = vld [vmem:[%s30] sm:$0x1]
    %32 = vrot.lane.b32.xlu0 %v31, 84
    %v33 = vpop.permute.xlu0 %32
    %vm34 = vcmask 786080
    %35 = vst.msk [vmem:[#allocation0] sm:$0x1] %vm34, %v33
    %s36 = scalar_lea.vmem %s0, 17
    %v37 = vld [vmem:[%s36] sm:$0x1]
    %38 = vrot.lane.b32.xlu0 %v37, 76
    %v39 = vpop.permute.xlu0 %38
    %vm40 = vcmask 720480
    %s41 = scalar_lea.vmem [#allocation0], 8
    %42 = vst.msk [vmem:[%s41] sm:$0x1] %vm40, %v39
    %s43 = scalar_lea.vmem %s0, 6
    %v44 = vld [vmem:[%s43] sm:$0x1]
    %45 = vrot.lane.b32.xlu0 %v44, 72
    %v46 = vpop.permute.xlu0 %45
    %vm47 = vcmask 687680
    %48 = vst.msk [vmem:[#allocation0] sm:$0x1] %vm47, %v46
    %s49 = scalar_lea.vmem %s0, 16
    %v50 = vld [vmem:[%s49] sm:$0x1]
    %51 = vrot.lane.b32.xlu0 %v50, 64
    %v52 = vpop.permute.xlu0 %51
    %vm53 = vcmask 622080
    %s54 = scalar_lea.vmem [#allocation0], 8
    %55 = vst.msk [vmem:[%s54] sm:$0x1] %vm53, %v52
    %s56 = scalar_lea.vmem %s0, 5
    %v57 = vld [vmem:[%s56] sm:$0x1]
    %58 = vrot.lane.b32.xlu0 %v57, 60
    %v59 = vpop.permute.xlu0 %58
    %vm60 = vcmask 589280
    %61 = vst.msk [vmem:[#allocation0] sm:$0x1] %vm60, %v59
    %s62 = scalar_lea.vmem %s0, 15
    %v63 = vld [vmem:[%s62] sm:$0x1]
    %64 = vrot.lane.b32.xlu0 %v63, 52
    %v65 = vpop.permute.xlu0 %64
    %vm66 = vcmask 523680
    %s67 = scalar_lea.vmem [#allocation0], 8
    %68 = vst.msk [vmem:[%s67] sm:$0x1] %vm66, %v65
    %s69 = scalar_lea.vmem %s0, 4
    %v70 = vld [vmem:[%s69] sm:$0x1]
    %71 = vrot.lane.b32.xlu0 %v70, 48
    %v72 = vpop.permute.xlu0 %71
    %vm73 = vcmask 490880
    %74 = vst.msk [vmem:[#allocation0] sm:$0x1] %vm73, %v72
    %s75 = scalar_lea.vmem %s0, 14
    %v76 = vld [vmem:[%s75] sm:$0x1]
    %77 = vrot.lane.b32.xlu0 %v76, 40
    %v78 = vpop.permute.xlu0 %77
    %vm79 = vcmask 425280
    %s80 = scalar_lea.vmem [#allocation0], 8
    %81 = vst.msk [vmem:[%s80] sm:$0x1] %vm79, %v78
    %s82 = scalar_lea.vmem %s0, 3
    %v83 = vld [vmem:[%s82] sm:$0x1]
    %84 = vrot.lane.b32.xlu0 %v83, 36
    %v85 = vpop.permute.xlu0 %84
    %vm86 = vcmask 392480
    %87 = vst.msk [vmem:[#allocation0] sm:$0x1] %vm86, %v85
    %s88 = scalar_lea.vmem %s0, 13
    %v89 = vld [vmem:[%s88] sm:$0x1]
    %90 = vrot.lane.b32.xlu0 %v89, 28
    %v91 = vpop.permute.xlu0 %90
    %vm92 = vcmask 326880
    %s93 = scalar_lea.vmem [#allocation0], 8
    %94 = vst.msk [vmem:[%s93] sm:$0x1] %vm92, %v91
    %s95 = scalar_lea.vmem %s0, 2
    %v96 = vld [vmem:[%s95] sm:$0x1]
    %97 = vrot.lane.b32.xlu0 %v96, 24
    %v98 = vpop.permute.xlu0 %97
    %vm99 = vcmask 294080
    %100 = vst.msk [vmem:[#allocation0] sm:$0x1] %vm99, %v98
    %s101 = scalar_lea.vmem %s0, 12
    %v102 = vld [vmem:[%s101] sm:$0x1]
    %103 = vrot.lane.b32.xlu0 %v102, 16
    %v104 = vpop.permute.xlu0 %103
    %vm105 = vcmask 228480
    %s106 = scalar_lea.vmem [#allocation0], 8
    %107 = vst.msk [vmem:[%s106] sm:$0x1] %vm105, %v104
    %s108 = scalar_lea.vmem %s0, 1
    %v109 = vld [vmem:[%s108] sm:$0x1]
    %110 = vrot.lane.b32.xlu0 %v109, 12
    %v111 = vpop.permute.xlu0 %110
    %vm112 = vcmask 195680
    %113 = vst.msk [vmem:[#allocation0] sm:$0x1] %vm112, %v111
    %s114 = scalar_lea.vmem %s0, 11
    %v115 = vld [vmem:[%s114] sm:$0x1]
    %116 = vrot.lane.b32.xlu0 %v115, 4
    %v117 = vpop.permute.xlu0 %116
    %vm118 = vcmask 130080
    %s119 = scalar_lea.vmem [#allocation0], 8
    %120 = vst.msk [vmem:[%s119] sm:$0x1] %vm118, %v117
    %s122 = sshllo.u32 0, 1
    %v124 = vld [vmem:[#allocation0] sm:%s122]
    %s125 = sshllo.u32 0, 1
    %126 = vst [vmem:[%s1] sm:%s125] %v124
    %s127 = scalar_lea.vmem [#allocation0], 8
    %v128 = vld [vmem:[%s127] sm:%s122]
    %s129 = sshllo.u32 0, 1
    %s130 = scalar_lea.vmem %s1, 1
    %131 = vst [vmem:[%s130] sm:%s129] %v128

// kernel: tile.28
$region0: #{tile.28}
  #allocation0 [shape = 's32[1]{0}', space=sflag, size = 0x4, scoped, tag = 'scoped memory for tile.28']
  %s0 = inlined_call_operand.vmem [shape: f32[3], index: 0, kind: input, shape index: {}]
  %s1 = inlined_call_operand.vmem [shape: f32[9,3], index: 1, kind: output, shape index: {}]
  // Predicated region
  $region2: #{tile.28} parent=0 // pred_check
    _
  $region3: #{tile.28} parent=0 // pred_check_branch
    %3 = sbr.rel (0) target = $region5
  $region4: #{tile.28} parent=0 // pred_region
    _
  $region5: #{tile.28} parent=0 // pred_fallthru
    _
  %v4 = vld [vmem:[%s0] ss:$0 sm:$0xff]
  %5 = vst [vmem:[%s1] sm:$0xff] %v4
  %s6 = scalar_lea.vmem %s1, 8
  %7 = vst [vmem:[%s6] sm:$0xff] %v4

// kernel: tile.29
$region0: #{tile.29}
  %s0 = inlined_call_operand.vmem [shape: f32[9,3], index: 0, kind: input, shape index: {}]
  %s1 = inlined_call_operand.vmem [shape: f32[1,27], index: 1, kind: output, shape index: {}]
  $region1: #{tile.29} parent=0
    #allocation0 [shape = 'u8[4096]{0}', space=vmem, size = 0x1000, scoped, tag = 'scoped mem for output reshape']
    %v2 = vld [vmem:[%s0] sm:$0x1]
    %vm3 = vcmask 23552
    %4 = vst.msk [vmem:[#allocation0] sm:$0x1] %vm3, %v2
    %s5 = scalar_lea.vmem %s0, 8
    %v6 = vld [vmem:[%s5] sm:$0x1]
    %7 = vrot.lane.b32.xlu0 %v6, 24
    %v8 = vpop.permute.xlu0 %7
    %vm9 = vcmask 220352
    %10 = vst.msk [vmem:[#allocation0] sm:$0x1] %vm9, %v8
    %s11 = scalar_lea.vmem %s0, 7
    %v12 = vld [vmem:[%s11] sm:$0x1]
    %13 = vrot.lane.b32.xlu0 %v12, 21
    %v14 = vpop.permute.xlu0 %13
    %vm15 = vcmask 195752
    %16 = vst.msk [vmem:[#allocation0] sm:$0x1] %vm15, %v14
    %s17 = scalar_lea.vmem %s0, 6
    %v18 = vld [vmem:[%s17] sm:$0x1]
    %19 = vrot.lane.b32.xlu0 %v18, 18
    %v20 = vpop.permute.xlu0 %19
    %vm21 = vcmask 171152
    %22 = vst.msk [vmem:[#allocation0] sm:$0x1] %vm21, %v20
    %s23 = scalar_lea.vmem %s0, 5
    %v24 = vld [vmem:[%s23] sm:$0x1]
    %25 = vrot.lane.b32.xlu0 %v24, 15
    %v26 = vpop.permute.xlu0 %25
    %vm27 = vcmask 146552
    %28 = vst.msk [vmem:[#allocation0] sm:$0x1] %vm27, %v26
    %s29 = scalar_lea.vmem %s0, 4
    %v30 = vld [vmem:[%s29] sm:$0x1]
    %31 = vrot.lane.b32.xlu0 %v30, 12
    %v32 = vpop.permute.xlu0 %31
    %vm33 = vcmask 121952
    %34 = vst.msk [vmem:[#allocation0] sm:$0x1] %vm33, %v32
    %s35 = scalar_lea.vmem %s0, 3
    %v36 = vld [vmem:[%s35] sm:$0x1]
    %37 = vrot.lane.b32.xlu0 %v36, 9
    %v38 = vpop.permute.xlu0 %37
    %vm39 = vcmask 97352
    %40 = vst.msk [vmem:[#allocation0] sm:$0x1] %vm39, %v38
    %s41 = scalar_lea.vmem %s0, 2
    %v42 = vld [vmem:[%s41] sm:$0x1]
    %43 = vrot.lane.b32.xlu0 %v42, 6
    %v44 = vpop.permute.xlu0 %43
    %vm45 = vcmask 72752
    %46 = vst.msk [vmem:[#allocation0] sm:$0x1] %vm45, %v44
    %s47 = scalar_lea.vmem %s0, 1
    %v48 = vld [vmem:[%s47] sm:$0x1]
    %49 = vrot.lane.b32.xlu0 %v48, 3
    %v50 = vpop.permute.xlu0 %49
    %vm51 = vcmask 48152
    %52 = vst.msk [vmem:[#allocation0] sm:$0x1] %vm51, %v50
    %s54 = sshllo.u32 0, 1
    %v56 = vld [vmem:[#allocation0] sm:%s54]
    %s57 = sshllo.u32 0, 1
    %58 = vst [vmem:[%s1] sm:%s57] %v56

// kernel: covnet_forward.1
$region0: #{covnet_forward.1}
  #allocation0 [shape = 'u32[]', space=smem, size = 0x4, offset = 0x4, fixed_abs, tag = 'smem constant byte address 0x4 - core index']
  #allocation1 [shape = 'u32[144,128]{1,0:T(1,128)}', space=vmem, size = 0x12000, scoped, tag = 'internal scratch']
  %s0 = inlined_call_operand.vmem [shape: f32[640,120], index: 0, kind: input, shape index: {}]
  %s1 = inlined_call_operand.vmem [shape: f32[2,120,256], index: 1, kind: input, shape index: {}]
  %s2 = inlined_call_operand.vmem [shape: f32[1,256], index: 2, kind: input, shape index: {}]
  %s3 = inlined_call_operand.vmem [shape: f32[2,256,216], index: 3, kind: input, shape index: {}]
  %s4 = inlined_call_operand.vmem [shape: f32[1,216], index: 4, kind: input, shape index: {}]
  %s5 = inlined_call_operand.vmem [shape: f32[216,27], index: 5, kind: input, shape index: {}]
  %s6 = inlined_call_operand.vmem [shape: f32[1,27], index: 6, kind: input, shape index: {}]
  %s7 = inlined_call_operand.vmem [shape: f32[9,27,120], index: 7, kind: input, shape index: {}]
  %s8 = inlined_call_operand.vmem [shape: f32[1,120], index: 8, kind: input, shape index: {}]
  %s9 = inlined_call_operand.vmem [shape: f32[120,3], index: 9, kind: input, shape index: {}]
  %s10 = inlined_call_operand.vmem [shape: f32[1,3], index: 10, kind: input, shape index: {}]
  %s11 = inlined_call_operand.vmem [shape: f32[16,3], index: 11, kind: output, shape index: {}]
  %s12 = sld [smem:[#allocation0]]
  $region77: #{covnet_forward.1} parent=0
    _
  %s14 = ssub.s32 1, %s12
  %s15 = scalar_select 0, %s14, %s12
  loop: start=0, step=1, limit=4
  $region2: #{covnet_forward.1} parent=0 // loop_pre_header
    _
  $region3: #{covnet_forward.1} parent=0 // loop_header
    %s17 = sphi 0, %s21
    %p18 = scmp.ge.s32.totalorder %s17, 4
    %s27 = sphi 0, %s29
    %s30 = sphi 0, %s27
    %s31 = sphi 0, %s30
    %s47 = sphi 0, %s31
    %s51 = sphi 0, %s51
    %s53 = sphi 0, %s51
    %s54 = sphi 0, %s53
    %s68 = sphi 0, %s54
    %s72 = sphi 0, %s72
    %s74 = sphi 0, %s72
    %s75 = sphi 0, %s74
    %s89 = sphi 0, %s75
    %s93 = sphi 0, %s93
    %s95 = sphi 0, %s93
    %s96 = sphi 0, %s95
    %s110 = sphi 0, %s96
    %s114 = sphi 0, %s114
    %s116 = sphi 0, %s114
    %s117 = sphi 0, %s116
    %s131 = sphi 0, %s117
    %s135 = sphi 0, %s135
    %s137 = sphi 0, %s135
    %s138 = sphi 0, %s137
    %s152 = sphi 0, %s138
    %s156 = sphi 0, %s156
    %s158 = sphi 0, %s156
    %s159 = sphi 0, %s158
    %s173 = sphi 0, %s159
    %s177 = sphi 0, %s177
    %s179 = sphi 0, %s177
    %s180 = sphi 0, %s179
    %s194 = sphi 0, %s180
    %s198 = sphi 0, %s198
    %s200 = sphi 0, %s198
    %s201 = sphi 0, %s200
    %s215 = sphi 0, %s201
    %s219 = sphi 0, %s219
    %s221 = sphi 0, %s219
    %s222 = sphi 0, %s221
    %s236 = sphi 0, %s222
    %s240 = sphi 0, %s240
    %s242 = sphi 0, %s240
    %s243 = sphi 0, %s242
    %s257 = sphi 0, %s243
    %s263 = sphi 0, %s265
    %s266 = sphi 0, %s263
    %s267 = sphi 0, %s266
    %s283 = sphi 0, %s267
  $region4: #{covnet_forward.1} parent=0 // loop_header_branch
    %20 = sbr.rel (%p18) target = $region8
  $region5: #{covnet_forward.1} parent=0 // loop_body
    %s22 = ssub.s32 %s17, 1
    %s23 = ssub.s32 %s17, 2
    %s24 = sadd.s32 %s17, 1
    %s25 = ssub.s32 %s17, %s24
    %p26 = scmp.eq.s32.totalorder %s25, 0
    %s28 = sadd.s32 %s27, 1
    %s29 = scalar_select %p26, %s27, %s28
    %p32 = pneg %p26
    %p33 = scmp.eq.s32.totalorder %s17, 1
    %p34 = por %p32, %p33
    %p35 = scmp.ne.s32.totalorder %s27, %s30
    %p36 = scmp.eq.s32.totalorder %s17, 0
    %p37 = por %p35, %p36
    %p38 = scmp.ne.s32.totalorder %s27, %s30
    %p39 = scmp.eq.s32.totalorder %s22, 1
    %p40 = por %p38, %p39
    %p41 = scmp.ne.s32.totalorder %s30, %s31
    %p42 = scmp.eq.s32.totalorder %s22, 0
    %p43 = por %p41, %p42
    %p44 = scmp.ne.s32.totalorder %s30, %s31
    %p45 = scmp.eq.s32.totalorder %s23, 1
    %p46 = por %p44, %p45
    %p48 = scmp.ne.s32.totalorder %s31, %s47
    %p49 = scmp.eq.s32.totalorder %s23, 0
    %p50 = por %p48, %p49
    %s52 = sadd.s32 %s51, 1
    %p55 = scmp.eq.s32.totalorder %s17, 1
    %p56 = scmp.ne.s32.totalorder %s51, %s53
    %p57 = scmp.eq.s32.totalorder %s17, 0
    %p58 = por %p56, %p57
    %p59 = scmp.ne.s32.totalorder %s51, %s53
    %p60 = scmp.eq.s32.totalorder %s22, 1
    %p61 = por %p59, %p60
    %p62 = scmp.ne.s32.totalorder %s53, %s54
    %p63 = scmp.eq.s32.totalorder %s22, 0
    %p64 = por %p62, %p63
    %p65 = scmp.ne.s32.totalorder %s53, %s54
    %p66 = scmp.eq.s32.totalorder %s23, 1
    %p67 = por %p65, %p66
    %p69 = scmp.ne.s32.totalorder %s54, %s68
    %p70 = scmp.eq.s32.totalorder %s23, 0
    %p71 = por %p69, %p70
    %s73 = sadd.s32 %s72, 1
    %p76 = scmp.eq.s32.totalorder %s17, 1
    %p77 = scmp.ne.s32.totalorder %s72, %s74
    %p78 = scmp.eq.s32.totalorder %s17, 0
    %p79 = por %p77, %p78
    %p80 = scmp.ne.s32.totalorder %s72, %s74
    %p81 = scmp.eq.s32.totalorder %s22, 1
    %p82 = por %p80, %p81
    %p83 = scmp.ne.s32.totalorder %s74, %s75
    %p84 = scmp.eq.s32.totalorder %s22, 0
    %p85 = por %p83, %p84
    %p86 = scmp.ne.s32.totalorder %s74, %s75
    %p87 = scmp.eq.s32.totalorder %s23, 1
    %p88 = por %p86, %p87
    %p90 = scmp.ne.s32.totalorder %s75, %s89
    %p91 = scmp.eq.s32.totalorder %s23, 0
    %p92 = por %p90, %p91
    %s94 = sadd.s32 %s93, 1
    %p97 = scmp.eq.s32.totalorder %s17, 1
    %p98 = scmp.ne.s32.totalorder %s93, %s95
    %p99 = scmp.eq.s32.totalorder %s17, 0
    %p100 = por %p98, %p99
    %p101 = scmp.ne.s32.totalorder %s93, %s95
    %p102 = scmp.eq.s32.totalorder %s22, 1
    %p103 = por %p101, %p102
    %p104 = scmp.ne.s32.totalorder %s95, %s96
    %p105 = scmp.eq.s32.totalorder %s22, 0
    %p106 = por %p104, %p105
    %p107 = scmp.ne.s32.totalorder %s95, %s96
    %p108 = scmp.eq.s32.totalorder %s23, 1
    %p109 = por %p107, %p108
    %p111 = scmp.ne.s32.totalorder %s96, %s110
    %p112 = scmp.eq.s32.totalorder %s23, 0
    %p113 = por %p111, %p112
    %s115 = sadd.s32 %s114, 1
    %p118 = scmp.eq.s32.totalorder %s17, 1
    %p119 = scmp.ne.s32.totalorder %s114, %s116
    %p120 = scmp.eq.s32.totalorder %s17, 0
    %p121 = por %p119, %p120
    %p122 = scmp.ne.s32.totalorder %s114, %s116
    %p123 = scmp.eq.s32.totalorder %s22, 1
    %p124 = por %p122, %p123
    %p125 = scmp.ne.s32.totalorder %s116, %s117
    %p126 = scmp.eq.s32.totalorder %s22, 0
    %p127 = por %p125, %p126
    %p128 = scmp.ne.s32.totalorder %s116, %s117
    %p129 = scmp.eq.s32.totalorder %s23, 1
    %p130 = por %p128, %p129
    %p132 = scmp.ne.s32.totalorder %s117, %s131
    %p133 = scmp.eq.s32.totalorder %s23, 0
    %p134 = por %p132, %p133
    %s136 = sadd.s32 %s135, 1
    %p139 = scmp.eq.s32.totalorder %s17, 1
    %p140 = scmp.ne.s32.totalorder %s135, %s137
    %p141 = scmp.eq.s32.totalorder %s17, 0
    %p142 = por %p140, %p141
    %p143 = scmp.ne.s32.totalorder %s135, %s137
    %p144 = scmp.eq.s32.totalorder %s22, 1
    %p145 = por %p143, %p144
    %p146 = scmp.ne.s32.totalorder %s137, %s138
    %p147 = scmp.eq.s32.totalorder %s22, 0
    %p148 = por %p146, %p147
    %p149 = scmp.ne.s32.totalorder %s137, %s138
    %p150 = scmp.eq.s32.totalorder %s23, 1
    %p151 = por %p149, %p150
    %p153 = scmp.ne.s32.totalorder %s138, %s152
    %p154 = scmp.eq.s32.totalorder %s23, 0
    %p155 = por %p153, %p154
    %s157 = sadd.s32 %s156, 1
    %p160 = scmp.eq.s32.totalorder %s17, 1
    %p161 = scmp.ne.s32.totalorder %s156, %s158
    %p162 = scmp.eq.s32.totalorder %s17, 0
    %p163 = por %p161, %p162
    %p164 = scmp.ne.s32.totalorder %s156, %s158
    %p165 = scmp.eq.s32.totalorder %s22, 1
    %p166 = por %p164, %p165
    %p167 = scmp.ne.s32.totalorder %s158, %s159
    %p168 = scmp.eq.s32.totalorder %s22, 0
    %p169 = por %p167, %p168
    %p170 = scmp.ne.s32.totalorder %s158, %s159
    %p171 = scmp.eq.s32.totalorder %s23, 1
    %p172 = por %p170, %p171
    %p174 = scmp.ne.s32.totalorder %s159, %s173
    %p175 = scmp.eq.s32.totalorder %s23, 0
    %p176 = por %p174, %p175
    %s178 = sadd.s32 %s177, 1
    %p181 = scmp.eq.s32.totalorder %s17, 1
    %p182 = scmp.ne.s32.totalorder %s177, %s179
    %p183 = scmp.eq.s32.totalorder %s17, 0
    %p184 = por %p182, %p183
    %p185 = scmp.ne.s32.totalorder %s177, %s179
    %p186 = scmp.eq.s32.totalorder %s22, 1
    %p187 = por %p185, %p186
    %p188 = scmp.ne.s32.totalorder %s179, %s180
    %p189 = scmp.eq.s32.totalorder %s22, 0
    %p190 = por %p188, %p189
    %p191 = scmp.ne.s32.totalorder %s179, %s180
    %p192 = scmp.eq.s32.totalorder %s23, 1
    %p193 = por %p191, %p192
    %p195 = scmp.ne.s32.totalorder %s180, %s194
    %p196 = scmp.eq.s32.totalorder %s23, 0
    %p197 = por %p195, %p196
    %s199 = sadd.s32 %s198, 1
    %p202 = scmp.eq.s32.totalorder %s17, 1
    %p203 = scmp.ne.s32.totalorder %s198, %s200
    %p204 = scmp.eq.s32.totalorder %s17, 0
    %p205 = por %p203, %p204
    %p206 = scmp.ne.s32.totalorder %s198, %s200
    %p207 = scmp.eq.s32.totalorder %s22, 1
    %p208 = por %p206, %p207
    %p209 = scmp.ne.s32.totalorder %s200, %s201
    %p210 = scmp.eq.s32.totalorder %s22, 0
    %p211 = por %p209, %p210
    %p212 = scmp.ne.s32.totalorder %s200, %s201
    %p213 = scmp.eq.s32.totalorder %s23, 1
    %p214 = por %p212, %p213
    %p216 = scmp.ne.s32.totalorder %s201, %s215
    %p217 = scmp.eq.s32.totalorder %s23, 0
    %p218 = por %p216, %p217
    %s220 = sadd.s32 %s219, 1
    %p223 = scmp.eq.s32.totalorder %s17, 1
    %p224 = scmp.ne.s32.totalorder %s219, %s221
    %p225 = scmp.eq.s32.totalorder %s17, 0
    %p226 = por %p224, %p225
    %p227 = scmp.ne.s32.totalorder %s219, %s221
    %p228 = scmp.eq.s32.totalorder %s22, 1
    %p229 = por %p227, %p228
    %p230 = scmp.ne.s32.totalorder %s221, %s222
    %p231 = scmp.eq.s32.totalorder %s22, 0
    %p232 = por %p230, %p231
    %p233 = scmp.ne.s32.totalorder %s221, %s222
    %p234 = scmp.eq.s32.totalorder %s23, 1
    %p235 = por %p233, %p234
    %p237 = scmp.ne.s32.totalorder %s222, %s236
    %p238 = scmp.eq.s32.totalorder %s23, 0
    %p239 = por %p237, %p238
    %s241 = sadd.s32 %s240, 1
    %p244 = scmp.eq.s32.totalorder %s17, 1
    %p245 = scmp.ne.s32.totalorder %s240, %s242
    %p246 = scmp.eq.s32.totalorder %s17, 0
    %p247 = por %p245, %p246
    %p248 = scmp.ne.s32.totalorder %s240, %s242
    %p249 = scmp.eq.s32.totalorder %s22, 1
    %p250 = por %p248, %p249
    %p251 = scmp.ne.s32.totalorder %s242, %s243
    %p252 = scmp.eq.s32.totalorder %s22, 0
    %p253 = por %p251, %p252
    %p254 = scmp.ne.s32.totalorder %s242, %s243
    %p255 = scmp.eq.s32.totalorder %s23, 1
    %p256 = por %p254, %p255
    %p258 = scmp.ne.s32.totalorder %s243, %s257
    %p259 = scmp.eq.s32.totalorder %s23, 0
    %p260 = por %p258, %p259
    %s261 = ssub.s32 %s17, %s24
    %p262 = scmp.eq.s32.totalorder %s261, 0
    %s264 = sadd.s32 %s263, 1
    %s265 = scalar_select %p262, %s263, %s264
    %p268 = pneg %p262
    %p269 = scmp.eq.s32.totalorder %s17, 1
    %p270 = por %p268, %p269
    %p271 = scmp.ne.s32.totalorder %s263, %s266
    %p272 = scmp.eq.s32.totalorder %s17, 0
    %p273 = por %p271, %p272
    %p274 = scmp.ne.s32.totalorder %s263, %s266
    %p275 = scmp.eq.s32.totalorder %s22, 1
    %p276 = por %p274, %p275
    %p277 = scmp.ne.s32.totalorder %s266, %s267
    %p278 = scmp.eq.s32.totalorder %s22, 0
    %p279 = por %p277, %p278
    %p280 = scmp.ne.s32.totalorder %s266, %s267
    %p281 = scmp.eq.s32.totalorder %s23, 1
    %p282 = por %p280, %p281
    %p284 = scmp.ne.s32.totalorder %s267, %s283
    %p285 = scmp.eq.s32.totalorder %s23, 0
    %p286 = por %p284, %p285
    %p287 = scmp.le.s32.totalorder 1, %s17
    %p288 = scmp.lt.s32.totalorder %s17, 3
    %p289 = pnand %p287, %p288
    %p290 = pneg %p289
    // Predicated region
    $region9: #{covnet_forward.1} parent=5 // pred_check
      _
    $region10: #{covnet_forward.1} parent=5 // pred_check_branch
      %292 = sbr.rel (%p289) target = $region12
    $region11: #{covnet_forward.1} parent=5 // pred_region
      %s293 = ssub.s32 %s17, 1
      // Predicated region
      $region13: #{covnet_forward.1} parent=11 // pred_check
        %p294 = pneg %p64
      $region14: #{covnet_forward.1} parent=11 // pred_check_branch
        %296 = sbr.rel (%p294) target = $region16
      $region15: #{covnet_forward.1} parent=11 // pred_region
        _
      $region16: #{covnet_forward.1} parent=11 // pred_fallthru
        _
      // Predicated region
      $region17: #{covnet_forward.1} parent=11 // pred_check
        %p297 = pneg %p85
      $region18: #{covnet_forward.1} parent=11 // pred_check_branch
        %299 = sbr.rel (%p297) target = $region20
      $region19: #{covnet_forward.1} parent=11 // pred_region
        _
      $region20: #{covnet_forward.1} parent=11 // pred_fallthru
        _
      // Predicated region
      $region21: #{covnet_forward.1} parent=11 // pred_check
        %p300 = pneg %p106
      $region22: #{covnet_forward.1} parent=11 // pred_check_branch
        %302 = sbr.rel (%p300) target = $region24
      $region23: #{covnet_forward.1} parent=11 // pred_region
        _
      $region24: #{covnet_forward.1} parent=11 // pred_fallthru
        _
      // Predicated region
      $region25: #{covnet_forward.1} parent=11 // pred_check
        %p303 = pneg %p127
      $region26: #{covnet_forward.1} parent=11 // pred_check_branch
        %305 = sbr.rel (%p303) target = $region28
      $region27: #{covnet_forward.1} parent=11 // pred_region
        _
      $region28: #{covnet_forward.1} parent=11 // pred_fallthru
        _
      // Predicated region
      $region29: #{covnet_forward.1} parent=11 // pred_check
        %p306 = pneg %p148
      $region30: #{covnet_forward.1} parent=11 // pred_check_branch
        %308 = sbr.rel (%p306) target = $region32
      $region31: #{covnet_forward.1} parent=11 // pred_region
        _
      $region32: #{covnet_forward.1} parent=11 // pred_fallthru
        _
      // Predicated region
      $region33: #{covnet_forward.1} parent=11 // pred_check
        %p309 = pneg %p169
      $region34: #{covnet_forward.1} parent=11 // pred_check_branch
        %311 = sbr.rel (%p309) target = $region36
      $region35: #{covnet_forward.1} parent=11 // pred_region
        _
      $region36: #{covnet_forward.1} parent=11 // pred_fallthru
        _
      // Predicated region
      $region37: #{covnet_forward.1} parent=11 // pred_check
        %p312 = pneg %p190
      $region38: #{covnet_forward.1} parent=11 // pred_check_branch
        %314 = sbr.rel (%p312) target = $region40
      $region39: #{covnet_forward.1} parent=11 // pred_region
        _
      $region40: #{covnet_forward.1} parent=11 // pred_fallthru
        _
      // Predicated region
      $region41: #{covnet_forward.1} parent=11 // pred_check
        %p315 = pneg %p211
      $region42: #{covnet_forward.1} parent=11 // pred_check_branch
        %317 = sbr.rel (%p315) target = $region44
      $region43: #{covnet_forward.1} parent=11 // pred_region
        _
      $region44: #{covnet_forward.1} parent=11 // pred_fallthru
        _
      // Predicated region
      $region45: #{covnet_forward.1} parent=11 // pred_check
        %p318 = pneg %p232
      $region46: #{covnet_forward.1} parent=11 // pred_check_branch
        %320 = sbr.rel (%p318) target = $region48
      $region47: #{covnet_forward.1} parent=11 // pred_region
        _
      $region48: #{covnet_forward.1} parent=11 // pred_fallthru
        _
      // Predicated region
      $region49: #{covnet_forward.1} parent=11 // pred_check
        %p321 = pneg %p253
      $region50: #{covnet_forward.1} parent=11 // pred_check_branch
        %323 = sbr.rel (%p321) target = $region52
      $region51: #{covnet_forward.1} parent=11 // pred_region
        _
      $region52: #{covnet_forward.1} parent=11 // pred_fallthru
        _
    $region12: #{covnet_forward.1} parent=5 // pred_fallthru
      _
    %p324 = scmp.lt.s32.totalorder %s17, 2
    // Predicated region
    $region53: #{covnet_forward.1} parent=5 // pred_check
      %p325 = pneg %p324
    $region54: #{covnet_forward.1} parent=5 // pred_check_branch
      %327 = sbr.rel (%p325) target = $region56
    $region55: #{covnet_forward.1} parent=5 // pred_region
      // Predicated region
      $region57: #{covnet_forward.1} parent=55 // pred_check
        %p328 = pneg %p37
      $region58: #{covnet_forward.1} parent=55 // pred_check_branch
        %330 = sbr.rel (%p328) target = $region60
      $region59: #{covnet_forward.1} parent=55 // pred_region
        %s331 = smul.u32 40, %s17
        %p332 = scmp.lt.s32.totalorder %s331, 79
        %s333 = scalar_select %p332, %s331, 79
        %s334 = smul.addr %s333, 8
        %s335 = scalar_lea.vmem %s0, %s334
        %s336 = smul.u32 40, %s17
      $region60: #{covnet_forward.1} parent=55 // pred_fallthru
        _
    $region56: #{covnet_forward.1} parent=5 // pred_fallthru
      _
    %p337 = scmp.le.s32.totalorder 1, %s17
    %p338 = scmp.lt.s32.totalorder %s17, 3
    %p339 = pnand %p337, %p338
    %p340 = pneg %p339
    // Predicated region
    $region61: #{covnet_forward.1} parent=5 // pred_check
      _
    $region62: #{covnet_forward.1} parent=5 // pred_check_branch
      %342 = sbr.rel (%p339) target = $region64
    $region63: #{covnet_forward.1} parent=5 // pred_region
      %s343 = ssub.s32 %s17, 1
      %s344 = smul.u32 40, %s22
      %p345 = scmp.lt.s32.totalorder %s344, 79
      %s346 = scalar_select %p345, %s344, 79
      %s347 = smul.addr %s346, 8
      %s348 = scalar_lea.vmem %s0, %s347
      %p349 = pneg %p43
      %p350 = pneg %p40
      %p351 = pneg %p64
      %p352 = pneg %p61
      %p353 = pneg %p85
      %p354 = pneg %p82
      %p355 = pneg %p106
      %p356 = pneg %p103
      %p357 = pneg %p127
      %p358 = pneg %p124
      %p359 = pneg %p148
      %p360 = pneg %p145
      %p361 = pneg %p169
      %p362 = pneg %p166
      %p363 = pneg %p190
      %p364 = pneg %p187
      %p365 = pneg %p211
      %p366 = pneg %p208
      %p367 = pneg %p232
      %p368 = pneg %p229
      %p369 = pneg %p253
      %p370 = pneg %p250
      %p371 = pneg %p279
      %p372 = pneg %p276
      %p373 = scmp.lt.s32.totalorder %s22, 1
      %s374 = scalar_select %p373, %s22, 1
      %s375 = smul.addr %s374, 8
      %s376 = scalar_lea.vmem %s11, %s375
      %s377 = smul.u32 40, %s22
      %p378 = scmp.lt.s32.totalorder %s377, 79
      %s379 = scalar_select %p378, %s377, 79
      %s380 = smul.addr %s379, 8
      %s381 = scalar_lea.vmem %s0, %s380
      %s382 = smul.u32 40, %s22
      %p383 = scmp.lt.s32.totalorder %s22, 1
      %s384 = scalar_select %p383, %s22, 1
      %s385 = smul.addr %s384, 8
      %s386 = scalar_lea.vmem %s11, %s385
      %v387 = vld [vmem:[%s381] sm:$0xff]
      %v388 = vld [vmem:[%s381 + $0x8] sm:$0xff]
      %v389 = vld [vmem:[%s381 + $0x10] sm:$0xff]
      %v390 = vld [vmem:[%s381 + $0x18] sm:$0xff]
      %v391 = vld [vmem:[%s381 + $0x20] sm:$0xff]
      %v392 = vld [vmem:[%s381 + $0x28] sm:$0xff]
      %v393 = vld [vmem:[%s381 + $0x30] sm:$0xff]
      %v394 = vld [vmem:[%s381 + $0x38] sm:$0xff]
      %v395 = vld [vmem:[%s381 + $0x40] sm:$0xff]
      %v396 = vld [vmem:[%s381 + $0x48] sm:$0xff]
      %v397 = vld [vmem:[%s381 + $0x50] sm:$0xff]
      %v398 = vld [vmem:[%s381 + $0x58] sm:$0xff]
      %v399 = vld [vmem:[%s381 + $0x60] sm:$0xff]
      %v400 = vld [vmem:[%s381 + $0x68] sm:$0xff]
      %v401 = vld [vmem:[%s381 + $0x70] sm:$0xff]
      %v402 = vld [vmem:[%s381 + $0x78] sm:$0xff]
      %v403 = vld [vmem:[%s381 + $0x80] sm:$0xff]
      %v404 = vld [vmem:[%s381 + $0x88] sm:$0xff]
      %v405 = vld [vmem:[%s381 + $0x90] sm:$0xff]
      %v406 = vld [vmem:[%s381 + $0x98] sm:$0xff]
      %v407 = vld [vmem:[%s381 + $0xa0] sm:$0xff]
      %v408 = vld [vmem:[%s381 + $0xa8] sm:$0xff]
      %v409 = vld [vmem:[%s381 + $0xb0] sm:$0xff]
      %v410 = vld [vmem:[%s381 + $0xb8] sm:$0xff]
      %v411 = vld [vmem:[%s381 + $0xc0] sm:$0xff]
      %v412 = vld [vmem:[%s381 + $0xc8] sm:$0xff]
      %v413 = vld [vmem:[%s381 + $0xd0] sm:$0xff]
      %v414 = vld [vmem:[%s381 + $0xd8] sm:$0xff]
      %v415 = vld [vmem:[%s381 + $0xe0] sm:$0xff]
      %v416 = vld [vmem:[%s381 + $0xe8] sm:$0xff]
      %v417 = vld [vmem:[%s381 + $0xf0] sm:$0xff]
      %v418 = vld [vmem:[%s381 + $0xf8] sm:$0xff]
      %v419 = vld [vmem:[%s381 + $0x100] sm:$0xff]
      %v420 = vld [vmem:[%s381 + $0x108] sm:$0xff]
      %v421 = vld [vmem:[%s381 + $0x110] sm:$0xff]
      %v422 = vld [vmem:[%s381 + $0x118] sm:$0xff]
      %v423 = vld [vmem:[%s381 + $0x120] sm:$0xff]
      %v424 = vld [vmem:[%s381 + $0x128] sm:$0xff]
      %v425 = vld [vmem:[%s381 + $0x130] sm:$0xff]
      %v426 = vld [vmem:[%s381 + $0x138] sm:$0xff]
      %v427 = vld [vmem:[%s1] sm:$0xff]
      %v428 = vld [vmem:[%s1 + $0x8] sm:$0xff]
      %v429 = vld [vmem:[%s1 + $0x10] sm:$0xff]
      %v430 = vld [vmem:[%s1 + $0x18] sm:$0xff]
      %v431 = vld [vmem:[%s1 + $0x20] sm:$0xff]
      %v432 = vld [vmem:[%s1 + $0x28] sm:$0xff]
      %v433 = vld [vmem:[%s1 + $0x30] sm:$0xff]
      %v434 = vld [vmem:[%s1 + $0x38] sm:$0xff]
      %v435 = vld [vmem:[%s1 + $0x40] sm:$0xff]
      %v436 = vld [vmem:[%s1 + $0x48] sm:$0xff]
      %v437 = vld [vmem:[%s1 + $0x50] sm:$0xff]
      %v438 = vld [vmem:[%s1 + $0x58] sm:$0xff]
      %v439 = vld [vmem:[%s1 + $0x60] sm:$0xff]
      %v440 = vld [vmem:[%s1 + $0x68] sm:$0xff]
      %v441 = vld [vmem:[%s1 + $0x70] sm:$0xff]
      %v442 = vld [vmem:[%s1 + $0x78] sm:$0xff]
      %v443 = vld [vmem:[%s1 + $0x80] sm:$0xff]
      %v444 = vld [vmem:[%s1 + $0x88] sm:$0xff]
      %v445 = vld [vmem:[%s1 + $0x90] sm:$0xff]
      %v446 = vld [vmem:[%s1 + $0x98] sm:$0xff]
      %v447 = vld [vmem:[%s1 + $0xa0] sm:$0xff]
      %v448 = vld [vmem:[%s1 + $0xa8] sm:$0xff]
      %v449 = vld [vmem:[%s1 + $0xb0] sm:$0xff]
      %v450 = vld [vmem:[%s1 + $0xb8] sm:$0xff]
      %v451 = vld [vmem:[%s1 + $0xc0] sm:$0xff]
      %v452 = vld [vmem:[%s1 + $0xc8] sm:$0xff]
      %v453 = vld [vmem:[%s1 + $0xd0] sm:$0xff]
      %v454 = vld [vmem:[%s1 + $0xd8] sm:$0xff]
      %v455 = vld [vmem:[%s1 + $0xe0] sm:$0xff]
      %v456 = vld [vmem:[%s1 + $0xe8] sm:$0xff]
      %v457 = vrot.slane %v387, 1
      %v458 = vrot.slane %v388, 1
      %v459 = vrot.slane %v389, 1
      %v460 = vrot.slane %v390, 1
      %v461 = vrot.slane %v391, 1
      %v462 = vrot.slane %v392, 1
      %v463 = vrot.slane %v393, 1
      %v464 = vrot.slane %v394, 1
      %v465 = vrot.slane %v395, 1
      %v466 = vrot.slane %v396, 1
      %v467 = vrot.slane %v397, 1
      %v468 = vrot.slane %v398, 1
      %v469 = vrot.slane %v399, 1
      %v470 = vrot.slane %v400, 1
      %v471 = vrot.slane %v401, 1
      %v472 = vrot.slane %v402, 1
      %v473 = vrot.slane %v403, 1
      %v474 = vrot.slane %v404, 1
      %v475 = vrot.slane %v405, 1
      %v476 = vrot.slane %v406, 1
      %v477 = vrot.slane %v407, 1
      %v478 = vrot.slane %v408, 1
      %v479 = vrot.slane %v409, 1
      %v480 = vrot.slane %v410, 1
      %v481 = vrot.slane %v411, 1
      %v482 = vrot.slane %v412, 1
      %v483 = vrot.slane %v413, 1
      %v484 = vrot.slane %v414, 1
      %v485 = vrot.slane %v415, 1
      %v486 = vrot.slane %v416, 1
      %v487 = vrot.slane %v417, 1
      %v488 = vrot.slane %v418, 1
      %v489 = vrot.slane %v419, 1
      %v490 = vrot.slane %v420, 1
      %v491 = vrot.slane %v421, 1
      %v492 = vrot.slane %v422, 1
      %v493 = vrot.slane %v423, 1
      %v494 = vrot.slane %v424, 1
      %v495 = vrot.slane %v425, 1
      %v496 = vrot.slane %v426, 1
      %v497 = vlaneseq
      %v498 = vshrl.u32 %v497, 7
      %vm499 = vcmp.lt.s32.totalorder %v498, 7
      %v500 = vsel %vm499, %v495, %v496
      %v501 = vsel %vm499, %v494, %v495
      %v502 = vsel %vm499, %v493, %v494
      %v503 = vsel %vm499, %v492, %v493
      %v504 = vsel %vm499, %v491, %v492
      %v505 = vsel %vm499, %v490, %v491
      %v506 = vsel %vm499, %v489, %v490
      %v507 = vsel %vm499, %v488, %v489
      %v508 = vsel %vm499, %v487, %v488
      %v509 = vsel %vm499, %v486, %v487
      %v510 = vsel %vm499, %v485, %v486
      %v511 = vsel %vm499, %v484, %v485
      %v512 = vsel %vm499, %v483, %v484
      %v513 = vsel %vm499, %v482, %v483
      %v514 = vsel %vm499, %v481, %v482
      %v515 = vsel %vm499, %v480, %v481
      %v516 = vsel %vm499, %v479, %v480
      %v517 = vsel %vm499, %v478, %v479
      %v518 = vsel %vm499, %v477, %v478
      %v519 = vsel %vm499, %v476, %v477
      %v520 = vsel %vm499, %v475, %v476
      %v521 = vsel %vm499, %v474, %v475
      %v522 = vsel %vm499, %v473, %v474
      %v523 = vsel %vm499, %v472, %v473
      %v524 = vsel %vm499, %v471, %v472
      %v525 = vsel %vm499, %v470, %v471
      %v526 = vsel %vm499, %v469, %v470
      %v527 = vsel %vm499, %v468, %v469
      %v528 = vsel %vm499, %v467, %v468
      %v529 = vsel %vm499, %v466, %v467
      %v530 = vsel %vm499, %v465, %v466
      %v531 = vsel %vm499, %v464, %v465
      %v532 = vsel %vm499, %v463, %v464
      %v533 = vsel %vm499, %v462, %v463
      %v534 = vsel %vm499, %v461, %v462
      %v535 = vsel %vm499, %v460, %v461
      %v536 = vsel %vm499, %v459, %v460
      %v537 = vsel %vm499, %v458, %v459
      %v538 = vsel %vm499, %v457, %v458
      %v539 = vsel %vm499, %v496, %v457
      %s540 = scalar_lea.vmem %s1, 240
      %v541 = vld [vmem:[%s540] sm:$0xff]
      %v542 = vld [vmem:[%s540 + $0x8] sm:$0xff]
      %v543 = vld [vmem:[%s540 + $0x10] sm:$0xff]
      %v544 = vld [vmem:[%s540 + $0x18] sm:$0xff]
      %v545 = vld [vmem:[%s540 + $0x20] sm:$0xff]
      %v546 = vld [vmem:[%s540 + $0x28] sm:$0xff]
      %v547 = vld [vmem:[%s540 + $0x30] sm:$0xff]
      %v548 = vld [vmem:[%s540 + $0x38] sm:$0xff]
      %v549 = vld [vmem:[%s540 + $0x40] sm:$0xff]
      %v550 = vld [vmem:[%s540 + $0x48] sm:$0xff]
      %v551 = vld [vmem:[%s540 + $0x50] sm:$0xff]
      %v552 = vld [vmem:[%s540 + $0x58] sm:$0xff]
      %v553 = vld [vmem:[%s540 + $0x60] sm:$0xff]
      %v554 = vld [vmem:[%s540 + $0x68] sm:$0xff]
      %v555 = vld [vmem:[%s540 + $0x70] sm:$0xff]
      %v556 = vld [vmem:[%s540 + $0x78] sm:$0xff]
      %v557 = vld [vmem:[%s540 + $0x80] sm:$0xff]
      %v558 = vld [vmem:[%s540 + $0x88] sm:$0xff]
      %v559 = vld [vmem:[%s540 + $0x90] sm:$0xff]
      %v560 = vld [vmem:[%s540 + $0x98] sm:$0xff]
      %v561 = vld [vmem:[%s540 + $0xa0] sm:$0xff]
      %v562 = vld [vmem:[%s540 + $0xa8] sm:$0xff]
      %v563 = vld [vmem:[%s540 + $0xb0] sm:$0xff]
      %v564 = vld [vmem:[%s540 + $0xb8] sm:$0xff]
      %v565 = vld [vmem:[%s540 + $0xc0] sm:$0xff]
      %v566 = vld [vmem:[%s540 + $0xc8] sm:$0xff]
      %v567 = vld [vmem:[%s540 + $0xd0] sm:$0xff]
      %v568 = vld [vmem:[%s540 + $0xd8] sm:$0xff]
      %v569 = vld [vmem:[%s540 + $0xe0] sm:$0xff]
      %v570 = vld [vmem:[%s540 + $0xe8] sm:$0xff]
      %vm571 = vcmask 982016
      %v573 = vsel %vm571, %v538, 0
      %v576 = vsel %vm571, %v537, 0
      %v579 = vsel %vm571, %v536, 0
      %v582 = vsel %vm571, %v535, 0
      %v585 = vsel %vm571, %v534, 0
      %v588 = vsel %vm571, %v533, 0
      %v591 = vsel %vm571, %v532, 0
      %v594 = vsel %vm571, %v531, 0
      %v597 = vsel %vm571, %v530, 0
      %v600 = vsel %vm571, %v529, 0
      %v603 = vsel %vm571, %v528, 0
      %v606 = vsel %vm571, %v527, 0
      %v609 = vsel %vm571, %v526, 0
      %v612 = vsel %vm571, %v525, 0
      %v615 = vsel %vm571, %v524, 0
      %v618 = vsel %vm571, %v523, 0
      %v621 = vsel %vm571, %v522, 0
      %v624 = vsel %vm571, %v521, 0
      %v627 = vsel %vm571, %v520, 0
      %v630 = vsel %vm571, %v519, 0
      %v633 = vsel %vm571, %v518, 0
      %v636 = vsel %vm571, %v517, 0
      %v639 = vsel %vm571, %v516, 0
      %v642 = vsel %vm571, %v515, 0
      %v645 = vsel %vm571, %v514, 0
      %v648 = vsel %vm571, %v513, 0
      %v651 = vsel %vm571, %v512, 0
      %v654 = vsel %vm571, %v511, 0
      %v657 = vsel %vm571, %v510, 0
      %v660 = vsel %vm571, %v509, 0
      %v663 = vsel %vm571, %v508, 0
      %v666 = vsel %vm571, %v507, 0
      %v669 = vsel %vm571, %v506, 0
      %v672 = vsel %vm571, %v505, 0
      %v675 = vsel %vm571, %v504, 0
      %v678 = vsel %vm571, %v503, 0
      %v681 = vsel %vm571, %v502, 0
      %v684 = vsel %vm571, %v501, 0
      %v687 = vsel %vm571, %v500, 0
      %v690 = vsel %vm571, %v539, 0
      %692 = vmatprep.subr.mxu0 %v542
      %693 = vmatpush1.msra.mxu0 %v541
      %694 = vmatprep.subr.mxu0 %v544
      %695 = vmatpush1.msra.mxu0 %v543
      %696 = vmatprep.subr.mxu0 %v546
      %697 = vmatpush1.msra.mxu0 %v545
      %698 = vmatprep.subr.mxu0 %v548
      %699 = vmatpush1.msra.mxu0 %v547
      %700 = vmatprep.subr.mxu0 %v550
      %701 = vmatpush1.msra.mxu0 %v549
      %702 = vmatprep.subr.mxu0 %v552
      %703 = vmatpush1.msra.mxu0 %v551
      %704 = vmatprep.subr.mxu0 %v554
      %705 = vmatpush1.msra.mxu0 %v553
      %706 = vmatprep.subr.mxu0 %v556
      %707 = vmatpush1.msra.mxu0 %v555
      %708 = vmatprep.subr.mxu0 %v558
      %709 = vmatpush1.msra.mxu0 %v557
      %710 = vmatprep.subr.mxu0 %v560
      %711 = vmatpush1.msra.mxu0 %v559
      %712 = vmatprep.subr.mxu0 %v562
      %713 = vmatpush1.msra.mxu0 %v561
      %714 = vmatprep.subr.mxu0 %v564
      %715 = vmatpush1.msra.mxu0 %v563
      %716 = vmatprep.subr.mxu0 %v566
      %717 = vmatpush1.msra.mxu0 %v565
      %718 = vmatprep.subr.mxu0 %v568
      %719 = vmatpush1.msra.mxu0 %v567
      %720 = vmatprep.subr.mxu0 %v570
      %721 = vmatpush1.msra.mxu0 %v569
      %722 = vmatprep.subr.mxu0 0.0
      %723 = vmatpush1.msra.mxu0 0.0
      %724 = vmatprep.subr.mxu0 0.0
      %725 = vmatpush1.msra.mxu0 0.0
      %726 = vmatprep.subr.mxu0 0.0
      %727 = vmatpush1.msra.mxu0 0.0
      %728 = vmatprep.subr.mxu0 0.0
      %729 = vmatpush1.msra.mxu0 0.0
      %730 = vmatprep.subr.mxu0 0.0
      %731 = vmatpush1.msra.mxu0 0.0
      %732 = vmatprep.subr.mxu0 0.0
      %733 = vmatpush1.msra.mxu0 0.0
      %734 = vmatprep.subr.mxu0 0.0
      %735 = vmatpush1.msra.mxu0 0.0
      %736 = vmatprep.subr.mxu0 0.0
      %737 = vmatpush1.msra.mxu0 0.0
      %738 = vmatprep.subr.mxu0 0.0
      %739 = vmatpush1.msra.mxu0 0.0
      %740 = vmatprep.subr.mxu0 0.0
      %741 = vmatpush1.msra.mxu0 0.0
      %742 = vmatprep.subr.mxu0 0.0
      %743 = vmatpush1.msra.mxu0 0.0
      %744 = vmatprep.subr.mxu0 0.0
      %745 = vmatpush1.msra.mxu0 0.0
      %746 = vmatprep.subr.mxu0 0.0
      %747 = vmatpush1.msra.mxu0 0.0
      %748 = vmatprep.subr.mxu0 0.0
      %749 = vmatpush1.msra.mxu0 0.0
      %750 = vmatprep.subr.mxu0 0.0
      %751 = vmatpush1.msra.mxu0 0.0
      %752 = vmatprep.subr.mxu0 0.0
      %753 = vmatpush1.msra.mxu0 0.0
      %754 = vmatprep.subr.mxu0 0.0
      %755 = vmatpush1.msra.mxu0 0.0
      %756 = vmatprep.mubr.f32.mxu0 0.0
      %757 = vmatmul.mubr.f32.gmra.mrb[0].mxu0 %v573
      %v758 = vpop.f32.mrb[0].mxu0
      %v759 = vadd.f32 0.0, %v758
      %v760 = vpop.f32.mrb[0].mxu0
      %v761 = vadd.f32 0.0, %v760
      %762 = vmatprep.mubr.f32.mxu0 0.0
      %763 = vmatmul.mubr.f32.gmra.mrb[0].mxu0 %v576
      %v764 = vpop.f32.mrb[0].mxu0
      %v765 = vadd.f32 0.0, %v764
      %v766 = vpop.f32.mrb[0].mxu0
      %v767 = vadd.f32 0.0, %v766
      %768 = vmatprep.mubr.f32.mxu0 0.0
      %769 = vmatmul.mubr.f32.gmra.mrb[0].mxu0 %v579
      %v770 = vpop.f32.mrb[0].mxu0
      %v771 = vadd.f32 0.0, %v770
      %v772 = vpop.f32.mrb[0].mxu0
      %v773 = vadd.f32 0.0, %v772
      %774 = vmatprep.mubr.f32.mxu0 0.0
      %775 = vmatmul.mubr.f32.gmra.mrb[0].mxu0 %v582
      %v776 = vpop.f32.mrb[0].mxu0
      %v777 = vadd.f32 0.0, %v776
      %v778 = vpop.f32.mrb[0].mxu0
      %v779 = vadd.f32 0.0, %v778
      %780 = vmatprep.mubr.f32.mxu0 0.0
      %781 = vmatmul.mubr.f32.gmra.mrb[0].mxu0 %v585
      %v782 = vpop.f32.mrb[0].mxu0
      %v783 = vadd.f32 0.0, %v782
      %v784 = vpop.f32.mrb[0].mxu0
      %v785 = vadd.f32 0.0, %v784
      %786 = vmatprep.mubr.f32.mxu0 0.0
      %787 = vmatmul.mubr.f32.gmra.mrb[0].mxu0 %v588
      %v788 = vpop.f32.mrb[0].mxu0
      %v789 = vadd.f32 0.0, %v788
      %v790 = vpop.f32.mrb[0].mxu0
      %v791 = vadd.f32 0.0, %v790
      %792 = vmatprep.mubr.f32.mxu0 0.0
      %793 = vmatmul.mubr.f32.gmra.mrb[0].mxu0 %v591
      %v794 = vpop.f32.mrb[0].mxu0
      %v795 = vadd.f32 0.0, %v794
      %v796 = vpop.f32.mrb[0].mxu0
      %v797 = vadd.f32 0.0, %v796
      %798 = vmatprep.mubr.f32.mxu0 0.0
      %799 = vmatmul.mubr.f32.gmra.mrb[0].mxu0 %v594
      %v800 = vpop.f32.mrb[0].mxu0
      %v801 = vadd.f32 0.0, %v800
      %v802 = vpop.f32.mrb[0].mxu0
      %v803 = vadd.f32 0.0, %v802
      %804 = vmatprep.mubr.f32.mxu0 0.0
      %805 = vmatmul.mubr.f32.gmra.mrb[0].mxu0 %v597
      %v806 = vpop.f32.mrb[0].mxu0
      %v807 = vadd.f32 0.0, %v806
      %v808 = vpop.f32.mrb[0].mxu0
      %v809 = vadd.f32 0.0, %v808
      %810 = vmatprep.mubr.f32.mxu0 0.0
      %811 = vmatmul.mubr.f32.gmra.mrb[0].mxu0 %v600
      %v812 = vpop.f32.mrb[0].mxu0
      %v813 = vadd.f32 0.0, %v812
      %v814 = vpop.f32.mrb[0].mxu0
      %v815 = vadd.f32 0.0, %v814
      %816 = vmatprep.mubr.f32.mxu0 0.0
      %817 = vmatmul.mubr.f32.gmra.mrb[0].mxu0 %v603
      %v818 = vpop.f32.mrb[0].mxu0
      %v819 = vadd.f32 0.0, %v818
      %v820 = vpop.f32.mrb[0].mxu0
      %v821 = vadd.f32 0.0, %v820
      %822 = vmatprep.mubr.f32.mxu0 0.0
      %823 = vmatmul.mubr.f32.gmra.mrb[0].mxu0 %v606
      %v824 = vpop.f32.mrb[0].mxu0
      %v825 = vadd.f32 0.0, %v824
      %v826 = vpop.f32.mrb[0].mxu0
      %v827 = vadd.f32 0.0, %v826
      %828 = vmatprep.mubr.f32.mxu0 0.0
      %829 = vmatmul.mubr.f32.gmra.mrb[0].mxu0 %v609
      %v830 = vpop.f32.mrb[0].mxu0
      %v831 = vadd.f32 0.0, %v830
      %v832 = vpop.f32.mrb[0].mxu0
      %v833 = vadd.f32 0.0, %v832
      %834 = vmatprep.mubr.f32.mxu0 0.0
      %835 = vmatmul.mubr.f32.gmra.mrb[0].mxu0 %v612
      %v836 = vpop.f32.mrb[0].mxu0
      %v837 = vadd.f32 0.0, %v836
      %v838 = vpop.f32.mrb[0].mxu0
      %v839 = vadd.f32 0.0, %v838
      %840 = vmatprep.mubr.f32.mxu0 0.0
      %841 = vmatmul.mubr.f32.gmra.mrb[0].mxu0 %v615
      %v842 = vpop.f32.mrb[0].mxu0
      %v843 = vadd.f32 0.0, %v842
      %v844 = vpop.f32.mrb[0].mxu0
      %v845 = vadd.f32 0.0, %v844
      %846 = vmatprep.mubr.f32.mxu0 0.0
      %847 = vmatmul.mubr.f32.gmra.mrb[0].mxu0 %v618
      %v848 = vpop.f32.mrb[0].mxu0
      %v849 = vadd.f32 0.0, %v848
      %v850 = vpop.f32.mrb[0].mxu0
      %v851 = vadd.f32 0.0, %v850
      %852 = vmatprep.mubr.f32.mxu0 0.0
      %853 = vmatmul.mubr.f32.gmra.mrb[0].mxu0 %v621
      %v854 = vpop.f32.mrb[0].mxu0
      %v855 = vadd.f32 0.0, %v854
      %v856 = vpop.f32.mrb[0].mxu0
      %v857 = vadd.f32 0.0, %v856
      %858 = vmatprep.mubr.f32.mxu0 0.0
      %859 = vmatmul.mubr.f32.gmra.mrb[0].mxu0 %v624
      %v860 = vpop.f32.mrb[0].mxu0
      %v861 = vadd.f32 0.0, %v860
      %v862 = vpop.f32.mrb[0].mxu0
      %v863 = vadd.f32 0.0, %v862
      %864 = vmatprep.mubr.f32.mxu0 0.0
      %865 = vmatmul.mubr.f32.gmra.mrb[0].mxu0 %v627
      %v866 = vpop.f32.mrb[0].mxu0
      %v867 = vadd.f32 0.0, %v866
      %v868 = vpop.f32.mrb[0].mxu0
      %v869 = vadd.f32 0.0, %v868
      %870 = vmatprep.mubr.f32.mxu0 0.0
      %871 = vmatmul.mubr.f32.gmra.mrb[0].mxu0 %v630
      %v872 = vpop.f32.mrb[0].mxu0
      %v873 = vadd.f32 0.0, %v872
      %v874 = vpop.f32.mrb[0].mxu0
      %v875 = vadd.f32 0.0, %v874
      %876 = vmatprep.mubr.f32.mxu0 0.0
      %877 = vmatmul.mubr.f32.gmra.mrb[0].mxu0 %v633
      %v878 = vpop.f32.mrb[0].mxu0
      %v879 = vadd.f32 0.0, %v878
      %v880 = vpop.f32.mrb[0].mxu0
      %v881 = vadd.f32 0.0, %v880
      %882 = vmatprep.mubr.f32.mxu0 0.0
      %883 = vmatmul.mubr.f32.gmra.mrb[0].mxu0 %v636
      %v884 = vpop.f32.mrb[0].mxu0
      %v885 = vadd.f32 0.0, %v884
      %v886 = vpop.f32.mrb[0].mxu0
      %v887 = vadd.f32 0.0, %v886
      %888 = vmatprep.mubr.f32.mxu0 0.0
      %889 = vmatmul.mubr.f32.gmra.mrb[0].mxu0 %v639
      %v890 = vpop.f32.mrb[0].mxu0
      %v891 = vadd.f32 0.0, %v890
      %v892 = vpop.f32.mrb[0].mxu0
      %v893 = vadd.f32 0.0, %v892
      %894 = vmatprep.mubr.f32.mxu0 0.0
      %895 = vmatmul.mubr.f32.gmra.mrb[0].mxu0 %v642
      %v896 = vpop.f32.mrb[0].mxu0
      %v897 = vadd.f32 0.0, %v896
      %v898 = vpop.f32.mrb[0].mxu0
      %v899 = vadd.f32 0.0, %v898
      %900 = vmatprep.mubr.f32.mxu0 0.0
      %901 = vmatmul.mubr.f32.gmra.mrb[0].mxu0 %v645
      %v902 = vpop.f32.mrb[0].mxu0
      %v903 = vadd.f32 0.0, %v902
      %v904 = vpop.f32.mrb[0].mxu0
      %v905 = vadd.f32 0.0, %v904
      %906 = vmatprep.mubr.f32.mxu0 0.0
      %907 = vmatmul.mubr.f32.gmra.mrb[0].mxu0 %v648
      %v908 = vpop.f32.mrb[0].mxu0
      %v909 = vadd.f32 0.0, %v908
      %v910 = vpop.f32.mrb[0].mxu0
      %v911 = vadd.f32 0.0, %v910
      %912 = vmatprep.mubr.f32.mxu0 0.0
      %913 = vmatmul.mubr.f32.gmra.mrb[0].mxu0 %v651
      %v914 = vpop.f32.mrb[0].mxu0
      %v915 = vadd.f32 0.0, %v914
      %v916 = vpop.f32.mrb[0].mxu0
      %v917 = vadd.f32 0.0, %v916
      %918 = vmatprep.mubr.f32.mxu0 0.0
      %919 = vmatmul.mubr.f32.gmra.mrb[0].mxu0 %v654
      %v920 = vpop.f32.mrb[0].mxu0
      %v921 = vadd.f32 0.0, %v920
      %v922 = vpop.f32.mrb[0].mxu0
      %v923 = vadd.f32 0.0, %v922
      %924 = vmatprep.mubr.f32.mxu0 0.0
      %925 = vmatmul.mubr.f32.gmra.mrb[0].mxu0 %v657
      %v926 = vpop.f32.mrb[0].mxu0
      %v927 = vadd.f32 0.0, %v926
      %v928 = vpop.f32.mrb[0].mxu0
      %v929 = vadd.f32 0.0, %v928
      %930 = vmatprep.mubr.f32.mxu0 0.0
      %931 = vmatmul.mubr.f32.gmra.mrb[0].mxu0 %v660
      %v932 = vpop.f32.mrb[0].mxu0
      %v933 = vadd.f32 0.0, %v932
      %v934 = vpop.f32.mrb[0].mxu0
      %v935 = vadd.f32 0.0, %v934
      %936 = vmatprep.mubr.f32.mxu0 0.0
      %937 = vmatmul.mubr.f32.gmra.mrb[0].mxu0 %v663
      %v938 = vpop.f32.mrb[0].mxu0
      %v939 = vadd.f32 0.0, %v938
      %v940 = vpop.f32.mrb[0].mxu0
      %v941 = vadd.f32 0.0, %v940
      %942 = vmatprep.mubr.f32.mxu0 0.0
      %943 = vmatmul.mubr.f32.gmra.mrb[0].mxu0 %v666
      %v944 = vpop.f32.mrb[0].mxu0
      %v945 = vadd.f32 0.0, %v944
      %v946 = vpop.f32.mrb[0].mxu0
      %v947 = vadd.f32 0.0, %v946
      %948 = vmatprep.mubr.f32.mxu0 0.0
      %949 = vmatmul.mubr.f32.gmra.mrb[0].mxu0 %v669
      %v950 = vpop.f32.mrb[0].mxu0
      %v951 = vadd.f32 0.0, %v950
      %v952 = vpop.f32.mrb[0].mxu0
      %v953 = vadd.f32 0.0, %v952
      %954 = vmatprep.mubr.f32.mxu0 0.0
      %955 = vmatmul.mubr.f32.gmra.mrb[0].mxu0 %v672
      %v956 = vpop.f32.mrb[0].mxu0
      %v957 = vadd.f32 0.0, %v956
      %v958 = vpop.f32.mrb[0].mxu0
      %v959 = vadd.f32 0.0, %v958
      %960 = vmatprep.mubr.f32.mxu0 0.0
      %961 = vmatmul.mubr.f32.gmra.mrb[0].mxu0 %v675
      %v962 = vpop.f32.mrb[0].mxu0
      %v963 = vadd.f32 0.0, %v962
      %v964 = vpop.f32.mrb[0].mxu0
      %v965 = vadd.f32 0.0, %v964
      %966 = vmatprep.mubr.f32.mxu0 0.0
      %967 = vmatmul.mubr.f32.gmra.mrb[0].mxu0 %v678
      %v968 = vpop.f32.mrb[0].mxu0
      %v969 = vadd.f32 0.0, %v968
      %v970 = vpop.f32.mrb[0].mxu0
      %v971 = vadd.f32 0.0, %v970
      %972 = vmatprep.mubr.f32.mxu0 0.0
      %973 = vmatmul.mubr.f32.gmra.mrb[0].mxu0 %v681
      %v974 = vpop.f32.mrb[0].mxu0
      %v975 = vadd.f32 0.0, %v974
      %v976 = vpop.f32.mrb[0].mxu0
      %v977 = vadd.f32 0.0, %v976
      %978 = vmatprep.mubr.f32.mxu0 0.0
      %979 = vmatmul.mubr.f32.gmra.mrb[0].mxu0 %v684
      %v980 = vpop.f32.mrb[0].mxu0
      %v981 = vadd.f32 0.0, %v980
      %v982 = vpop.f32.mrb[0].mxu0
      %v983 = vadd.f32 0.0, %v982
      %984 = vmatprep.mubr.f32.mxu0 0.0
      %985 = vmatmul.mubr.f32.gmra.mrb[0].mxu0 %v687
      %v986 = vpop.f32.mrb[0].mxu0
      %v987 = vadd.f32 0.0, %v986
      %v988 = vpop.f32.mrb[0].mxu0
      %v989 = vadd.f32 0.0, %v988
      %990 = vmatprep.mubr.f32.mxu0 0.0
      %991 = vmatmul.mubr.f32.gmra.mrb[0].mxu0 %v690
      %v992 = vpop.f32.mrb[0].mxu0
      %v993 = vadd.f32 0.0, %v992
      %v994 = vpop.f32.mrb[0].mxu0
      %v995 = vadd.f32 0.0, %v994
      %996 = vdwg.mxu0
      %v998 = vsel %vm571, %v387, 0
      %v1001 = vsel %vm571, %v388, 0
      %v1004 = vsel %vm571, %v389, 0
      %v1007 = vsel %vm571, %v390, 0
      %v1010 = vsel %vm571, %v391, 0
      %v1013 = vsel %vm571, %v392, 0
      %v1016 = vsel %vm571, %v393, 0
      %v1019 = vsel %vm571, %v394, 0
      %v1022 = vsel %vm571, %v395, 0
      %v1025 = vsel %vm571, %v396, 0
      %v1028 = vsel %vm571, %v397, 0
      %v1031 = vsel %vm571, %v398, 0
      %v1034 = vsel %vm571, %v399, 0
      %v1037 = vsel %vm571, %v400, 0
      %v1040 = vsel %vm571, %v401, 0
      %v1043 = vsel %vm571, %v402, 0
      %v1046 = vsel %vm571, %v403, 0
      %v1049 = vsel %vm571, %v404, 0
      %v1052 = vsel %vm571, %v405, 0
      %v1055 = vsel %vm571, %v406, 0
      %v1058 = vsel %vm571, %v407, 0
      %v1061 = vsel %vm571, %v408, 0
      %v1064 = vsel %vm571, %v409, 0
      %v1067 = vsel %vm571, %v410, 0
      %v1070 = vsel %vm571, %v411, 0
      %v1073 = vsel %vm571, %v412, 0
      %v1076 = vsel %vm571, %v413, 0
      %v1079 = vsel %vm571, %v414, 0
      %v1082 = vsel %vm571, %v415, 0
      %v1085 = vsel %vm571, %v416, 0
      %v1088 = vsel %vm571, %v417, 0
      %v1091 = vsel %vm571, %v418, 0
      %v1094 = vsel %vm571, %v419, 0
      %v1097 = vsel %vm571, %v420, 0
      %v1100 = vsel %vm571, %v421, 0
      %v1103 = vsel %vm571, %v422, 0
      %v1106 = vsel %vm571, %v423, 0
      %v1109 = vsel %vm571, %v424, 0
      %v1112 = vsel %vm571, %v425, 0
      %v1115 = vsel %vm571, %v426, 0
      %1117 = vmatprep.subr.mxu0 %v428
      %1118 = vmatpush1.msra.mxu0 %v427
      %1119 = vmatprep.subr.mxu0 %v430
      %1120 = vmatpush1.msra.mxu0 %v429
      %1121 = vmatprep.subr.mxu0 %v432
      %1122 = vmatpush1.msra.mxu0 %v431
      %1123 = vmatprep.subr.mxu0 %v434
      %1124 = vmatpush1.msra.mxu0 %v433
      %1125 = vmatprep.subr.mxu0 %v436
      %1126 = vmatpush1.msra.mxu0 %v435
      %1127 = vmatprep.subr.mxu0 %v438
      %1128 = vmatpush1.msra.mxu0 %v437
      %1129 = vmatprep.subr.mxu0 %v440
      %1130 = vmatpush1.msra.mxu0 %v439
      %1131 = vmatprep.subr.mxu0 %v442
      %1132 = vmatpush1.msra.mxu0 %v441
      %1133 = vmatprep.subr.mxu0 %v444
      %1134 = vmatpush1.msra.mxu0 %v443
      %1135 = vmatprep.subr.mxu0 %v446
      %1136 = vmatpush1.msra.mxu0 %v445
      %1137 = vmatprep.subr.mxu0 %v448
      %1138 = vmatpush1.msra.mxu0 %v447
      %1139 = vmatprep.subr.mxu0 %v450
      %1140 = vmatpush1.msra.mxu0 %v449
      %1141 = vmatprep.subr.mxu0 %v452
      %1142 = vmatpush1.msra.mxu0 %v451
      %1143 = vmatprep.subr.mxu0 %v454
      %1144 = vmatpush1.msra.mxu0 %v453
      %1145 = vmatprep.subr.mxu0 %v456
      %1146 = vmatpush1.msra.mxu0 %v455
      %1147 = vmatprep.subr.mxu0 0.0
      %1148 = vmatpush1.msra.mxu0 0.0
      %1149 = vmatprep.subr.mxu0 0.0
      %1150 = vmatpush1.msra.mxu0 0.0
      %1151 = vmatprep.subr.mxu0 0.0
      %1152 = vmatpush1.msra.mxu0 0.0
      %1153 = vmatprep.subr.mxu0 0.0
      %1154 = vmatpush1.msra.mxu0 0.0
      %1155 = vmatprep.subr.mxu0 0.0
      %1156 = vmatpush1.msra.mxu0 0.0
      %1157 = vmatprep.subr.mxu0 0.0
      %1158 = vmatpush1.msra.mxu0 0.0
      %1159 = vmatprep.subr.mxu0 0.0
      %1160 = vmatpush1.msra.mxu0 0.0
      %1161 = vmatprep.subr.mxu0 0.0
      %1162 = vmatpush1.msra.mxu0 0.0
      %1163 = vmatprep.subr.mxu0 0.0
      %1164 = vmatpush1.msra.mxu0 0.0
      %1165 = vmatprep.subr.mxu0 0.0
      %1166 = vmatpush1.msra.mxu0 0.0
      %1167 = vmatprep.subr.mxu0 0.0
      %1168 = vmatpush1.msra.mxu0 0.0
      %1169 = vmatprep.subr.mxu0 0.0
      %1170 = vmatpush1.msra.mxu0 0.0
      %1171 = vmatprep.subr.mxu0 0.0
      %1172 = vmatpush1.msra.mxu0 0.0
      %1173 = vmatprep.subr.mxu0 0.0
      %1174 = vmatpush1.msra.mxu0 0.0
      %1175 = vmatprep.subr.mxu0 0.0
      %1176 = vmatpush1.msra.mxu0 0.0
      %1177 = vmatprep.subr.mxu0 0.0
      %1178 = vmatpush1.msra.mxu0 0.0
      %1179 = vmatprep.subr.mxu0 0.0
      %1180 = vmatpush1.msra.mxu0 0.0
      %1181 = vmatprep.mubr.f32.mxu0 0.0
      %1182 = vmatmul.mubr.f32.gmra.mrb[0].mxu0 %v998
      %v1183 = vpop.f32.mrb[0].mxu0
      %v1184 = vadd.f32 %v759, %v1183
      %v1185 = vpop.f32.mrb[0].mxu0
      %v1186 = vadd.f32 %v761, %v1185
      %1187 = vmatprep.mubr.f32.mxu0 0.0
      %1188 = vmatmul.mubr.f32.gmra.mrb[0].mxu0 %v1001
      %v1189 = vpop.f32.mrb[0].mxu0
      %v1190 = vadd.f32 %v765, %v1189
      %v1191 = vpop.f32.mrb[0].mxu0
      %v1192 = vadd.f32 %v767, %v1191
      %1193 = vmatprep.mubr.f32.mxu0 0.0
      %1194 = vmatmul.mubr.f32.gmra.mrb[0].mxu0 %v1004
      %v1195 = vpop.f32.mrb[0].mxu0
      %v1196 = vadd.f32 %v771, %v1195
      %v1197 = vpop.f32.mrb[0].mxu0
      %v1198 = vadd.f32 %v773, %v1197
      %1199 = vmatprep.mubr.f32.mxu0 0.0
      %1200 = vmatmul.mubr.f32.gmra.mrb[0].mxu0 %v1007
      %v1201 = vpop.f32.mrb[0].mxu0
      %v1202 = vadd.f32 %v777, %v1201
      %v1203 = vpop.f32.mrb[0].mxu0
      %v1204 = vadd.f32 %v779, %v1203
      %1205 = vmatprep.mubr.f32.mxu0 0.0
      %1206 = vmatmul.mubr.f32.gmra.mrb[0].mxu0 %v1010
      %v1207 = vpop.f32.mrb[0].mxu0
      %v1208 = vadd.f32 %v783, %v1207
      %v1209 = vpop.f32.mrb[0].mxu0
      %v1210 = vadd.f32 %v785, %v1209
      %1211 = vmatprep.mubr.f32.mxu0 0.0
      %1212 = vmatmul.mubr.f32.gmra.mrb[0].mxu0 %v1013
      %v1213 = vpop.f32.mrb[0].mxu0
      %v1214 = vadd.f32 %v789, %v1213
      %v1215 = vpop.f32.mrb[0].mxu0
      %v1216 = vadd.f32 %v791, %v1215
      %1217 = vmatprep.mubr.f32.mxu0 0.0
      %1218 = vmatmul.mubr.f32.gmra.mrb[0].mxu0 %v1016
      %v1219 = vpop.f32.mrb[0].mxu0
      %v1220 = vadd.f32 %v795, %v1219
      %v1221 = vpop.f32.mrb[0].mxu0
      %v1222 = vadd.f32 %v797, %v1221
      %1223 = vmatprep.mubr.f32.mxu0 0.0
      %1224 = vmatmul.mubr.f32.gmra.mrb[0].mxu0 %v1019
      %v1225 = vpop.f32.mrb[0].mxu0
      %v1226 = vadd.f32 %v801, %v1225
      %v1227 = vpop.f32.mrb[0].mxu0
      %v1228 = vadd.f32 %v803, %v1227
      %1229 = vmatprep.mubr.f32.mxu0 0.0
      %1230 = vmatmul.mubr.f32.gmra.mrb[0].mxu0 %v1022
      %v1231 = vpop.f32.mrb[0].mxu0
      %v1232 = vadd.f32 %v807, %v1231
      %v1233 = vpop.f32.mrb[0].mxu0
      %v1234 = vadd.f32 %v809, %v1233
      %1235 = vmatprep.mubr.f32.mxu0 0.0
      %1236 = vmatmul.mubr.f32.gmra.mrb[0].mxu0 %v1025
      %v1237 = vpop.f32.mrb[0].mxu0
      %v1238 = vadd.f32 %v813, %v1237
      %v1239 = vpop.f32.mrb[0].mxu0
      %v1240 = vadd.f32 %v815, %v1239
      %1241 = vmatprep.mubr.f32.mxu0 0.0
      %1242 = vmatmul.mubr.f32.gmra.mrb[0].mxu0 %v1028
      %v1243 = vpop.f32.mrb[0].mxu0
      %v1244 = vadd.f32 %v819, %v1243
      %v1245 = vpop.f32.mrb[0].mxu0
      %v1246 = vadd.f32 %v821, %v1245
      %1247 = vmatprep.mubr.f32.mxu0 0.0
      %1248 = vmatmul.mubr.f32.gmra.mrb[0].mxu0 %v1031
      %v1249 = vpop.f32.mrb[0].mxu0
      %v1250 = vadd.f32 %v825, %v1249
      %v1251 = vpop.f32.mrb[0].mxu0
      %v1252 = vadd.f32 %v827, %v1251
      %1253 = vmatprep.mubr.f32.mxu0 0.0
      %1254 = vmatmul.mubr.f32.gmra.mrb[0].mxu0 %v1034
      %v1255 = vpop.f32.mrb[0].mxu0
      %v1256 = vadd.f32 %v831, %v1255
      %v1257 = vpop.f32.mrb[0].mxu0
      %v1258 = vadd.f32 %v833, %v1257
      %1259 = vmatprep.mubr.f32.mxu0 0.0
      %1260 = vmatmul.mubr.f32.gmra.mrb[0].mxu0 %v1037
      %v1261 = vpop.f32.mrb[0].mxu0
      %v1262 = vadd.f32 %v837, %v1261
      %v1263 = vpop.f32.mrb[0].mxu0
      %v1264 = vadd.f32 %v839, %v1263
      %1265 = vmatprep.mubr.f32.mxu0 0.0
      %1266 = vmatmul.mubr.f32.gmra.mrb[0].mxu0 %v1040
      %v1267 = vpop.f32.mrb[0].mxu0
      %v1268 = vadd.f32 %v843, %v1267
      %v1269 = vpop.f32.mrb[0].mxu0
      %v1270 = vadd.f32 %v845, %v1269
      %1271 = vmatprep.mubr.f32.mxu0 0.0
      %1272 = vmatmul.mubr.f32.gmra.mrb[0].mxu0 %v1043
      %v1273 = vpop.f32.mrb[0].mxu0
      %v1274 = vadd.f32 %v849, %v1273
      %v1275 = vpop.f32.mrb[0].mxu0
      %v1276 = vadd.f32 %v851, %v1275
      %1277 = vmatprep.mubr.f32.mxu0 0.0
      %1278 = vmatmul.mubr.f32.gmra.mrb[0].mxu0 %v1046
      %v1279 = vpop.f32.mrb[0].mxu0
      %v1280 = vadd.f32 %v855, %v1279
      %v1281 = vpop.f32.mrb[0].mxu0
      %v1282 = vadd.f32 %v857, %v1281
      %1283 = vmatprep.mubr.f32.mxu0 0.0
      %1284 = vmatmul.mubr.f32.gmra.mrb[0].mxu0 %v1049
      %v1285 = vpop.f32.mrb[0].mxu0
      %v1286 = vadd.f32 %v861, %v1285
      %v1287 = vpop.f32.mrb[0].mxu0
      %v1288 = vadd.f32 %v863, %v1287
      %1289 = vmatprep.mubr.f32.mxu0 0.0
      %1290 = vmatmul.mubr.f32.gmra.mrb[0].mxu0 %v1052
      %v1291 = vpop.f32.mrb[0].mxu0
      %v1292 = vadd.f32 %v867, %v1291
      %v1293 = vpop.f32.mrb[0].mxu0
      %v1294 = vadd.f32 %v869, %v1293
      %1295 = vmatprep.mubr.f32.mxu0 0.0
      %1296 = vmatmul.mubr.f32.gmra.mrb[0].mxu0 %v1055
      %v1297 = vpop.f32.mrb[0].mxu0
      %v1298 = vadd.f32 %v873, %v1297
      %v1299 = vpop.f32.mrb[0].mxu0
      %v1300 = vadd.f32 %v875, %v1299
      %1301 = vmatprep.mubr.f32.mxu0 0.0
      %1302 = vmatmul.mubr.f32.gmra.mrb[0].mxu0 %v1058
      %v1303 = vpop.f32.mrb[0].mxu0
      %v1304 = vadd.f32 %v879, %v1303
      %v1305 = vpop.f32.mrb[0].mxu0
      %v1306 = vadd.f32 %v881, %v1305
      %1307 = vmatprep.mubr.f32.mxu0 0.0
      %1308 = vmatmul.mubr.f32.gmra.mrb[0].mxu0 %v1061
      %v1309 = vpop.f32.mrb[0].mxu0
      %v1310 = vadd.f32 %v885, %v1309
      %v1311 = vpop.f32.mrb[0].mxu0
      %v1312 = vadd.f32 %v887, %v1311
      %1313 = vmatprep.mubr.f32.mxu0 0.0
      %1314 = vmatmul.mubr.f32.gmra.mrb[0].mxu0 %v1064
      %v1315 = vpop.f32.mrb[0].mxu0
      %v1316 = vadd.f32 %v891, %v1315
      %v1317 = vpop.f32.mrb[0].mxu0
      %v1318 = vadd.f32 %v893, %v1317
      %1319 = vmatprep.mubr.f32.mxu0 0.0
      %1320 = vmatmul.mubr.f32.gmra.mrb[0].mxu0 %v1067
      %v1321 = vpop.f32.mrb[0].mxu0
      %v1322 = vadd.f32 %v897, %v1321
      %v1323 = vpop.f32.mrb[0].mxu0
      %v1324 = vadd.f32 %v899, %v1323
      %1325 = vmatprep.mubr.f32.mxu0 0.0
      %1326 = vmatmul.mubr.f32.gmra.mrb[0].mxu0 %v1070
      %v1327 = vpop.f32.mrb[0].mxu0
      %v1328 = vadd.f32 %v903, %v1327
      %v1329 = vpop.f32.mrb[0].mxu0
      %v1330 = vadd.f32 %v905, %v1329
      %1331 = vmatprep.mubr.f32.mxu0 0.0
      %1332 = vmatmul.mubr.f32.gmra.mrb[0].mxu0 %v1073
      %v1333 = vpop.f32.mrb[0].mxu0
      %v1334 = vadd.f32 %v909, %v1333
      %v1335 = vpop.f32.mrb[0].mxu0
      %v1336 = vadd.f32 %v911, %v1335
      %1337 = vmatprep.mubr.f32.mxu0 0.0
      %1338 = vmatmul.mubr.f32.gmra.mrb[0].mxu0 %v1076
      %v1339 = vpop.f32.mrb[0].mxu0
      %v1340 = vadd.f32 %v915, %v1339
      %v1341 = vpop.f32.mrb[0].mxu0
      %v1342 = vadd.f32 %v917, %v1341
      %1343 = vmatprep.mubr.f32.mxu0 0.0
      %1344 = vmatmul.mubr.f32.gmra.mrb[0].mxu0 %v1079
      %v1345 = vpop.f32.mrb[0].mxu0
      %v1346 = vadd.f32 %v921, %v1345
      %v1347 = vpop.f32.mrb[0].mxu0
      %v1348 = vadd.f32 %v923, %v1347
      %1349 = vmatprep.mubr.f32.mxu0 0.0
      %1350 = vmatmul.mubr.f32.gmra.mrb[0].mxu0 %v1082
      %v1351 = vpop.f32.mrb[0].mxu0
      %v1352 = vadd.f32 %v927, %v1351
      %v1353 = vpop.f32.mrb[0].mxu0
      %v1354 = vadd.f32 %v929, %v1353
      %1355 = vmatprep.mubr.f32.mxu0 0.0
      %1356 = vmatmul.mubr.f32.gmra.mrb[0].mxu0 %v1085
      %v1357 = vpop.f32.mrb[0].mxu0
      %v1358 = vadd.f32 %v933, %v1357
      %v1359 = vpop.f32.mrb[0].mxu0
      %v1360 = vadd.f32 %v935, %v1359
      %1361 = vmatprep.mubr.f32.mxu0 0.0
      %1362 = vmatmul.mubr.f32.gmra.mrb[0].mxu0 %v1088
      %v1363 = vpop.f32.mrb[0].mxu0
      %v1364 = vadd.f32 %v939, %v1363
      %v1365 = vpop.f32.mrb[0].mxu0
      %v1366 = vadd.f32 %v941, %v1365
      %1367 = vmatprep.mubr.f32.mxu0 0.0
      %1368 = vmatmul.mubr.f32.gmra.mrb[0].mxu0 %v1091
      %v1369 = vpop.f32.mrb[0].mxu0
      %v1370 = vadd.f32 %v945, %v1369
      %v1371 = vpop.f32.mrb[0].mxu0
      %v1372 = vadd.f32 %v947, %v1371
      %1373 = vmatprep.mubr.f32.mxu0 0.0
      %1374 = vmatmul.mubr.f32.gmra.mrb[0].mxu0 %v1094
      %v1375 = vpop.f32.mrb[0].mxu0
      %v1376 = vadd.f32 %v951, %v1375
      %v1377 = vpop.f32.mrb[0].mxu0
      %v1378 = vadd.f32 %v953, %v1377
      %1379 = vmatprep.mubr.f32.mxu0 0.0
      %1380 = vmatmul.mubr.f32.gmra.mrb[0].mxu0 %v1097
      %v1381 = vpop.f32.mrb[0].mxu0
      %v1382 = vadd.f32 %v957, %v1381
      %v1383 = vpop.f32.mrb[0].mxu0
      %v1384 = vadd.f32 %v959, %v1383
      %1385 = vmatprep.mubr.f32.mxu0 0.0
      %1386 = vmatmul.mubr.f32.gmra.mrb[0].mxu0 %v1100
      %v1387 = vpop.f32.mrb[0].mxu0
      %v1388 = vadd.f32 %v963, %v1387
      %v1389 = vpop.f32.mrb[0].mxu0
      %v1390 = vadd.f32 %v965, %v1389
      %1391 = vmatprep.mubr.f32.mxu0 0.0
      %1392 = vmatmul.mubr.f32.gmra.mrb[0].mxu0 %v1103
      %v1393 = vpop.f32.mrb[0].mxu0
      %v1394 = vadd.f32 %v969, %v1393
      %v1395 = vpop.f32.mrb[0].mxu0
      %v1396 = vadd.f32 %v971, %v1395
      %1397 = vmatprep.mubr.f32.mxu0 0.0
      %1398 = vmatmul.mubr.f32.gmra.mrb[0].mxu0 %v1106
      %v1399 = vpop.f32.mrb[0].mxu0
      %v1400 = vadd.f32 %v975, %v1399
      %v1401 = vpop.f32.mrb[0].mxu0
      %v1402 = vadd.f32 %v977, %v1401
      %1403 = vmatprep.mubr.f32.mxu0 0.0
      %1404 = vmatmul.mubr.f32.gmra.mrb[0].mxu0 %v1109
      %v1405 = vpop.f32.mrb[0].mxu0
      %v1406 = vadd.f32 %v981, %v1405
      %v1407 = vpop.f32.mrb[0].mxu0
      %v1408 = vadd.f32 %v983, %v1407
      %1409 = vmatprep.mubr.f32.mxu0 0.0
      %1410 = vmatmul.mubr.f32.gmra.mrb[0].mxu0 %v1112
      %v1411 = vpop.f32.mrb[0].mxu0
      %v1412 = vadd.f32 %v987, %v1411
      %v1413 = vpop.f32.mrb[0].mxu0
      %v1414 = vadd.f32 %v989, %v1413
      %1415 = vmatprep.mubr.f32.mxu0 0.0
      %1416 = vmatmul.mubr.f32.gmra.mrb[0].mxu0 %v1115
      %v1417 = vpop.f32.mrb[0].mxu0
      %v1418 = vadd.f32 %v993, %v1417
      %v1419 = vpop.f32.mrb[0].mxu0
      %v1420 = vadd.f32 %v995, %v1419
      %1421 = vdwg.mxu0
      %v1422 = vld [vmem:[%s2] sm:$0x3]
      %v1424 = vlaneseq
      %v1425 = vshrl.u32 %v1424, 7
      %v1426 = vsub.s32 0, %v1425
      %v1427 = vrot.slane %v1422, %v1426
      %v1428 = vlaneseq
      %v1429 = vshrl.u32 %v1428, 7
      %v1430 = vsub.s32 1, %v1429
      %v1431 = vrot.slane %v1422, %v1430
      %v1434 = vadd.f32 %v1184, %v1427
      %v1435 = vadd.f32 %v1186, %v1431
      %v1436 = vadd.f32 %v1190, %v1427
      %v1437 = vadd.f32 %v1192, %v1431
      %v1438 = vadd.f32 %v1196, %v1427
      %v1439 = vadd.f32 %v1198, %v1431
      %v1440 = vadd.f32 %v1202, %v1427
      %v1441 = vadd.f32 %v1204, %v1431
      %v1442 = vadd.f32 %v1208, %v1427
      %v1443 = vadd.f32 %v1210, %v1431
      %v1444 = vadd.f32 %v1214, %v1427
      %v1445 = vadd.f32 %v1216, %v1431
      %v1446 = vadd.f32 %v1220, %v1427
      %v1447 = vadd.f32 %v1222, %v1431
      %v1448 = vadd.f32 %v1226, %v1427
      %v1449 = vadd.f32 %v1228, %v1431
      %v1450 = vadd.f32 %v1232, %v1427
      %v1451 = vadd.f32 %v1234, %v1431
      %v1452 = vadd.f32 %v1238, %v1427
      %v1453 = vadd.f32 %v1240, %v1431
      %v1454 = vadd.f32 %v1244, %v1427
      %v1455 = vadd.f32 %v1246, %v1431
      %v1456 = vadd.f32 %v1250, %v1427
      %v1457 = vadd.f32 %v1252, %v1431
      %v1458 = vadd.f32 %v1256, %v1427
      %v1459 = vadd.f32 %v1258, %v1431
      %v1460 = vadd.f32 %v1262, %v1427
      %v1461 = vadd.f32 %v1264, %v1431
      %v1462 = vadd.f32 %v1268, %v1427
      %v1463 = vadd.f32 %v1270, %v1431
      %v1464 = vadd.f32 %v1274, %v1427
      %v1465 = vadd.f32 %v1276, %v1431
      %v1466 = vadd.f32 %v1280, %v1427
      %v1467 = vadd.f32 %v1282, %v1431
      %v1468 = vadd.f32 %v1286, %v1427
      %v1469 = vadd.f32 %v1288, %v1431
      %v1470 = vadd.f32 %v1292, %v1427
      %v1471 = vadd.f32 %v1294, %v1431
      %v1472 = vadd.f32 %v1298, %v1427
      %v1473 = vadd.f32 %v1300, %v1431
      %v1474 = vadd.f32 %v1304, %v1427
      %v1475 = vadd.f32 %v1306, %v1431
      %v1476 = vadd.f32 %v1310, %v1427
      %v1477 = vadd.f32 %v1312, %v1431
      %v1478 = vadd.f32 %v1316, %v1427
      %v1479 = vadd.f32 %v1318, %v1431
      %v1480 = vadd.f32 %v1322, %v1427
      %v1481 = vadd.f32 %v1324, %v1431
      %v1482 = vadd.f32 %v1328, %v1427
      %v1483 = vadd.f32 %v1330, %v1431
      %v1484 = vadd.f32 %v1334, %v1427
      %v1485 = vadd.f32 %v1336, %v1431
      %v1486 = vadd.f32 %v1340, %v1427
      %v1487 = vadd.f32 %v1342, %v1431
      %v1488 = vadd.f32 %v1346, %v1427
      %v1489 = vadd.f32 %v1348, %v1431
      %v1490 = vadd.f32 %v1352, %v1427
      %v1491 = vadd.f32 %v1354, %v1431
      %v1492 = vadd.f32 %v1358, %v1427
      %v1493 = vadd.f32 %v1360, %v1431
      %v1494 = vadd.f32 %v1364, %v1427
      %v1495 = vadd.f32 %v1366, %v1431
      %v1496 = vadd.f32 %v1370, %v1427
      %v1497 = vadd.f32 %v1372, %v1431
      %v1498 = vadd.f32 %v1376, %v1427
      %v1499 = vadd.f32 %v1378, %v1431
      %v1500 = vadd.f32 %v1382, %v1427
      %v1501 = vadd.f32 %v1384, %v1431
      %v1502 = vadd.f32 %v1388, %v1427
      %v1503 = vadd.f32 %v1390, %v1431
      %v1504 = vadd.f32 %v1394, %v1427
      %v1505 = vadd.f32 %v1396, %v1431
      %v1506 = vadd.f32 %v1400, %v1427
      %v1507 = vadd.f32 %v1402, %v1431
      %v1508 = vadd.f32 %v1406, %v1427
      %v1509 = vadd.f32 %v1408, %v1431
      %v1510 = vadd.f32 %v1412, %v1427
      %v1511 = vadd.f32 %v1414, %v1431
      %v1512 = vadd.f32 %v1418, %v1427
      %v1513 = vadd.f32 %v1420, %v1431
      %v1514 = vmax.f32 %v1434, 0.0
      %v1515 = vmax.f32 %v1435, 0.0
      %v1516 = vmax.f32 %v1436, 0.0
      %v1517 = vmax.f32 %v1437, 0.0
      %v1518 = vmax.f32 %v1438, 0.0
      %v1519 = vmax.f32 %v1439, 0.0
      %v1520 = vmax.f32 %v1440, 0.0
      %v1521 = vmax.f32 %v1441, 0.0
      %v1522 = vmax.f32 %v1442, 0.0
      %v1523 = vmax.f32 %v1443, 0.0
      %v1524 = vmax.f32 %v1444, 0.0
      %v1525 = vmax.f32 %v1445, 0.0
      %v1526 = vmax.f32 %v1446, 0.0
      %v1527 = vmax.f32 %v1447, 0.0
      %v1528 = vmax.f32 %v1448, 0.0
      %v1529 = vmax.f32 %v1449, 0.0
      %v1530 = vmax.f32 %v1450, 0.0
      %v1531 = vmax.f32 %v1451, 0.0
      %v1532 = vmax.f32 %v1452, 0.0
      %v1533 = vmax.f32 %v1453, 0.0
      %v1534 = vmax.f32 %v1454, 0.0
      %v1535 = vmax.f32 %v1455, 0.0
      %v1536 = vmax.f32 %v1456, 0.0
      %v1537 = vmax.f32 %v1457, 0.0
      %v1538 = vmax.f32 %v1458, 0.0
      %v1539 = vmax.f32 %v1459, 0.0
      %v1540 = vmax.f32 %v1460, 0.0
      %v1541 = vmax.f32 %v1461, 0.0
      %v1542 = vmax.f32 %v1462, 0.0
      %v1543 = vmax.f32 %v1463, 0.0
      %v1544 = vmax.f32 %v1464, 0.0
      %v1545 = vmax.f32 %v1465, 0.0
      %v1546 = vmax.f32 %v1466, 0.0
      %v1547 = vmax.f32 %v1467, 0.0
      %v1548 = vmax.f32 %v1468, 0.0
      %v1549 = vmax.f32 %v1469, 0.0
      %v1550 = vmax.f32 %v1470, 0.0
      %v1551 = vmax.f32 %v1471, 0.0
      %v1552 = vmax.f32 %v1472, 0.0
      %v1553 = vmax.f32 %v1473, 0.0
      %v1554 = vmax.f32 %v1474, 0.0
      %v1555 = vmax.f32 %v1475, 0.0
      %v1556 = vmax.f32 %v1476, 0.0
      %v1557 = vmax.f32 %v1477, 0.0
      %v1558 = vmax.f32 %v1478, 0.0
      %v1559 = vmax.f32 %v1479, 0.0
      %v1560 = vmax.f32 %v1480, 0.0
      %v1561 = vmax.f32 %v1481, 0.0
      %v1562 = vmax.f32 %v1482, 0.0
      %v1563 = vmax.f32 %v1483, 0.0
      %v1564 = vmax.f32 %v1484, 0.0
      %v1565 = vmax.f32 %v1485, 0.0
      %v1566 = vmax.f32 %v1486, 0.0
      %v1567 = vmax.f32 %v1487, 0.0
      %v1568 = vmax.f32 %v1488, 0.0
      %v1569 = vmax.f32 %v1489, 0.0
      %v1570 = vmax.f32 %v1490, 0.0
      %v1571 = vmax.f32 %v1491, 0.0
      %v1572 = vmax.f32 %v1492, 0.0
      %v1573 = vmax.f32 %v1493, 0.0
      %v1574 = vmax.f32 %v1494, 0.0
      %v1575 = vmax.f32 %v1495, 0.0
      %v1576 = vmax.f32 %v1496, 0.0
      %v1577 = vmax.f32 %v1497, 0.0
      %v1578 = vmax.f32 %v1498, 0.0
      %v1579 = vmax.f32 %v1499, 0.0
      %v1580 = vmax.f32 %v1500, 0.0
      %v1581 = vmax.f32 %v1501, 0.0
      %v1582 = vmax.f32 %v1502, 0.0
      %v1583 = vmax.f32 %v1503, 0.0
      %v1584 = vmax.f32 %v1504, 0.0
      %v1585 = vmax.f32 %v1505, 0.0
      %v1586 = vmax.f32 %v1506, 0.0
      %v1587 = vmax.f32 %v1507, 0.0
      %v1588 = vmax.f32 %v1508, 0.0
      %v1589 = vmax.f32 %v1509, 0.0
      %v1590 = vmax.f32 %v1510, 0.0
      %v1591 = vmax.f32 %v1511, 0.0
      %v1592 = vmax.f32 %v1512, 0.0
      %v1593 = vmax.f32 %v1513, 0.0
      %v1594 = vrot.slane %v1514, 1
      %v1595 = vrot.slane %v1515, 1
      %v1596 = vrot.slane %v1516, 1
      %v1597 = vrot.slane %v1517, 1
      %v1598 = vrot.slane %v1518, 1
      %v1599 = vrot.slane %v1519, 1
      %v1600 = vrot.slane %v1520, 1
      %v1601 = vrot.slane %v1521, 1
      %v1602 = vrot.slane %v1522, 1
      %v1603 = vrot.slane %v1523, 1
      %v1604 = vrot.slane %v1524, 1
      %v1605 = vrot.slane %v1525, 1
      %v1606 = vrot.slane %v1526, 1
      %v1607 = vrot.slane %v1527, 1
      %v1608 = vrot.slane %v1528, 1
      %v1609 = vrot.slane %v1529, 1
      %v1610 = vrot.slane %v1530, 1
      %v1611 = vrot.slane %v1531, 1
      %v1612 = vrot.slane %v1532, 1
      %v1613 = vrot.slane %v1533, 1
      %v1614 = vrot.slane %v1534, 1
      %v1615 = vrot.slane %v1535, 1
      %v1616 = vrot.slane %v1536, 1
      %v1617 = vrot.slane %v1537, 1
      %v1618 = vrot.slane %v1538, 1
      %v1619 = vrot.slane %v1539, 1
      %v1620 = vrot.slane %v1540, 1
      %v1621 = vrot.slane %v1541, 1
      %v1622 = vrot.slane %v1542, 1
      %v1623 = vrot.slane %v1543, 1
      %v1624 = vrot.slane %v1544, 1
      %v1625 = vrot.slane %v1545, 1
      %v1626 = vrot.slane %v1546, 1
      %v1627 = vrot.slane %v1547, 1
      %v1628 = vrot.slane %v1548, 1
      %v1629 = vrot.slane %v1549, 1
      %v1630 = vrot.slane %v1550, 1
      %v1631 = vrot.slane %v1551, 1
      %v1632 = vrot.slane %v1552, 1
      %v1633 = vrot.slane %v1553, 1
      %v1634 = vrot.slane %v1554, 1
      %v1635 = vrot.slane %v1555, 1
      %v1636 = vrot.slane %v1556, 1
      %v1637 = vrot.slane %v1557, 1
      %v1638 = vrot.slane %v1558, 1
      %v1639 = vrot.slane %v1559, 1
      %v1640 = vrot.slane %v1560, 1
      %v1641 = vrot.slane %v1561, 1
      %v1642 = vrot.slane %v1562, 1
      %v1643 = vrot.slane %v1563, 1
      %v1644 = vrot.slane %v1564, 1
      %v1645 = vrot.slane %v1565, 1
      %v1646 = vrot.slane %v1566, 1
      %v1647 = vrot.slane %v1567, 1
      %v1648 = vrot.slane %v1568, 1
      %v1649 = vrot.slane %v1569, 1
      %v1650 = vrot.slane %v1570, 1
      %v1651 = vrot.slane %v1571, 1
      %v1652 = vrot.slane %v1572, 1
      %v1653 = vrot.slane %v1573, 1
      %v1654 = vrot.slane %v1574, 1
      %v1655 = vrot.slane %v1575, 1
      %v1656 = vrot.slane %v1576, 1
      %v1657 = vrot.slane %v1577, 1
      %v1658 = vrot.slane %v1578, 1
      %v1659 = vrot.slane %v1579, 1
      %v1660 = vrot.slane %v1580, 1
      %v1661 = vrot.slane %v1581, 1
      %v1662 = vrot.slane %v1582, 1
      %v1663 = vrot.slane %v1583, 1
      %v1664 = vrot.slane %v1584, 1
      %v1665 = vrot.slane %v1585, 1
      %v1666 = vrot.slane %v1586, 1
      %v1667 = vrot.slane %v1587, 1
      %v1668 = vrot.slane %v1588, 1
      %v1669 = vrot.slane %v1589, 1
      %v1670 = vrot.slane %v1590, 1
      %v1671 = vrot.slane %v1591, 1
      %v1672 = vrot.slane %v1592, 1
      %v1673 = vrot.slane %v1593, 1
      %v1674 = vsel %vm499, %v1670, %v1672
      %v1675 = vsel %vm499, %v1671, %v1673
      %v1676 = vsel %vm499, %v1668, %v1670
      %v1677 = vsel %vm499, %v1669, %v1671
      %v1678 = vsel %vm499, %v1666, %v1668
      %v1679 = vsel %vm499, %v1667, %v1669
      %v1680 = vsel %vm499, %v1664, %v1666
      %v1681 = vsel %vm499, %v1665, %v1667
      %v1682 = vsel %vm499, %v1662, %v1664
      %v1683 = vsel %vm499, %v1663, %v1665
      %v1684 = vsel %vm499, %v1660, %v1662
      %v1685 = vsel %vm499, %v1661, %v1663
      %v1686 = vsel %vm499, %v1658, %v1660
      %v1687 = vsel %vm499, %v1659, %v1661
      %v1688 = vsel %vm499, %v1656, %v1658
      %v1689 = vsel %vm499, %v1657, %v1659
      %v1690 = vsel %vm499, %v1654, %v1656
      %v1691 = vsel %vm499, %v1655, %v1657
      %v1692 = vsel %vm499, %v1652, %v1654
      %v1693 = vsel %vm499, %v1653, %v1655
      %v1694 = vsel %vm499, %v1650, %v1652
      %v1695 = vsel %vm499, %v1651, %v1653
      %v1696 = vsel %vm499, %v1648, %v1650
      %v1697 = vsel %vm499, %v1649, %v1651
      %v1698 = vsel %vm499, %v1646, %v1648
      %v1699 = vsel %vm499, %v1647, %v1649
      %v1700 = vsel %vm499, %v1644, %v1646
      %v1701 = vsel %vm499, %v1645, %v1647
      %v1702 = vsel %vm499, %v1642, %v1644
      %v1703 = vsel %vm499, %v1643, %v1645
      %v1704 = vsel %vm499, %v1640, %v1642
      %v1705 = vsel %vm499, %v1641, %v1643
      %v1706 = vsel %vm499, %v1638, %v1640
      %v1707 = vsel %vm499, %v1639, %v1641
      %v1708 = vsel %vm499, %v1636, %v1638
      %v1709 = vsel %vm499, %v1637, %v1639
      %v1710 = vsel %vm499, %v1634, %v1636
      %v1711 = vsel %vm499, %v1635, %v1637
      %v1712 = vsel %vm499, %v1632, %v1634
      %v1713 = vsel %vm499, %v1633, %v1635
      %v1714 = vsel %vm499, %v1630, %v1632
      %v1715 = vsel %vm499, %v1631, %v1633
      %v1716 = vsel %vm499, %v1628, %v1630
      %v1717 = vsel %vm499, %v1629, %v1631
      %v1718 = vsel %vm499, %v1626, %v1628
      %v1719 = vsel %vm499, %v1627, %v1629
      %v1720 = vsel %vm499, %v1624, %v1626
      %v1721 = vsel %vm499, %v1625, %v1627
      %v1722 = vsel %vm499, %v1622, %v1624
      %v1723 = vsel %vm499, %v1623, %v1625
      %v1724 = vsel %vm499, %v1620, %v1622
      %v1725 = vsel %vm499, %v1621, %v1623
      %v1726 = vsel %vm499, %v1618, %v1620
      %v1727 = vsel %vm499, %v1619, %v1621
      %v1728 = vsel %vm499, %v1616, %v1618
      %v1729 = vsel %vm499, %v1617, %v1619
      %v1730 = vsel %vm499, %v1614, %v1616
      %v1731 = vsel %vm499, %v1615, %v1617
      %v1732 = vsel %vm499, %v1612, %v1614
      %v1733 = vsel %vm499, %v1613, %v1615
      %v1734 = vsel %vm499, %v1610, %v1612
      %v1735 = vsel %vm499, %v1611, %v1613
      %v1736 = vsel %vm499, %v1608, %v1610
      %v1737 = vsel %vm499, %v1609, %v1611
      %v1738 = vsel %vm499, %v1606, %v1608
      %v1739 = vsel %vm499, %v1607, %v1609
      %v1740 = vsel %vm499, %v1604, %v1606
      %v1741 = vsel %vm499, %v1605, %v1607
      %v1742 = vsel %vm499, %v1602, %v1604
      %v1743 = vsel %vm499, %v1603, %v1605
      %v1744 = vsel %vm499, %v1600, %v1602
      %v1745 = vsel %vm499, %v1601, %v1603
      %v1746 = vsel %vm499, %v1598, %v1600
      %v1747 = vsel %vm499, %v1599, %v1601
      %v1748 = vsel %vm499, %v1596, %v1598
      %v1749 = vsel %vm499, %v1597, %v1599
      %v1750 = vsel %vm499, %v1594, %v1596
      %v1751 = vsel %vm499, %v1595, %v1597
      %v1752 = vsel %vm499, %v1672, %v1594
      %v1753 = vsel %vm499, %v1673, %v1595
      %v1754 = vmax.f32 %v1514, %v1750
      %v1755 = vmax.f32 %v1515, %v1751
      %v1756 = vmax.f32 %v1516, %v1748
      %v1757 = vmax.f32 %v1517, %v1749
      %v1758 = vmax.f32 %v1518, %v1746
      %v1759 = vmax.f32 %v1519, %v1747
      %v1760 = vmax.f32 %v1520, %v1744
      %v1761 = vmax.f32 %v1521, %v1745
      %v1762 = vmax.f32 %v1522, %v1742
      %v1763 = vmax.f32 %v1523, %v1743
      %v1764 = vmax.f32 %v1524, %v1740
      %v1765 = vmax.f32 %v1525, %v1741
      %v1766 = vmax.f32 %v1526, %v1738
      %v1767 = vmax.f32 %v1527, %v1739
      %v1768 = vmax.f32 %v1528, %v1736
      %v1769 = vmax.f32 %v1529, %v1737
      %v1770 = vmax.f32 %v1530, %v1734
      %v1771 = vmax.f32 %v1531, %v1735
      %v1772 = vmax.f32 %v1532, %v1732
      %v1773 = vmax.f32 %v1533, %v1733
      %v1774 = vmax.f32 %v1534, %v1730
      %v1775 = vmax.f32 %v1535, %v1731
      %v1776 = vmax.f32 %v1536, %v1728
      %v1777 = vmax.f32 %v1537, %v1729
      %v1778 = vmax.f32 %v1538, %v1726
      %v1779 = vmax.f32 %v1539, %v1727
      %v1780 = vmax.f32 %v1540, %v1724
      %v1781 = vmax.f32 %v1541, %v1725
      %v1782 = vmax.f32 %v1542, %v1722
      %v1783 = vmax.f32 %v1543, %v1723
      %v1784 = vmax.f32 %v1544, %v1720
      %v1785 = vmax.f32 %v1545, %v1721
      %v1786 = vmax.f32 %v1546, %v1718
      %v1787 = vmax.f32 %v1547, %v1719
      %v1788 = vmax.f32 %v1548, %v1716
      %v1789 = vmax.f32 %v1549, %v1717
      %v1790 = vmax.f32 %v1550, %v1714
      %v1791 = vmax.f32 %v1551, %v1715
      %v1792 = vmax.f32 %v1552, %v1712
      %v1793 = vmax.f32 %v1553, %v1713
      %v1794 = vmax.f32 %v1554, %v1710
      %v1795 = vmax.f32 %v1555, %v1711
      %v1796 = vmax.f32 %v1556, %v1708
      %v1797 = vmax.f32 %v1557, %v1709
      %v1798 = vmax.f32 %v1558, %v1706
      %v1799 = vmax.f32 %v1559, %v1707
      %v1800 = vmax.f32 %v1560, %v1704
      %v1801 = vmax.f32 %v1561, %v1705
      %v1802 = vmax.f32 %v1562, %v1702
      %v1803 = vmax.f32 %v1563, %v1703
      %v1804 = vmax.f32 %v1564, %v1700
      %v1805 = vmax.f32 %v1565, %v1701
      %v1806 = vmax.f32 %v1566, %v1698
      %v1807 = vmax.f32 %v1567, %v1699
      %v1808 = vmax.f32 %v1568, %v1696
      %v1809 = vmax.f32 %v1569, %v1697
      %v1810 = vmax.f32 %v1570, %v1694
      %v1811 = vmax.f32 %v1571, %v1695
      %v1812 = vmax.f32 %v1572, %v1692
      %v1813 = vmax.f32 %v1573, %v1693
      %v1814 = vmax.f32 %v1574, %v1690
      %v1815 = vmax.f32 %v1575, %v1691
      %v1816 = vmax.f32 %v1576, %v1688
      %v1817 = vmax.f32 %v1577, %v1689
      %v1818 = vmax.f32 %v1578, %v1686
      %v1819 = vmax.f32 %v1579, %v1687
      %v1820 = vmax.f32 %v1580, %v1684
      %v1821 = vmax.f32 %v1581, %v1685
      %v1822 = vmax.f32 %v1582, %v1682
      %v1823 = vmax.f32 %v1583, %v1683
      %v1824 = vmax.f32 %v1584, %v1680
      %v1825 = vmax.f32 %v1585, %v1681
      %v1826 = vmax.f32 %v1586, %v1678
      %v1827 = vmax.f32 %v1587, %v1679
      %v1828 = vmax.f32 %v1588, %v1676
      %v1829 = vmax.f32 %v1589, %v1677
      %v1830 = vmax.f32 %v1590, %v1674
      %v1831 = vmax.f32 %v1591, %v1675
      %v1832 = vmax.f32 %v1592, %v1752
      %v1833 = vmax.f32 %v1593, %v1753
      %1834 = vrot.lane.b32.xlu0 %v1754, 122
      %v1835 = vpop.permute.xlu0 %1834
      %1836 = vrot.lane.b32.xlu0 %v1756, 122
      %v1837 = vpop.permute.xlu0 %1836
      %1838 = vrot.lane.b32.xlu0 %v1758, 122
      %v1839 = vpop.permute.xlu0 %1838
      %1840 = vrot.lane.b32.xlu0 %v1760, 122
      %v1841 = vpop.permute.xlu0 %1840
      %1842 = vrot.lane.b32.xlu0 %v1762, 122
      %v1843 = vpop.permute.xlu0 %1842
      %1844 = vrot.lane.b32.xlu0 %v1764, 122
      %v1845 = vpop.permute.xlu0 %1844
      %1846 = vrot.lane.b32.xlu0 %v1766, 122
      %v1847 = vpop.permute.xlu0 %1846
      %1848 = vrot.lane.b32.xlu0 %v1768, 122
      %v1849 = vpop.permute.xlu0 %1848
      %1850 = vrot.lane.b32.xlu0 %v1770, 122
      %v1851 = vpop.permute.xlu0 %1850
      %1852 = vrot.lane.b32.xlu0 %v1772, 122
      %v1853 = vpop.permute.xlu0 %1852
      %1854 = vrot.lane.b32.xlu0 %v1774, 122
      %v1855 = vpop.permute.xlu0 %1854
      %1856 = vrot.lane.b32.xlu0 %v1776, 122
      %v1857 = vpop.permute.xlu0 %1856
      %1858 = vrot.lane.b32.xlu0 %v1778, 122
      %v1859 = vpop.permute.xlu0 %1858
      %1860 = vrot.lane.b32.xlu0 %v1780, 122
      %v1861 = vpop.permute.xlu0 %1860
      %1862 = vrot.lane.b32.xlu0 %v1782, 122
      %v1863 = vpop.permute.xlu0 %1862
      %1864 = vrot.lane.b32.xlu0 %v1784, 122
      %v1865 = vpop.permute.xlu0 %1864
      %1866 = vrot.lane.b32.xlu0 %v1786, 122
      %v1867 = vpop.permute.xlu0 %1866
      %1868 = vrot.lane.b32.xlu0 %v1788, 122
      %v1869 = vpop.permute.xlu0 %1868
      %1870 = vrot.lane.b32.xlu0 %v1790, 122
      %v1871 = vpop.permute.xlu0 %1870
      %1872 = vrot.lane.b32.xlu0 %v1792, 122
      %v1873 = vpop.permute.xlu0 %1872
      %1874 = vrot.lane.b32.xlu0 %v1794, 122
      %v1875 = vpop.permute.xlu0 %1874
      %1876 = vrot.lane.b32.xlu0 %v1796, 122
      %v1877 = vpop.permute.xlu0 %1876
      %1878 = vrot.lane.b32.xlu0 %v1798, 122
      %v1879 = vpop.permute.xlu0 %1878
      %1880 = vrot.lane.b32.xlu0 %v1800, 122
      %v1881 = vpop.permute.xlu0 %1880
      %1882 = vrot.lane.b32.xlu0 %v1802, 122
      %v1883 = vpop.permute.xlu0 %1882
      %1884 = vrot.lane.b32.xlu0 %v1804, 122
      %v1885 = vpop.permute.xlu0 %1884
      %1886 = vrot.lane.b32.xlu0 %v1806, 122
      %v1887 = vpop.permute.xlu0 %1886
      %1888 = vrot.lane.b32.xlu0 %v1808, 122
      %v1889 = vpop.permute.xlu0 %1888
      %1890 = vrot.lane.b32.xlu0 %v1810, 122
      %v1891 = vpop.permute.xlu0 %1890
      %1892 = vrot.lane.b32.xlu0 %v1812, 122
      %v1893 = vpop.permute.xlu0 %1892
      %1894 = vrot.lane.b32.xlu0 %v1814, 122
      %v1895 = vpop.permute.xlu0 %1894
      %1896 = vrot.lane.b32.xlu0 %v1816, 122
      %v1897 = vpop.permute.xlu0 %1896
      %1898 = vrot.lane.b32.xlu0 %v1818, 122
      %v1899 = vpop.permute.xlu0 %1898
      %1900 = vrot.lane.b32.xlu0 %v1820, 122
      %v1901 = vpop.permute.xlu0 %1900
      %1902 = vrot.lane.b32.xlu0 %v1822, 122
      %v1903 = vpop.permute.xlu0 %1902
      %1904 = vrot.lane.b32.xlu0 %v1824, 122
      %v1905 = vpop.permute.xlu0 %1904
      %1906 = vrot.lane.b32.xlu0 %v1826, 122
      %v1907 = vpop.permute.xlu0 %1906
      %1908 = vrot.lane.b32.xlu0 %v1828, 122
      %v1909 = vpop.permute.xlu0 %1908
      %1910 = vrot.lane.b32.xlu0 %v1830, 122
      %v1911 = vpop.permute.xlu0 %1910
      %1912 = vrot.lane.b32.xlu0 %v1832, 122
      %v1913 = vpop.permute.xlu0 %1912
      %1914 = vrot.lane.b32.xlu0 %v1755, 122
      %v1915 = vpop.permute.xlu0 %1914
      %1916 = vrot.lane.b32.xlu0 %v1757, 122
      %v1917 = vpop.permute.xlu0 %1916
      %1918 = vrot.lane.b32.xlu0 %v1759, 122
      %v1919 = vpop.permute.xlu0 %1918
      %1920 = vrot.lane.b32.xlu0 %v1761, 122
      %v1921 = vpop.permute.xlu0 %1920
      %1922 = vrot.lane.b32.xlu0 %v1763, 122
      %v1923 = vpop.permute.xlu0 %1922
      %1924 = vrot.lane.b32.xlu0 %v1765, 122
      %v1925 = vpop.permute.xlu0 %1924
      %1926 = vrot.lane.b32.xlu0 %v1767, 122
      %v1927 = vpop.permute.xlu0 %1926
      %1928 = vrot.lane.b32.xlu0 %v1769, 122
      %v1929 = vpop.permute.xlu0 %1928
      %1930 = vrot.lane.b32.xlu0 %v1771, 122
      %v1931 = vpop.permute.xlu0 %1930
      %1932 = vrot.lane.b32.xlu0 %v1773, 122
      %v1933 = vpop.permute.xlu0 %1932
      %1934 = vrot.lane.b32.xlu0 %v1775, 122
      %v1935 = vpop.permute.xlu0 %1934
      %1936 = vrot.lane.b32.xlu0 %v1777, 122
      %v1937 = vpop.permute.xlu0 %1936
      %1938 = vrot.lane.b32.xlu0 %v1779, 122
      %v1939 = vpop.permute.xlu0 %1938
      %1940 = vrot.lane.b32.xlu0 %v1781, 122
      %v1941 = vpop.permute.xlu0 %1940
      %1942 = vrot.lane.b32.xlu0 %v1783, 122
      %v1943 = vpop.permute.xlu0 %1942
      %1944 = vrot.lane.b32.xlu0 %v1785, 122
      %v1945 = vpop.permute.xlu0 %1944
      %1946 = vrot.lane.b32.xlu0 %v1787, 122
      %v1947 = vpop.permute.xlu0 %1946
      %1948 = vrot.lane.b32.xlu0 %v1789, 122
      %v1949 = vpop.permute.xlu0 %1948
      %1950 = vrot.lane.b32.xlu0 %v1791, 122
      %v1951 = vpop.permute.xlu0 %1950
      %1952 = vrot.lane.b32.xlu0 %v1793, 122
      %v1953 = vpop.permute.xlu0 %1952
      %1954 = vrot.lane.b32.xlu0 %v1795, 122
      %v1955 = vpop.permute.xlu0 %1954
      %1956 = vrot.lane.b32.xlu0 %v1797, 122
      %v1957 = vpop.permute.xlu0 %1956
      %1958 = vrot.lane.b32.xlu0 %v1799, 122
      %v1959 = vpop.permute.xlu0 %1958
      %1960 = vrot.lane.b32.xlu0 %v1801, 122
      %v1961 = vpop.permute.xlu0 %1960
      %1962 = vrot.lane.b32.xlu0 %v1803, 122
      %v1963 = vpop.permute.xlu0 %1962
      %1964 = vrot.lane.b32.xlu0 %v1805, 122
      %v1965 = vpop.permute.xlu0 %1964
      %1966 = vrot.lane.b32.xlu0 %v1807, 122
      %v1967 = vpop.permute.xlu0 %1966
      %1968 = vrot.lane.b32.xlu0 %v1809, 122
      %v1969 = vpop.permute.xlu0 %1968
      %1970 = vrot.lane.b32.xlu0 %v1811, 122
      %v1971 = vpop.permute.xlu0 %1970
      %1972 = vrot.lane.b32.xlu0 %v1813, 122
      %v1973 = vpop.permute.xlu0 %1972
      %1974 = vrot.lane.b32.xlu0 %v1815, 122
      %v1975 = vpop.permute.xlu0 %1974
      %1976 = vrot.lane.b32.xlu0 %v1817, 122
      %v1977 = vpop.permute.xlu0 %1976
      %1978 = vrot.lane.b32.xlu0 %v1819, 122
      %v1979 = vpop.permute.xlu0 %1978
      %1980 = vrot.lane.b32.xlu0 %v1821, 122
      %v1981 = vpop.permute.xlu0 %1980
      %1982 = vrot.lane.b32.xlu0 %v1823, 122
      %v1983 = vpop.permute.xlu0 %1982
      %1984 = vrot.lane.b32.xlu0 %v1825, 122
      %v1985 = vpop.permute.xlu0 %1984
      %1986 = vrot.lane.b32.xlu0 %v1827, 122
      %v1987 = vpop.permute.xlu0 %1986
      %1988 = vrot.lane.b32.xlu0 %v1829, 122
      %v1989 = vpop.permute.xlu0 %1988
      %1990 = vrot.lane.b32.xlu0 %v1831, 122
      %v1991 = vpop.permute.xlu0 %1990
      %1992 = vrot.lane.b32.xlu0 %v1833, 122
      %v1993 = vpop.permute.xlu0 %1992
      %v1994 = vlaneseq
      %v1995 = vand.u32 %v1994, 127
      %vm1996 = vcmp.lt.s32.totalorder %v1995, 122
      %v1997 = vsel %vm1996, %v1835, %v1915
      %v1998 = vsel %vm1996, %v1837, %v1917
      %v1999 = vsel %vm1996, %v1839, %v1919
      %v2000 = vsel %vm1996, %v1841, %v1921
      %v2001 = vsel %vm1996, %v1843, %v1923
      %v2002 = vsel %vm1996, %v1845, %v1925
      %v2003 = vsel %vm1996, %v1847, %v1927
      %v2004 = vsel %vm1996, %v1849, %v1929
      %v2005 = vsel %vm1996, %v1851, %v1931
      %v2006 = vsel %vm1996, %v1853, %v1933
      %v2007 = vsel %vm1996, %v1855, %v1935
      %v2008 = vsel %vm1996, %v1857, %v1937
      %v2009 = vsel %vm1996, %v1859, %v1939
      %v2010 = vsel %vm1996, %v1861, %v1941
      %v2011 = vsel %vm1996, %v1863, %v1943
      %v2012 = vsel %vm1996, %v1865, %v1945
      %v2013 = vsel %vm1996, %v1867, %v1947
      %v2014 = vsel %vm1996, %v1869, %v1949
      %v2015 = vsel %vm1996, %v1871, %v1951
      %v2016 = vsel %vm1996, %v1873, %v1953
      %v2017 = vsel %vm1996, %v1875, %v1955
      %v2018 = vsel %vm1996, %v1877, %v1957
      %v2019 = vsel %vm1996, %v1879, %v1959
      %v2020 = vsel %vm1996, %v1881, %v1961
      %v2021 = vsel %vm1996, %v1883, %v1963
      %v2022 = vsel %vm1996, %v1885, %v1965
      %v2023 = vsel %vm1996, %v1887, %v1967
      %v2024 = vsel %vm1996, %v1889, %v1969
      %v2025 = vsel %vm1996, %v1891, %v1971
      %v2026 = vsel %vm1996, %v1893, %v1973
      %v2027 = vsel %vm1996, %v1895, %v1975
      %v2028 = vsel %vm1996, %v1897, %v1977
      %v2029 = vsel %vm1996, %v1899, %v1979
      %v2030 = vsel %vm1996, %v1901, %v1981
      %v2031 = vsel %vm1996, %v1903, %v1983
      %v2032 = vsel %vm1996, %v1905, %v1985
      %v2033 = vsel %vm1996, %v1907, %v1987
      %v2034 = vsel %vm1996, %v1909, %v1989
      %v2035 = vsel %vm1996, %v1911, %v1991
      %v2036 = vsel %vm1996, %v1913, %v1993
      %v2037 = vsel %vm1996, %v1915, %v1835
      %v2038 = vsel %vm1996, %v1917, %v1837
      %v2039 = vsel %vm1996, %v1919, %v1839
      %v2040 = vsel %vm1996, %v1921, %v1841
      %v2041 = vsel %vm1996, %v1923, %v1843
      %v2042 = vsel %vm1996, %v1925, %v1845
      %v2043 = vsel %vm1996, %v1927, %v1847
      %v2044 = vsel %vm1996, %v1929, %v1849
      %v2045 = vsel %vm1996, %v1931, %v1851
      %v2046 = vsel %vm1996, %v1933, %v1853
      %v2047 = vsel %vm1996, %v1935, %v1855
      %v2048 = vsel %vm1996, %v1937, %v1857
      %v2049 = vsel %vm1996, %v1939, %v1859
      %v2050 = vsel %vm1996, %v1941, %v1861
      %v2051 = vsel %vm1996, %v1943, %v1863
      %v2052 = vsel %vm1996, %v1945, %v1865
      %v2053 = vsel %vm1996, %v1947, %v1867
      %v2054 = vsel %vm1996, %v1949, %v1869
      %v2055 = vsel %vm1996, %v1951, %v1871
      %v2056 = vsel %vm1996, %v1953, %v1873
      %v2057 = vsel %vm1996, %v1955, %v1875
      %v2058 = vsel %vm1996, %v1957, %v1877
      %v2059 = vsel %vm1996, %v1959, %v1879
      %v2060 = vsel %vm1996, %v1961, %v1881
      %v2061 = vsel %vm1996, %v1963, %v1883
      %v2062 = vsel %vm1996, %v1965, %v1885
      %v2063 = vsel %vm1996, %v1967, %v1887
      %v2064 = vsel %vm1996, %v1969, %v1889
      %v2065 = vsel %vm1996, %v1971, %v1891
      %v2066 = vsel %vm1996, %v1973, %v1893
      %v2067 = vsel %vm1996, %v1975, %v1895
      %v2068 = vsel %vm1996, %v1977, %v1897
      %v2069 = vsel %vm1996, %v1979, %v1899
      %v2070 = vsel %vm1996, %v1981, %v1901
      %v2071 = vsel %vm1996, %v1983, %v1903
      %v2072 = vsel %vm1996, %v1985, %v1905
      %v2073 = vsel %vm1996, %v1987, %v1907
      %v2074 = vsel %vm1996, %v1989, %v1909
      %v2075 = vsel %vm1996, %v1991, %v1911
      %v2076 = vsel %vm1996, %v1993, %v1913
      %v2077 = vmax.f32 %v1754, %v1997
      %v2078 = vmax.f32 %v1755, %v2037
      %v2079 = vmax.f32 %v1756, %v1998
      %v2080 = vmax.f32 %v1757, %v2038
      %v2081 = vmax.f32 %v1758, %v1999
      %v2082 = vmax.f32 %v1759, %v2039
      %v2083 = vmax.f32 %v1760, %v2000
      %v2084 = vmax.f32 %v1761, %v2040
      %v2085 = vmax.f32 %v1762, %v2001
      %v2086 = vmax.f32 %v1763, %v2041
      %v2087 = vmax.f32 %v1764, %v2002
      %v2088 = vmax.f32 %v1765, %v2042
      %v2089 = vmax.f32 %v1766, %v2003
      %v2090 = vmax.f32 %v1767, %v2043
      %v2091 = vmax.f32 %v1768, %v2004
      %v2092 = vmax.f32 %v1769, %v2044
      %v2093 = vmax.f32 %v1770, %v2005
      %v2094 = vmax.f32 %v1771, %v2045
      %v2095 = vmax.f32 %v1772, %v2006
      %v2096 = vmax.f32 %v1773, %v2046
      %v2097 = vmax.f32 %v1774, %v2007
      %v2098 = vmax.f32 %v1775, %v2047
      %v2099 = vmax.f32 %v1776, %v2008
      %v2100 = vmax.f32 %v1777, %v2048
      %v2101 = vmax.f32 %v1778, %v2009
      %v2102 = vmax.f32 %v1779, %v2049
      %v2103 = vmax.f32 %v1780, %v2010
      %v2104 = vmax.f32 %v1781, %v2050
      %v2105 = vmax.f32 %v1782, %v2011
      %v2106 = vmax.f32 %v1783, %v2051
      %v2107 = vmax.f32 %v1784, %v2012
      %v2108 = vmax.f32 %v1785, %v2052
      %v2109 = vmax.f32 %v1786, %v2013
      %v2110 = vmax.f32 %v1787, %v2053
      %v2111 = vmax.f32 %v1788, %v2014
      %v2112 = vmax.f32 %v1789, %v2054
      %v2113 = vmax.f32 %v1790, %v2015
      %v2114 = vmax.f32 %v1791, %v2055
      %v2115 = vmax.f32 %v1792, %v2016
      %v2116 = vmax.f32 %v1793, %v2056
      %v2117 = vmax.f32 %v1794, %v2017
      %v2118 = vmax.f32 %v1795, %v2057
      %v2119 = vmax.f32 %v1796, %v2018
      %v2120 = vmax.f32 %v1797, %v2058
      %v2121 = vmax.f32 %v1798, %v2019
      %v2122 = vmax.f32 %v1799, %v2059
      %v2123 = vmax.f32 %v1800, %v2020
      %v2124 = vmax.f32 %v1801, %v2060
      %v2125 = vmax.f32 %v1802, %v2021
      %v2126 = vmax.f32 %v1803, %v2061
      %v2127 = vmax.f32 %v1804, %v2022
      %v2128 = vmax.f32 %v1805, %v2062
      %v2129 = vmax.f32 %v1806, %v2023
      %v2130 = vmax.f32 %v1807, %v2063
      %v2131 = vmax.f32 %v1808, %v2024
      %v2132 = vmax.f32 %v1809, %v2064
      %v2133 = vmax.f32 %v1810, %v2025
      %v2134 = vmax.f32 %v1811, %v2065
      %v2135 = vmax.f32 %v1812, %v2026
      %v2136 = vmax.f32 %v1813, %v2066
      %v2137 = vmax.f32 %v1814, %v2027
      %v2138 = vmax.f32 %v1815, %v2067
      %v2139 = vmax.f32 %v1816, %v2028
      %v2140 = vmax.f32 %v1817, %v2068
      %v2141 = vmax.f32 %v1818, %v2029
      %v2142 = vmax.f32 %v1819, %v2069
      %v2143 = vmax.f32 %v1820, %v2030
      %v2144 = vmax.f32 %v1821, %v2070
      %v2145 = vmax.f32 %v1822, %v2031
      %v2146 = vmax.f32 %v1823, %v2071
      %v2147 = vmax.f32 %v1824, %v2032
      %v2148 = vmax.f32 %v1825, %v2072
      %v2149 = vmax.f32 %v1826, %v2033
      %v2150 = vmax.f32 %v1827, %v2073
      %v2151 = vmax.f32 %v1828, %v2034
      %v2152 = vmax.f32 %v1829, %v2074
      %v2153 = vmax.f32 %v1830, %v2035
      %v2154 = vmax.f32 %v1831, %v2075
      %v2155 = vmax.f32 %v1832, %v2036
      %v2156 = vmax.f32 %v1833, %v2076
      %v2157 = vld [vmem:[%s3] sm:$0xff]
      %v2158 = vld [vmem:[%s3 + $0x8] sm:$0xff]
      %v2159 = vld [vmem:[%s3 + $0x10] sm:$0xff]
      %v2160 = vld [vmem:[%s3 + $0x18] sm:$0xff]
      %v2161 = vld [vmem:[%s3 + $0x20] sm:$0xff]
      %v2162 = vld [vmem:[%s3 + $0x28] sm:$0xff]
      %v2163 = vld [vmem:[%s3 + $0x30] sm:$0xff]
      %v2164 = vld [vmem:[%s3 + $0x38] sm:$0xff]
      %v2165 = vld [vmem:[%s3 + $0x40] sm:$0xff]
      %v2166 = vld [vmem:[%s3 + $0x48] sm:$0xff]
      %v2167 = vld [vmem:[%s3 + $0x50] sm:$0xff]
      %v2168 = vld [vmem:[%s3 + $0x58] sm:$0xff]
      %v2169 = vld [vmem:[%s3 + $0x60] sm:$0xff]
      %v2170 = vld [vmem:[%s3 + $0x68] sm:$0xff]
      %v2171 = vld [vmem:[%s3 + $0x70] sm:$0xff]
      %v2172 = vld [vmem:[%s3 + $0x78] sm:$0xff]
      %v2173 = vld [vmem:[%s3 + $0x80] sm:$0xff]
      %v2174 = vld [vmem:[%s3 + $0x88] sm:$0xff]
      %v2175 = vld [vmem:[%s3 + $0x90] sm:$0xff]
      %v2176 = vld [vmem:[%s3 + $0x98] sm:$0xff]
      %v2177 = vld [vmem:[%s3 + $0xa0] sm:$0xff]
      %v2178 = vld [vmem:[%s3 + $0xa8] sm:$0xff]
      %v2179 = vld [vmem:[%s3 + $0xb0] sm:$0xff]
      %v2180 = vld [vmem:[%s3 + $0xb8] sm:$0xff]
      %v2181 = vld [vmem:[%s3 + $0xc0] sm:$0xff]
      %v2182 = vld [vmem:[%s3 + $0xc8] sm:$0xff]
      %v2183 = vld [vmem:[%s3 + $0xd0] sm:$0xff]
      %v2184 = vld [vmem:[%s3 + $0xd8] sm:$0xff]
      %v2185 = vld [vmem:[%s3 + $0xe0] sm:$0xff]
      %v2186 = vld [vmem:[%s3 + $0xe8] sm:$0xff]
      %v2187 = vld [vmem:[%s3 + $0xf0] sm:$0xff]
      %v2188 = vld [vmem:[%s3 + $0xf8] sm:$0xff]
      %v2189 = vld [vmem:[%s3 + $0x100] sm:$0xff]
      %v2190 = vld [vmem:[%s3 + $0x108] sm:$0xff]
      %v2191 = vld [vmem:[%s3 + $0x110] sm:$0xff]
      %v2192 = vld [vmem:[%s3 + $0x118] sm:$0xff]
      %v2193 = vld [vmem:[%s3 + $0x120] sm:$0xff]
      %v2194 = vld [vmem:[%s3 + $0x128] sm:$0xff]
      %v2195 = vld [vmem:[%s3 + $0x130] sm:$0xff]
      %v2196 = vld [vmem:[%s3 + $0x138] sm:$0xff]
      %v2197 = vld [vmem:[%s3 + $0x140] sm:$0xff]
      %v2198 = vld [vmem:[%s3 + $0x148] sm:$0xff]
      %v2199 = vld [vmem:[%s3 + $0x150] sm:$0xff]
      %v2200 = vld [vmem:[%s3 + $0x158] sm:$0xff]
      %v2201 = vld [vmem:[%s3 + $0x160] sm:$0xff]
      %v2202 = vld [vmem:[%s3 + $0x168] sm:$0xff]
      %v2203 = vld [vmem:[%s3 + $0x170] sm:$0xff]
      %v2204 = vld [vmem:[%s3 + $0x178] sm:$0xff]
      %v2205 = vld [vmem:[%s3 + $0x180] sm:$0xff]
      %v2206 = vld [vmem:[%s3 + $0x188] sm:$0xff]
      %v2207 = vld [vmem:[%s3 + $0x190] sm:$0xff]
      %v2208 = vld [vmem:[%s3 + $0x198] sm:$0xff]
      %v2209 = vld [vmem:[%s3 + $0x1a0] sm:$0xff]
      %v2210 = vld [vmem:[%s3 + $0x1a8] sm:$0xff]
      %v2211 = vld [vmem:[%s3 + $0x1b0] sm:$0xff]
      %v2212 = vld [vmem:[%s3 + $0x1b8] sm:$0xff]
      %v2213 = vld [vmem:[%s3 + $0x1c0] sm:$0xff]
      %v2214 = vld [vmem:[%s3 + $0x1c8] sm:$0xff]
      %v2215 = vld [vmem:[%s3 + $0x1d0] sm:$0xff]
      %v2216 = vld [vmem:[%s3 + $0x1d8] sm:$0xff]
      %v2217 = vld [vmem:[%s3 + $0x1e0] sm:$0xff]
      %v2218 = vld [vmem:[%s3 + $0x1e8] sm:$0xff]
      %v2219 = vld [vmem:[%s3 + $0x1f0] sm:$0xff]
      %v2220 = vld [vmem:[%s3 + $0x1f8] sm:$0xff]
      %v2221 = vrot.slane %v2077, 2
      %v2222 = vrot.slane %v2078, 2
      %v2223 = vrot.slane %v2079, 2
      %v2224 = vrot.slane %v2080, 2
      %v2225 = vrot.slane %v2081, 2
      %v2226 = vrot.slane %v2082, 2
      %v2227 = vrot.slane %v2083, 2
      %v2228 = vrot.slane %v2084, 2
      %v2229 = vrot.slane %v2085, 2
      %v2230 = vrot.slane %v2086, 2
      %v2231 = vrot.slane %v2087, 2
      %v2232 = vrot.slane %v2088, 2
      %v2233 = vrot.slane %v2089, 2
      %v2234 = vrot.slane %v2090, 2
      %v2235 = vrot.slane %v2091, 2
      %v2236 = vrot.slane %v2092, 2
      %v2237 = vrot.slane %v2093, 2
      %v2238 = vrot.slane %v2094, 2
      %v2239 = vrot.slane %v2095, 2
      %v2240 = vrot.slane %v2096, 2
      %v2241 = vrot.slane %v2097, 2
      %v2242 = vrot.slane %v2098, 2
      %v2243 = vrot.slane %v2099, 2
      %v2244 = vrot.slane %v2100, 2
      %v2245 = vrot.slane %v2101, 2
      %v2246 = vrot.slane %v2102, 2
      %v2247 = vrot.slane %v2103, 2
      %v2248 = vrot.slane %v2104, 2
      %v2249 = vrot.slane %v2105, 2
      %v2250 = vrot.slane %v2106, 2
      %v2251 = vrot.slane %v2107, 2
      %v2252 = vrot.slane %v2108, 2
      %v2253 = vrot.slane %v2109, 2
      %v2254 = vrot.slane %v2110, 2
      %v2255 = vrot.slane %v2111, 2
      %v2256 = vrot.slane %v2112, 2
      %v2257 = vrot.slane %v2113, 2
      %v2258 = vrot.slane %v2114, 2
      %v2259 = vrot.slane %v2115, 2
      %v2260 = vrot.slane %v2116, 2
      %v2261 = vrot.slane %v2117, 2
      %v2262 = vrot.slane %v2118, 2
      %v2263 = vrot.slane %v2119, 2
      %v2264 = vrot.slane %v2120, 2
      %v2265 = vrot.slane %v2121, 2
      %v2266 = vrot.slane %v2122, 2
      %v2267 = vrot.slane %v2123, 2
      %v2268 = vrot.slane %v2124, 2
      %v2269 = vrot.slane %v2125, 2
      %v2270 = vrot.slane %v2126, 2
      %v2271 = vrot.slane %v2127, 2
      %v2272 = vrot.slane %v2128, 2
      %v2273 = vrot.slane %v2129, 2
      %v2274 = vrot.slane %v2130, 2
      %v2275 = vrot.slane %v2131, 2
      %v2276 = vrot.slane %v2132, 2
      %v2277 = vrot.slane %v2133, 2
      %v2278 = vrot.slane %v2134, 2
      %v2279 = vrot.slane %v2135, 2
      %v2280 = vrot.slane %v2136, 2
      %v2281 = vrot.slane %v2137, 2
      %v2282 = vrot.slane %v2138, 2
      %v2283 = vrot.slane %v2139, 2
      %v2284 = vrot.slane %v2140, 2
      %v2285 = vrot.slane %v2141, 2
      %v2286 = vrot.slane %v2142, 2
      %v2287 = vrot.slane %v2143, 2
      %v2288 = vrot.slane %v2144, 2
      %v2289 = vrot.slane %v2145, 2
      %v2290 = vrot.slane %v2146, 2
      %v2291 = vrot.slane %v2147, 2
      %v2292 = vrot.slane %v2148, 2
      %v2293 = vrot.slane %v2149, 2
      %v2294 = vrot.slane %v2150, 2
      %v2295 = vrot.slane %v2151, 2
      %v2296 = vrot.slane %v2152, 2
      %v2297 = vrot.slane %v2153, 2
      %v2298 = vrot.slane %v2154, 2
      %v2299 = vrot.slane %v2155, 2
      %v2300 = vrot.slane %v2156, 2
      %vm2301 = vcmp.lt.s32.totalorder %v498, 6
      %v2302 = vsel %vm2301, %v2297, %v2299
      %v2303 = vsel %vm2301, %v2298, %v2300
      %v2304 = vsel %vm2301, %v2295, %v2297
      %v2305 = vsel %vm2301, %v2296, %v2298
      %v2306 = vsel %vm2301, %v2293, %v2295
      %v2307 = vsel %vm2301, %v2294, %v2296
      %v2308 = vsel %vm2301, %v2291, %v2293
      %v2309 = vsel %vm2301, %v2292, %v2294
      %v2310 = vsel %vm2301, %v2289, %v2291
      %v2311 = vsel %vm2301, %v2290, %v2292
      %v2312 = vsel %vm2301, %v2287, %v2289
      %v2313 = vsel %vm2301, %v2288, %v2290
      %v2314 = vsel %vm2301, %v2285, %v2287
      %v2315 = vsel %vm2301, %v2286, %v2288
      %v2316 = vsel %vm2301, %v2283, %v2285
      %v2317 = vsel %vm2301, %v2284, %v2286
      %v2318 = vsel %vm2301, %v2281, %v2283
      %v2319 = vsel %vm2301, %v2282, %v2284
      %v2320 = vsel %vm2301, %v2279, %v2281
      %v2321 = vsel %vm2301, %v2280, %v2282
      %v2322 = vsel %vm2301, %v2277, %v2279
      %v2323 = vsel %vm2301, %v2278, %v2280
      %v2324 = vsel %vm2301, %v2275, %v2277
      %v2325 = vsel %vm2301, %v2276, %v2278
      %v2326 = vsel %vm2301, %v2273, %v2275
      %v2327 = vsel %vm2301, %v2274, %v2276
      %v2328 = vsel %vm2301, %v2271, %v2273
      %v2329 = vsel %vm2301, %v2272, %v2274
      %v2330 = vsel %vm2301, %v2269, %v2271
      %v2331 = vsel %vm2301, %v2270, %v2272
      %v2332 = vsel %vm2301, %v2267, %v2269
      %v2333 = vsel %vm2301, %v2268, %v2270
      %v2334 = vsel %vm2301, %v2265, %v2267
      %v2335 = vsel %vm2301, %v2266, %v2268
      %v2336 = vsel %vm2301, %v2263, %v2265
      %v2337 = vsel %vm2301, %v2264, %v2266
      %v2338 = vsel %vm2301, %v2261, %v2263
      %v2339 = vsel %vm2301, %v2262, %v2264
      %v2340 = vsel %vm2301, %v2259, %v2261
      %v2341 = vsel %vm2301, %v2260, %v2262
      %v2342 = vsel %vm2301, %v2257, %v2259
      %v2343 = vsel %vm2301, %v2258, %v2260
      %v2344 = vsel %vm2301, %v2255, %v2257
      %v2345 = vsel %vm2301, %v2256, %v2258
      %v2346 = vsel %vm2301, %v2253, %v2255
      %v2347 = vsel %vm2301, %v2254, %v2256
      %v2348 = vsel %vm2301, %v2251, %v2253
      %v2349 = vsel %vm2301, %v2252, %v2254
      %v2350 = vsel %vm2301, %v2249, %v2251
      %v2351 = vsel %vm2301, %v2250, %v2252
      %v2352 = vsel %vm2301, %v2247, %v2249
      %v2353 = vsel %vm2301, %v2248, %v2250
      %v2354 = vsel %vm2301, %v2245, %v2247
      %v2355 = vsel %vm2301, %v2246, %v2248
      %v2356 = vsel %vm2301, %v2243, %v2245
      %v2357 = vsel %vm2301, %v2244, %v2246
      %v2358 = vsel %vm2301, %v2241, %v2243
      %v2359 = vsel %vm2301, %v2242, %v2244
      %v2360 = vsel %vm2301, %v2239, %v2241
      %v2361 = vsel %vm2301, %v2240, %v2242
      %v2362 = vsel %vm2301, %v2237, %v2239
      %v2363 = vsel %vm2301, %v2238, %v2240
      %v2364 = vsel %vm2301, %v2235, %v2237
      %v2365 = vsel %vm2301, %v2236, %v2238
      %v2366 = vsel %vm2301, %v2233, %v2235
      %v2367 = vsel %vm2301, %v2234, %v2236
      %v2368 = vsel %vm2301, %v2231, %v2233
      %v2369 = vsel %vm2301, %v2232, %v2234
      %v2370 = vsel %vm2301, %v2229, %v2231
      %v2371 = vsel %vm2301, %v2230, %v2232
      %v2372 = vsel %vm2301, %v2227, %v2229
      %v2373 = vsel %vm2301, %v2228, %v2230
      %v2374 = vsel %vm2301, %v2225, %v2227
      %v2375 = vsel %vm2301, %v2226, %v2228
      %v2376 = vsel %vm2301, %v2223, %v2225
      %v2377 = vsel %vm2301, %v2224, %v2226
      %v2378 = vsel %vm2301, %v2221, %v2223
      %v2379 = vsel %vm2301, %v2222, %v2224
      %v2380 = vsel %vm2301, %v2299, %v2221
      %v2381 = vsel %vm2301, %v2300, %v2222
      %s2382 = scalar_lea.vmem %s3, 512
      %v2383 = vld [vmem:[%s2382] sm:$0xff]
      %v2384 = vld [vmem:[%s2382 + $0x8] sm:$0xff]
      %v2385 = vld [vmem:[%s2382 + $0x10] sm:$0xff]
      %v2386 = vld [vmem:[%s2382 + $0x18] sm:$0xff]
      %v2387 = vld [vmem:[%s2382 + $0x20] sm:$0xff]
      %v2388 = vld [vmem:[%s2382 + $0x28] sm:$0xff]
      %v2389 = vld [vmem:[%s2382 + $0x30] sm:$0xff]
      %v2390 = vld [vmem:[%s2382 + $0x38] sm:$0xff]
      %v2391 = vld [vmem:[%s2382 + $0x40] sm:$0xff]
      %v2392 = vld [vmem:[%s2382 + $0x48] sm:$0xff]
      %v2393 = vld [vmem:[%s2382 + $0x50] sm:$0xff]
      %v2394 = vld [vmem:[%s2382 + $0x58] sm:$0xff]
      %v2395 = vld [vmem:[%s2382 + $0x60] sm:$0xff]
      %v2396 = vld [vmem:[%s2382 + $0x68] sm:$0xff]
      %v2397 = vld [vmem:[%s2382 + $0x70] sm:$0xff]
      %v2398 = vld [vmem:[%s2382 + $0x78] sm:$0xff]
      %v2399 = vld [vmem:[%s2382 + $0x80] sm:$0xff]
      %v2400 = vld [vmem:[%s2382 + $0x88] sm:$0xff]
      %v2401 = vld [vmem:[%s2382 + $0x90] sm:$0xff]
      %v2402 = vld [vmem:[%s2382 + $0x98] sm:$0xff]
      %v2403 = vld [vmem:[%s2382 + $0xa0] sm:$0xff]
      %v2404 = vld [vmem:[%s2382 + $0xa8] sm:$0xff]
      %v2405 = vld [vmem:[%s2382 + $0xb0] sm:$0xff]
      %v2406 = vld [vmem:[%s2382 + $0xb8] sm:$0xff]
      %v2407 = vld [vmem:[%s2382 + $0xc0] sm:$0xff]
      %v2408 = vld [vmem:[%s2382 + $0xc8] sm:$0xff]
      %v2409 = vld [vmem:[%s2382 + $0xd0] sm:$0xff]
      %v2410 = vld [vmem:[%s2382 + $0xd8] sm:$0xff]
      %v2411 = vld [vmem:[%s2382 + $0xe0] sm:$0xff]
      %v2412 = vld [vmem:[%s2382 + $0xe8] sm:$0xff]
      %v2413 = vld [vmem:[%s2382 + $0xf0] sm:$0xff]
      %v2414 = vld [vmem:[%s2382 + $0xf8] sm:$0xff]
      %v2415 = vld [vmem:[%s2382 + $0x100] sm:$0xff]
      %v2416 = vld [vmem:[%s2382 + $0x108] sm:$0xff]
      %v2417 = vld [vmem:[%s2382 + $0x110] sm:$0xff]
      %v2418 = vld [vmem:[%s2382 + $0x118] sm:$0xff]
      %v2419 = vld [vmem:[%s2382 + $0x120] sm:$0xff]
      %v2420 = vld [vmem:[%s2382 + $0x128] sm:$0xff]
      %v2421 = vld [vmem:[%s2382 + $0x130] sm:$0xff]
      %v2422 = vld [vmem:[%s2382 + $0x138] sm:$0xff]
      %v2423 = vld [vmem:[%s2382 + $0x140] sm:$0xff]
      %v2424 = vld [vmem:[%s2382 + $0x148] sm:$0xff]
      %v2425 = vld [vmem:[%s2382 + $0x150] sm:$0xff]
      %v2426 = vld [vmem:[%s2382 + $0x158] sm:$0xff]
      %v2427 = vld [vmem:[%s2382 + $0x160] sm:$0xff]
      %v2428 = vld [vmem:[%s2382 + $0x168] sm:$0xff]
      %v2429 = vld [vmem:[%s2382 + $0x170] sm:$0xff]
      %v2430 = vld [vmem:[%s2382 + $0x178] sm:$0xff]
      %v2431 = vld [vmem:[%s2382 + $0x180] sm:$0xff]
      %v2432 = vld [vmem:[%s2382 + $0x188] sm:$0xff]
      %v2433 = vld [vmem:[%s2382 + $0x190] sm:$0xff]
      %v2434 = vld [vmem:[%s2382 + $0x198] sm:$0xff]
      %v2435 = vld [vmem:[%s2382 + $0x1a0] sm:$0xff]
      %v2436 = vld [vmem:[%s2382 + $0x1a8] sm:$0xff]
      %v2437 = vld [vmem:[%s2382 + $0x1b0] sm:$0xff]
      %v2438 = vld [vmem:[%s2382 + $0x1b8] sm:$0xff]
      %v2439 = vld [vmem:[%s2382 + $0x1c0] sm:$0xff]
      %v2440 = vld [vmem:[%s2382 + $0x1c8] sm:$0xff]
      %v2441 = vld [vmem:[%s2382 + $0x1d0] sm:$0xff]
      %v2442 = vld [vmem:[%s2382 + $0x1d8] sm:$0xff]
      %v2443 = vld [vmem:[%s2382 + $0x1e0] sm:$0xff]
      %v2444 = vld [vmem:[%s2382 + $0x1e8] sm:$0xff]
      %v2445 = vld [vmem:[%s2382 + $0x1f0] sm:$0xff]
      %v2446 = vld [vmem:[%s2382 + $0x1f8] sm:$0xff]
      %2447 = vmatprep.subr.mxu0 %v2384
      %2448 = vmatpush1.msra.mxu0 %v2383
      %2449 = vmatprep.subr.mxu0 %v2386
      %2450 = vmatpush1.msra.mxu0 %v2385
      %2451 = vmatprep.subr.mxu0 %v2388
      %2452 = vmatpush1.msra.mxu0 %v2387
      %2453 = vmatprep.subr.mxu0 %v2390
      %2454 = vmatpush1.msra.mxu0 %v2389
      %2455 = vmatprep.subr.mxu0 %v2392
      %2456 = vmatpush1.msra.mxu0 %v2391
      %2457 = vmatprep.subr.mxu0 %v2394
      %2458 = vmatpush1.msra.mxu0 %v2393
      %2459 = vmatprep.subr.mxu0 %v2396
      %2460 = vmatpush1.msra.mxu0 %v2395
      %2461 = vmatprep.subr.mxu0 %v2398
      %2462 = vmatpush1.msra.mxu0 %v2397
      %2463 = vmatprep.subr.mxu0 %v2400
      %2464 = vmatpush1.msra.mxu0 %v2399
      %2465 = vmatprep.subr.mxu0 %v2402
      %2466 = vmatpush1.msra.mxu0 %v2401
      %2467 = vmatprep.subr.mxu0 %v2404
      %2468 = vmatpush1.msra.mxu0 %v2403
      %2469 = vmatprep.subr.mxu0 %v2406
      %2470 = vmatpush1.msra.mxu0 %v2405
      %2471 = vmatprep.subr.mxu0 %v2408
      %2472 = vmatpush1.msra.mxu0 %v2407
      %2473 = vmatprep.subr.mxu0 %v2410
      %2474 = vmatpush1.msra.mxu0 %v2409
      %2475 = vmatprep.subr.mxu0 %v2412
      %2476 = vmatpush1.msra.mxu0 %v2411
      %2477 = vmatprep.subr.mxu0 %v2414
      %2478 = vmatpush1.msra.mxu0 %v2413
      %2479 = vmatprep.subr.mxu0 %v2416
      %2480 = vmatpush1.msra.mxu0 %v2415
      %2481 = vmatprep.subr.mxu0 %v2418
      %2482 = vmatpush1.msra.mxu0 %v2417
      %2483 = vmatprep.subr.mxu0 %v2420
      %2484 = vmatpush1.msra.mxu0 %v2419
      %2485 = vmatprep.subr.mxu0 %v2422
      %2486 = vmatpush1.msra.mxu0 %v2421
      %2487 = vmatprep.subr.mxu0 %v2424
      %2488 = vmatpush1.msra.mxu0 %v2423
      %2489 = vmatprep.subr.mxu0 %v2426
      %2490 = vmatpush1.msra.mxu0 %v2425
      %2491 = vmatprep.subr.mxu0 %v2428
      %2492 = vmatpush1.msra.mxu0 %v2427
      %2493 = vmatprep.subr.mxu0 %v2430
      %2494 = vmatpush1.msra.mxu0 %v2429
      %2495 = vmatprep.subr.mxu0 %v2432
      %2496 = vmatpush1.msra.mxu0 %v2431
      %2497 = vmatprep.subr.mxu0 %v2434
      %2498 = vmatpush1.msra.mxu0 %v2433
      %2499 = vmatprep.subr.mxu0 %v2436
      %2500 = vmatpush1.msra.mxu0 %v2435
      %2501 = vmatprep.subr.mxu0 %v2438
      %2502 = vmatpush1.msra.mxu0 %v2437
      %2503 = vmatprep.subr.mxu0 %v2440
      %2504 = vmatpush1.msra.mxu0 %v2439
      %2505 = vmatprep.subr.mxu0 %v2442
      %2506 = vmatpush1.msra.mxu0 %v2441
      %2507 = vmatprep.subr.mxu0 %v2444
      %2508 = vmatpush1.msra.mxu0 %v2443
      %2509 = vmatprep.subr.mxu0 %v2446
      %2510 = vmatpush1.msra.mxu0 %v2445
      %2511 = vmatprep.mubr.f32.mxu0 %v2379
      %2512 = vmatmul.mubr.f32.gmra.mrb[0].mxu0 %v2378
      %v2513 = vpop.f32.mrb[0].mxu0
      %v2514 = vadd.f32 0.0, %v2513
      %v2515 = vpop.f32.mrb[0].mxu0
      %v2516 = vadd.f32 0.0, %v2515
      %2517 = vmatprep.mubr.f32.mxu0 %v2377
      %2518 = vmatmul.mubr.f32.gmra.mrb[0].mxu0 %v2376
      %v2519 = vpop.f32.mrb[0].mxu0
      %v2520 = vadd.f32 0.0, %v2519
      %v2521 = vpop.f32.mrb[0].mxu0
      %v2522 = vadd.f32 0.0, %v2521
      %2523 = vmatprep.mubr.f32.mxu0 %v2375
      %2524 = vmatmul.mubr.f32.gmra.mrb[0].mxu0 %v2374
      %v2525 = vpop.f32.mrb[0].mxu0
      %v2526 = vadd.f32 0.0, %v2525
      %v2527 = vpop.f32.mrb[0].mxu0
      %v2528 = vadd.f32 0.0, %v2527
      %2529 = vmatprep.mubr.f32.mxu0 %v2373
      %2530 = vmatmul.mubr.f32.gmra.mrb[0].mxu0 %v2372
      %v2531 = vpop.f32.mrb[0].mxu0
      %v2532 = vadd.f32 0.0, %v2531
      %v2533 = vpop.f32.mrb[0].mxu0
      %v2534 = vadd.f32 0.0, %v2533
      %2535 = vmatprep.mubr.f32.mxu0 %v2371
      %2536 = vmatmul.mubr.f32.gmra.mrb[0].mxu0 %v2370
      %v2537 = vpop.f32.mrb[0].mxu0
      %v2538 = vadd.f32 0.0, %v2537
      %v2539 = vpop.f32.mrb[0].mxu0
      %v2540 = vadd.f32 0.0, %v2539
      %2541 = vmatprep.mubr.f32.mxu0 %v2369
      %2542 = vmatmul.mubr.f32.gmra.mrb[0].mxu0 %v2368
      %v2543 = vpop.f32.mrb[0].mxu0
      %v2544 = vadd.f32 0.0, %v2543
      %v2545 = vpop.f32.mrb[0].mxu0
      %v2546 = vadd.f32 0.0, %v2545
      %2547 = vmatprep.mubr.f32.mxu0 %v2367
      %2548 = vmatmul.mubr.f32.gmra.mrb[0].mxu0 %v2366
      %v2549 = vpop.f32.mrb[0].mxu0
      %v2550 = vadd.f32 0.0, %v2549
      %v2551 = vpop.f32.mrb[0].mxu0
      %v2552 = vadd.f32 0.0, %v2551
      %2553 = vmatprep.mubr.f32.mxu0 %v2365
      %2554 = vmatmul.mubr.f32.gmra.mrb[0].mxu0 %v2364
      %v2555 = vpop.f32.mrb[0].mxu0
      %v2556 = vadd.f32 0.0, %v2555
      %v2557 = vpop.f32.mrb[0].mxu0
      %v2558 = vadd.f32 0.0, %v2557
      %2559 = vmatprep.mubr.f32.mxu0 %v2363
      %2560 = vmatmul.mubr.f32.gmra.mrb[0].mxu0 %v2362
      %v2561 = vpop.f32.mrb[0].mxu0
      %v2562 = vadd.f32 0.0, %v2561
      %v2563 = vpop.f32.mrb[0].mxu0
      %v2564 = vadd.f32 0.0, %v2563
      %2565 = vmatprep.mubr.f32.mxu0 %v2361
      %2566 = vmatmul.mubr.f32.gmra.mrb[0].mxu0 %v2360
      %v2567 = vpop.f32.mrb[0].mxu0
      %v2568 = vadd.f32 0.0, %v2567
      %v2569 = vpop.f32.mrb[0].mxu0
      %v2570 = vadd.f32 0.0, %v2569
      %2571 = vmatprep.mubr.f32.mxu0 %v2359
      %2572 = vmatmul.mubr.f32.gmra.mrb[0].mxu0 %v2358
      %v2573 = vpop.f32.mrb[0].mxu0
      %v2574 = vadd.f32 0.0, %v2573
      %v2575 = vpop.f32.mrb[0].mxu0
      %v2576 = vadd.f32 0.0, %v2575
      %2577 = vmatprep.mubr.f32.mxu0 %v2357
      %2578 = vmatmul.mubr.f32.gmra.mrb[0].mxu0 %v2356
      %v2579 = vpop.f32.mrb[0].mxu0
      %v2580 = vadd.f32 0.0, %v2579
      %v2581 = vpop.f32.mrb[0].mxu0
      %v2582 = vadd.f32 0.0, %v2581
      %2583 = vmatprep.mubr.f32.mxu0 %v2355
      %2584 = vmatmul.mubr.f32.gmra.mrb[0].mxu0 %v2354
      %v2585 = vpop.f32.mrb[0].mxu0
      %v2586 = vadd.f32 0.0, %v2585
      %v2587 = vpop.f32.mrb[0].mxu0
      %v2588 = vadd.f32 0.0, %v2587
      %2589 = vmatprep.mubr.f32.mxu0 %v2353
      %2590 = vmatmul.mubr.f32.gmra.mrb[0].mxu0 %v2352
      %v2591 = vpop.f32.mrb[0].mxu0
      %v2592 = vadd.f32 0.0, %v2591
      %v2593 = vpop.f32.mrb[0].mxu0
      %v2594 = vadd.f32 0.0, %v2593
      %2595 = vmatprep.mubr.f32.mxu0 %v2351
      %2596 = vmatmul.mubr.f32.gmra.mrb[0].mxu0 %v2350
      %v2597 = vpop.f32.mrb[0].mxu0
      %v2598 = vadd.f32 0.0, %v2597
      %v2599 = vpop.f32.mrb[0].mxu0
      %v2600 = vadd.f32 0.0, %v2599
      %2601 = vmatprep.mubr.f32.mxu0 %v2349
      %2602 = vmatmul.mubr.f32.gmra.mrb[0].mxu0 %v2348
      %v2603 = vpop.f32.mrb[0].mxu0
      %v2604 = vadd.f32 0.0, %v2603
      %v2605 = vpop.f32.mrb[0].mxu0
      %v2606 = vadd.f32 0.0, %v2605
      %2607 = vmatprep.mubr.f32.mxu0 %v2347
      %2608 = vmatmul.mubr.f32.gmra.mrb[0].mxu0 %v2346
      %v2609 = vpop.f32.mrb[0].mxu0
      %v2610 = vadd.f32 0.0, %v2609
      %v2611 = vpop.f32.mrb[0].mxu0
      %v2612 = vadd.f32 0.0, %v2611
      %2613 = vmatprep.mubr.f32.mxu0 %v2345
      %2614 = vmatmul.mubr.f32.gmra.mrb[0].mxu0 %v2344
      %v2615 = vpop.f32.mrb[0].mxu0
      %v2616 = vadd.f32 0.0, %v2615
      %v2617 = vpop.f32.mrb[0].mxu0
      %v2618 = vadd.f32 0.0, %v2617
      %2619 = vmatprep.mubr.f32.mxu0 %v2343
      %2620 = vmatmul.mubr.f32.gmra.mrb[0].mxu0 %v2342
      %v2621 = vpop.f32.mrb[0].mxu0
      %v2622 = vadd.f32 0.0, %v2621
      %v2623 = vpop.f32.mrb[0].mxu0
      %v2624 = vadd.f32 0.0, %v2623
      %2625 = vmatprep.mubr.f32.mxu0 %v2341
      %2626 = vmatmul.mubr.f32.gmra.mrb[0].mxu0 %v2340
      %v2627 = vpop.f32.mrb[0].mxu0
      %v2628 = vadd.f32 0.0, %v2627
      %v2629 = vpop.f32.mrb[0].mxu0
      %v2630 = vadd.f32 0.0, %v2629
      %2631 = vmatprep.mubr.f32.mxu0 %v2339
      %2632 = vmatmul.mubr.f32.gmra.mrb[0].mxu0 %v2338
      %v2633 = vpop.f32.mrb[0].mxu0
      %v2634 = vadd.f32 0.0, %v2633
      %v2635 = vpop.f32.mrb[0].mxu0
      %v2636 = vadd.f32 0.0, %v2635
      %2637 = vmatprep.mubr.f32.mxu0 %v2337
      %2638 = vmatmul.mubr.f32.gmra.mrb[0].mxu0 %v2336
      %v2639 = vpop.f32.mrb[0].mxu0
      %v2640 = vadd.f32 0.0, %v2639
      %v2641 = vpop.f32.mrb[0].mxu0
      %v2642 = vadd.f32 0.0, %v2641
      %2643 = vmatprep.mubr.f32.mxu0 %v2335
      %2644 = vmatmul.mubr.f32.gmra.mrb[0].mxu0 %v2334
      %v2645 = vpop.f32.mrb[0].mxu0
      %v2646 = vadd.f32 0.0, %v2645
      %v2647 = vpop.f32.mrb[0].mxu0
      %v2648 = vadd.f32 0.0, %v2647
      %2649 = vmatprep.mubr.f32.mxu0 %v2333
      %2650 = vmatmul.mubr.f32.gmra.mrb[0].mxu0 %v2332
      %v2651 = vpop.f32.mrb[0].mxu0
      %v2652 = vadd.f32 0.0, %v2651
      %v2653 = vpop.f32.mrb[0].mxu0
      %v2654 = vadd.f32 0.0, %v2653
      %2655 = vmatprep.mubr.f32.mxu0 %v2331
      %2656 = vmatmul.mubr.f32.gmra.mrb[0].mxu0 %v2330
      %v2657 = vpop.f32.mrb[0].mxu0
      %v2658 = vadd.f32 0.0, %v2657
      %v2659 = vpop.f32.mrb[0].mxu0
      %v2660 = vadd.f32 0.0, %v2659
      %2661 = vmatprep.mubr.f32.mxu0 %v2329
      %2662 = vmatmul.mubr.f32.gmra.mrb[0].mxu0 %v2328
      %v2663 = vpop.f32.mrb[0].mxu0
      %v2664 = vadd.f32 0.0, %v2663
      %v2665 = vpop.f32.mrb[0].mxu0
      %v2666 = vadd.f32 0.0, %v2665
      %2667 = vmatprep.mubr.f32.mxu0 %v2327
      %2668 = vmatmul.mubr.f32.gmra.mrb[0].mxu0 %v2326
      %v2669 = vpop.f32.mrb[0].mxu0
      %v2670 = vadd.f32 0.0, %v2669
      %v2671 = vpop.f32.mrb[0].mxu0
      %v2672 = vadd.f32 0.0, %v2671
      %2673 = vmatprep.mubr.f32.mxu0 %v2325
      %2674 = vmatmul.mubr.f32.gmra.mrb[0].mxu0 %v2324
      %v2675 = vpop.f32.mrb[0].mxu0
      %v2676 = vadd.f32 0.0, %v2675
      %v2677 = vpop.f32.mrb[0].mxu0
      %v2678 = vadd.f32 0.0, %v2677
      %2679 = vmatprep.mubr.f32.mxu0 %v2323
      %2680 = vmatmul.mubr.f32.gmra.mrb[0].mxu0 %v2322
      %v2681 = vpop.f32.mrb[0].mxu0
      %v2682 = vadd.f32 0.0, %v2681
      %v2683 = vpop.f32.mrb[0].mxu0
      %v2684 = vadd.f32 0.0, %v2683
      %2685 = vmatprep.mubr.f32.mxu0 %v2321
      %2686 = vmatmul.mubr.f32.gmra.mrb[0].mxu0 %v2320
      %v2687 = vpop.f32.mrb[0].mxu0
      %v2688 = vadd.f32 0.0, %v2687
      %v2689 = vpop.f32.mrb[0].mxu0
      %v2690 = vadd.f32 0.0, %v2689
      %2691 = vmatprep.mubr.f32.mxu0 %v2319
      %2692 = vmatmul.mubr.f32.gmra.mrb[0].mxu0 %v2318
      %v2693 = vpop.f32.mrb[0].mxu0
      %v2694 = vadd.f32 0.0, %v2693
      %v2695 = vpop.f32.mrb[0].mxu0
      %v2696 = vadd.f32 0.0, %v2695
      %2697 = vmatprep.mubr.f32.mxu0 %v2317
      %2698 = vmatmul.mubr.f32.gmra.mrb[0].mxu0 %v2316
      %v2699 = vpop.f32.mrb[0].mxu0
      %v2700 = vadd.f32 0.0, %v2699
      %v2701 = vpop.f32.mrb[0].mxu0
      %v2702 = vadd.f32 0.0, %v2701
      %2703 = vmatprep.mubr.f32.mxu0 %v2315
      %2704 = vmatmul.mubr.f32.gmra.mrb[0].mxu0 %v2314
      %v2705 = vpop.f32.mrb[0].mxu0
      %v2706 = vadd.f32 0.0, %v2705
      %v2707 = vpop.f32.mrb[0].mxu0
      %v2708 = vadd.f32 0.0, %v2707
      %2709 = vmatprep.mubr.f32.mxu0 %v2313
      %2710 = vmatmul.mubr.f32.gmra.mrb[0].mxu0 %v2312
      %v2711 = vpop.f32.mrb[0].mxu0
      %v2712 = vadd.f32 0.0, %v2711
      %v2713 = vpop.f32.mrb[0].mxu0
      %v2714 = vadd.f32 0.0, %v2713
      %2715 = vmatprep.mubr.f32.mxu0 %v2311
      %2716 = vmatmul.mubr.f32.gmra.mrb[0].mxu0 %v2310
      %v2717 = vpop.f32.mrb[0].mxu0
      %v2718 = vadd.f32 0.0, %v2717
      %v2719 = vpop.f32.mrb[0].mxu0
      %v2720 = vadd.f32 0.0, %v2719
      %2721 = vmatprep.mubr.f32.mxu0 %v2309
      %2722 = vmatmul.mubr.f32.gmra.mrb[0].mxu0 %v2308
      %v2723 = vpop.f32.mrb[0].mxu0
      %v2724 = vadd.f32 0.0, %v2723
      %v2725 = vpop.f32.mrb[0].mxu0
      %v2726 = vadd.f32 0.0, %v2725
      %2727 = vmatprep.mubr.f32.mxu0 %v2307
      %2728 = vmatmul.mubr.f32.gmra.mrb[0].mxu0 %v2306
      %v2729 = vpop.f32.mrb[0].mxu0
      %v2730 = vadd.f32 0.0, %v2729
      %v2731 = vpop.f32.mrb[0].mxu0
      %v2732 = vadd.f32 0.0, %v2731
      %2733 = vmatprep.mubr.f32.mxu0 %v2305
      %2734 = vmatmul.mubr.f32.gmra.mrb[0].mxu0 %v2304
      %v2735 = vpop.f32.mrb[0].mxu0
      %v2736 = vadd.f32 0.0, %v2735
      %v2737 = vpop.f32.mrb[0].mxu0
      %v2738 = vadd.f32 0.0, %v2737
      %2739 = vmatprep.mubr.f32.mxu0 %v2303
      %2740 = vmatmul.mubr.f32.gmra.mrb[0].mxu0 %v2302
      %v2741 = vpop.f32.mrb[0].mxu0
      %v2742 = vadd.f32 0.0, %v2741
      %v2743 = vpop.f32.mrb[0].mxu0
      %v2744 = vadd.f32 0.0, %v2743
      %2745 = vmatprep.mubr.f32.mxu0 %v2381
      %2746 = vmatmul.mubr.f32.gmra.mrb[0].mxu0 %v2380
      %v2747 = vpop.f32.mrb[0].mxu0
      %v2748 = vadd.f32 0.0, %v2747
      %v2749 = vpop.f32.mrb[0].mxu0
      %v2750 = vadd.f32 0.0, %v2749
      %2751 = vdwg.mxu0
      %2752 = vmatprep.subr.mxu0 %v2158
      %2753 = vmatpush1.msra.mxu0 %v2157
      %2754 = vmatprep.subr.mxu0 %v2160
      %2755 = vmatpush1.msra.mxu0 %v2159
      %2756 = vmatprep.subr.mxu0 %v2162
      %2757 = vmatpush1.msra.mxu0 %v2161
      %2758 = vmatprep.subr.mxu0 %v2164
      %2759 = vmatpush1.msra.mxu0 %v2163
      %2760 = vmatprep.subr.mxu0 %v2166
      %2761 = vmatpush1.msra.mxu0 %v2165
      %2762 = vmatprep.subr.mxu0 %v2168
      %2763 = vmatpush1.msra.mxu0 %v2167
      %2764 = vmatprep.subr.mxu0 %v2170
      %2765 = vmatpush1.msra.mxu0 %v2169
      %2766 = vmatprep.subr.mxu0 %v2172
      %2767 = vmatpush1.msra.mxu0 %v2171
      %2768 = vmatprep.subr.mxu0 %v2174
      %2769 = vmatpush1.msra.mxu0 %v2173
      %2770 = vmatprep.subr.mxu0 %v2176
      %2771 = vmatpush1.msra.mxu0 %v2175
      %2772 = vmatprep.subr.mxu0 %v2178
      %2773 = vmatpush1.msra.mxu0 %v2177
      %2774 = vmatprep.subr.mxu0 %v2180
      %2775 = vmatpush1.msra.mxu0 %v2179
      %2776 = vmatprep.subr.mxu0 %v2182
      %2777 = vmatpush1.msra.mxu0 %v2181
      %2778 = vmatprep.subr.mxu0 %v2184
      %2779 = vmatpush1.msra.mxu0 %v2183
      %2780 = vmatprep.subr.mxu0 %v2186
      %2781 = vmatpush1.msra.mxu0 %v2185
      %2782 = vmatprep.subr.mxu0 %v2188
      %2783 = vmatpush1.msra.mxu0 %v2187
      %2784 = vmatprep.subr.mxu0 %v2190
      %2785 = vmatpush1.msra.mxu0 %v2189
      %2786 = vmatprep.subr.mxu0 %v2192
      %2787 = vmatpush1.msra.mxu0 %v2191
      %2788 = vmatprep.subr.mxu0 %v2194
      %2789 = vmatpush1.msra.mxu0 %v2193
      %2790 = vmatprep.subr.mxu0 %v2196
      %2791 = vmatpush1.msra.mxu0 %v2195
      %2792 = vmatprep.subr.mxu0 %v2198
      %2793 = vmatpush1.msra.mxu0 %v2197
      %2794 = vmatprep.subr.mxu0 %v2200
      %2795 = vmatpush1.msra.mxu0 %v2199
      %2796 = vmatprep.subr.mxu0 %v2202
      %2797 = vmatpush1.msra.mxu0 %v2201
      %2798 = vmatprep.subr.mxu0 %v2204
      %2799 = vmatpush1.msra.mxu0 %v2203
      %2800 = vmatprep.subr.mxu0 %v2206
      %2801 = vmatpush1.msra.mxu0 %v2205
      %2802 = vmatprep.subr.mxu0 %v2208
      %2803 = vmatpush1.msra.mxu0 %v2207
      %2804 = vmatprep.subr.mxu0 %v2210
      %2805 = vmatpush1.msra.mxu0 %v2209
      %2806 = vmatprep.subr.mxu0 %v2212
      %2807 = vmatpush1.msra.mxu0 %v2211
      %2808 = vmatprep.subr.mxu0 %v2214
      %2809 = vmatpush1.msra.mxu0 %v2213
      %2810 = vmatprep.subr.mxu0 %v2216
      %2811 = vmatpush1.msra.mxu0 %v2215
      %2812 = vmatprep.subr.mxu0 %v2218
      %2813 = vmatpush1.msra.mxu0 %v2217
      %2814 = vmatprep.subr.mxu0 %v2220
      %2815 = vmatpush1.msra.mxu0 %v2219
      %2816 = vmatprep.mubr.f32.mxu0 %v2078
      %2817 = vmatmul.mubr.f32.gmra.mrb[0].mxu0 %v2077
      %v2818 = vpop.f32.mrb[0].mxu0
      %v2819 = vadd.f32 %v2514, %v2818
      %v2820 = vpop.f32.mrb[0].mxu0
      %v2821 = vadd.f32 %v2516, %v2820
      %2822 = vmatprep.mubr.f32.mxu0 %v2080
      %2823 = vmatmul.mubr.f32.gmra.mrb[0].mxu0 %v2079
      %v2824 = vpop.f32.mrb[0].mxu0
      %v2825 = vadd.f32 %v2520, %v2824
      %v2826 = vpop.f32.mrb[0].mxu0
      %v2827 = vadd.f32 %v2522, %v2826
      %2828 = vmatprep.mubr.f32.mxu0 %v2082
      %2829 = vmatmul.mubr.f32.gmra.mrb[0].mxu0 %v2081
      %v2830 = vpop.f32.mrb[0].mxu0
      %v2831 = vadd.f32 %v2526, %v2830
      %v2832 = vpop.f32.mrb[0].mxu0
      %v2833 = vadd.f32 %v2528, %v2832
      %2834 = vmatprep.mubr.f32.mxu0 %v2084
      %2835 = vmatmul.mubr.f32.gmra.mrb[0].mxu0 %v2083
      %v2836 = vpop.f32.mrb[0].mxu0
      %v2837 = vadd.f32 %v2532, %v2836
      %v2838 = vpop.f32.mrb[0].mxu0
      %v2839 = vadd.f32 %v2534, %v2838
      %2840 = vmatprep.mubr.f32.mxu0 %v2086
      %2841 = vmatmul.mubr.f32.gmra.mrb[0].mxu0 %v2085
      %v2842 = vpop.f32.mrb[0].mxu0
      %v2843 = vadd.f32 %v2538, %v2842
      %v2844 = vpop.f32.mrb[0].mxu0
      %v2845 = vadd.f32 %v2540, %v2844
      %2846 = vmatprep.mubr.f32.mxu0 %v2088
      %2847 = vmatmul.mubr.f32.gmra.mrb[0].mxu0 %v2087
      %v2848 = vpop.f32.mrb[0].mxu0
      %v2849 = vadd.f32 %v2544, %v2848
      %v2850 = vpop.f32.mrb[0].mxu0
      %v2851 = vadd.f32 %v2546, %v2850
      %2852 = vmatprep.mubr.f32.mxu0 %v2090
      %2853 = vmatmul.mubr.f32.gmra.mrb[0].mxu0 %v2089
      %v2854 = vpop.f32.mrb[0].mxu0
      %v2855 = vadd.f32 %v2550, %v2854
      %v2856 = vpop.f32.mrb[0].mxu0
      %v2857 = vadd.f32 %v2552, %v2856
      %2858 = vmatprep.mubr.f32.mxu0 %v2092
      %2859 = vmatmul.mubr.f32.gmra.mrb[0].mxu0 %v2091
      %v2860 = vpop.f32.mrb[0].mxu0
      %v2861 = vadd.f32 %v2556, %v2860
      %v2862 = vpop.f32.mrb[0].mxu0
      %v2863 = vadd.f32 %v2558, %v2862
      %2864 = vmatprep.mubr.f32.mxu0 %v2094
      %2865 = vmatmul.mubr.f32.gmra.mrb[0].mxu0 %v2093
      %v2866 = vpop.f32.mrb[0].mxu0
      %v2867 = vadd.f32 %v2562, %v2866
      %v2868 = vpop.f32.mrb[0].mxu0
      %v2869 = vadd.f32 %v2564, %v2868
      %2870 = vmatprep.mubr.f32.mxu0 %v2096
      %2871 = vmatmul.mubr.f32.gmra.mrb[0].mxu0 %v2095
      %v2872 = vpop.f32.mrb[0].mxu0
      %v2873 = vadd.f32 %v2568, %v2872
      %v2874 = vpop.f32.mrb[0].mxu0
      %v2875 = vadd.f32 %v2570, %v2874
      %2876 = vmatprep.mubr.f32.mxu0 %v2098
      %2877 = vmatmul.mubr.f32.gmra.mrb[0].mxu0 %v2097
      %v2878 = vpop.f32.mrb[0].mxu0
      %v2879 = vadd.f32 %v2574, %v2878
      %v2880 = vpop.f32.mrb[0].mxu0
      %v2881 = vadd.f32 %v2576, %v2880
      %2882 = vmatprep.mubr.f32.mxu0 %v2100
      %2883 = vmatmul.mubr.f32.gmra.mrb[0].mxu0 %v2099
      %v2884 = vpop.f32.mrb[0].mxu0
      %v2885 = vadd.f32 %v2580, %v2884
      %v2886 = vpop.f32.mrb[0].mxu0
      %v2887 = vadd.f32 %v2582, %v2886
      %2888 = vmatprep.mubr.f32.mxu0 %v2102
      %2889 = vmatmul.mubr.f32.gmra.mrb[0].mxu0 %v2101
      %v2890 = vpop.f32.mrb[0].mxu0
      %v2891 = vadd.f32 %v2586, %v2890
      %v2892 = vpop.f32.mrb[0].mxu0
      %v2893 = vadd.f32 %v2588, %v2892
      %2894 = vmatprep.mubr.f32.mxu0 %v2104
      %2895 = vmatmul.mubr.f32.gmra.mrb[0].mxu0 %v2103
      %v2896 = vpop.f32.mrb[0].mxu0
      %v2897 = vadd.f32 %v2592, %v2896
      %v2898 = vpop.f32.mrb[0].mxu0
      %v2899 = vadd.f32 %v2594, %v2898
      %2900 = vmatprep.mubr.f32.mxu0 %v2106
      %2901 = vmatmul.mubr.f32.gmra.mrb[0].mxu0 %v2105
      %v2902 = vpop.f32.mrb[0].mxu0
      %v2903 = vadd.f32 %v2598, %v2902
      %v2904 = vpop.f32.mrb[0].mxu0
      %v2905 = vadd.f32 %v2600, %v2904
      %2906 = vmatprep.mubr.f32.mxu0 %v2108
      %2907 = vmatmul.mubr.f32.gmra.mrb[0].mxu0 %v2107
      %v2908 = vpop.f32.mrb[0].mxu0
      %v2909 = vadd.f32 %v2604, %v2908
      %v2910 = vpop.f32.mrb[0].mxu0
      %v2911 = vadd.f32 %v2606, %v2910
      %2912 = vmatprep.mubr.f32.mxu0 %v2110
      %2913 = vmatmul.mubr.f32.gmra.mrb[0].mxu0 %v2109
      %v2914 = vpop.f32.mrb[0].mxu0
      %v2915 = vadd.f32 %v2610, %v2914
      %v2916 = vpop.f32.mrb[0].mxu0
      %v2917 = vadd.f32 %v2612, %v2916
      %2918 = vmatprep.mubr.f32.mxu0 %v2112
      %2919 = vmatmul.mubr.f32.gmra.mrb[0].mxu0 %v2111
      %v2920 = vpop.f32.mrb[0].mxu0
      %v2921 = vadd.f32 %v2616, %v2920
      %v2922 = vpop.f32.mrb[0].mxu0
      %v2923 = vadd.f32 %v2618, %v2922
      %2924 = vmatprep.mubr.f32.mxu0 %v2114
      %2925 = vmatmul.mubr.f32.gmra.mrb[0].mxu0 %v2113
      %v2926 = vpop.f32.mrb[0].mxu0
      %v2927 = vadd.f32 %v2622, %v2926
      %v2928 = vpop.f32.mrb[0].mxu0
      %v2929 = vadd.f32 %v2624, %v2928
      %2930 = vmatprep.mubr.f32.mxu0 %v2116
      %2931 = vmatmul.mubr.f32.gmra.mrb[0].mxu0 %v2115
      %v2932 = vpop.f32.mrb[0].mxu0
      %v2933 = vadd.f32 %v2628, %v2932
      %v2934 = vpop.f32.mrb[0].mxu0
      %v2935 = vadd.f32 %v2630, %v2934
      %2936 = vmatprep.mubr.f32.mxu0 %v2118
      %2937 = vmatmul.mubr.f32.gmra.mrb[0].mxu0 %v2117
      %v2938 = vpop.f32.mrb[0].mxu0
      %v2939 = vadd.f32 %v2634, %v2938
      %v2940 = vpop.f32.mrb[0].mxu0
      %v2941 = vadd.f32 %v2636, %v2940
      %2942 = vmatprep.mubr.f32.mxu0 %v2120
      %2943 = vmatmul.mubr.f32.gmra.mrb[0].mxu0 %v2119
      %v2944 = vpop.f32.mrb[0].mxu0
      %v2945 = vadd.f32 %v2640, %v2944
      %v2946 = vpop.f32.mrb[0].mxu0
      %v2947 = vadd.f32 %v2642, %v2946
      %2948 = vmatprep.mubr.f32.mxu0 %v2122
      %2949 = vmatmul.mubr.f32.gmra.mrb[0].mxu0 %v2121
      %v2950 = vpop.f32.mrb[0].mxu0
      %v2951 = vadd.f32 %v2646, %v2950
      %v2952 = vpop.f32.mrb[0].mxu0
      %v2953 = vadd.f32 %v2648, %v2952
      %2954 = vmatprep.mubr.f32.mxu0 %v2124
      %2955 = vmatmul.mubr.f32.gmra.mrb[0].mxu0 %v2123
      %v2956 = vpop.f32.mrb[0].mxu0
      %v2957 = vadd.f32 %v2652, %v2956
      %v2958 = vpop.f32.mrb[0].mxu0
      %v2959 = vadd.f32 %v2654, %v2958
      %2960 = vmatprep.mubr.f32.mxu0 %v2126
      %2961 = vmatmul.mubr.f32.gmra.mrb[0].mxu0 %v2125
      %v2962 = vpop.f32.mrb[0].mxu0
      %v2963 = vadd.f32 %v2658, %v2962
      %v2964 = vpop.f32.mrb[0].mxu0
      %v2965 = vadd.f32 %v2660, %v2964
      %2966 = vmatprep.mubr.f32.mxu0 %v2128
      %2967 = vmatmul.mubr.f32.gmra.mrb[0].mxu0 %v2127
      %v2968 = vpop.f32.mrb[0].mxu0
      %v2969 = vadd.f32 %v2664, %v2968
      %v2970 = vpop.f32.mrb[0].mxu0
      %v2971 = vadd.f32 %v2666, %v2970
      %2972 = vmatprep.mubr.f32.mxu0 %v2130
      %2973 = vmatmul.mubr.f32.gmra.mrb[0].mxu0 %v2129
      %v2974 = vpop.f32.mrb[0].mxu0
      %v2975 = vadd.f32 %v2670, %v2974
      %v2976 = vpop.f32.mrb[0].mxu0
      %v2977 = vadd.f32 %v2672, %v2976
      %2978 = vmatprep.mubr.f32.mxu0 %v2132
      %2979 = vmatmul.mubr.f32.gmra.mrb[0].mxu0 %v2131
      %v2980 = vpop.f32.mrb[0].mxu0
      %v2981 = vadd.f32 %v2676, %v2980
      %v2982 = vpop.f32.mrb[0].mxu0
      %v2983 = vadd.f32 %v2678, %v2982
      %2984 = vmatprep.mubr.f32.mxu0 %v2134
      %2985 = vmatmul.mubr.f32.gmra.mrb[0].mxu0 %v2133
      %v2986 = vpop.f32.mrb[0].mxu0
      %v2987 = vadd.f32 %v2682, %v2986
      %v2988 = vpop.f32.mrb[0].mxu0
      %v2989 = vadd.f32 %v2684, %v2988
      %2990 = vmatprep.mubr.f32.mxu0 %v2136
      %2991 = vmatmul.mubr.f32.gmra.mrb[0].mxu0 %v2135
      %v2992 = vpop.f32.mrb[0].mxu0
      %v2993 = vadd.f32 %v2688, %v2992
      %v2994 = vpop.f32.mrb[0].mxu0
      %v2995 = vadd.f32 %v2690, %v2994
      %2996 = vmatprep.mubr.f32.mxu0 %v2138
      %2997 = vmatmul.mubr.f32.gmra.mrb[0].mxu0 %v2137
      %v2998 = vpop.f32.mrb[0].mxu0
      %v2999 = vadd.f32 %v2694, %v2998
      %v3000 = vpop.f32.mrb[0].mxu0
      %v3001 = vadd.f32 %v2696, %v3000
      %3002 = vmatprep.mubr.f32.mxu0 %v2140
      %3003 = vmatmul.mubr.f32.gmra.mrb[0].mxu0 %v2139
      %v3004 = vpop.f32.mrb[0].mxu0
      %v3005 = vadd.f32 %v2700, %v3004
      %v3006 = vpop.f32.mrb[0].mxu0
      %v3007 = vadd.f32 %v2702, %v3006
      %3008 = vmatprep.mubr.f32.mxu0 %v2142
      %3009 = vmatmul.mubr.f32.gmra.mrb[0].mxu0 %v2141
      %v3010 = vpop.f32.mrb[0].mxu0
      %v3011 = vadd.f32 %v2706, %v3010
      %v3012 = vpop.f32.mrb[0].mxu0
      %v3013 = vadd.f32 %v2708, %v3012
      %3014 = vmatprep.mubr.f32.mxu0 %v2144
      %3015 = vmatmul.mubr.f32.gmra.mrb[0].mxu0 %v2143
      %v3016 = vpop.f32.mrb[0].mxu0
      %v3017 = vadd.f32 %v2712, %v3016
      %v3018 = vpop.f32.mrb[0].mxu0
      %v3019 = vadd.f32 %v2714, %v3018
      %3020 = vmatprep.mubr.f32.mxu0 %v2146
      %3021 = vmatmul.mubr.f32.gmra.mrb[0].mxu0 %v2145
      %v3022 = vpop.f32.mrb[0].mxu0
      %v3023 = vadd.f32 %v2718, %v3022
      %v3024 = vpop.f32.mrb[0].mxu0
      %v3025 = vadd.f32 %v2720, %v3024
      %3026 = vmatprep.mubr.f32.mxu0 %v2148
      %3027 = vmatmul.mubr.f32.gmra.mrb[0].mxu0 %v2147
      %v3028 = vpop.f32.mrb[0].mxu0
      %v3029 = vadd.f32 %v2724, %v3028
      %v3030 = vpop.f32.mrb[0].mxu0
      %v3031 = vadd.f32 %v2726, %v3030
      %3032 = vmatprep.mubr.f32.mxu0 %v2150
      %3033 = vmatmul.mubr.f32.gmra.mrb[0].mxu0 %v2149
      %v3034 = vpop.f32.mrb[0].mxu0
      %v3035 = vadd.f32 %v2730, %v3034
      %v3036 = vpop.f32.mrb[0].mxu0
      %v3037 = vadd.f32 %v2732, %v3036
      %3038 = vmatprep.mubr.f32.mxu0 %v2152
      %3039 = vmatmul.mubr.f32.gmra.mrb[0].mxu0 %v2151
      %v3040 = vpop.f32.mrb[0].mxu0
      %v3041 = vadd.f32 %v2736, %v3040
      %v3042 = vpop.f32.mrb[0].mxu0
      %v3043 = vadd.f32 %v2738, %v3042
      %3044 = vmatprep.mubr.f32.mxu0 %v2154
      %3045 = vmatmul.mubr.f32.gmra.mrb[0].mxu0 %v2153
      %v3046 = vpop.f32.mrb[0].mxu0
      %v3047 = vadd.f32 %v2742, %v3046
      %v3048 = vpop.f32.mrb[0].mxu0
      %v3049 = vadd.f32 %v2744, %v3048
      %3050 = vmatprep.mubr.f32.mxu0 %v2156
      %3051 = vmatmul.mubr.f32.gmra.mrb[0].mxu0 %v2155
      %v3052 = vpop.f32.mrb[0].mxu0
      %v3053 = vadd.f32 %v2748, %v3052
      %v3054 = vpop.f32.mrb[0].mxu0
      %v3055 = vadd.f32 %v2750, %v3054
      %3056 = vdwg.mxu0
      %v3057 = vld [vmem:[%s4] sm:$0x3]
      %v3059 = vlaneseq
      %v3060 = vshrl.u32 %v3059, 7
      %v3061 = vsub.s32 0, %v3060
      %v3062 = vrot.slane %v3057, %v3061
      %v3063 = vlaneseq
      %v3064 = vshrl.u32 %v3063, 7
      %v3065 = vsub.s32 1, %v3064
      %v3066 = vrot.slane %v3057, %v3065
      %v3069 = vadd.f32 %v2819, %v3062
      %v3070 = vadd.f32 %v2821, %v3066
      %v3071 = vadd.f32 %v2825, %v3062
      %v3072 = vadd.f32 %v2827, %v3066
      %v3073 = vadd.f32 %v2831, %v3062
      %v3074 = vadd.f32 %v2833, %v3066
      %v3075 = vadd.f32 %v2837, %v3062
      %v3076 = vadd.f32 %v2839, %v3066
      %v3077 = vadd.f32 %v2843, %v3062
      %v3078 = vadd.f32 %v2845, %v3066
      %v3079 = vadd.f32 %v2849, %v3062
      %v3080 = vadd.f32 %v2851, %v3066
      %v3081 = vadd.f32 %v2855, %v3062
      %v3082 = vadd.f32 %v2857, %v3066
      %v3083 = vadd.f32 %v2861, %v3062
      %v3084 = vadd.f32 %v2863, %v3066
      %v3085 = vadd.f32 %v2867, %v3062
      %v3086 = vadd.f32 %v2869, %v3066
      %v3087 = vadd.f32 %v2873, %v3062
      %v3088 = vadd.f32 %v2875, %v3066
      %v3089 = vadd.f32 %v2879, %v3062
      %v3090 = vadd.f32 %v2881, %v3066
      %v3091 = vadd.f32 %v2885, %v3062
      %v3092 = vadd.f32 %v2887, %v3066
      %v3093 = vadd.f32 %v2891, %v3062
      %v3094 = vadd.f32 %v2893, %v3066
      %v3095 = vadd.f32 %v2897, %v3062
      %v3096 = vadd.f32 %v2899, %v3066
      %v3097 = vadd.f32 %v2903, %v3062
      %v3098 = vadd.f32 %v2905, %v3066
      %v3099 = vadd.f32 %v2909, %v3062
      %v3100 = vadd.f32 %v2911, %v3066
      %v3101 = vadd.f32 %v2915, %v3062
      %v3102 = vadd.f32 %v2917, %v3066
      %v3103 = vadd.f32 %v2921, %v3062
      %v3104 = vadd.f32 %v2923, %v3066
      %v3105 = vadd.f32 %v2927, %v3062
      %v3106 = vadd.f32 %v2929, %v3066
      %v3107 = vadd.f32 %v2933, %v3062
      %v3108 = vadd.f32 %v2935, %v3066
      %v3109 = vadd.f32 %v2939, %v3062
      %v3110 = vadd.f32 %v2941, %v3066
      %v3111 = vadd.f32 %v2945, %v3062
      %v3112 = vadd.f32 %v2947, %v3066
      %v3113 = vadd.f32 %v2951, %v3062
      %v3114 = vadd.f32 %v2953, %v3066
      %v3115 = vadd.f32 %v2957, %v3062
      %v3116 = vadd.f32 %v2959, %v3066
      %v3117 = vadd.f32 %v2963, %v3062
      %v3118 = vadd.f32 %v2965, %v3066
      %v3119 = vadd.f32 %v2969, %v3062
      %v3120 = vadd.f32 %v2971, %v3066
      %v3121 = vadd.f32 %v2975, %v3062
      %v3122 = vadd.f32 %v2977, %v3066
      %v3123 = vadd.f32 %v2981, %v3062
      %v3124 = vadd.f32 %v2983, %v3066
      %v3125 = vadd.f32 %v2987, %v3062
      %v3126 = vadd.f32 %v2989, %v3066
      %v3127 = vadd.f32 %v2993, %v3062
      %v3128 = vadd.f32 %v2995, %v3066
      %v3129 = vadd.f32 %v2999, %v3062
      %v3130 = vadd.f32 %v3001, %v3066
      %v3131 = vadd.f32 %v3005, %v3062
      %v3132 = vadd.f32 %v3007, %v3066
      %v3133 = vadd.f32 %v3011, %v3062
      %v3134 = vadd.f32 %v3013, %v3066
      %v3135 = vadd.f32 %v3017, %v3062
      %v3136 = vadd.f32 %v3019, %v3066
      %v3137 = vadd.f32 %v3023, %v3062
      %v3138 = vadd.f32 %v3025, %v3066
      %v3139 = vadd.f32 %v3029, %v3062
      %v3140 = vadd.f32 %v3031, %v3066
      %v3141 = vadd.f32 %v3035, %v3062
      %v3142 = vadd.f32 %v3037, %v3066
      %v3143 = vadd.f32 %v3041, %v3062
      %v3144 = vadd.f32 %v3043, %v3066
      %v3145 = vadd.f32 %v3047, %v3062
      %v3146 = vadd.f32 %v3049, %v3066
      %v3147 = vadd.f32 %v3053, %v3062
      %v3148 = vadd.f32 %v3055, %v3066
      %v3149 = vmax.f32 %v3069, 0.0
      %v3150 = vmax.f32 %v3070, 0.0
      %v3151 = vmax.f32 %v3071, 0.0
      %v3152 = vmax.f32 %v3072, 0.0
      %v3153 = vmax.f32 %v3073, 0.0
      %v3154 = vmax.f32 %v3074, 0.0
      %v3155 = vmax.f32 %v3075, 0.0
      %v3156 = vmax.f32 %v3076, 0.0
      %v3157 = vmax.f32 %v3077, 0.0
      %v3158 = vmax.f32 %v3078, 0.0
      %v3159 = vmax.f32 %v3079, 0.0
      %v3160 = vmax.f32 %v3080, 0.0
      %v3161 = vmax.f32 %v3081, 0.0
      %v3162 = vmax.f32 %v3082, 0.0
      %v3163 = vmax.f32 %v3083, 0.0
      %v3164 = vmax.f32 %v3084, 0.0
      %v3165 = vmax.f32 %v3085, 0.0
      %v3166 = vmax.f32 %v3086, 0.0
      %v3167 = vmax.f32 %v3087, 0.0
      %v3168 = vmax.f32 %v3088, 0.0
      %v3169 = vmax.f32 %v3089, 0.0
      %v3170 = vmax.f32 %v3090, 0.0
      %v3171 = vmax.f32 %v3091, 0.0
      %v3172 = vmax.f32 %v3092, 0.0
      %v3173 = vmax.f32 %v3093, 0.0
      %v3174 = vmax.f32 %v3094, 0.0
      %v3175 = vmax.f32 %v3095, 0.0
      %v3176 = vmax.f32 %v3096, 0.0
      %v3177 = vmax.f32 %v3097, 0.0
      %v3178 = vmax.f32 %v3098, 0.0
      %v3179 = vmax.f32 %v3099, 0.0
      %v3180 = vmax.f32 %v3100, 0.0
      %v3181 = vmax.f32 %v3101, 0.0
      %v3182 = vmax.f32 %v3102, 0.0
      %v3183 = vmax.f32 %v3103, 0.0
      %v3184 = vmax.f32 %v3104, 0.0
      %v3185 = vmax.f32 %v3105, 0.0
      %v3186 = vmax.f32 %v3106, 0.0
      %v3187 = vmax.f32 %v3107, 0.0
      %v3188 = vmax.f32 %v3108, 0.0
      %v3189 = vmax.f32 %v3109, 0.0
      %v3190 = vmax.f32 %v3110, 0.0
      %v3191 = vmax.f32 %v3111, 0.0
      %v3192 = vmax.f32 %v3112, 0.0
      %v3193 = vmax.f32 %v3113, 0.0
      %v3194 = vmax.f32 %v3114, 0.0
      %v3195 = vmax.f32 %v3115, 0.0
      %v3196 = vmax.f32 %v3116, 0.0
      %v3197 = vmax.f32 %v3117, 0.0
      %v3198 = vmax.f32 %v3118, 0.0
      %v3199 = vmax.f32 %v3119, 0.0
      %v3200 = vmax.f32 %v3120, 0.0
      %v3201 = vmax.f32 %v3121, 0.0
      %v3202 = vmax.f32 %v3122, 0.0
      %v3203 = vmax.f32 %v3123, 0.0
      %v3204 = vmax.f32 %v3124, 0.0
      %v3205 = vmax.f32 %v3125, 0.0
      %v3206 = vmax.f32 %v3126, 0.0
      %v3207 = vmax.f32 %v3127, 0.0
      %v3208 = vmax.f32 %v3128, 0.0
      %v3209 = vmax.f32 %v3129, 0.0
      %v3210 = vmax.f32 %v3130, 0.0
      %v3211 = vmax.f32 %v3131, 0.0
      %v3212 = vmax.f32 %v3132, 0.0
      %v3213 = vmax.f32 %v3133, 0.0
      %v3214 = vmax.f32 %v3134, 0.0
      %v3215 = vmax.f32 %v3135, 0.0
      %v3216 = vmax.f32 %v3136, 0.0
      %v3217 = vmax.f32 %v3137, 0.0
      %v3218 = vmax.f32 %v3138, 0.0
      %v3219 = vmax.f32 %v3139, 0.0
      %v3220 = vmax.f32 %v3140, 0.0
      %v3221 = vmax.f32 %v3141, 0.0
      %v3222 = vmax.f32 %v3142, 0.0
      %v3223 = vmax.f32 %v3143, 0.0
      %v3224 = vmax.f32 %v3144, 0.0
      %v3225 = vmax.f32 %v3145, 0.0
      %v3226 = vmax.f32 %v3146, 0.0
      %v3227 = vmax.f32 %v3147, 0.0
      %v3228 = vmax.f32 %v3148, 0.0
      %v3229 = vld [vmem:[%s5] sm:$0xff]
      %v3230 = vld [vmem:[%s5 + $0x8] sm:$0xff]
      %v3231 = vld [vmem:[%s5 + $0x10] sm:$0xff]
      %v3232 = vld [vmem:[%s5 + $0x18] sm:$0xff]
      %v3233 = vld [vmem:[%s5 + $0x20] sm:$0xff]
      %v3234 = vld [vmem:[%s5 + $0x28] sm:$0xff]
      %v3235 = vld [vmem:[%s5 + $0x30] sm:$0xff]
      %v3236 = vld [vmem:[%s5 + $0x38] sm:$0xff]
      %v3237 = vld [vmem:[%s5 + $0x40] sm:$0xff]
      %v3238 = vld [vmem:[%s5 + $0x48] sm:$0xff]
      %v3239 = vld [vmem:[%s5 + $0x50] sm:$0xff]
      %v3240 = vld [vmem:[%s5 + $0x58] sm:$0xff]
      %v3241 = vld [vmem:[%s5 + $0x60] sm:$0xff]
      %v3242 = vld [vmem:[%s5 + $0x68] sm:$0xff]
      %v3243 = vld [vmem:[%s5 + $0x70] sm:$0xff]
      %v3244 = vld [vmem:[%s5 + $0x78] sm:$0xff]
      %v3245 = vld [vmem:[%s5 + $0x80] sm:$0xff]
      %v3246 = vld [vmem:[%s5 + $0x88] sm:$0xff]
      %v3247 = vld [vmem:[%s5 + $0x90] sm:$0xff]
      %v3248 = vld [vmem:[%s5 + $0x98] sm:$0xff]
      %v3249 = vld [vmem:[%s5 + $0xa0] sm:$0xff]
      %v3250 = vld [vmem:[%s5 + $0xa8] sm:$0xff]
      %v3251 = vld [vmem:[%s5 + $0xb0] sm:$0xff]
      %v3252 = vld [vmem:[%s5 + $0xb8] sm:$0xff]
      %v3253 = vld [vmem:[%s5 + $0xc0] sm:$0xff]
      %v3254 = vld [vmem:[%s5 + $0xc8] sm:$0xff]
      %v3255 = vld [vmem:[%s5 + $0xd0] sm:$0xff]
      %v3256 = vld [vmem:[%s6] sm:$0x1]
      %v3258 = vlaneseq
      %v3259 = vshrl.u32 %v3258, 7
      %v3260 = vsub.s32 0, %v3259
      %v3261 = vrot.slane %v3256, %v3260
      %vm3263 = vcmask 719872
      %v3265 = vsel %vm3263, %v3150, 0
      %v3268 = vsel %vm3263, %v3152, 0
      %v3271 = vsel %vm3263, %v3154, 0
      %v3274 = vsel %vm3263, %v3156, 0
      %v3277 = vsel %vm3263, %v3158, 0
      %v3280 = vsel %vm3263, %v3160, 0
      %v3283 = vsel %vm3263, %v3162, 0
      %v3286 = vsel %vm3263, %v3164, 0
      %v3289 = vsel %vm3263, %v3166, 0
      %v3292 = vsel %vm3263, %v3168, 0
      %v3295 = vsel %vm3263, %v3170, 0
      %v3298 = vsel %vm3263, %v3172, 0
      %v3301 = vsel %vm3263, %v3174, 0
      %v3304 = vsel %vm3263, %v3176, 0
      %v3307 = vsel %vm3263, %v3178, 0
      %v3310 = vsel %vm3263, %v3180, 0
      %v3313 = vsel %vm3263, %v3182, 0
      %v3316 = vsel %vm3263, %v3184, 0
      %v3319 = vsel %vm3263, %v3186, 0
      %v3322 = vsel %vm3263, %v3188, 0
      %v3325 = vsel %vm3263, %v3190, 0
      %v3328 = vsel %vm3263, %v3192, 0
      %v3331 = vsel %vm3263, %v3194, 0
      %v3334 = vsel %vm3263, %v3196, 0
      %v3337 = vsel %vm3263, %v3198, 0
      %v3340 = vsel %vm3263, %v3200, 0
      %v3343 = vsel %vm3263, %v3202, 0
      %v3346 = vsel %vm3263, %v3204, 0
      %v3349 = vsel %vm3263, %v3206, 0
      %v3352 = vsel %vm3263, %v3208, 0
      %v3355 = vsel %vm3263, %v3210, 0
      %v3358 = vsel %vm3263, %v3212, 0
      %v3361 = vsel %vm3263, %v3214, 0
      %v3364 = vsel %vm3263, %v3216, 0
      %v3367 = vsel %vm3263, %v3218, 0
      %v3370 = vsel %vm3263, %v3220, 0
      %v3373 = vsel %vm3263, %v3222, 0
      %v3376 = vsel %vm3263, %v3224, 0
      %v3379 = vsel %vm3263, %v3226, 0
      %v3382 = vsel %vm3263, %v3228, 0
      %3384 = vmatprep.subr.mxu0 0.0
      %3385 = vmatpush1.msra.mxu0 %v3229
      %3386 = vmatprep.subr.mxu0 0.0
      %3387 = vmatpush1.msra.mxu0 %v3230
      %3388 = vmatprep.subr.mxu0 0.0
      %3389 = vmatpush1.msra.mxu0 %v3231
      %3390 = vmatprep.subr.mxu0 0.0
      %3391 = vmatpush1.msra.mxu0 %v3232
      %3392 = vmatprep.subr.mxu0 0.0
      %3393 = vmatpush1.msra.mxu0 %v3233
      %3394 = vmatprep.subr.mxu0 0.0
      %3395 = vmatpush1.msra.mxu0 %v3234
      %3396 = vmatprep.subr.mxu0 0.0
      %3397 = vmatpush1.msra.mxu0 %v3235
      %3398 = vmatprep.subr.mxu0 0.0
      %3399 = vmatpush1.msra.mxu0 %v3236
      %3400 = vmatprep.subr.mxu0 0.0
      %3401 = vmatpush1.msra.mxu0 %v3237
      %3402 = vmatprep.subr.mxu0 0.0
      %3403 = vmatpush1.msra.mxu0 %v3238
      %3404 = vmatprep.subr.mxu0 0.0
      %3405 = vmatpush1.msra.mxu0 %v3239
      %3406 = vmatprep.subr.mxu0 0.0
      %3407 = vmatpush1.msra.mxu0 %v3240
      %3408 = vmatprep.subr.mxu0 0.0
      %3409 = vmatpush1.msra.mxu0 %v3241
      %3410 = vmatprep.subr.mxu0 0.0
      %3411 = vmatpush1.msra.mxu0 %v3242
      %3412 = vmatprep.subr.mxu0 0.0
      %3413 = vmatpush1.msra.mxu0 %v3243
      %3414 = vmatprep.subr.mxu0 0.0
      %3415 = vmatpush1.msra.mxu0 %v3244
      %3416 = vmatprep.subr.mxu0 0.0
      %3417 = vmatpush1.msra.mxu0 %v3245
      %3418 = vmatprep.subr.mxu0 0.0
      %3419 = vmatpush1.msra.mxu0 %v3246
      %3420 = vmatprep.subr.mxu0 0.0
      %3421 = vmatpush1.msra.mxu0 %v3247
      %3422 = vmatprep.subr.mxu0 0.0
      %3423 = vmatpush1.msra.mxu0 %v3248
      %3424 = vmatprep.subr.mxu0 0.0
      %3425 = vmatpush1.msra.mxu0 %v3249
      %3426 = vmatprep.subr.mxu0 0.0
      %3427 = vmatpush1.msra.mxu0 %v3250
      %3428 = vmatprep.subr.mxu0 0.0
      %3429 = vmatpush1.msra.mxu0 %v3251
      %3430 = vmatprep.subr.mxu0 0.0
      %3431 = vmatpush1.msra.mxu0 %v3252
      %3432 = vmatprep.subr.mxu0 0.0
      %3433 = vmatpush1.msra.mxu0 %v3253
      %3434 = vmatprep.subr.mxu0 0.0
      %3435 = vmatpush1.msra.mxu0 %v3254
      %3436 = vmatprep.subr.mxu0 0.0
      %3437 = vmatpush1.msra.mxu0 %v3255
      %3438 = vmatprep.subr.mxu0 0.0
      %3439 = vmatpush1.msra.mxu0 0.0
      %3440 = vmatprep.subr.mxu0 0.0
      %3441 = vmatpush1.msra.mxu0 0.0
      %3442 = vmatprep.subr.mxu0 0.0
      %3443 = vmatpush1.msra.mxu0 0.0
      %3444 = vmatprep.subr.mxu0 0.0
      %3445 = vmatpush1.msra.mxu0 0.0
      %3446 = vmatprep.subr.mxu0 0.0
      %3447 = vmatpush1.msra.mxu0 0.0
      %3448 = vmatprep.mubr.f32.mxu0 %v3265
      %3449 = vmatmul.mubr.f32.gmra.mrb[0].mxu0 %v3149
      %v3450 = vpop.f32.mrb[0].mxu0
      %v3451 = vadd.f32 %v3261, %v3450
      %v3452 = vpop.f32.mrb[0].mxu0
      %3453 = vmatprep.mubr.f32.mxu0 %v3268
      %3454 = vmatmul.mubr.f32.gmra.mrb[0].mxu0 %v3151
      %v3455 = vpop.f32.mrb[0].mxu0
      %v3456 = vadd.f32 %v3261, %v3455
      %v3457 = vpop.f32.mrb[0].mxu0
      %3458 = vmatprep.mubr.f32.mxu0 %v3271
      %3459 = vmatmul.mubr.f32.gmra.mrb[0].mxu0 %v3153
      %v3460 = vpop.f32.mrb[0].mxu0
      %v3461 = vadd.f32 %v3261, %v3460
      %v3462 = vpop.f32.mrb[0].mxu0
      %3463 = vmatprep.mubr.f32.mxu0 %v3274
      %3464 = vmatmul.mubr.f32.gmra.mrb[0].mxu0 %v3155
      %v3465 = vpop.f32.mrb[0].mxu0
      %v3466 = vadd.f32 %v3261, %v3465
      %v3467 = vpop.f32.mrb[0].mxu0
      %3468 = vmatprep.mubr.f32.mxu0 %v3277
      %3469 = vmatmul.mubr.f32.gmra.mrb[0].mxu0 %v3157
      %v3470 = vpop.f32.mrb[0].mxu0
      %v3471 = vadd.f32 %v3261, %v3470
      %v3472 = vpop.f32.mrb[0].mxu0
      %3473 = vmatprep.mubr.f32.mxu0 %v3280
      %3474 = vmatmul.mubr.f32.gmra.mrb[0].mxu0 %v3159
      %v3475 = vpop.f32.mrb[0].mxu0
      %v3476 = vadd.f32 %v3261, %v3475
      %v3477 = vpop.f32.mrb[0].mxu0
      %3478 = vmatprep.mubr.f32.mxu0 %v3283
      %3479 = vmatmul.mubr.f32.gmra.mrb[0].mxu0 %v3161
      %v3480 = vpop.f32.mrb[0].mxu0
      %v3481 = vadd.f32 %v3261, %v3480
      %v3482 = vpop.f32.mrb[0].mxu0
      %3483 = vmatprep.mubr.f32.mxu0 %v3286
      %3484 = vmatmul.mubr.f32.gmra.mrb[0].mxu0 %v3163
      %v3485 = vpop.f32.mrb[0].mxu0
      %v3486 = vadd.f32 %v3261, %v3485
      %v3487 = vpop.f32.mrb[0].mxu0
      %3488 = vmatprep.mubr.f32.mxu0 %v3289
      %3489 = vmatmul.mubr.f32.gmra.mrb[0].mxu0 %v3165
      %v3490 = vpop.f32.mrb[0].mxu0
      %v3491 = vadd.f32 %v3261, %v3490
      %v3492 = vpop.f32.mrb[0].mxu0
      %3493 = vmatprep.mubr.f32.mxu0 %v3292
      %3494 = vmatmul.mubr.f32.gmra.mrb[0].mxu0 %v3167
      %v3495 = vpop.f32.mrb[0].mxu0
      %v3496 = vadd.f32 %v3261, %v3495
      %v3497 = vpop.f32.mrb[0].mxu0
      %3498 = vmatprep.mubr.f32.mxu0 %v3295
      %3499 = vmatmul.mubr.f32.gmra.mrb[0].mxu0 %v3169
      %v3500 = vpop.f32.mrb[0].mxu0
      %v3501 = vadd.f32 %v3261, %v3500
      %v3502 = vpop.f32.mrb[0].mxu0
      %3503 = vmatprep.mubr.f32.mxu0 %v3298
      %3504 = vmatmul.mubr.f32.gmra.mrb[0].mxu0 %v3171
      %v3505 = vpop.f32.mrb[0].mxu0
      %v3506 = vadd.f32 %v3261, %v3505
      %v3507 = vpop.f32.mrb[0].mxu0
      %3508 = vmatprep.mubr.f32.mxu0 %v3301
      %3509 = vmatmul.mubr.f32.gmra.mrb[0].mxu0 %v3173
      %v3510 = vpop.f32.mrb[0].mxu0
      %v3511 = vadd.f32 %v3261, %v3510
      %v3512 = vpop.f32.mrb[0].mxu0
      %3513 = vmatprep.mubr.f32.mxu0 %v3304
      %3514 = vmatmul.mubr.f32.gmra.mrb[0].mxu0 %v3175
      %v3515 = vpop.f32.mrb[0].mxu0
      %v3516 = vadd.f32 %v3261, %v3515
      %v3517 = vpop.f32.mrb[0].mxu0
      %3518 = vmatprep.mubr.f32.mxu0 %v3307
      %3519 = vmatmul.mubr.f32.gmra.mrb[0].mxu0 %v3177
      %v3520 = vpop.f32.mrb[0].mxu0
      %v3521 = vadd.f32 %v3261, %v3520
      %v3522 = vpop.f32.mrb[0].mxu0
      %3523 = vmatprep.mubr.f32.mxu0 %v3310
      %3524 = vmatmul.mubr.f32.gmra.mrb[0].mxu0 %v3179
      %v3525 = vpop.f32.mrb[0].mxu0
      %v3526 = vadd.f32 %v3261, %v3525
      %v3527 = vpop.f32.mrb[0].mxu0
      %3528 = vmatprep.mubr.f32.mxu0 %v3313
      %3529 = vmatmul.mubr.f32.gmra.mrb[0].mxu0 %v3181
      %v3530 = vpop.f32.mrb[0].mxu0
      %v3531 = vadd.f32 %v3261, %v3530
      %v3532 = vpop.f32.mrb[0].mxu0
      %3533 = vmatprep.mubr.f32.mxu0 %v3316
      %3534 = vmatmul.mubr.f32.gmra.mrb[0].mxu0 %v3183
      %v3535 = vpop.f32.mrb[0].mxu0
      %v3536 = vadd.f32 %v3261, %v3535
      %v3537 = vpop.f32.mrb[0].mxu0
      %3538 = vmatprep.mubr.f32.mxu0 %v3319
      %3539 = vmatmul.mubr.f32.gmra.mrb[0].mxu0 %v3185
      %v3540 = vpop.f32.mrb[0].mxu0
      %v3541 = vadd.f32 %v3261, %v3540
      %v3542 = vpop.f32.mrb[0].mxu0
      %3543 = vmatprep.mubr.f32.mxu0 %v3322
      %3544 = vmatmul.mubr.f32.gmra.mrb[0].mxu0 %v3187
      %v3545 = vpop.f32.mrb[0].mxu0
      %v3546 = vadd.f32 %v3261, %v3545
      %v3547 = vpop.f32.mrb[0].mxu0
      %3548 = vmatprep.mubr.f32.mxu0 %v3325
      %3549 = vmatmul.mubr.f32.gmra.mrb[0].mxu0 %v3189
      %v3550 = vpop.f32.mrb[0].mxu0
      %v3551 = vadd.f32 %v3261, %v3550
      %v3552 = vpop.f32.mrb[0].mxu0
      %3553 = vmatprep.mubr.f32.mxu0 %v3328
      %3554 = vmatmul.mubr.f32.gmra.mrb[0].mxu0 %v3191
      %v3555 = vpop.f32.mrb[0].mxu0
      %v3556 = vadd.f32 %v3261, %v3555
      %v3557 = vpop.f32.mrb[0].mxu0
      %3558 = vmatprep.mubr.f32.mxu0 %v3331
      %3559 = vmatmul.mubr.f32.gmra.mrb[0].mxu0 %v3193
      %v3560 = vpop.f32.mrb[0].mxu0
      %v3561 = vadd.f32 %v3261, %v3560
      %v3562 = vpop.f32.mrb[0].mxu0
      %3563 = vmatprep.mubr.f32.mxu0 %v3334
      %3564 = vmatmul.mubr.f32.gmra.mrb[0].mxu0 %v3195
      %v3565 = vpop.f32.mrb[0].mxu0
      %v3566 = vadd.f32 %v3261, %v3565
      %v3567 = vpop.f32.mrb[0].mxu0
      %3568 = vmatprep.mubr.f32.mxu0 %v3337
      %3569 = vmatmul.mubr.f32.gmra.mrb[0].mxu0 %v3197
      %v3570 = vpop.f32.mrb[0].mxu0
      %v3571 = vadd.f32 %v3261, %v3570
      %v3572 = vpop.f32.mrb[0].mxu0
      %3573 = vmatprep.mubr.f32.mxu0 %v3340
      %3574 = vmatmul.mubr.f32.gmra.mrb[0].mxu0 %v3199
      %v3575 = vpop.f32.mrb[0].mxu0
      %v3576 = vadd.f32 %v3261, %v3575
      %v3577 = vpop.f32.mrb[0].mxu0
      %3578 = vmatprep.mubr.f32.mxu0 %v3343
      %3579 = vmatmul.mubr.f32.gmra.mrb[0].mxu0 %v3201
      %v3580 = vpop.f32.mrb[0].mxu0
      %v3581 = vadd.f32 %v3261, %v3580
      %v3582 = vpop.f32.mrb[0].mxu0
      %3583 = vmatprep.mubr.f32.mxu0 %v3346
      %3584 = vmatmul.mubr.f32.gmra.mrb[0].mxu0 %v3203
      %v3585 = vpop.f32.mrb[0].mxu0
      %v3586 = vadd.f32 %v3261, %v3585
      %v3587 = vpop.f32.mrb[0].mxu0
      %3588 = vmatprep.mubr.f32.mxu0 %v3349
      %3589 = vmatmul.mubr.f32.gmra.mrb[0].mxu0 %v3205
      %v3590 = vpop.f32.mrb[0].mxu0
      %v3591 = vadd.f32 %v3261, %v3590
      %v3592 = vpop.f32.mrb[0].mxu0
      %3593 = vmatprep.mubr.f32.mxu0 %v3352
      %3594 = vmatmul.mubr.f32.gmra.mrb[0].mxu0 %v3207
      %v3595 = vpop.f32.mrb[0].mxu0
      %v3596 = vadd.f32 %v3261, %v3595
      %v3597 = vpop.f32.mrb[0].mxu0
      %3598 = vmatprep.mubr.f32.mxu0 %v3355
      %3599 = vmatmul.mubr.f32.gmra.mrb[0].mxu0 %v3209
      %v3600 = vpop.f32.mrb[0].mxu0
      %v3601 = vadd.f32 %v3261, %v3600
      %v3602 = vpop.f32.mrb[0].mxu0
      %3603 = vmatprep.mubr.f32.mxu0 %v3358
      %3604 = vmatmul.mubr.f32.gmra.mrb[0].mxu0 %v3211
      %v3605 = vpop.f32.mrb[0].mxu0
      %v3606 = vadd.f32 %v3261, %v3605
      %v3607 = vpop.f32.mrb[0].mxu0
      %3608 = vmatprep.mubr.f32.mxu0 %v3361
      %3609 = vmatmul.mubr.f32.gmra.mrb[0].mxu0 %v3213
      %v3610 = vpop.f32.mrb[0].mxu0
      %v3611 = vadd.f32 %v3261, %v3610
      %v3612 = vpop.f32.mrb[0].mxu0
      %3613 = vmatprep.mubr.f32.mxu0 %v3364
      %3614 = vmatmul.mubr.f32.gmra.mrb[0].mxu0 %v3215
      %v3615 = vpop.f32.mrb[0].mxu0
      %v3616 = vadd.f32 %v3261, %v3615
      %v3617 = vpop.f32.mrb[0].mxu0
      %3618 = vmatprep.mubr.f32.mxu0 %v3367
      %3619 = vmatmul.mubr.f32.gmra.mrb[0].mxu0 %v3217
      %v3620 = vpop.f32.mrb[0].mxu0
      %v3621 = vadd.f32 %v3261, %v3620
      %v3622 = vpop.f32.mrb[0].mxu0
      %3623 = vmatprep.mubr.f32.mxu0 %v3370
      %3624 = vmatmul.mubr.f32.gmra.mrb[0].mxu0 %v3219
      %v3625 = vpop.f32.mrb[0].mxu0
      %v3626 = vadd.f32 %v3261, %v3625
      %v3627 = vpop.f32.mrb[0].mxu0
      %3628 = vmatprep.mubr.f32.mxu0 %v3373
      %3629 = vmatmul.mubr.f32.gmra.mrb[0].mxu0 %v3221
      %v3630 = vpop.f32.mrb[0].mxu0
      %v3631 = vadd.f32 %v3261, %v3630
      %v3632 = vpop.f32.mrb[0].mxu0
      %3633 = vmatprep.mubr.f32.mxu0 %v3376
      %3634 = vmatmul.mubr.f32.gmra.mrb[0].mxu0 %v3223
      %v3635 = vpop.f32.mrb[0].mxu0
      %v3636 = vadd.f32 %v3261, %v3635
      %v3637 = vpop.f32.mrb[0].mxu0
      %3638 = vmatprep.mubr.f32.mxu0 %v3379
      %3639 = vmatmul.mubr.f32.gmra.mrb[0].mxu0 %v3225
      %v3640 = vpop.f32.mrb[0].mxu0
      %v3641 = vadd.f32 %v3261, %v3640
      %v3642 = vpop.f32.mrb[0].mxu0
      %3643 = vmatprep.mubr.f32.mxu0 %v3382
      %3644 = vmatmul.mubr.f32.gmra.mrb[0].mxu0 %v3227
      %v3645 = vpop.f32.mrb[0].mxu0
      %v3646 = vadd.f32 %v3261, %v3645
      %v3647 = vpop.f32.mrb[0].mxu0
      %3648 = vdwg.mxu0
      %v3649 = vmax.f32 %v3451, 0.0
      %v3650 = vmax.f32 %v3456, 0.0
      %v3651 = vmax.f32 %v3461, 0.0
      %v3652 = vmax.f32 %v3466, 0.0
      %v3653 = vmax.f32 %v3471, 0.0
      %v3654 = vmax.f32 %v3476, 0.0
      %v3655 = vmax.f32 %v3481, 0.0
      %v3656 = vmax.f32 %v3486, 0.0
      %v3657 = vmax.f32 %v3491, 0.0
      %v3658 = vmax.f32 %v3496, 0.0
      %v3659 = vmax.f32 %v3501, 0.0
      %v3660 = vmax.f32 %v3506, 0.0
      %v3661 = vmax.f32 %v3511, 0.0
      %v3662 = vmax.f32 %v3516, 0.0
      %v3663 = vmax.f32 %v3521, 0.0
      %v3664 = vmax.f32 %v3526, 0.0
      %v3665 = vmax.f32 %v3531, 0.0
      %v3666 = vmax.f32 %v3536, 0.0
      %v3667 = vmax.f32 %v3541, 0.0
      %v3668 = vmax.f32 %v3546, 0.0
      %v3669 = vmax.f32 %v3551, 0.0
      %v3670 = vmax.f32 %v3556, 0.0
      %v3671 = vmax.f32 %v3561, 0.0
      %v3672 = vmax.f32 %v3566, 0.0
      %v3673 = vmax.f32 %v3571, 0.0
      %v3674 = vmax.f32 %v3576, 0.0
      %v3675 = vmax.f32 %v3581, 0.0
      %v3676 = vmax.f32 %v3586, 0.0
      %v3677 = vmax.f32 %v3591, 0.0
      %v3678 = vmax.f32 %v3596, 0.0
      %v3679 = vmax.f32 %v3601, 0.0
      %v3680 = vmax.f32 %v3606, 0.0
      %v3681 = vmax.f32 %v3611, 0.0
      %v3682 = vmax.f32 %v3616, 0.0
      %v3683 = vmax.f32 %v3621, 0.0
      %v3684 = vmax.f32 %v3626, 0.0
      %v3685 = vmax.f32 %v3631, 0.0
      %v3686 = vmax.f32 %v3636, 0.0
      %v3687 = vmax.f32 %v3641, 0.0
      %v3688 = vmax.f32 %v3646, 0.0
      %v3689 = vadd.s32 %v498, 8
      %v3690 = vadd.s32 %v498, 16
      %v3691 = vadd.s32 %v498, 24
      %v3692 = vadd.s32 %v498, 32
      %vm3693 = vcmp.eq.s32.totalorder %v498, 0
      %vm3694 = vcmp.eq.s32.totalorder %v3689, 0
      %vm3695 = vcmp.eq.s32.totalorder %v3690, 0
      %vm3696 = vcmp.eq.s32.totalorder %v3691, 0
      %vm3697 = vcmp.eq.s32.totalorder %v3692, 0
      %v3698 = vsel %vm3693, 1, 0
      %v3699 = vsel %vm3694, 1, 0
      %v3700 = vsel %vm3695, 1, 0
      %v3701 = vsel %vm3696, 1, 0
      %v3702 = vsel %vm3697, 1, 0
      %v3703 = vcvt.s32.f32 %v3698
      %v3704 = vcvt.s32.f32 %v3699
      %v3705 = vcvt.s32.f32 %v3700
      %v3706 = vcvt.s32.f32 %v3701
      %v3707 = vcvt.s32.f32 %v3702
      %v3708 = vmul.f32 %v3649, %v3703
      %v3709 = vmul.f32 %v3650, %v3704
      %v3710 = vmul.f32 %v3651, %v3705
      %v3711 = vmul.f32 %v3652, %v3706
      %v3712 = vmul.f32 %v3653, %v3707
      %v3713 = vmul.f32 %v3654, %v3703
      %v3714 = vmul.f32 %v3655, %v3704
      %v3715 = vmul.f32 %v3656, %v3705
      %v3716 = vmul.f32 %v3657, %v3706
      %v3717 = vmul.f32 %v3658, %v3707
      %v3718 = vmul.f32 %v3659, %v3703
      %v3719 = vmul.f32 %v3660, %v3704
      %v3720 = vmul.f32 %v3661, %v3705
      %v3721 = vmul.f32 %v3662, %v3706
      %v3722 = vmul.f32 %v3663, %v3707
      %v3723 = vmul.f32 %v3664, %v3703
      %v3724 = vmul.f32 %v3665, %v3704
      %v3725 = vmul.f32 %v3666, %v3705
      %v3726 = vmul.f32 %v3667, %v3706
      %v3727 = vmul.f32 %v3668, %v3707
      %v3728 = vmul.f32 %v3669, %v3703
      %v3729 = vmul.f32 %v3670, %v3704
      %v3730 = vmul.f32 %v3671, %v3705
      %v3731 = vmul.f32 %v3672, %v3706
      %v3732 = vmul.f32 %v3673, %v3707
      %v3733 = vmul.f32 %v3674, %v3703
      %v3734 = vmul.f32 %v3675, %v3704
      %v3735 = vmul.f32 %v3676, %v3705
      %v3736 = vmul.f32 %v3677, %v3706
      %v3737 = vmul.f32 %v3678, %v3707
      %v3738 = vmul.f32 %v3679, %v3703
      %v3739 = vmul.f32 %v3680, %v3704
      %v3740 = vmul.f32 %v3681, %v3705
      %v3741 = vmul.f32 %v3682, %v3706
      %v3742 = vmul.f32 %v3683, %v3707
      %v3743 = vmul.f32 %v3684, %v3703
      %v3744 = vmul.f32 %v3685, %v3704
      %v3745 = vmul.f32 %v3686, %v3705
      %v3746 = vmul.f32 %v3687, %v3706
      %v3747 = vmul.f32 %v3688, %v3707
      %vm3748 = vcmask 220160
      %v3749 = vsel %vm3748, %v3708, 0.0
      %v3750 = vsel %vm3748, %v3709, 0.0
      %v3751 = vadd.f32 %v3749, %v3750
      %v3752 = vsel %vm3748, %v3710, 0.0
      %v3753 = vadd.f32 %v3751, %v3752
      %v3754 = vsel %vm3748, %v3711, 0.0
      %v3755 = vadd.f32 %v3753, %v3754
      %v3756 = vsel %vm3748, %v3712, 0.0
      %v3757 = vadd.f32 %v3755, %v3756
      %v3758 = vrot.slane %v3757, 4
      %v3759 = vadd.f32 %v3757, %v3758
      %v3760 = vrot.slane %v3759, 2
      %v3761 = vadd.f32 %v3759, %v3760
      %v3762 = vrot.slane %v3761, 1
      %v3763 = vadd.f32 %v3761, %v3762
      %v3764 = vsel %vm3748, %v3713, 0.0
      %v3765 = vsel %vm3748, %v3714, 0.0
      %v3766 = vadd.f32 %v3764, %v3765
      %v3767 = vsel %vm3748, %v3715, 0.0
      %v3768 = vadd.f32 %v3766, %v3767
      %v3769 = vsel %vm3748, %v3716, 0.0
      %v3770 = vadd.f32 %v3768, %v3769
      %v3771 = vsel %vm3748, %v3717, 0.0
      %v3772 = vadd.f32 %v3770, %v3771
      %v3773 = vrot.slane %v3772, 4
      %v3774 = vadd.f32 %v3772, %v3773
      %v3775 = vrot.slane %v3774, 2
      %v3776 = vadd.f32 %v3774, %v3775
      %v3777 = vrot.slane %v3776, 1
      %v3778 = vadd.f32 %v3776, %v3777
      %v3779 = vsel %vm3748, %v3718, 0.0
      %v3780 = vsel %vm3748, %v3719, 0.0
      %v3781 = vadd.f32 %v3779, %v3780
      %v3782 = vsel %vm3748, %v3720, 0.0
      %v3783 = vadd.f32 %v3781, %v3782
      %v3784 = vsel %vm3748, %v3721, 0.0
      %v3785 = vadd.f32 %v3783, %v3784
      %v3786 = vsel %vm3748, %v3722, 0.0
      %v3787 = vadd.f32 %v3785, %v3786
      %v3788 = vrot.slane %v3787, 4
      %v3789 = vadd.f32 %v3787, %v3788
      %v3790 = vrot.slane %v3789, 2
      %v3791 = vadd.f32 %v3789, %v3790
      %v3792 = vrot.slane %v3791, 1
      %v3793 = vadd.f32 %v3791, %v3792
      %v3794 = vsel %vm3748, %v3723, 0.0
      %v3795 = vsel %vm3748, %v3724, 0.0
      %v3796 = vadd.f32 %v3794, %v3795
      %v3797 = vsel %vm3748, %v3725, 0.0
      %v3798 = vadd.f32 %v3796, %v3797
      %v3799 = vsel %vm3748, %v3726, 0.0
      %v3800 = vadd.f32 %v3798, %v3799
      %v3801 = vsel %vm3748, %v3727, 0.0
      %v3802 = vadd.f32 %v3800, %v3801
      %v3803 = vrot.slane %v3802, 4
      %v3804 = vadd.f32 %v3802, %v3803
      %v3805 = vrot.slane %v3804, 2
      %v3806 = vadd.f32 %v3804, %v3805
      %v3807 = vrot.slane %v3806, 1
      %v3808 = vadd.f32 %v3806, %v3807
      %v3809 = vsel %vm3748, %v3728, 0.0
      %v3810 = vsel %vm3748, %v3729, 0.0
      %v3811 = vadd.f32 %v3809, %v3810
      %v3812 = vsel %vm3748, %v3730, 0.0
      %v3813 = vadd.f32 %v3811, %v3812
      %v3814 = vsel %vm3748, %v3731, 0.0
      %v3815 = vadd.f32 %v3813, %v3814
      %v3816 = vsel %vm3748, %v3732, 0.0
      %v3817 = vadd.f32 %v3815, %v3816
      %v3818 = vrot.slane %v3817, 4
      %v3819 = vadd.f32 %v3817, %v3818
      %v3820 = vrot.slane %v3819, 2
      %v3821 = vadd.f32 %v3819, %v3820
      %v3822 = vrot.slane %v3821, 1
      %v3823 = vadd.f32 %v3821, %v3822
      %v3824 = vsel %vm3748, %v3733, 0.0
      %v3825 = vsel %vm3748, %v3734, 0.0
      %v3826 = vadd.f32 %v3824, %v3825
      %v3827 = vsel %vm3748, %v3735, 0.0
      %v3828 = vadd.f32 %v3826, %v3827
      %v3829 = vsel %vm3748, %v3736, 0.0
      %v3830 = vadd.f32 %v3828, %v3829
      %v3831 = vsel %vm3748, %v3737, 0.0
      %v3832 = vadd.f32 %v3830, %v3831
      %v3833 = vrot.slane %v3832, 4
      %v3834 = vadd.f32 %v3832, %v3833
      %v3835 = vrot.slane %v3834, 2
      %v3836 = vadd.f32 %v3834, %v3835
      %v3837 = vrot.slane %v3836, 1
      %v3838 = vadd.f32 %v3836, %v3837
      %v3839 = vsel %vm3748, %v3738, 0.0
      %v3840 = vsel %vm3748, %v3739, 0.0
      %v3841 = vadd.f32 %v3839, %v3840
      %v3842 = vsel %vm3748, %v3740, 0.0
      %v3843 = vadd.f32 %v3841, %v3842
      %v3844 = vsel %vm3748, %v3741, 0.0
      %v3845 = vadd.f32 %v3843, %v3844
      %v3846 = vsel %vm3748, %v3742, 0.0
      %v3847 = vadd.f32 %v3845, %v3846
      %v3848 = vrot.slane %v3847, 4
      %v3849 = vadd.f32 %v3847, %v3848
      %v3850 = vrot.slane %v3849, 2
      %v3851 = vadd.f32 %v3849, %v3850
      %v3852 = vrot.slane %v3851, 1
      %v3853 = vadd.f32 %v3851, %v3852
      %v3854 = vsel %vm3748, %v3743, 0.0
      %v3855 = vsel %vm3748, %v3744, 0.0
      %v3856 = vadd.f32 %v3854, %v3855
      %v3857 = vsel %vm3748, %v3745, 0.0
      %v3858 = vadd.f32 %v3856, %v3857
      %v3859 = vsel %vm3748, %v3746, 0.0
      %v3860 = vadd.f32 %v3858, %v3859
      %v3861 = vsel %vm3748, %v3747, 0.0
      %v3862 = vadd.f32 %v3860, %v3861
      %v3863 = vrot.slane %v3862, 4
      %v3864 = vadd.f32 %v3862, %v3863
      %v3865 = vrot.slane %v3864, 2
      %v3866 = vadd.f32 %v3864, %v3865
      %v3867 = vrot.slane %v3866, 1
      %v3868 = vadd.f32 %v3866, %v3867
      %v3869 = vld [vmem:[%s7] sm:$0xff]
      %v3870 = vld [vmem:[%s7 + $0x8] sm:$0xff]
      %v3871 = vld [vmem:[%s7 + $0x10] sm:$0xff]
      %v3872 = vld [vmem:[%s7 + $0x18] sm:$0x7]
      %vm3873 = vcmp.eq.s32.totalorder %v498, 4
      %vm3874 = vcmp.eq.s32.totalorder %v3689, 4
      %vm3875 = vcmp.eq.s32.totalorder %v3690, 4
      %vm3876 = vcmp.eq.s32.totalorder %v3691, 4
      %vm3877 = vcmp.eq.s32.totalorder %v3692, 4
      %v3878 = vsel %vm3873, 1, 0
      %v3879 = vsel %vm3874, 1, 0
      %v3880 = vsel %vm3875, 1, 0
      %v3881 = vsel %vm3876, 1, 0
      %v3882 = vsel %vm3877, 1, 0
      %v3883 = vcvt.s32.f32 %v3878
      %v3884 = vcvt.s32.f32 %v3879
      %v3885 = vcvt.s32.f32 %v3880
      %v3886 = vcvt.s32.f32 %v3881
      %v3887 = vcvt.s32.f32 %v3882
      %v3888 = vmul.f32 %v3649, %v3883
      %v3889 = vmul.f32 %v3650, %v3884
      %v3890 = vmul.f32 %v3651, %v3885
      %v3891 = vmul.f32 %v3652, %v3886
      %v3892 = vmul.f32 %v3653, %v3887
      %v3893 = vmul.f32 %v3654, %v3883
      %v3894 = vmul.f32 %v3655, %v3884
      %v3895 = vmul.f32 %v3656, %v3885
      %v3896 = vmul.f32 %v3657, %v3886
      %v3897 = vmul.f32 %v3658, %v3887
      %v3898 = vmul.f32 %v3659, %v3883
      %v3899 = vmul.f32 %v3660, %v3884
      %v3900 = vmul.f32 %v3661, %v3885
      %v3901 = vmul.f32 %v3662, %v3886
      %v3902 = vmul.f32 %v3663, %v3887
      %v3903 = vmul.f32 %v3664, %v3883
      %v3904 = vmul.f32 %v3665, %v3884
      %v3905 = vmul.f32 %v3666, %v3885
      %v3906 = vmul.f32 %v3667, %v3886
      %v3907 = vmul.f32 %v3668, %v3887
      %v3908 = vmul.f32 %v3669, %v3883
      %v3909 = vmul.f32 %v3670, %v3884
      %v3910 = vmul.f32 %v3671, %v3885
      %v3911 = vmul.f32 %v3672, %v3886
      %v3912 = vmul.f32 %v3673, %v3887
      %v3913 = vmul.f32 %v3674, %v3883
      %v3914 = vmul.f32 %v3675, %v3884
      %v3915 = vmul.f32 %v3676, %v3885
      %v3916 = vmul.f32 %v3677, %v3886
      %v3917 = vmul.f32 %v3678, %v3887
      %v3918 = vmul.f32 %v3679, %v3883
      %v3919 = vmul.f32 %v3680, %v3884
      %v3920 = vmul.f32 %v3681, %v3885
      %v3921 = vmul.f32 %v3682, %v3886
      %v3922 = vmul.f32 %v3683, %v3887
      %v3923 = vmul.f32 %v3684, %v3883
      %v3924 = vmul.f32 %v3685, %v3884
      %v3925 = vmul.f32 %v3686, %v3885
      %v3926 = vmul.f32 %v3687, %v3886
      %v3927 = vmul.f32 %v3688, %v3887
      %v3928 = vsel %vm3748, %v3888, 0.0
      %v3929 = vsel %vm3748, %v3889, 0.0
      %v3930 = vadd.f32 %v3928, %v3929
      %v3931 = vsel %vm3748, %v3890, 0.0
      %v3932 = vadd.f32 %v3930, %v3931
      %v3933 = vsel %vm3748, %v3891, 0.0
      %v3934 = vadd.f32 %v3932, %v3933
      %v3935 = vsel %vm3748, %v3892, 0.0
      %v3936 = vadd.f32 %v3934, %v3935
      %v3937 = vrot.slane %v3936, 4
      %v3938 = vadd.f32 %v3936, %v3937
      %v3939 = vrot.slane %v3938, 2
      %v3940 = vadd.f32 %v3938, %v3939
      %v3941 = vrot.slane %v3940, 1
      %v3942 = vadd.f32 %v3940, %v3941
      %v3943 = vsel %vm3748, %v3893, 0.0
      %v3944 = vsel %vm3748, %v3894, 0.0
      %v3945 = vadd.f32 %v3943, %v3944
      %v3946 = vsel %vm3748, %v3895, 0.0
      %v3947 = vadd.f32 %v3945, %v3946
      %v3948 = vsel %vm3748, %v3896, 0.0
      %v3949 = vadd.f32 %v3947, %v3948
      %v3950 = vsel %vm3748, %v3897, 0.0
      %v3951 = vadd.f32 %v3949, %v3950
      %v3952 = vrot.slane %v3951, 4
      %v3953 = vadd.f32 %v3951, %v3952
      %v3954 = vrot.slane %v3953, 2
      %v3955 = vadd.f32 %v3953, %v3954
      %v3956 = vrot.slane %v3955, 1
      %v3957 = vadd.f32 %v3955, %v3956
      %v3958 = vsel %vm3748, %v3898, 0.0
      %v3959 = vsel %vm3748, %v3899, 0.0
      %v3960 = vadd.f32 %v3958, %v3959
      %v3961 = vsel %vm3748, %v3900, 0.0
      %v3962 = vadd.f32 %v3960, %v3961
      %v3963 = vsel %vm3748, %v3901, 0.0
      %v3964 = vadd.f32 %v3962, %v3963
      %v3965 = vsel %vm3748, %v3902, 0.0
      %v3966 = vadd.f32 %v3964, %v3965
      %v3967 = vrot.slane %v3966, 4
      %v3968 = vadd.f32 %v3966, %v3967
      %v3969 = vrot.slane %v3968, 2
      %v3970 = vadd.f32 %v3968, %v3969
      %v3971 = vrot.slane %v3970, 1
      %v3972 = vadd.f32 %v3970, %v3971
      %v3973 = vsel %vm3748, %v3903, 0.0
      %v3974 = vsel %vm3748, %v3904, 0.0
      %v3975 = vadd.f32 %v3973, %v3974
      %v3976 = vsel %vm3748, %v3905, 0.0
      %v3977 = vadd.f32 %v3975, %v3976
      %v3978 = vsel %vm3748, %v3906, 0.0
      %v3979 = vadd.f32 %v3977, %v3978
      %v3980 = vsel %vm3748, %v3907, 0.0
      %v3981 = vadd.f32 %v3979, %v3980
      %v3982 = vrot.slane %v3981, 4
      %v3983 = vadd.f32 %v3981, %v3982
      %v3984 = vrot.slane %v3983, 2
      %v3985 = vadd.f32 %v3983, %v3984
      %v3986 = vrot.slane %v3985, 1
      %v3987 = vadd.f32 %v3985, %v3986
      %v3988 = vsel %vm3748, %v3908, 0.0
      %v3989 = vsel %vm3748, %v3909, 0.0
      %v3990 = vadd.f32 %v3988, %v3989
      %v3991 = vsel %vm3748, %v3910, 0.0
      %v3992 = vadd.f32 %v3990, %v3991
      %v3993 = vsel %vm3748, %v3911, 0.0
      %v3994 = vadd.f32 %v3992, %v3993
      %v3995 = vsel %vm3748, %v3912, 0.0
      %v3996 = vadd.f32 %v3994, %v3995
      %v3997 = vrot.slane %v3996, 4
      %v3998 = vadd.f32 %v3996, %v3997
      %v3999 = vrot.slane %v3998, 2
      %v4000 = vadd.f32 %v3998, %v3999
      %v4001 = vrot.slane %v4000, 1
      %v4002 = vadd.f32 %v4000, %v4001
      %v4003 = vsel %vm3748, %v3913, 0.0
      %v4004 = vsel %vm3748, %v3914, 0.0
      %v4005 = vadd.f32 %v4003, %v4004
      %v4006 = vsel %vm3748, %v3915, 0.0
      %v4007 = vadd.f32 %v4005, %v4006
      %v4008 = vsel %vm3748, %v3916, 0.0
      %v4009 = vadd.f32 %v4007, %v4008
      %v4010 = vsel %vm3748, %v3917, 0.0
      %v4011 = vadd.f32 %v4009, %v4010
      %v4012 = vrot.slane %v4011, 4
      %v4013 = vadd.f32 %v4011, %v4012
      %v4014 = vrot.slane %v4013, 2
      %v4015 = vadd.f32 %v4013, %v4014
      %v4016 = vrot.slane %v4015, 1
      %v4017 = vadd.f32 %v4015, %v4016
      %v4018 = vsel %vm3748, %v3918, 0.0
      %v4019 = vsel %vm3748, %v3919, 0.0
      %v4020 = vadd.f32 %v4018, %v4019
      %v4021 = vsel %vm3748, %v3920, 0.0
      %v4022 = vadd.f32 %v4020, %v4021
      %v4023 = vsel %vm3748, %v3921, 0.0
      %v4024 = vadd.f32 %v4022, %v4023
      %v4025 = vsel %vm3748, %v3922, 0.0
      %v4026 = vadd.f32 %v4024, %v4025
      %v4027 = vrot.slane %v4026, 4
      %v4028 = vadd.f32 %v4026, %v4027
      %v4029 = vrot.slane %v4028, 2
      %v4030 = vadd.f32 %v4028, %v4029
      %v4031 = vrot.slane %v4030, 1
      %v4032 = vadd.f32 %v4030, %v4031
      %v4033 = vsel %vm3748, %v3923, 0.0
      %v4034 = vsel %vm3748, %v3924, 0.0
      %v4035 = vadd.f32 %v4033, %v4034
      %v4036 = vsel %vm3748, %v3925, 0.0
      %v4037 = vadd.f32 %v4035, %v4036
      %v4038 = vsel %vm3748, %v3926, 0.0
      %v4039 = vadd.f32 %v4037, %v4038
      %v4040 = vsel %vm3748, %v3927, 0.0
      %v4041 = vadd.f32 %v4039, %v4040
      %v4042 = vrot.slane %v4041, 4
      %v4043 = vadd.f32 %v4041, %v4042
      %v4044 = vrot.slane %v4043, 2
      %v4045 = vadd.f32 %v4043, %v4044
      %v4046 = vrot.slane %v4045, 1
      %v4047 = vadd.f32 %v4045, %v4046
      %s4048 = scalar_lea.vmem %s7, 32
      %v4049 = vld [vmem:[%s4048] sm:$0xff]
      %v4050 = vld [vmem:[%s4048 + $0x8] sm:$0xff]
      %v4051 = vld [vmem:[%s4048 + $0x10] sm:$0xff]
      %v4052 = vld [vmem:[%s4048 + $0x18] sm:$0x7]
      %vm4061 = vcmask 1041409
      %v4062 = vsel %vm4061, %v3957, %v3942
      %vm4063 = vcmask 1042434
      %v4064 = vsel %vm4063, %v3972, %v4062
      %vm4065 = vcmask 1043459
      %v4066 = vsel %vm4065, %v3987, %v4064
      %vm4067 = vcmask 1044484
      %v4068 = vsel %vm4067, %v4002, %v4066
      %vm4069 = vcmask 1045509
      %v4070 = vsel %vm4069, %v4017, %v4068
      %vm4071 = vcmask 1046534
      %v4072 = vsel %vm4071, %v4032, %v4070
      %vm4073 = vcmask 1047559
      %v4074 = vsel %vm4073, %v4047, %v4072
      %v4075 = vsel %vm3748, %v4074, 0
      %vm4077 = vcmask 1042432
      %v4079 = vsel %vm4077, %v4052, 0
      %4081 = vmatprep.subr.mxu0 0.0
      %4082 = vmatpush1.msra.mxu0 %v4049
      %4083 = vmatprep.subr.mxu0 0.0
      %4084 = vmatpush1.msra.mxu0 %v4050
      %4085 = vmatprep.subr.mxu0 0.0
      %4086 = vmatpush1.msra.mxu0 %v4051
      %4087 = vmatprep.subr.mxu0 0.0
      %4088 = vmatpush1.msra.mxu0 %v4079
      %4089 = vmatprep.subr.mxu0 0.0
      %4090 = vmatpush1.msra.mxu0 0.0
      %4091 = vmatprep.subr.mxu0 0.0
      %4092 = vmatpush1.msra.mxu0 0.0
      %4093 = vmatprep.subr.mxu0 0.0
      %4094 = vmatpush1.msra.mxu0 0.0
      %4095 = vmatprep.subr.mxu0 0.0
      %4096 = vmatpush1.msra.mxu0 0.0
      %4097 = vmatprep.subr.mxu0 0.0
      %4098 = vmatpush1.msra.mxu0 0.0
      %4099 = vmatprep.subr.mxu0 0.0
      %4100 = vmatpush1.msra.mxu0 0.0
      %4101 = vmatprep.subr.mxu0 0.0
      %4102 = vmatpush1.msra.mxu0 0.0
      %4103 = vmatprep.subr.mxu0 0.0
      %4104 = vmatpush1.msra.mxu0 0.0
      %4105 = vmatprep.subr.mxu0 0.0
      %4106 = vmatpush1.msra.mxu0 0.0
      %4107 = vmatprep.subr.mxu0 0.0
      %4108 = vmatpush1.msra.mxu0 0.0
      %4109 = vmatprep.subr.mxu0 0.0
      %4110 = vmatpush1.msra.mxu0 0.0
      %4111 = vmatprep.subr.mxu0 0.0
      %4112 = vmatpush1.msra.mxu0 0.0
      %4113 = vmatprep.subr.mxu0 0.0
      %4114 = vmatpush1.msra.mxu0 0.0
      %4115 = vmatprep.subr.mxu0 0.0
      %4116 = vmatpush1.msra.mxu0 0.0
      %4117 = vmatprep.subr.mxu0 0.0
      %4118 = vmatpush1.msra.mxu0 0.0
      %4119 = vmatprep.subr.mxu0 0.0
      %4120 = vmatpush1.msra.mxu0 0.0
      %4121 = vmatprep.subr.mxu0 0.0
      %4122 = vmatpush1.msra.mxu0 0.0
      %4123 = vmatprep.subr.mxu0 0.0
      %4124 = vmatpush1.msra.mxu0 0.0
      %4125 = vmatprep.subr.mxu0 0.0
      %4126 = vmatpush1.msra.mxu0 0.0
      %4127 = vmatprep.subr.mxu0 0.0
      %4128 = vmatpush1.msra.mxu0 0.0
      %4129 = vmatprep.subr.mxu0 0.0
      %4130 = vmatpush1.msra.mxu0 0.0
      %4131 = vmatprep.subr.mxu0 0.0
      %4132 = vmatpush1.msra.mxu0 0.0
      %4133 = vmatprep.subr.mxu0 0.0
      %4134 = vmatpush1.msra.mxu0 0.0
      %4135 = vmatprep.subr.mxu0 0.0
      %4136 = vmatpush1.msra.mxu0 0.0
      %4137 = vmatprep.subr.mxu0 0.0
      %4138 = vmatpush1.msra.mxu0 0.0
      %4139 = vmatprep.subr.mxu0 0.0
      %4140 = vmatpush1.msra.mxu0 0.0
      %4141 = vmatprep.subr.mxu0 0.0
      %4142 = vmatpush1.msra.mxu0 0.0
      %4143 = vmatprep.subr.mxu0 0.0
      %4144 = vmatpush1.msra.mxu0 0.0
      %4145 = vmatprep.mubr.f32.mxu0 0.0
      %4146 = vmatmul.mubr.f32.gmra.mrb[0].mxu0 %v4075
      %v4147 = vpop.f32.mrb[0].mxu0
      %v4148 = vadd.f32 0.0, %v4147
      %v4149 = vpop.f32.mrb[0].mxu0
      %4150 = vdwg.mxu0
      %v4159 = vsel %vm4061, %v3778, %v3763
      %v4160 = vsel %vm4063, %v3793, %v4159
      %v4161 = vsel %vm4065, %v3808, %v4160
      %v4162 = vsel %vm4067, %v3823, %v4161
      %v4163 = vsel %vm4069, %v3838, %v4162
      %v4164 = vsel %vm4071, %v3853, %v4163
      %v4165 = vsel %vm4073, %v3868, %v4164
      %v4166 = vsel %vm3748, %v4165, 0
      %v4169 = vsel %vm4077, %v3872, 0
      %4171 = vmatprep.subr.mxu0 0.0
      %4172 = vmatpush1.msra.mxu0 %v3869
      %4173 = vmatprep.subr.mxu0 0.0
      %4174 = vmatpush1.msra.mxu0 %v3870
      %4175 = vmatprep.subr.mxu0 0.0
      %4176 = vmatpush1.msra.mxu0 %v3871
      %4177 = vmatprep.subr.mxu0 0.0
      %4178 = vmatpush1.msra.mxu0 %v4169
      %4179 = vmatprep.subr.mxu0 0.0
      %4180 = vmatpush1.msra.mxu0 0.0
      %4181 = vmatprep.subr.mxu0 0.0
      %4182 = vmatpush1.msra.mxu0 0.0
      %4183 = vmatprep.subr.mxu0 0.0
      %4184 = vmatpush1.msra.mxu0 0.0
      %4185 = vmatprep.subr.mxu0 0.0
      %4186 = vmatpush1.msra.mxu0 0.0
      %4187 = vmatprep.subr.mxu0 0.0
      %4188 = vmatpush1.msra.mxu0 0.0
      %4189 = vmatprep.subr.mxu0 0.0
      %4190 = vmatpush1.msra.mxu0 0.0
      %4191 = vmatprep.subr.mxu0 0.0
      %4192 = vmatpush1.msra.mxu0 0.0
      %4193 = vmatprep.subr.mxu0 0.0
      %4194 = vmatpush1.msra.mxu0 0.0
      %4195 = vmatprep.subr.mxu0 0.0
      %4196 = vmatpush1.msra.mxu0 0.0
      %4197 = vmatprep.subr.mxu0 0.0
      %4198 = vmatpush1.msra.mxu0 0.0
      %4199 = vmatprep.subr.mxu0 0.0
      %4200 = vmatpush1.msra.mxu0 0.0
      %4201 = vmatprep.subr.mxu0 0.0
      %4202 = vmatpush1.msra.mxu0 0.0
      %4203 = vmatprep.subr.mxu0 0.0
      %4204 = vmatpush1.msra.mxu0 0.0
      %4205 = vmatprep.subr.mxu0 0.0
      %4206 = vmatpush1.msra.mxu0 0.0
      %4207 = vmatprep.subr.mxu0 0.0
      %4208 = vmatpush1.msra.mxu0 0.0
      %4209 = vmatprep.subr.mxu0 0.0
      %4210 = vmatpush1.msra.mxu0 0.0
      %4211 = vmatprep.subr.mxu0 0.0
      %4212 = vmatpush1.msra.mxu0 0.0
      %4213 = vmatprep.subr.mxu0 0.0
      %4214 = vmatpush1.msra.mxu0 0.0
      %4215 = vmatprep.subr.mxu0 0.0
      %4216 = vmatpush1.msra.mxu0 0.0
      %4217 = vmatprep.subr.mxu0 0.0
      %4218 = vmatpush1.msra.mxu0 0.0
      %4219 = vmatprep.subr.mxu0 0.0
      %4220 = vmatpush1.msra.mxu0 0.0
      %4221 = vmatprep.subr.mxu0 0.0
      %4222 = vmatpush1.msra.mxu0 0.0
      %4223 = vmatprep.subr.mxu0 0.0
      %4224 = vmatpush1.msra.mxu0 0.0
      %4225 = vmatprep.subr.mxu0 0.0
      %4226 = vmatpush1.msra.mxu0 0.0
      %4227 = vmatprep.subr.mxu0 0.0
      %4228 = vmatpush1.msra.mxu0 0.0
      %4229 = vmatprep.subr.mxu0 0.0
      %4230 = vmatpush1.msra.mxu0 0.0
      %4231 = vmatprep.subr.mxu0 0.0
      %4232 = vmatpush1.msra.mxu0 0.0
      %4233 = vmatprep.subr.mxu0 0.0
      %4234 = vmatpush1.msra.mxu0 0.0
      %4235 = vmatprep.mubr.f32.mxu0 0.0
      %4236 = vmatmul.mubr.f32.gmra.mrb[0].mxu0 %v4166
      %v4237 = vpop.f32.mrb[0].mxu0
      %v4238 = vadd.f32 %v4148, %v4237
      %v4239 = vpop.f32.mrb[0].mxu0
      %4240 = vdwg.mxu0
      %vm4241 = vcmp.eq.s32.totalorder %v498, 8
      %vm4242 = vcmp.eq.s32.totalorder %v3689, 8
      %vm4243 = vcmp.eq.s32.totalorder %v3690, 8
      %vm4244 = vcmp.eq.s32.totalorder %v3691, 8
      %vm4245 = vcmp.eq.s32.totalorder %v3692, 8
      %v4246 = vsel %vm4241, 1, 0
      %v4247 = vsel %vm4242, 1, 0
      %v4248 = vsel %vm4243, 1, 0
      %v4249 = vsel %vm4244, 1, 0
      %v4250 = vsel %vm4245, 1, 0
      %v4251 = vcvt.s32.f32 %v4246
      %v4252 = vcvt.s32.f32 %v4247
      %v4253 = vcvt.s32.f32 %v4248
      %v4254 = vcvt.s32.f32 %v4249
      %v4255 = vcvt.s32.f32 %v4250
      %v4256 = vmul.f32 %v3649, %v4251
      %v4257 = vmul.f32 %v3650, %v4252
      %v4258 = vmul.f32 %v3651, %v4253
      %v4259 = vmul.f32 %v3652, %v4254
      %v4260 = vmul.f32 %v3653, %v4255
      %v4261 = vmul.f32 %v3654, %v4251
      %v4262 = vmul.f32 %v3655, %v4252
      %v4263 = vmul.f32 %v3656, %v4253
      %v4264 = vmul.f32 %v3657, %v4254
      %v4265 = vmul.f32 %v3658, %v4255
      %v4266 = vmul.f32 %v3659, %v4251
      %v4267 = vmul.f32 %v3660, %v4252
      %v4268 = vmul.f32 %v3661, %v4253
      %v4269 = vmul.f32 %v3662, %v4254
      %v4270 = vmul.f32 %v3663, %v4255
      %v4271 = vmul.f32 %v3664, %v4251
      %v4272 = vmul.f32 %v3665, %v4252
      %v4273 = vmul.f32 %v3666, %v4253
      %v4274 = vmul.f32 %v3667, %v4254
      %v4275 = vmul.f32 %v3668, %v4255
      %v4276 = vmul.f32 %v3669, %v4251
      %v4277 = vmul.f32 %v3670, %v4252
      %v4278 = vmul.f32 %v3671, %v4253
      %v4279 = vmul.f32 %v3672, %v4254
      %v4280 = vmul.f32 %v3673, %v4255
      %v4281 = vmul.f32 %v3674, %v4251
      %v4282 = vmul.f32 %v3675, %v4252
      %v4283 = vmul.f32 %v3676, %v4253
      %v4284 = vmul.f32 %v3677, %v4254
      %v4285 = vmul.f32 %v3678, %v4255
      %v4286 = vmul.f32 %v3679, %v4251
      %v4287 = vmul.f32 %v3680, %v4252
      %v4288 = vmul.f32 %v3681, %v4253
      %v4289 = vmul.f32 %v3682, %v4254
      %v4290 = vmul.f32 %v3683, %v4255
      %v4291 = vmul.f32 %v3684, %v4251
      %v4292 = vmul.f32 %v3685, %v4252
      %v4293 = vmul.f32 %v3686, %v4253
      %v4294 = vmul.f32 %v3687, %v4254
      %v4295 = vmul.f32 %v3688, %v4255
      %v4296 = vsel %vm3748, %v4256, 0.0
      %v4297 = vsel %vm3748, %v4257, 0.0
      %v4298 = vadd.f32 %v4296, %v4297
      %v4299 = vsel %vm3748, %v4258, 0.0
      %v4300 = vadd.f32 %v4298, %v4299
      %v4301 = vsel %vm3748, %v4259, 0.0
      %v4302 = vadd.f32 %v4300, %v4301
      %v4303 = vsel %vm3748, %v4260, 0.0
      %v4304 = vadd.f32 %v4302, %v4303
      %v4305 = vrot.slane %v4304, 4
      %v4306 = vadd.f32 %v4304, %v4305
      %v4307 = vrot.slane %v4306, 2
      %v4308 = vadd.f32 %v4306, %v4307
      %v4309 = vrot.slane %v4308, 1
      %v4310 = vadd.f32 %v4308, %v4309
      %v4311 = vsel %vm3748, %v4261, 0.0
      %v4312 = vsel %vm3748, %v4262, 0.0
      %v4313 = vadd.f32 %v4311, %v4312
      %v4314 = vsel %vm3748, %v4263, 0.0
      %v4315 = vadd.f32 %v4313, %v4314
      %v4316 = vsel %vm3748, %v4264, 0.0
      %v4317 = vadd.f32 %v4315, %v4316
      %v4318 = vsel %vm3748, %v4265, 0.0
      %v4319 = vadd.f32 %v4317, %v4318
      %v4320 = vrot.slane %v4319, 4
      %v4321 = vadd.f32 %v4319, %v4320
      %v4322 = vrot.slane %v4321, 2
      %v4323 = vadd.f32 %v4321, %v4322
      %v4324 = vrot.slane %v4323, 1
      %v4325 = vadd.f32 %v4323, %v4324
      %v4326 = vsel %vm3748, %v4266, 0.0
      %v4327 = vsel %vm3748, %v4267, 0.0
      %v4328 = vadd.f32 %v4326, %v4327
      %v4329 = vsel %vm3748, %v4268, 0.0
      %v4330 = vadd.f32 %v4328, %v4329
      %v4331 = vsel %vm3748, %v4269, 0.0
      %v4332 = vadd.f32 %v4330, %v4331
      %v4333 = vsel %vm3748, %v4270, 0.0
      %v4334 = vadd.f32 %v4332, %v4333
      %v4335 = vrot.slane %v4334, 4
      %v4336 = vadd.f32 %v4334, %v4335
      %v4337 = vrot.slane %v4336, 2
      %v4338 = vadd.f32 %v4336, %v4337
      %v4339 = vrot.slane %v4338, 1
      %v4340 = vadd.f32 %v4338, %v4339
      %v4341 = vsel %vm3748, %v4271, 0.0
      %v4342 = vsel %vm3748, %v4272, 0.0
      %v4343 = vadd.f32 %v4341, %v4342
      %v4344 = vsel %vm3748, %v4273, 0.0
      %v4345 = vadd.f32 %v4343, %v4344
      %v4346 = vsel %vm3748, %v4274, 0.0
      %v4347 = vadd.f32 %v4345, %v4346
      %v4348 = vsel %vm3748, %v4275, 0.0
      %v4349 = vadd.f32 %v4347, %v4348
      %v4350 = vrot.slane %v4349, 4
      %v4351 = vadd.f32 %v4349, %v4350
      %v4352 = vrot.slane %v4351, 2
      %v4353 = vadd.f32 %v4351, %v4352
      %v4354 = vrot.slane %v4353, 1
      %v4355 = vadd.f32 %v4353, %v4354
      %v4356 = vsel %vm3748, %v4276, 0.0
      %v4357 = vsel %vm3748, %v4277, 0.0
      %v4358 = vadd.f32 %v4356, %v4357
      %v4359 = vsel %vm3748, %v4278, 0.0
      %v4360 = vadd.f32 %v4358, %v4359
      %v4361 = vsel %vm3748, %v4279, 0.0
      %v4362 = vadd.f32 %v4360, %v4361
      %v4363 = vsel %vm3748, %v4280, 0.0
      %v4364 = vadd.f32 %v4362, %v4363
      %v4365 = vrot.slane %v4364, 4
      %v4366 = vadd.f32 %v4364, %v4365
      %v4367 = vrot.slane %v4366, 2
      %v4368 = vadd.f32 %v4366, %v4367
      %v4369 = vrot.slane %v4368, 1
      %v4370 = vadd.f32 %v4368, %v4369
      %v4371 = vsel %vm3748, %v4281, 0.0
      %v4372 = vsel %vm3748, %v4282, 0.0
      %v4373 = vadd.f32 %v4371, %v4372
      %v4374 = vsel %vm3748, %v4283, 0.0
      %v4375 = vadd.f32 %v4373, %v4374
      %v4376 = vsel %vm3748, %v4284, 0.0
      %v4377 = vadd.f32 %v4375, %v4376
      %v4378 = vsel %vm3748, %v4285, 0.0
      %v4379 = vadd.f32 %v4377, %v4378
      %v4380 = vrot.slane %v4379, 4
      %v4381 = vadd.f32 %v4379, %v4380
      %v4382 = vrot.slane %v4381, 2
      %v4383 = vadd.f32 %v4381, %v4382
      %v4384 = vrot.slane %v4383, 1
      %v4385 = vadd.f32 %v4383, %v4384
      %v4386 = vsel %vm3748, %v4286, 0.0
      %v4387 = vsel %vm3748, %v4287, 0.0
      %v4388 = vadd.f32 %v4386, %v4387
      %v4389 = vsel %vm3748, %v4288, 0.0
      %v4390 = vadd.f32 %v4388, %v4389
      %v4391 = vsel %vm3748, %v4289, 0.0
      %v4392 = vadd.f32 %v4390, %v4391
      %v4393 = vsel %vm3748, %v4290, 0.0
      %v4394 = vadd.f32 %v4392, %v4393
      %v4395 = vrot.slane %v4394, 4
      %v4396 = vadd.f32 %v4394, %v4395
      %v4397 = vrot.slane %v4396, 2
      %v4398 = vadd.f32 %v4396, %v4397
      %v4399 = vrot.slane %v4398, 1
      %v4400 = vadd.f32 %v4398, %v4399
      %v4401 = vsel %vm3748, %v4291, 0.0
      %v4402 = vsel %vm3748, %v4292, 0.0
      %v4403 = vadd.f32 %v4401, %v4402
      %v4404 = vsel %vm3748, %v4293, 0.0
      %v4405 = vadd.f32 %v4403, %v4404
      %v4406 = vsel %vm3748, %v4294, 0.0
      %v4407 = vadd.f32 %v4405, %v4406
      %v4408 = vsel %vm3748, %v4295, 0.0
      %v4409 = vadd.f32 %v4407, %v4408
      %v4410 = vrot.slane %v4409, 4
      %v4411 = vadd.f32 %v4409, %v4410
      %v4412 = vrot.slane %v4411, 2
      %v4413 = vadd.f32 %v4411, %v4412
      %v4414 = vrot.slane %v4413, 1
      %v4415 = vadd.f32 %v4413, %v4414
      %s4416 = scalar_lea.vmem %s7, 64
      %v4417 = vld [vmem:[%s4416] sm:$0xff]
      %v4418 = vld [vmem:[%s4416 + $0x8] sm:$0xff]
      %v4419 = vld [vmem:[%s4416 + $0x10] sm:$0xff]
      %v4420 = vld [vmem:[%s4416 + $0x18] sm:$0x7]
      %v4429 = vsel %vm4061, %v4325, %v4310
      %v4430 = vsel %vm4063, %v4340, %v4429
      %v4431 = vsel %vm4065, %v4355, %v4430
      %v4432 = vsel %vm4067, %v4370, %v4431
      %v4433 = vsel %vm4069, %v4385, %v4432
      %v4434 = vsel %vm4071, %v4400, %v4433
      %v4435 = vsel %vm4073, %v4415, %v4434
      %v4436 = vsel %vm3748, %v4435, 0
      %v4439 = vsel %vm4077, %v4420, 0
      %4441 = vmatprep.subr.mxu0 0.0
      %4442 = vmatpush1.msra.mxu0 %v4417
      %4443 = vmatprep.subr.mxu0 0.0
      %4444 = vmatpush1.msra.mxu0 %v4418
      %4445 = vmatprep.subr.mxu0 0.0
      %4446 = vmatpush1.msra.mxu0 %v4419
      %4447 = vmatprep.subr.mxu0 0.0
      %4448 = vmatpush1.msra.mxu0 %v4439
      %4449 = vmatprep.subr.mxu0 0.0
      %4450 = vmatpush1.msra.mxu0 0.0
      %4451 = vmatprep.subr.mxu0 0.0
      %4452 = vmatpush1.msra.mxu0 0.0
      %4453 = vmatprep.subr.mxu0 0.0
      %4454 = vmatpush1.msra.mxu0 0.0
      %4455 = vmatprep.subr.mxu0 0.0
      %4456 = vmatpush1.msra.mxu0 0.0
      %4457 = vmatprep.subr.mxu0 0.0
      %4458 = vmatpush1.msra.mxu0 0.0
      %4459 = vmatprep.subr.mxu0 0.0
      %4460 = vmatpush1.msra.mxu0 0.0
      %4461 = vmatprep.subr.mxu0 0.0
      %4462 = vmatpush1.msra.mxu0 0.0
      %4463 = vmatprep.subr.mxu0 0.0
      %4464 = vmatpush1.msra.mxu0 0.0
      %4465 = vmatprep.subr.mxu0 0.0
      %4466 = vmatpush1.msra.mxu0 0.0
      %4467 = vmatprep.subr.mxu0 0.0
      %4468 = vmatpush1.msra.mxu0 0.0
      %4469 = vmatprep.subr.mxu0 0.0
      %4470 = vmatpush1.msra.mxu0 0.0
      %4471 = vmatprep.subr.mxu0 0.0
      %4472 = vmatpush1.msra.mxu0 0.0
      %4473 = vmatprep.subr.mxu0 0.0
      %4474 = vmatpush1.msra.mxu0 0.0
      %4475 = vmatprep.subr.mxu0 0.0
      %4476 = vmatpush1.msra.mxu0 0.0
      %4477 = vmatprep.subr.mxu0 0.0
      %4478 = vmatpush1.msra.mxu0 0.0
      %4479 = vmatprep.subr.mxu0 0.0
      %4480 = vmatpush1.msra.mxu0 0.0
      %4481 = vmatprep.subr.mxu0 0.0
      %4482 = vmatpush1.msra.mxu0 0.0
      %4483 = vmatprep.subr.mxu0 0.0
      %4484 = vmatpush1.msra.mxu0 0.0
      %4485 = vmatprep.subr.mxu0 0.0
      %4486 = vmatpush1.msra.mxu0 0.0
      %4487 = vmatprep.subr.mxu0 0.0
      %4488 = vmatpush1.msra.mxu0 0.0
      %4489 = vmatprep.subr.mxu0 0.0
      %4490 = vmatpush1.msra.mxu0 0.0
      %4491 = vmatprep.subr.mxu0 0.0
      %4492 = vmatpush1.msra.mxu0 0.0
      %4493 = vmatprep.subr.mxu0 0.0
      %4494 = vmatpush1.msra.mxu0 0.0
      %4495 = vmatprep.subr.mxu0 0.0
      %4496 = vmatpush1.msra.mxu0 0.0
      %4497 = vmatprep.subr.mxu0 0.0
      %4498 = vmatpush1.msra.mxu0 0.0
      %4499 = vmatprep.subr.mxu0 0.0
      %4500 = vmatpush1.msra.mxu0 0.0
      %4501 = vmatprep.subr.mxu0 0.0
      %4502 = vmatpush1.msra.mxu0 0.0
      %4503 = vmatprep.subr.mxu0 0.0
      %4504 = vmatpush1.msra.mxu0 0.0
      %4505 = vmatprep.mubr.f32.mxu0 0.0
      %4506 = vmatmul.mubr.f32.gmra.mrb[0].mxu0 %v4436
      %v4507 = vpop.f32.mrb[0].mxu0
      %v4508 = vadd.f32 0.0, %v4507
      %v4509 = vpop.f32.mrb[0].mxu0
      %4510 = vdwg.mxu0
      %v4511 = vadd.f32 %v4238, %v4508
      %vm4512 = vcmp.eq.s32.totalorder %v498, 12
      %vm4513 = vcmp.eq.s32.totalorder %v3689, 12
      %vm4514 = vcmp.eq.s32.totalorder %v3690, 12
      %vm4515 = vcmp.eq.s32.totalorder %v3691, 12
      %vm4516 = vcmp.eq.s32.totalorder %v3692, 12
      %v4517 = vsel %vm4512, 1, 0
      %v4518 = vsel %vm4513, 1, 0
      %v4519 = vsel %vm4514, 1, 0
      %v4520 = vsel %vm4515, 1, 0
      %v4521 = vsel %vm4516, 1, 0
      %v4522 = vcvt.s32.f32 %v4517
      %v4523 = vcvt.s32.f32 %v4518
      %v4524 = vcvt.s32.f32 %v4519
      %v4525 = vcvt.s32.f32 %v4520
      %v4526 = vcvt.s32.f32 %v4521
      %v4527 = vmul.f32 %v3649, %v4522
      %v4528 = vmul.f32 %v3650, %v4523
      %v4529 = vmul.f32 %v3651, %v4524
      %v4530 = vmul.f32 %v3652, %v4525
      %v4531 = vmul.f32 %v3653, %v4526
      %v4532 = vmul.f32 %v3654, %v4522
      %v4533 = vmul.f32 %v3655, %v4523
      %v4534 = vmul.f32 %v3656, %v4524
      %v4535 = vmul.f32 %v3657, %v4525
      %v4536 = vmul.f32 %v3658, %v4526
      %v4537 = vmul.f32 %v3659, %v4522
      %v4538 = vmul.f32 %v3660, %v4523
      %v4539 = vmul.f32 %v3661, %v4524
      %v4540 = vmul.f32 %v3662, %v4525
      %v4541 = vmul.f32 %v3663, %v4526
      %v4542 = vmul.f32 %v3664, %v4522
      %v4543 = vmul.f32 %v3665, %v4523
      %v4544 = vmul.f32 %v3666, %v4524
      %v4545 = vmul.f32 %v3667, %v4525
      %v4546 = vmul.f32 %v3668, %v4526
      %v4547 = vmul.f32 %v3669, %v4522
      %v4548 = vmul.f32 %v3670, %v4523
      %v4549 = vmul.f32 %v3671, %v4524
      %v4550 = vmul.f32 %v3672, %v4525
      %v4551 = vmul.f32 %v3673, %v4526
      %v4552 = vmul.f32 %v3674, %v4522
      %v4553 = vmul.f32 %v3675, %v4523
      %v4554 = vmul.f32 %v3676, %v4524
      %v4555 = vmul.f32 %v3677, %v4525
      %v4556 = vmul.f32 %v3678, %v4526
      %v4557 = vmul.f32 %v3679, %v4522
      %v4558 = vmul.f32 %v3680, %v4523
      %v4559 = vmul.f32 %v3681, %v4524
      %v4560 = vmul.f32 %v3682, %v4525
      %v4561 = vmul.f32 %v3683, %v4526
      %v4562 = vmul.f32 %v3684, %v4522
      %v4563 = vmul.f32 %v3685, %v4523
      %v4564 = vmul.f32 %v3686, %v4524
      %v4565 = vmul.f32 %v3687, %v4525
      %v4566 = vmul.f32 %v3688, %v4526
      %v4567 = vsel %vm3748, %v4527, 0.0
      %v4568 = vsel %vm3748, %v4528, 0.0
      %v4569 = vadd.f32 %v4567, %v4568
      %v4570 = vsel %vm3748, %v4529, 0.0
      %v4571 = vadd.f32 %v4569, %v4570
      %v4572 = vsel %vm3748, %v4530, 0.0
      %v4573 = vadd.f32 %v4571, %v4572
      %v4574 = vsel %vm3748, %v4531, 0.0
      %v4575 = vadd.f32 %v4573, %v4574
      %v4576 = vrot.slane %v4575, 4
      %v4577 = vadd.f32 %v4575, %v4576
      %v4578 = vrot.slane %v4577, 2
      %v4579 = vadd.f32 %v4577, %v4578
      %v4580 = vrot.slane %v4579, 1
      %v4581 = vadd.f32 %v4579, %v4580
      %v4582 = vsel %vm3748, %v4532, 0.0
      %v4583 = vsel %vm3748, %v4533, 0.0
      %v4584 = vadd.f32 %v4582, %v4583
      %v4585 = vsel %vm3748, %v4534, 0.0
      %v4586 = vadd.f32 %v4584, %v4585
      %v4587 = vsel %vm3748, %v4535, 0.0
      %v4588 = vadd.f32 %v4586, %v4587
      %v4589 = vsel %vm3748, %v4536, 0.0
      %v4590 = vadd.f32 %v4588, %v4589
      %v4591 = vrot.slane %v4590, 4
      %v4592 = vadd.f32 %v4590, %v4591
      %v4593 = vrot.slane %v4592, 2
      %v4594 = vadd.f32 %v4592, %v4593
      %v4595 = vrot.slane %v4594, 1
      %v4596 = vadd.f32 %v4594, %v4595
      %v4597 = vsel %vm3748, %v4537, 0.0
      %v4598 = vsel %vm3748, %v4538, 0.0
      %v4599 = vadd.f32 %v4597, %v4598
      %v4600 = vsel %vm3748, %v4539, 0.0
      %v4601 = vadd.f32 %v4599, %v4600
      %v4602 = vsel %vm3748, %v4540, 0.0
      %v4603 = vadd.f32 %v4601, %v4602
      %v4604 = vsel %vm3748, %v4541, 0.0
      %v4605 = vadd.f32 %v4603, %v4604
      %v4606 = vrot.slane %v4605, 4
      %v4607 = vadd.f32 %v4605, %v4606
      %v4608 = vrot.slane %v4607, 2
      %v4609 = vadd.f32 %v4607, %v4608
      %v4610 = vrot.slane %v4609, 1
      %v4611 = vadd.f32 %v4609, %v4610
      %v4612 = vsel %vm3748, %v4542, 0.0
      %v4613 = vsel %vm3748, %v4543, 0.0
      %v4614 = vadd.f32 %v4612, %v4613
      %v4615 = vsel %vm3748, %v4544, 0.0
      %v4616 = vadd.f32 %v4614, %v4615
      %v4617 = vsel %vm3748, %v4545, 0.0
      %v4618 = vadd.f32 %v4616, %v4617
      %v4619 = vsel %vm3748, %v4546, 0.0
      %v4620 = vadd.f32 %v4618, %v4619
      %v4621 = vrot.slane %v4620, 4
      %v4622 = vadd.f32 %v4620, %v4621
      %v4623 = vrot.slane %v4622, 2
      %v4624 = vadd.f32 %v4622, %v4623
      %v4625 = vrot.slane %v4624, 1
      %v4626 = vadd.f32 %v4624, %v4625
      %v4627 = vsel %vm3748, %v4547, 0.0
      %v4628 = vsel %vm3748, %v4548, 0.0
      %v4629 = vadd.f32 %v4627, %v4628
      %v4630 = vsel %vm3748, %v4549, 0.0
      %v4631 = vadd.f32 %v4629, %v4630
      %v4632 = vsel %vm3748, %v4550, 0.0
      %v4633 = vadd.f32 %v4631, %v4632
      %v4634 = vsel %vm3748, %v4551, 0.0
      %v4635 = vadd.f32 %v4633, %v4634
      %v4636 = vrot.slane %v4635, 4
      %v4637 = vadd.f32 %v4635, %v4636
      %v4638 = vrot.slane %v4637, 2
      %v4639 = vadd.f32 %v4637, %v4638
      %v4640 = vrot.slane %v4639, 1
      %v4641 = vadd.f32 %v4639, %v4640
      %v4642 = vsel %vm3748, %v4552, 0.0
      %v4643 = vsel %vm3748, %v4553, 0.0
      %v4644 = vadd.f32 %v4642, %v4643
      %v4645 = vsel %vm3748, %v4554, 0.0
      %v4646 = vadd.f32 %v4644, %v4645
      %v4647 = vsel %vm3748, %v4555, 0.0
      %v4648 = vadd.f32 %v4646, %v4647
      %v4649 = vsel %vm3748, %v4556, 0.0
      %v4650 = vadd.f32 %v4648, %v4649
      %v4651 = vrot.slane %v4650, 4
      %v4652 = vadd.f32 %v4650, %v4651
      %v4653 = vrot.slane %v4652, 2
      %v4654 = vadd.f32 %v4652, %v4653
      %v4655 = vrot.slane %v4654, 1
      %v4656 = vadd.f32 %v4654, %v4655
      %v4657 = vsel %vm3748, %v4557, 0.0
      %v4658 = vsel %vm3748, %v4558, 0.0
      %v4659 = vadd.f32 %v4657, %v4658
      %v4660 = vsel %vm3748, %v4559, 0.0
      %v4661 = vadd.f32 %v4659, %v4660
      %v4662 = vsel %vm3748, %v4560, 0.0
      %v4663 = vadd.f32 %v4661, %v4662
      %v4664 = vsel %vm3748, %v4561, 0.0
      %v4665 = vadd.f32 %v4663, %v4664
      %v4666 = vrot.slane %v4665, 4
      %v4667 = vadd.f32 %v4665, %v4666
      %v4668 = vrot.slane %v4667, 2
      %v4669 = vadd.f32 %v4667, %v4668
      %v4670 = vrot.slane %v4669, 1
      %v4671 = vadd.f32 %v4669, %v4670
      %v4672 = vsel %vm3748, %v4562, 0.0
      %v4673 = vsel %vm3748, %v4563, 0.0
      %v4674 = vadd.f32 %v4672, %v4673
      %v4675 = vsel %vm3748, %v4564, 0.0
      %v4676 = vadd.f32 %v4674, %v4675
      %v4677 = vsel %vm3748, %v4565, 0.0
      %v4678 = vadd.f32 %v4676, %v4677
      %v4679 = vsel %vm3748, %v4566, 0.0
      %v4680 = vadd.f32 %v4678, %v4679
      %v4681 = vrot.slane %v4680, 4
      %v4682 = vadd.f32 %v4680, %v4681
      %v4683 = vrot.slane %v4682, 2
      %v4684 = vadd.f32 %v4682, %v4683
      %v4685 = vrot.slane %v4684, 1
      %v4686 = vadd.f32 %v4684, %v4685
      %s4687 = scalar_lea.vmem %s7, 96
      %v4688 = vld [vmem:[%s4687] sm:$0xff]
      %v4689 = vld [vmem:[%s4687 + $0x8] sm:$0xff]
      %v4690 = vld [vmem:[%s4687 + $0x10] sm:$0xff]
      %v4691 = vld [vmem:[%s4687 + $0x18] sm:$0x7]
      %v4700 = vsel %vm4061, %v4596, %v4581
      %v4701 = vsel %vm4063, %v4611, %v4700
      %v4702 = vsel %vm4065, %v4626, %v4701
      %v4703 = vsel %vm4067, %v4641, %v4702
      %v4704 = vsel %vm4069, %v4656, %v4703
      %v4705 = vsel %vm4071, %v4671, %v4704
      %v4706 = vsel %vm4073, %v4686, %v4705
      %v4707 = vsel %vm3748, %v4706, 0
      %v4710 = vsel %vm4077, %v4691, 0
      %4712 = vmatprep.subr.mxu0 0.0
      %4713 = vmatpush1.msra.mxu0 %v4688
      %4714 = vmatprep.subr.mxu0 0.0
      %4715 = vmatpush1.msra.mxu0 %v4689
      %4716 = vmatprep.subr.mxu0 0.0
      %4717 = vmatpush1.msra.mxu0 %v4690
      %4718 = vmatprep.subr.mxu0 0.0
      %4719 = vmatpush1.msra.mxu0 %v4710
      %4720 = vmatprep.subr.mxu0 0.0
      %4721 = vmatpush1.msra.mxu0 0.0
      %4722 = vmatprep.subr.mxu0 0.0
      %4723 = vmatpush1.msra.mxu0 0.0
      %4724 = vmatprep.subr.mxu0 0.0
      %4725 = vmatpush1.msra.mxu0 0.0
      %4726 = vmatprep.subr.mxu0 0.0
      %4727 = vmatpush1.msra.mxu0 0.0
      %4728 = vmatprep.subr.mxu0 0.0
      %4729 = vmatpush1.msra.mxu0 0.0
      %4730 = vmatprep.subr.mxu0 0.0
      %4731 = vmatpush1.msra.mxu0 0.0
      %4732 = vmatprep.subr.mxu0 0.0
      %4733 = vmatpush1.msra.mxu0 0.0
      %4734 = vmatprep.subr.mxu0 0.0
      %4735 = vmatpush1.msra.mxu0 0.0
      %4736 = vmatprep.subr.mxu0 0.0
      %4737 = vmatpush1.msra.mxu0 0.0
      %4738 = vmatprep.subr.mxu0 0.0
      %4739 = vmatpush1.msra.mxu0 0.0
      %4740 = vmatprep.subr.mxu0 0.0
      %4741 = vmatpush1.msra.mxu0 0.0
      %4742 = vmatprep.subr.mxu0 0.0
      %4743 = vmatpush1.msra.mxu0 0.0
      %4744 = vmatprep.subr.mxu0 0.0
      %4745 = vmatpush1.msra.mxu0 0.0
      %4746 = vmatprep.subr.mxu0 0.0
      %4747 = vmatpush1.msra.mxu0 0.0
      %4748 = vmatprep.subr.mxu0 0.0
      %4749 = vmatpush1.msra.mxu0 0.0
      %4750 = vmatprep.subr.mxu0 0.0
      %4751 = vmatpush1.msra.mxu0 0.0
      %4752 = vmatprep.subr.mxu0 0.0
      %4753 = vmatpush1.msra.mxu0 0.0
      %4754 = vmatprep.subr.mxu0 0.0
      %4755 = vmatpush1.msra.mxu0 0.0
      %4756 = vmatprep.subr.mxu0 0.0
      %4757 = vmatpush1.msra.mxu0 0.0
      %4758 = vmatprep.subr.mxu0 0.0
      %4759 = vmatpush1.msra.mxu0 0.0
      %4760 = vmatprep.subr.mxu0 0.0
      %4761 = vmatpush1.msra.mxu0 0.0
      %4762 = vmatprep.subr.mxu0 0.0
      %4763 = vmatpush1.msra.mxu0 0.0
      %4764 = vmatprep.subr.mxu0 0.0
      %4765 = vmatpush1.msra.mxu0 0.0
      %4766 = vmatprep.subr.mxu0 0.0
      %4767 = vmatpush1.msra.mxu0 0.0
      %4768 = vmatprep.subr.mxu0 0.0
      %4769 = vmatpush1.msra.mxu0 0.0
      %4770 = vmatprep.subr.mxu0 0.0
      %4771 = vmatpush1.msra.mxu0 0.0
      %4772 = vmatprep.subr.mxu0 0.0
      %4773 = vmatpush1.msra.mxu0 0.0
      %4774 = vmatprep.subr.mxu0 0.0
      %4775 = vmatpush1.msra.mxu0 0.0
      %4776 = vmatprep.mubr.f32.mxu0 0.0
      %4777 = vmatmul.mubr.f32.gmra.mrb[0].mxu0 %v4707
      %v4778 = vpop.f32.mrb[0].mxu0
      %v4779 = vadd.f32 0.0, %v4778
      %v4780 = vpop.f32.mrb[0].mxu0
      %4781 = vdwg.mxu0
      %v4782 = vadd.f32 %v4511, %v4779
      %vm4783 = vcmp.eq.s32.totalorder %v498, 16
      %vm4784 = vcmp.eq.s32.totalorder %v3689, 16
      %vm4785 = vcmp.eq.s32.totalorder %v3690, 16
      %vm4786 = vcmp.eq.s32.totalorder %v3691, 16
      %vm4787 = vcmp.eq.s32.totalorder %v3692, 16
      %v4788 = vsel %vm4783, 1, 0
      %v4789 = vsel %vm4784, 1, 0
      %v4790 = vsel %vm4785, 1, 0
      %v4791 = vsel %vm4786, 1, 0
      %v4792 = vsel %vm4787, 1, 0
      %v4793 = vcvt.s32.f32 %v4788
      %v4794 = vcvt.s32.f32 %v4789
      %v4795 = vcvt.s32.f32 %v4790
      %v4796 = vcvt.s32.f32 %v4791
      %v4797 = vcvt.s32.f32 %v4792
      %v4798 = vmul.f32 %v3649, %v4793
      %v4799 = vmul.f32 %v3650, %v4794
      %v4800 = vmul.f32 %v3651, %v4795
      %v4801 = vmul.f32 %v3652, %v4796
      %v4802 = vmul.f32 %v3653, %v4797
      %v4803 = vmul.f32 %v3654, %v4793
      %v4804 = vmul.f32 %v3655, %v4794
      %v4805 = vmul.f32 %v3656, %v4795
      %v4806 = vmul.f32 %v3657, %v4796
      %v4807 = vmul.f32 %v3658, %v4797
      %v4808 = vmul.f32 %v3659, %v4793
      %v4809 = vmul.f32 %v3660, %v4794
      %v4810 = vmul.f32 %v3661, %v4795
      %v4811 = vmul.f32 %v3662, %v4796
      %v4812 = vmul.f32 %v3663, %v4797
      %v4813 = vmul.f32 %v3664, %v4793
      %v4814 = vmul.f32 %v3665, %v4794
      %v4815 = vmul.f32 %v3666, %v4795
      %v4816 = vmul.f32 %v3667, %v4796
      %v4817 = vmul.f32 %v3668, %v4797
      %v4818 = vmul.f32 %v3669, %v4793
      %v4819 = vmul.f32 %v3670, %v4794
      %v4820 = vmul.f32 %v3671, %v4795
      %v4821 = vmul.f32 %v3672, %v4796
      %v4822 = vmul.f32 %v3673, %v4797
      %v4823 = vmul.f32 %v3674, %v4793
      %v4824 = vmul.f32 %v3675, %v4794
      %v4825 = vmul.f32 %v3676, %v4795
      %v4826 = vmul.f32 %v3677, %v4796
      %v4827 = vmul.f32 %v3678, %v4797
      %v4828 = vmul.f32 %v3679, %v4793
      %v4829 = vmul.f32 %v3680, %v4794
      %v4830 = vmul.f32 %v3681, %v4795
      %v4831 = vmul.f32 %v3682, %v4796
      %v4832 = vmul.f32 %v3683, %v4797
      %v4833 = vmul.f32 %v3684, %v4793
      %v4834 = vmul.f32 %v3685, %v4794
      %v4835 = vmul.f32 %v3686, %v4795
      %v4836 = vmul.f32 %v3687, %v4796
      %v4837 = vmul.f32 %v3688, %v4797
      %v4838 = vsel %vm3748, %v4798, 0.0
      %v4839 = vsel %vm3748, %v4799, 0.0
      %v4840 = vadd.f32 %v4838, %v4839
      %v4841 = vsel %vm3748, %v4800, 0.0
      %v4842 = vadd.f32 %v4840, %v4841
      %v4843 = vsel %vm3748, %v4801, 0.0
      %v4844 = vadd.f32 %v4842, %v4843
      %v4845 = vsel %vm3748, %v4802, 0.0
      %v4846 = vadd.f32 %v4844, %v4845
      %v4847 = vrot.slane %v4846, 4
      %v4848 = vadd.f32 %v4846, %v4847
      %v4849 = vrot.slane %v4848, 2
      %v4850 = vadd.f32 %v4848, %v4849
      %v4851 = vrot.slane %v4850, 1
      %v4852 = vadd.f32 %v4850, %v4851
      %v4853 = vsel %vm3748, %v4803, 0.0
      %v4854 = vsel %vm3748, %v4804, 0.0
      %v4855 = vadd.f32 %v4853, %v4854
      %v4856 = vsel %vm3748, %v4805, 0.0
      %v4857 = vadd.f32 %v4855, %v4856
      %v4858 = vsel %vm3748, %v4806, 0.0
      %v4859 = vadd.f32 %v4857, %v4858
      %v4860 = vsel %vm3748, %v4807, 0.0
      %v4861 = vadd.f32 %v4859, %v4860
      %v4862 = vrot.slane %v4861, 4
      %v4863 = vadd.f32 %v4861, %v4862
      %v4864 = vrot.slane %v4863, 2
      %v4865 = vadd.f32 %v4863, %v4864
      %v4866 = vrot.slane %v4865, 1
      %v4867 = vadd.f32 %v4865, %v4866
      %v4868 = vsel %vm3748, %v4808, 0.0
      %v4869 = vsel %vm3748, %v4809, 0.0
      %v4870 = vadd.f32 %v4868, %v4869
      %v4871 = vsel %vm3748, %v4810, 0.0
      %v4872 = vadd.f32 %v4870, %v4871
      %v4873 = vsel %vm3748, %v4811, 0.0
      %v4874 = vadd.f32 %v4872, %v4873
      %v4875 = vsel %vm3748, %v4812, 0.0
      %v4876 = vadd.f32 %v4874, %v4875
      %v4877 = vrot.slane %v4876, 4
      %v4878 = vadd.f32 %v4876, %v4877
      %v4879 = vrot.slane %v4878, 2
      %v4880 = vadd.f32 %v4878, %v4879
      %v4881 = vrot.slane %v4880, 1
      %v4882 = vadd.f32 %v4880, %v4881
      %v4883 = vsel %vm3748, %v4813, 0.0
      %v4884 = vsel %vm3748, %v4814, 0.0
      %v4885 = vadd.f32 %v4883, %v4884
      %v4886 = vsel %vm3748, %v4815, 0.0
      %v4887 = vadd.f32 %v4885, %v4886
      %v4888 = vsel %vm3748, %v4816, 0.0
      %v4889 = vadd.f32 %v4887, %v4888
      %v4890 = vsel %vm3748, %v4817, 0.0
      %v4891 = vadd.f32 %v4889, %v4890
      %v4892 = vrot.slane %v4891, 4
      %v4893 = vadd.f32 %v4891, %v4892
      %v4894 = vrot.slane %v4893, 2
      %v4895 = vadd.f32 %v4893, %v4894
      %v4896 = vrot.slane %v4895, 1
      %v4897 = vadd.f32 %v4895, %v4896
      %v4898 = vsel %vm3748, %v4818, 0.0
      %v4899 = vsel %vm3748, %v4819, 0.0
      %v4900 = vadd.f32 %v4898, %v4899
      %v4901 = vsel %vm3748, %v4820, 0.0
      %v4902 = vadd.f32 %v4900, %v4901
      %v4903 = vsel %vm3748, %v4821, 0.0
      %v4904 = vadd.f32 %v4902, %v4903
      %v4905 = vsel %vm3748, %v4822, 0.0
      %v4906 = vadd.f32 %v4904, %v4905
      %v4907 = vrot.slane %v4906, 4
      %v4908 = vadd.f32 %v4906, %v4907
      %v4909 = vrot.slane %v4908, 2
      %v4910 = vadd.f32 %v4908, %v4909
      %v4911 = vrot.slane %v4910, 1
      %v4912 = vadd.f32 %v4910, %v4911
      %v4913 = vsel %vm3748, %v4823, 0.0
      %v4914 = vsel %vm3748, %v4824, 0.0
      %v4915 = vadd.f32 %v4913, %v4914
      %v4916 = vsel %vm3748, %v4825, 0.0
      %v4917 = vadd.f32 %v4915, %v4916
      %v4918 = vsel %vm3748, %v4826, 0.0
      %v4919 = vadd.f32 %v4917, %v4918
      %v4920 = vsel %vm3748, %v4827, 0.0
      %v4921 = vadd.f32 %v4919, %v4920
      %v4922 = vrot.slane %v4921, 4
      %v4923 = vadd.f32 %v4921, %v4922
      %v4924 = vrot.slane %v4923, 2
      %v4925 = vadd.f32 %v4923, %v4924
      %v4926 = vrot.slane %v4925, 1
      %v4927 = vadd.f32 %v4925, %v4926
      %v4928 = vsel %vm3748, %v4828, 0.0
      %v4929 = vsel %vm3748, %v4829, 0.0
      %v4930 = vadd.f32 %v4928, %v4929
      %v4931 = vsel %vm3748, %v4830, 0.0
      %v4932 = vadd.f32 %v4930, %v4931
      %v4933 = vsel %vm3748, %v4831, 0.0
      %v4934 = vadd.f32 %v4932, %v4933
      %v4935 = vsel %vm3748, %v4832, 0.0
      %v4936 = vadd.f32 %v4934, %v4935
      %v4937 = vrot.slane %v4936, 4
      %v4938 = vadd.f32 %v4936, %v4937
      %v4939 = vrot.slane %v4938, 2
      %v4940 = vadd.f32 %v4938, %v4939
      %v4941 = vrot.slane %v4940, 1
      %v4942 = vadd.f32 %v4940, %v4941
      %v4943 = vsel %vm3748, %v4833, 0.0
      %v4944 = vsel %vm3748, %v4834, 0.0
      %v4945 = vadd.f32 %v4943, %v4944
      %v4946 = vsel %vm3748, %v4835, 0.0
      %v4947 = vadd.f32 %v4945, %v4946
      %v4948 = vsel %vm3748, %v4836, 0.0
      %v4949 = vadd.f32 %v4947, %v4948
      %v4950 = vsel %vm3748, %v4837, 0.0
      %v4951 = vadd.f32 %v4949, %v4950
      %v4952 = vrot.slane %v4951, 4
      %v4953 = vadd.f32 %v4951, %v4952
      %v4954 = vrot.slane %v4953, 2
      %v4955 = vadd.f32 %v4953, %v4954
      %v4956 = vrot.slane %v4955, 1
      %v4957 = vadd.f32 %v4955, %v4956
      %s4958 = scalar_lea.vmem %s7, 128
      %v4959 = vld [vmem:[%s4958] sm:$0xff]
      %v4960 = vld [vmem:[%s4958 + $0x8] sm:$0xff]
      %v4961 = vld [vmem:[%s4958 + $0x10] sm:$0xff]
      %v4962 = vld [vmem:[%s4958 + $0x18] sm:$0x7]
      %v4971 = vsel %vm4061, %v4867, %v4852
      %v4972 = vsel %vm4063, %v4882, %v4971
      %v4973 = vsel %vm4065, %v4897, %v4972
      %v4974 = vsel %vm4067, %v4912, %v4973
      %v4975 = vsel %vm4069, %v4927, %v4974
      %v4976 = vsel %vm4071, %v4942, %v4975
      %v4977 = vsel %vm4073, %v4957, %v4976
      %v4978 = vsel %vm3748, %v4977, 0
      %v4981 = vsel %vm4077, %v4962, 0
      %4983 = vmatprep.subr.mxu0 0.0
      %4984 = vmatpush1.msra.mxu0 %v4959
      %4985 = vmatprep.subr.mxu0 0.0
      %4986 = vmatpush1.msra.mxu0 %v4960
      %4987 = vmatprep.subr.mxu0 0.0
      %4988 = vmatpush1.msra.mxu0 %v4961
      %4989 = vmatprep.subr.mxu0 0.0
      %4990 = vmatpush1.msra.mxu0 %v4981
      %4991 = vmatprep.subr.mxu0 0.0
      %4992 = vmatpush1.msra.mxu0 0.0
      %4993 = vmatprep.subr.mxu0 0.0
      %4994 = vmatpush1.msra.mxu0 0.0
      %4995 = vmatprep.subr.mxu0 0.0
      %4996 = vmatpush1.msra.mxu0 0.0
      %4997 = vmatprep.subr.mxu0 0.0
      %4998 = vmatpush1.msra.mxu0 0.0
      %4999 = vmatprep.subr.mxu0 0.0
      %5000 = vmatpush1.msra.mxu0 0.0
      %5001 = vmatprep.subr.mxu0 0.0
      %5002 = vmatpush1.msra.mxu0 0.0
      %5003 = vmatprep.subr.mxu0 0.0
      %5004 = vmatpush1.msra.mxu0 0.0
      %5005 = vmatprep.subr.mxu0 0.0
      %5006 = vmatpush1.msra.mxu0 0.0
      %5007 = vmatprep.subr.mxu0 0.0
      %5008 = vmatpush1.msra.mxu0 0.0
      %5009 = vmatprep.subr.mxu0 0.0
      %5010 = vmatpush1.msra.mxu0 0.0
      %5011 = vmatprep.subr.mxu0 0.0
      %5012 = vmatpush1.msra.mxu0 0.0
      %5013 = vmatprep.subr.mxu0 0.0
      %5014 = vmatpush1.msra.mxu0 0.0
      %5015 = vmatprep.subr.mxu0 0.0
      %5016 = vmatpush1.msra.mxu0 0.0
      %5017 = vmatprep.subr.mxu0 0.0
      %5018 = vmatpush1.msra.mxu0 0.0
      %5019 = vmatprep.subr.mxu0 0.0
      %5020 = vmatpush1.msra.mxu0 0.0
      %5021 = vmatprep.subr.mxu0 0.0
      %5022 = vmatpush1.msra.mxu0 0.0
      %5023 = vmatprep.subr.mxu0 0.0
      %5024 = vmatpush1.msra.mxu0 0.0
      %5025 = vmatprep.subr.mxu0 0.0
      %5026 = vmatpush1.msra.mxu0 0.0
      %5027 = vmatprep.subr.mxu0 0.0
      %5028 = vmatpush1.msra.mxu0 0.0
      %5029 = vmatprep.subr.mxu0 0.0
      %5030 = vmatpush1.msra.mxu0 0.0
      %5031 = vmatprep.subr.mxu0 0.0
      %5032 = vmatpush1.msra.mxu0 0.0
      %5033 = vmatprep.subr.mxu0 0.0
      %5034 = vmatpush1.msra.mxu0 0.0
      %5035 = vmatprep.subr.mxu0 0.0
      %5036 = vmatpush1.msra.mxu0 0.0
      %5037 = vmatprep.subr.mxu0 0.0
      %5038 = vmatpush1.msra.mxu0 0.0
      %5039 = vmatprep.subr.mxu0 0.0
      %5040 = vmatpush1.msra.mxu0 0.0
      %5041 = vmatprep.subr.mxu0 0.0
      %5042 = vmatpush1.msra.mxu0 0.0
      %5043 = vmatprep.subr.mxu0 0.0
      %5044 = vmatpush1.msra.mxu0 0.0
      %5045 = vmatprep.subr.mxu0 0.0
      %5046 = vmatpush1.msra.mxu0 0.0
      %5047 = vmatprep.mubr.f32.mxu0 0.0
      %5048 = vmatmul.mubr.f32.gmra.mrb[0].mxu0 %v4978
      %v5049 = vpop.f32.mrb[0].mxu0
      %v5050 = vadd.f32 0.0, %v5049
      %v5051 = vpop.f32.mrb[0].mxu0
      %5052 = vdwg.mxu0
      %v5053 = vadd.f32 %v4782, %v5050
      %vm5054 = vcmp.eq.s32.totalorder %v498, 20
      %vm5055 = vcmp.eq.s32.totalorder %v3689, 20
      %vm5056 = vcmp.eq.s32.totalorder %v3690, 20
      %vm5057 = vcmp.eq.s32.totalorder %v3691, 20
      %vm5058 = vcmp.eq.s32.totalorder %v3692, 20
      %v5059 = vsel %vm5054, 1, 0
      %v5060 = vsel %vm5055, 1, 0
      %v5061 = vsel %vm5056, 1, 0
      %v5062 = vsel %vm5057, 1, 0
      %v5063 = vsel %vm5058, 1, 0
      %v5064 = vcvt.s32.f32 %v5059
      %v5065 = vcvt.s32.f32 %v5060
      %v5066 = vcvt.s32.f32 %v5061
      %v5067 = vcvt.s32.f32 %v5062
      %v5068 = vcvt.s32.f32 %v5063
      %v5069 = vmul.f32 %v3649, %v5064
      %v5070 = vmul.f32 %v3650, %v5065
      %v5071 = vmul.f32 %v3651, %v5066
      %v5072 = vmul.f32 %v3652, %v5067
      %v5073 = vmul.f32 %v3653, %v5068
      %v5074 = vmul.f32 %v3654, %v5064
      %v5075 = vmul.f32 %v3655, %v5065
      %v5076 = vmul.f32 %v3656, %v5066
      %v5077 = vmul.f32 %v3657, %v5067
      %v5078 = vmul.f32 %v3658, %v5068
      %v5079 = vmul.f32 %v3659, %v5064
      %v5080 = vmul.f32 %v3660, %v5065
      %v5081 = vmul.f32 %v3661, %v5066
      %v5082 = vmul.f32 %v3662, %v5067
      %v5083 = vmul.f32 %v3663, %v5068
      %v5084 = vmul.f32 %v3664, %v5064
      %v5085 = vmul.f32 %v3665, %v5065
      %v5086 = vmul.f32 %v3666, %v5066
      %v5087 = vmul.f32 %v3667, %v5067
      %v5088 = vmul.f32 %v3668, %v5068
      %v5089 = vmul.f32 %v3669, %v5064
      %v5090 = vmul.f32 %v3670, %v5065
      %v5091 = vmul.f32 %v3671, %v5066
      %v5092 = vmul.f32 %v3672, %v5067
      %v5093 = vmul.f32 %v3673, %v5068
      %v5094 = vmul.f32 %v3674, %v5064
      %v5095 = vmul.f32 %v3675, %v5065
      %v5096 = vmul.f32 %v3676, %v5066
      %v5097 = vmul.f32 %v3677, %v5067
      %v5098 = vmul.f32 %v3678, %v5068
      %v5099 = vmul.f32 %v3679, %v5064
      %v5100 = vmul.f32 %v3680, %v5065
      %v5101 = vmul.f32 %v3681, %v5066
      %v5102 = vmul.f32 %v3682, %v5067
      %v5103 = vmul.f32 %v3683, %v5068
      %v5104 = vmul.f32 %v3684, %v5064
      %v5105 = vmul.f32 %v3685, %v5065
      %v5106 = vmul.f32 %v3686, %v5066
      %v5107 = vmul.f32 %v3687, %v5067
      %v5108 = vmul.f32 %v3688, %v5068
      %v5109 = vsel %vm3748, %v5069, 0.0
      %v5110 = vsel %vm3748, %v5070, 0.0
      %v5111 = vadd.f32 %v5109, %v5110
      %v5112 = vsel %vm3748, %v5071, 0.0
      %v5113 = vadd.f32 %v5111, %v5112
      %v5114 = vsel %vm3748, %v5072, 0.0
      %v5115 = vadd.f32 %v5113, %v5114
      %v5116 = vsel %vm3748, %v5073, 0.0
      %v5117 = vadd.f32 %v5115, %v5116
      %v5118 = vrot.slane %v5117, 4
      %v5119 = vadd.f32 %v5117, %v5118
      %v5120 = vrot.slane %v5119, 2
      %v5121 = vadd.f32 %v5119, %v5120
      %v5122 = vrot.slane %v5121, 1
      %v5123 = vadd.f32 %v5121, %v5122
      %v5124 = vsel %vm3748, %v5074, 0.0
      %v5125 = vsel %vm3748, %v5075, 0.0
      %v5126 = vadd.f32 %v5124, %v5125
      %v5127 = vsel %vm3748, %v5076, 0.0
      %v5128 = vadd.f32 %v5126, %v5127
      %v5129 = vsel %vm3748, %v5077, 0.0
      %v5130 = vadd.f32 %v5128, %v5129
      %v5131 = vsel %vm3748, %v5078, 0.0
      %v5132 = vadd.f32 %v5130, %v5131
      %v5133 = vrot.slane %v5132, 4
      %v5134 = vadd.f32 %v5132, %v5133
      %v5135 = vrot.slane %v5134, 2
      %v5136 = vadd.f32 %v5134, %v5135
      %v5137 = vrot.slane %v5136, 1
      %v5138 = vadd.f32 %v5136, %v5137
      %v5139 = vsel %vm3748, %v5079, 0.0
      %v5140 = vsel %vm3748, %v5080, 0.0
      %v5141 = vadd.f32 %v5139, %v5140
      %v5142 = vsel %vm3748, %v5081, 0.0
      %v5143 = vadd.f32 %v5141, %v5142
      %v5144 = vsel %vm3748, %v5082, 0.0
      %v5145 = vadd.f32 %v5143, %v5144
      %v5146 = vsel %vm3748, %v5083, 0.0
      %v5147 = vadd.f32 %v5145, %v5146
      %v5148 = vrot.slane %v5147, 4
      %v5149 = vadd.f32 %v5147, %v5148
      %v5150 = vrot.slane %v5149, 2
      %v5151 = vadd.f32 %v5149, %v5150
      %v5152 = vrot.slane %v5151, 1
      %v5153 = vadd.f32 %v5151, %v5152
      %v5154 = vsel %vm3748, %v5084, 0.0
      %v5155 = vsel %vm3748, %v5085, 0.0
      %v5156 = vadd.f32 %v5154, %v5155
      %v5157 = vsel %vm3748, %v5086, 0.0
      %v5158 = vadd.f32 %v5156, %v5157
      %v5159 = vsel %vm3748, %v5087, 0.0
      %v5160 = vadd.f32 %v5158, %v5159
      %v5161 = vsel %vm3748, %v5088, 0.0
      %v5162 = vadd.f32 %v5160, %v5161
      %v5163 = vrot.slane %v5162, 4
      %v5164 = vadd.f32 %v5162, %v5163
      %v5165 = vrot.slane %v5164, 2
      %v5166 = vadd.f32 %v5164, %v5165
      %v5167 = vrot.slane %v5166, 1
      %v5168 = vadd.f32 %v5166, %v5167
      %v5169 = vsel %vm3748, %v5089, 0.0
      %v5170 = vsel %vm3748, %v5090, 0.0
      %v5171 = vadd.f32 %v5169, %v5170
      %v5172 = vsel %vm3748, %v5091, 0.0
      %v5173 = vadd.f32 %v5171, %v5172
      %v5174 = vsel %vm3748, %v5092, 0.0
      %v5175 = vadd.f32 %v5173, %v5174
      %v5176 = vsel %vm3748, %v5093, 0.0
      %v5177 = vadd.f32 %v5175, %v5176
      %v5178 = vrot.slane %v5177, 4
      %v5179 = vadd.f32 %v5177, %v5178
      %v5180 = vrot.slane %v5179, 2
      %v5181 = vadd.f32 %v5179, %v5180
      %v5182 = vrot.slane %v5181, 1
      %v5183 = vadd.f32 %v5181, %v5182
      %v5184 = vsel %vm3748, %v5094, 0.0
      %v5185 = vsel %vm3748, %v5095, 0.0
      %v5186 = vadd.f32 %v5184, %v5185
      %v5187 = vsel %vm3748, %v5096, 0.0
      %v5188 = vadd.f32 %v5186, %v5187
      %v5189 = vsel %vm3748, %v5097, 0.0
      %v5190 = vadd.f32 %v5188, %v5189
      %v5191 = vsel %vm3748, %v5098, 0.0
      %v5192 = vadd.f32 %v5190, %v5191
      %v5193 = vrot.slane %v5192, 4
      %v5194 = vadd.f32 %v5192, %v5193
      %v5195 = vrot.slane %v5194, 2
      %v5196 = vadd.f32 %v5194, %v5195
      %v5197 = vrot.slane %v5196, 1
      %v5198 = vadd.f32 %v5196, %v5197
      %v5199 = vsel %vm3748, %v5099, 0.0
      %v5200 = vsel %vm3748, %v5100, 0.0
      %v5201 = vadd.f32 %v5199, %v5200
      %v5202 = vsel %vm3748, %v5101, 0.0
      %v5203 = vadd.f32 %v5201, %v5202
      %v5204 = vsel %vm3748, %v5102, 0.0
      %v5205 = vadd.f32 %v5203, %v5204
      %v5206 = vsel %vm3748, %v5103, 0.0
      %v5207 = vadd.f32 %v5205, %v5206
      %v5208 = vrot.slane %v5207, 4
      %v5209 = vadd.f32 %v5207, %v5208
      %v5210 = vrot.slane %v5209, 2
      %v5211 = vadd.f32 %v5209, %v5210
      %v5212 = vrot.slane %v5211, 1
      %v5213 = vadd.f32 %v5211, %v5212
      %v5214 = vsel %vm3748, %v5104, 0.0
      %v5215 = vsel %vm3748, %v5105, 0.0
      %v5216 = vadd.f32 %v5214, %v5215
      %v5217 = vsel %vm3748, %v5106, 0.0
      %v5218 = vadd.f32 %v5216, %v5217
      %v5219 = vsel %vm3748, %v5107, 0.0
      %v5220 = vadd.f32 %v5218, %v5219
      %v5221 = vsel %vm3748, %v5108, 0.0
      %v5222 = vadd.f32 %v5220, %v5221
      %v5223 = vrot.slane %v5222, 4
      %v5224 = vadd.f32 %v5222, %v5223
      %v5225 = vrot.slane %v5224, 2
      %v5226 = vadd.f32 %v5224, %v5225
      %v5227 = vrot.slane %v5226, 1
      %v5228 = vadd.f32 %v5226, %v5227
      %s5229 = scalar_lea.vmem %s7, 160
      %v5230 = vld [vmem:[%s5229] sm:$0xff]
      %v5231 = vld [vmem:[%s5229 + $0x8] sm:$0xff]
      %v5232 = vld [vmem:[%s5229 + $0x10] sm:$0xff]
      %v5233 = vld [vmem:[%s5229 + $0x18] sm:$0x7]
      %v5242 = vsel %vm4061, %v5138, %v5123
      %v5243 = vsel %vm4063, %v5153, %v5242
      %v5244 = vsel %vm4065, %v5168, %v5243
      %v5245 = vsel %vm4067, %v5183, %v5244
      %v5246 = vsel %vm4069, %v5198, %v5245
      %v5247 = vsel %vm4071, %v5213, %v5246
      %v5248 = vsel %vm4073, %v5228, %v5247
      %v5249 = vsel %vm3748, %v5248, 0
      %v5252 = vsel %vm4077, %v5233, 0
      %5254 = vmatprep.subr.mxu0 0.0
      %5255 = vmatpush1.msra.mxu0 %v5230
      %5256 = vmatprep.subr.mxu0 0.0
      %5257 = vmatpush1.msra.mxu0 %v5231
      %5258 = vmatprep.subr.mxu0 0.0
      %5259 = vmatpush1.msra.mxu0 %v5232
      %5260 = vmatprep.subr.mxu0 0.0
      %5261 = vmatpush1.msra.mxu0 %v5252
      %5262 = vmatprep.subr.mxu0 0.0
      %5263 = vmatpush1.msra.mxu0 0.0
      %5264 = vmatprep.subr.mxu0 0.0
      %5265 = vmatpush1.msra.mxu0 0.0
      %5266 = vmatprep.subr.mxu0 0.0
      %5267 = vmatpush1.msra.mxu0 0.0
      %5268 = vmatprep.subr.mxu0 0.0
      %5269 = vmatpush1.msra.mxu0 0.0
      %5270 = vmatprep.subr.mxu0 0.0
      %5271 = vmatpush1.msra.mxu0 0.0
      %5272 = vmatprep.subr.mxu0 0.0
      %5273 = vmatpush1.msra.mxu0 0.0
      %5274 = vmatprep.subr.mxu0 0.0
      %5275 = vmatpush1.msra.mxu0 0.0
      %5276 = vmatprep.subr.mxu0 0.0
      %5277 = vmatpush1.msra.mxu0 0.0
      %5278 = vmatprep.subr.mxu0 0.0
      %5279 = vmatpush1.msra.mxu0 0.0
      %5280 = vmatprep.subr.mxu0 0.0
      %5281 = vmatpush1.msra.mxu0 0.0
      %5282 = vmatprep.subr.mxu0 0.0
      %5283 = vmatpush1.msra.mxu0 0.0
      %5284 = vmatprep.subr.mxu0 0.0
      %5285 = vmatpush1.msra.mxu0 0.0
      %5286 = vmatprep.subr.mxu0 0.0
      %5287 = vmatpush1.msra.mxu0 0.0
      %5288 = vmatprep.subr.mxu0 0.0
      %5289 = vmatpush1.msra.mxu0 0.0
      %5290 = vmatprep.subr.mxu0 0.0
      %5291 = vmatpush1.msra.mxu0 0.0
      %5292 = vmatprep.subr.mxu0 0.0
      %5293 = vmatpush1.msra.mxu0 0.0
      %5294 = vmatprep.subr.mxu0 0.0
      %5295 = vmatpush1.msra.mxu0 0.0
      %5296 = vmatprep.subr.mxu0 0.0
      %5297 = vmatpush1.msra.mxu0 0.0
      %5298 = vmatprep.subr.mxu0 0.0
      %5299 = vmatpush1.msra.mxu0 0.0
      %5300 = vmatprep.subr.mxu0 0.0
      %5301 = vmatpush1.msra.mxu0 0.0
      %5302 = vmatprep.subr.mxu0 0.0
      %5303 = vmatpush1.msra.mxu0 0.0
      %5304 = vmatprep.subr.mxu0 0.0
      %5305 = vmatpush1.msra.mxu0 0.0
      %5306 = vmatprep.subr.mxu0 0.0
      %5307 = vmatpush1.msra.mxu0 0.0
      %5308 = vmatprep.subr.mxu0 0.0
      %5309 = vmatpush1.msra.mxu0 0.0
      %5310 = vmatprep.subr.mxu0 0.0
      %5311 = vmatpush1.msra.mxu0 0.0
      %5312 = vmatprep.subr.mxu0 0.0
      %5313 = vmatpush1.msra.mxu0 0.0
      %5314 = vmatprep.subr.mxu0 0.0
      %5315 = vmatpush1.msra.mxu0 0.0
      %5316 = vmatprep.subr.mxu0 0.0
      %5317 = vmatpush1.msra.mxu0 0.0
      %5318 = vmatprep.mubr.f32.mxu0 0.0
      %5319 = vmatmul.mubr.f32.gmra.mrb[0].mxu0 %v5249
      %v5320 = vpop.f32.mrb[0].mxu0
      %v5321 = vadd.f32 0.0, %v5320
      %v5322 = vpop.f32.mrb[0].mxu0
      %5323 = vdwg.mxu0
      %v5324 = vadd.f32 %v5053, %v5321
      %vm5325 = vcmp.eq.s32.totalorder %v498, 24
      %vm5326 = vcmp.eq.s32.totalorder %v3689, 24
      %vm5327 = vcmp.eq.s32.totalorder %v3690, 24
      %vm5328 = vcmp.eq.s32.totalorder %v3691, 24
      %vm5329 = vcmp.eq.s32.totalorder %v3692, 24
      %v5330 = vsel %vm5325, 1, 0
      %v5331 = vsel %vm5326, 1, 0
      %v5332 = vsel %vm5327, 1, 0
      %v5333 = vsel %vm5328, 1, 0
      %v5334 = vsel %vm5329, 1, 0
      %v5335 = vcvt.s32.f32 %v5330
      %v5336 = vcvt.s32.f32 %v5331
      %v5337 = vcvt.s32.f32 %v5332
      %v5338 = vcvt.s32.f32 %v5333
      %v5339 = vcvt.s32.f32 %v5334
      %v5340 = vmul.f32 %v3649, %v5335
      %v5341 = vmul.f32 %v3650, %v5336
      %v5342 = vmul.f32 %v3651, %v5337
      %v5343 = vmul.f32 %v3652, %v5338
      %v5344 = vmul.f32 %v3653, %v5339
      %v5345 = vmul.f32 %v3654, %v5335
      %v5346 = vmul.f32 %v3655, %v5336
      %v5347 = vmul.f32 %v3656, %v5337
      %v5348 = vmul.f32 %v3657, %v5338
      %v5349 = vmul.f32 %v3658, %v5339
      %v5350 = vmul.f32 %v3659, %v5335
      %v5351 = vmul.f32 %v3660, %v5336
      %v5352 = vmul.f32 %v3661, %v5337
      %v5353 = vmul.f32 %v3662, %v5338
      %v5354 = vmul.f32 %v3663, %v5339
      %v5355 = vmul.f32 %v3664, %v5335
      %v5356 = vmul.f32 %v3665, %v5336
      %v5357 = vmul.f32 %v3666, %v5337
      %v5358 = vmul.f32 %v3667, %v5338
      %v5359 = vmul.f32 %v3668, %v5339
      %v5360 = vmul.f32 %v3669, %v5335
      %v5361 = vmul.f32 %v3670, %v5336
      %v5362 = vmul.f32 %v3671, %v5337
      %v5363 = vmul.f32 %v3672, %v5338
      %v5364 = vmul.f32 %v3673, %v5339
      %v5365 = vmul.f32 %v3674, %v5335
      %v5366 = vmul.f32 %v3675, %v5336
      %v5367 = vmul.f32 %v3676, %v5337
      %v5368 = vmul.f32 %v3677, %v5338
      %v5369 = vmul.f32 %v3678, %v5339
      %v5370 = vmul.f32 %v3679, %v5335
      %v5371 = vmul.f32 %v3680, %v5336
      %v5372 = vmul.f32 %v3681, %v5337
      %v5373 = vmul.f32 %v3682, %v5338
      %v5374 = vmul.f32 %v3683, %v5339
      %v5375 = vmul.f32 %v3684, %v5335
      %v5376 = vmul.f32 %v3685, %v5336
      %v5377 = vmul.f32 %v3686, %v5337
      %v5378 = vmul.f32 %v3687, %v5338
      %v5379 = vmul.f32 %v3688, %v5339
      %v5380 = vsel %vm3748, %v5340, 0.0
      %v5381 = vsel %vm3748, %v5341, 0.0
      %v5382 = vadd.f32 %v5380, %v5381
      %v5383 = vsel %vm3748, %v5342, 0.0
      %v5384 = vadd.f32 %v5382, %v5383
      %v5385 = vsel %vm3748, %v5343, 0.0
      %v5386 = vadd.f32 %v5384, %v5385
      %v5387 = vsel %vm3748, %v5344, 0.0
      %v5388 = vadd.f32 %v5386, %v5387
      %v5389 = vrot.slane %v5388, 4
      %v5390 = vadd.f32 %v5388, %v5389
      %v5391 = vrot.slane %v5390, 2
      %v5392 = vadd.f32 %v5390, %v5391
      %v5393 = vrot.slane %v5392, 1
      %v5394 = vadd.f32 %v5392, %v5393
      %v5395 = vsel %vm3748, %v5345, 0.0
      %v5396 = vsel %vm3748, %v5346, 0.0
      %v5397 = vadd.f32 %v5395, %v5396
      %v5398 = vsel %vm3748, %v5347, 0.0
      %v5399 = vadd.f32 %v5397, %v5398
      %v5400 = vsel %vm3748, %v5348, 0.0
      %v5401 = vadd.f32 %v5399, %v5400
      %v5402 = vsel %vm3748, %v5349, 0.0
      %v5403 = vadd.f32 %v5401, %v5402
      %v5404 = vrot.slane %v5403, 4
      %v5405 = vadd.f32 %v5403, %v5404
      %v5406 = vrot.slane %v5405, 2
      %v5407 = vadd.f32 %v5405, %v5406
      %v5408 = vrot.slane %v5407, 1
      %v5409 = vadd.f32 %v5407, %v5408
      %v5410 = vsel %vm3748, %v5350, 0.0
      %v5411 = vsel %vm3748, %v5351, 0.0
      %v5412 = vadd.f32 %v5410, %v5411
      %v5413 = vsel %vm3748, %v5352, 0.0
      %v5414 = vadd.f32 %v5412, %v5413
      %v5415 = vsel %vm3748, %v5353, 0.0
      %v5416 = vadd.f32 %v5414, %v5415
      %v5417 = vsel %vm3748, %v5354, 0.0
      %v5418 = vadd.f32 %v5416, %v5417
      %v5419 = vrot.slane %v5418, 4
      %v5420 = vadd.f32 %v5418, %v5419
      %v5421 = vrot.slane %v5420, 2
      %v5422 = vadd.f32 %v5420, %v5421
      %v5423 = vrot.slane %v5422, 1
      %v5424 = vadd.f32 %v5422, %v5423
      %v5425 = vsel %vm3748, %v5355, 0.0
      %v5426 = vsel %vm3748, %v5356, 0.0
      %v5427 = vadd.f32 %v5425, %v5426
      %v5428 = vsel %vm3748, %v5357, 0.0
      %v5429 = vadd.f32 %v5427, %v5428
      %v5430 = vsel %vm3748, %v5358, 0.0
      %v5431 = vadd.f32 %v5429, %v5430
      %v5432 = vsel %vm3748, %v5359, 0.0
      %v5433 = vadd.f32 %v5431, %v5432
      %v5434 = vrot.slane %v5433, 4
      %v5435 = vadd.f32 %v5433, %v5434
      %v5436 = vrot.slane %v5435, 2
      %v5437 = vadd.f32 %v5435, %v5436
      %v5438 = vrot.slane %v5437, 1
      %v5439 = vadd.f32 %v5437, %v5438
      %v5440 = vsel %vm3748, %v5360, 0.0
      %v5441 = vsel %vm3748, %v5361, 0.0
      %v5442 = vadd.f32 %v5440, %v5441
      %v5443 = vsel %vm3748, %v5362, 0.0
      %v5444 = vadd.f32 %v5442, %v5443
      %v5445 = vsel %vm3748, %v5363, 0.0
      %v5446 = vadd.f32 %v5444, %v5445
      %v5447 = vsel %vm3748, %v5364, 0.0
      %v5448 = vadd.f32 %v5446, %v5447
      %v5449 = vrot.slane %v5448, 4
      %v5450 = vadd.f32 %v5448, %v5449
      %v5451 = vrot.slane %v5450, 2
      %v5452 = vadd.f32 %v5450, %v5451
      %v5453 = vrot.slane %v5452, 1
      %v5454 = vadd.f32 %v5452, %v5453
      %v5455 = vsel %vm3748, %v5365, 0.0
      %v5456 = vsel %vm3748, %v5366, 0.0
      %v5457 = vadd.f32 %v5455, %v5456
      %v5458 = vsel %vm3748, %v5367, 0.0
      %v5459 = vadd.f32 %v5457, %v5458
      %v5460 = vsel %vm3748, %v5368, 0.0
      %v5461 = vadd.f32 %v5459, %v5460
      %v5462 = vsel %vm3748, %v5369, 0.0
      %v5463 = vadd.f32 %v5461, %v5462
      %v5464 = vrot.slane %v5463, 4
      %v5465 = vadd.f32 %v5463, %v5464
      %v5466 = vrot.slane %v5465, 2
      %v5467 = vadd.f32 %v5465, %v5466
      %v5468 = vrot.slane %v5467, 1
      %v5469 = vadd.f32 %v5467, %v5468
      %v5470 = vsel %vm3748, %v5370, 0.0
      %v5471 = vsel %vm3748, %v5371, 0.0
      %v5472 = vadd.f32 %v5470, %v5471
      %v5473 = vsel %vm3748, %v5372, 0.0
      %v5474 = vadd.f32 %v5472, %v5473
      %v5475 = vsel %vm3748, %v5373, 0.0
      %v5476 = vadd.f32 %v5474, %v5475
      %v5477 = vsel %vm3748, %v5374, 0.0
      %v5478 = vadd.f32 %v5476, %v5477
      %v5479 = vrot.slane %v5478, 4
      %v5480 = vadd.f32 %v5478, %v5479
      %v5481 = vrot.slane %v5480, 2
      %v5482 = vadd.f32 %v5480, %v5481
      %v5483 = vrot.slane %v5482, 1
      %v5484 = vadd.f32 %v5482, %v5483
      %v5485 = vsel %vm3748, %v5375, 0.0
      %v5486 = vsel %vm3748, %v5376, 0.0
      %v5487 = vadd.f32 %v5485, %v5486
      %v5488 = vsel %vm3748, %v5377, 0.0
      %v5489 = vadd.f32 %v5487, %v5488
      %v5490 = vsel %vm3748, %v5378, 0.0
      %v5491 = vadd.f32 %v5489, %v5490
      %v5492 = vsel %vm3748, %v5379, 0.0
      %v5493 = vadd.f32 %v5491, %v5492
      %v5494 = vrot.slane %v5493, 4
      %v5495 = vadd.f32 %v5493, %v5494
      %v5496 = vrot.slane %v5495, 2
      %v5497 = vadd.f32 %v5495, %v5496
      %v5498 = vrot.slane %v5497, 1
      %v5499 = vadd.f32 %v5497, %v5498
      %s5500 = scalar_lea.vmem %s7, 192
      %v5501 = vld [vmem:[%s5500] sm:$0xff]
      %v5502 = vld [vmem:[%s5500 + $0x8] sm:$0xff]
      %v5503 = vld [vmem:[%s5500 + $0x10] sm:$0xff]
      %v5504 = vld [vmem:[%s5500 + $0x18] sm:$0x7]
      %v5513 = vsel %vm4061, %v5409, %v5394
      %v5514 = vsel %vm4063, %v5424, %v5513
      %v5515 = vsel %vm4065, %v5439, %v5514
      %v5516 = vsel %vm4067, %v5454, %v5515
      %v5517 = vsel %vm4069, %v5469, %v5516
      %v5518 = vsel %vm4071, %v5484, %v5517
      %v5519 = vsel %vm4073, %v5499, %v5518
      %v5520 = vsel %vm3748, %v5519, 0
      %v5523 = vsel %vm4077, %v5504, 0
      %5525 = vmatprep.subr.mxu0 0.0
      %5526 = vmatpush1.msra.mxu0 %v5501
      %5527 = vmatprep.subr.mxu0 0.0
      %5528 = vmatpush1.msra.mxu0 %v5502
      %5529 = vmatprep.subr.mxu0 0.0
      %5530 = vmatpush1.msra.mxu0 %v5503
      %5531 = vmatprep.subr.mxu0 0.0
      %5532 = vmatpush1.msra.mxu0 %v5523
      %5533 = vmatprep.subr.mxu0 0.0
      %5534 = vmatpush1.msra.mxu0 0.0
      %5535 = vmatprep.subr.mxu0 0.0
      %5536 = vmatpush1.msra.mxu0 0.0
      %5537 = vmatprep.subr.mxu0 0.0
      %5538 = vmatpush1.msra.mxu0 0.0
      %5539 = vmatprep.subr.mxu0 0.0
      %5540 = vmatpush1.msra.mxu0 0.0
      %5541 = vmatprep.subr.mxu0 0.0
      %5542 = vmatpush1.msra.mxu0 0.0
      %5543 = vmatprep.subr.mxu0 0.0
      %5544 = vmatpush1.msra.mxu0 0.0
      %5545 = vmatprep.subr.mxu0 0.0
      %5546 = vmatpush1.msra.mxu0 0.0
      %5547 = vmatprep.subr.mxu0 0.0
      %5548 = vmatpush1.msra.mxu0 0.0
      %5549 = vmatprep.subr.mxu0 0.0
      %5550 = vmatpush1.msra.mxu0 0.0
      %5551 = vmatprep.subr.mxu0 0.0
      %5552 = vmatpush1.msra.mxu0 0.0
      %5553 = vmatprep.subr.mxu0 0.0
      %5554 = vmatpush1.msra.mxu0 0.0
      %5555 = vmatprep.subr.mxu0 0.0
      %5556 = vmatpush1.msra.mxu0 0.0
      %5557 = vmatprep.subr.mxu0 0.0
      %5558 = vmatpush1.msra.mxu0 0.0
      %5559 = vmatprep.subr.mxu0 0.0
      %5560 = vmatpush1.msra.mxu0 0.0
      %5561 = vmatprep.subr.mxu0 0.0
      %5562 = vmatpush1.msra.mxu0 0.0
      %5563 = vmatprep.subr.mxu0 0.0
      %5564 = vmatpush1.msra.mxu0 0.0
      %5565 = vmatprep.subr.mxu0 0.0
      %5566 = vmatpush1.msra.mxu0 0.0
      %5567 = vmatprep.subr.mxu0 0.0
      %5568 = vmatpush1.msra.mxu0 0.0
      %5569 = vmatprep.subr.mxu0 0.0
      %5570 = vmatpush1.msra.mxu0 0.0
      %5571 = vmatprep.subr.mxu0 0.0
      %5572 = vmatpush1.msra.mxu0 0.0
      %5573 = vmatprep.subr.mxu0 0.0
      %5574 = vmatpush1.msra.mxu0 0.0
      %5575 = vmatprep.subr.mxu0 0.0
      %5576 = vmatpush1.msra.mxu0 0.0
      %5577 = vmatprep.subr.mxu0 0.0
      %5578 = vmatpush1.msra.mxu0 0.0
      %5579 = vmatprep.subr.mxu0 0.0
      %5580 = vmatpush1.msra.mxu0 0.0
      %5581 = vmatprep.subr.mxu0 0.0
      %5582 = vmatpush1.msra.mxu0 0.0
      %5583 = vmatprep.subr.mxu0 0.0
      %5584 = vmatpush1.msra.mxu0 0.0
      %5585 = vmatprep.subr.mxu0 0.0
      %5586 = vmatpush1.msra.mxu0 0.0
      %5587 = vmatprep.subr.mxu0 0.0
      %5588 = vmatpush1.msra.mxu0 0.0
      %5589 = vmatprep.mubr.f32.mxu0 0.0
      %5590 = vmatmul.mubr.f32.gmra.mrb[0].mxu0 %v5520
      %v5591 = vpop.f32.mrb[0].mxu0
      %v5592 = vadd.f32 0.0, %v5591
      %v5593 = vpop.f32.mrb[0].mxu0
      %5594 = vdwg.mxu0
      %v5595 = vadd.f32 %v5324, %v5592
      %vm5596 = vcmp.eq.s32.totalorder %v498, 28
      %vm5597 = vcmp.eq.s32.totalorder %v3689, 28
      %vm5598 = vcmp.eq.s32.totalorder %v3690, 28
      %vm5599 = vcmp.eq.s32.totalorder %v3691, 28
      %vm5600 = vcmp.eq.s32.totalorder %v3692, 28
      %v5601 = vsel %vm5596, 1, 0
      %v5602 = vsel %vm5597, 1, 0
      %v5603 = vsel %vm5598, 1, 0
      %v5604 = vsel %vm5599, 1, 0
      %v5605 = vsel %vm5600, 1, 0
      %v5606 = vcvt.s32.f32 %v5601
      %v5607 = vcvt.s32.f32 %v5602
      %v5608 = vcvt.s32.f32 %v5603
      %v5609 = vcvt.s32.f32 %v5604
      %v5610 = vcvt.s32.f32 %v5605
      %v5611 = vmul.f32 %v3649, %v5606
      %v5612 = vmul.f32 %v3650, %v5607
      %v5613 = vmul.f32 %v3651, %v5608
      %v5614 = vmul.f32 %v3652, %v5609
      %v5615 = vmul.f32 %v3653, %v5610
      %v5616 = vmul.f32 %v3654, %v5606
      %v5617 = vmul.f32 %v3655, %v5607
      %v5618 = vmul.f32 %v3656, %v5608
      %v5619 = vmul.f32 %v3657, %v5609
      %v5620 = vmul.f32 %v3658, %v5610
      %v5621 = vmul.f32 %v3659, %v5606
      %v5622 = vmul.f32 %v3660, %v5607
      %v5623 = vmul.f32 %v3661, %v5608
      %v5624 = vmul.f32 %v3662, %v5609
      %v5625 = vmul.f32 %v3663, %v5610
      %v5626 = vmul.f32 %v3664, %v5606
      %v5627 = vmul.f32 %v3665, %v5607
      %v5628 = vmul.f32 %v3666, %v5608
      %v5629 = vmul.f32 %v3667, %v5609
      %v5630 = vmul.f32 %v3668, %v5610
      %v5631 = vmul.f32 %v3669, %v5606
      %v5632 = vmul.f32 %v3670, %v5607
      %v5633 = vmul.f32 %v3671, %v5608
      %v5634 = vmul.f32 %v3672, %v5609
      %v5635 = vmul.f32 %v3673, %v5610
      %v5636 = vmul.f32 %v3674, %v5606
      %v5637 = vmul.f32 %v3675, %v5607
      %v5638 = vmul.f32 %v3676, %v5608
      %v5639 = vmul.f32 %v3677, %v5609
      %v5640 = vmul.f32 %v3678, %v5610
      %v5641 = vmul.f32 %v3679, %v5606
      %v5642 = vmul.f32 %v3680, %v5607
      %v5643 = vmul.f32 %v3681, %v5608
      %v5644 = vmul.f32 %v3682, %v5609
      %v5645 = vmul.f32 %v3683, %v5610
      %v5646 = vmul.f32 %v3684, %v5606
      %v5647 = vmul.f32 %v3685, %v5607
      %v5648 = vmul.f32 %v3686, %v5608
      %v5649 = vmul.f32 %v3687, %v5609
      %v5650 = vmul.f32 %v3688, %v5610
      %v5651 = vsel %vm3748, %v5611, 0.0
      %v5652 = vsel %vm3748, %v5612, 0.0
      %v5653 = vadd.f32 %v5651, %v5652
      %v5654 = vsel %vm3748, %v5613, 0.0
      %v5655 = vadd.f32 %v5653, %v5654
      %v5656 = vsel %vm3748, %v5614, 0.0
      %v5657 = vadd.f32 %v5655, %v5656
      %v5658 = vsel %vm3748, %v5615, 0.0
      %v5659 = vadd.f32 %v5657, %v5658
      %v5660 = vrot.slane %v5659, 4
      %v5661 = vadd.f32 %v5659, %v5660
      %v5662 = vrot.slane %v5661, 2
      %v5663 = vadd.f32 %v5661, %v5662
      %v5664 = vrot.slane %v5663, 1
      %v5665 = vadd.f32 %v5663, %v5664
      %v5666 = vsel %vm3748, %v5616, 0.0
      %v5667 = vsel %vm3748, %v5617, 0.0
      %v5668 = vadd.f32 %v5666, %v5667
      %v5669 = vsel %vm3748, %v5618, 0.0
      %v5670 = vadd.f32 %v5668, %v5669
      %v5671 = vsel %vm3748, %v5619, 0.0
      %v5672 = vadd.f32 %v5670, %v5671
      %v5673 = vsel %vm3748, %v5620, 0.0
      %v5674 = vadd.f32 %v5672, %v5673
      %v5675 = vrot.slane %v5674, 4
      %v5676 = vadd.f32 %v5674, %v5675
      %v5677 = vrot.slane %v5676, 2
      %v5678 = vadd.f32 %v5676, %v5677
      %v5679 = vrot.slane %v5678, 1
      %v5680 = vadd.f32 %v5678, %v5679
      %v5681 = vsel %vm3748, %v5621, 0.0
      %v5682 = vsel %vm3748, %v5622, 0.0
      %v5683 = vadd.f32 %v5681, %v5682
      %v5684 = vsel %vm3748, %v5623, 0.0
      %v5685 = vadd.f32 %v5683, %v5684
      %v5686 = vsel %vm3748, %v5624, 0.0
      %v5687 = vadd.f32 %v5685, %v5686
      %v5688 = vsel %vm3748, %v5625, 0.0
      %v5689 = vadd.f32 %v5687, %v5688
      %v5690 = vrot.slane %v5689, 4
      %v5691 = vadd.f32 %v5689, %v5690
      %v5692 = vrot.slane %v5691, 2
      %v5693 = vadd.f32 %v5691, %v5692
      %v5694 = vrot.slane %v5693, 1
      %v5695 = vadd.f32 %v5693, %v5694
      %v5696 = vsel %vm3748, %v5626, 0.0
      %v5697 = vsel %vm3748, %v5627, 0.0
      %v5698 = vadd.f32 %v5696, %v5697
      %v5699 = vsel %vm3748, %v5628, 0.0
      %v5700 = vadd.f32 %v5698, %v5699
      %v5701 = vsel %vm3748, %v5629, 0.0
      %v5702 = vadd.f32 %v5700, %v5701
      %v5703 = vsel %vm3748, %v5630, 0.0
      %v5704 = vadd.f32 %v5702, %v5703
      %v5705 = vrot.slane %v5704, 4
      %v5706 = vadd.f32 %v5704, %v5705
      %v5707 = vrot.slane %v5706, 2
      %v5708 = vadd.f32 %v5706, %v5707
      %v5709 = vrot.slane %v5708, 1
      %v5710 = vadd.f32 %v5708, %v5709
      %v5711 = vsel %vm3748, %v5631, 0.0
      %v5712 = vsel %vm3748, %v5632, 0.0
      %v5713 = vadd.f32 %v5711, %v5712
      %v5714 = vsel %vm3748, %v5633, 0.0
      %v5715 = vadd.f32 %v5713, %v5714
      %v5716 = vsel %vm3748, %v5634, 0.0
      %v5717 = vadd.f32 %v5715, %v5716
      %v5718 = vsel %vm3748, %v5635, 0.0
      %v5719 = vadd.f32 %v5717, %v5718
      %v5720 = vrot.slane %v5719, 4
      %v5721 = vadd.f32 %v5719, %v5720
      %v5722 = vrot.slane %v5721, 2
      %v5723 = vadd.f32 %v5721, %v5722
      %v5724 = vrot.slane %v5723, 1
      %v5725 = vadd.f32 %v5723, %v5724
      %v5726 = vsel %vm3748, %v5636, 0.0
      %v5727 = vsel %vm3748, %v5637, 0.0
      %v5728 = vadd.f32 %v5726, %v5727
      %v5729 = vsel %vm3748, %v5638, 0.0
      %v5730 = vadd.f32 %v5728, %v5729
      %v5731 = vsel %vm3748, %v5639, 0.0
      %v5732 = vadd.f32 %v5730, %v5731
      %v5733 = vsel %vm3748, %v5640, 0.0
      %v5734 = vadd.f32 %v5732, %v5733
      %v5735 = vrot.slane %v5734, 4
      %v5736 = vadd.f32 %v5734, %v5735
      %v5737 = vrot.slane %v5736, 2
      %v5738 = vadd.f32 %v5736, %v5737
      %v5739 = vrot.slane %v5738, 1
      %v5740 = vadd.f32 %v5738, %v5739
      %v5741 = vsel %vm3748, %v5641, 0.0
      %v5742 = vsel %vm3748, %v5642, 0.0
      %v5743 = vadd.f32 %v5741, %v5742
      %v5744 = vsel %vm3748, %v5643, 0.0
      %v5745 = vadd.f32 %v5743, %v5744
      %v5746 = vsel %vm3748, %v5644, 0.0
      %v5747 = vadd.f32 %v5745, %v5746
      %v5748 = vsel %vm3748, %v5645, 0.0
      %v5749 = vadd.f32 %v5747, %v5748
      %v5750 = vrot.slane %v5749, 4
      %v5751 = vadd.f32 %v5749, %v5750
      %v5752 = vrot.slane %v5751, 2
      %v5753 = vadd.f32 %v5751, %v5752
      %v5754 = vrot.slane %v5753, 1
      %v5755 = vadd.f32 %v5753, %v5754
      %v5756 = vsel %vm3748, %v5646, 0.0
      %v5757 = vsel %vm3748, %v5647, 0.0
      %v5758 = vadd.f32 %v5756, %v5757
      %v5759 = vsel %vm3748, %v5648, 0.0
      %v5760 = vadd.f32 %v5758, %v5759
      %v5761 = vsel %vm3748, %v5649, 0.0
      %v5762 = vadd.f32 %v5760, %v5761
      %v5763 = vsel %vm3748, %v5650, 0.0
      %v5764 = vadd.f32 %v5762, %v5763
      %v5765 = vrot.slane %v5764, 4
      %v5766 = vadd.f32 %v5764, %v5765
      %v5767 = vrot.slane %v5766, 2
      %v5768 = vadd.f32 %v5766, %v5767
      %v5769 = vrot.slane %v5768, 1
      %v5770 = vadd.f32 %v5768, %v5769
      %s5771 = scalar_lea.vmem %s7, 224
      %v5772 = vld [vmem:[%s5771] sm:$0xff]
      %v5773 = vld [vmem:[%s5771 + $0x8] sm:$0xff]
      %v5774 = vld [vmem:[%s5771 + $0x10] sm:$0xff]
      %v5775 = vld [vmem:[%s5771 + $0x18] sm:$0x7]
      %v5784 = vsel %vm4061, %v5680, %v5665
      %v5785 = vsel %vm4063, %v5695, %v5784
      %v5786 = vsel %vm4065, %v5710, %v5785
      %v5787 = vsel %vm4067, %v5725, %v5786
      %v5788 = vsel %vm4069, %v5740, %v5787
      %v5789 = vsel %vm4071, %v5755, %v5788
      %v5790 = vsel %vm4073, %v5770, %v5789
      %v5791 = vsel %vm3748, %v5790, 0
      %v5794 = vsel %vm4077, %v5775, 0
      %5796 = vmatprep.subr.mxu0 0.0
      %5797 = vmatpush1.msra.mxu0 %v5772
      %5798 = vmatprep.subr.mxu0 0.0
      %5799 = vmatpush1.msra.mxu0 %v5773
      %5800 = vmatprep.subr.mxu0 0.0
      %5801 = vmatpush1.msra.mxu0 %v5774
      %5802 = vmatprep.subr.mxu0 0.0
      %5803 = vmatpush1.msra.mxu0 %v5794
      %5804 = vmatprep.subr.mxu0 0.0
      %5805 = vmatpush1.msra.mxu0 0.0
      %5806 = vmatprep.subr.mxu0 0.0
      %5807 = vmatpush1.msra.mxu0 0.0
      %5808 = vmatprep.subr.mxu0 0.0
      %5809 = vmatpush1.msra.mxu0 0.0
      %5810 = vmatprep.subr.mxu0 0.0
      %5811 = vmatpush1.msra.mxu0 0.0
      %5812 = vmatprep.subr.mxu0 0.0
      %5813 = vmatpush1.msra.mxu0 0.0
      %5814 = vmatprep.subr.mxu0 0.0
      %5815 = vmatpush1.msra.mxu0 0.0
      %5816 = vmatprep.subr.mxu0 0.0
      %5817 = vmatpush1.msra.mxu0 0.0
      %5818 = vmatprep.subr.mxu0 0.0
      %5819 = vmatpush1.msra.mxu0 0.0
      %5820 = vmatprep.subr.mxu0 0.0
      %5821 = vmatpush1.msra.mxu0 0.0
      %5822 = vmatprep.subr.mxu0 0.0
      %5823 = vmatpush1.msra.mxu0 0.0
      %5824 = vmatprep.subr.mxu0 0.0
      %5825 = vmatpush1.msra.mxu0 0.0
      %5826 = vmatprep.subr.mxu0 0.0
      %5827 = vmatpush1.msra.mxu0 0.0
      %5828 = vmatprep.subr.mxu0 0.0
      %5829 = vmatpush1.msra.mxu0 0.0
      %5830 = vmatprep.subr.mxu0 0.0
      %5831 = vmatpush1.msra.mxu0 0.0
      %5832 = vmatprep.subr.mxu0 0.0
      %5833 = vmatpush1.msra.mxu0 0.0
      %5834 = vmatprep.subr.mxu0 0.0
      %5835 = vmatpush1.msra.mxu0 0.0
      %5836 = vmatprep.subr.mxu0 0.0
      %5837 = vmatpush1.msra.mxu0 0.0
      %5838 = vmatprep.subr.mxu0 0.0
      %5839 = vmatpush1.msra.mxu0 0.0
      %5840 = vmatprep.subr.mxu0 0.0
      %5841 = vmatpush1.msra.mxu0 0.0
      %5842 = vmatprep.subr.mxu0 0.0
      %5843 = vmatpush1.msra.mxu0 0.0
      %5844 = vmatprep.subr.mxu0 0.0
      %5845 = vmatpush1.msra.mxu0 0.0
      %5846 = vmatprep.subr.mxu0 0.0
      %5847 = vmatpush1.msra.mxu0 0.0
      %5848 = vmatprep.subr.mxu0 0.0
      %5849 = vmatpush1.msra.mxu0 0.0
      %5850 = vmatprep.subr.mxu0 0.0
      %5851 = vmatpush1.msra.mxu0 0.0
      %5852 = vmatprep.subr.mxu0 0.0
      %5853 = vmatpush1.msra.mxu0 0.0
      %5854 = vmatprep.subr.mxu0 0.0
      %5855 = vmatpush1.msra.mxu0 0.0
      %5856 = vmatprep.subr.mxu0 0.0
      %5857 = vmatpush1.msra.mxu0 0.0
      %5858 = vmatprep.subr.mxu0 0.0
      %5859 = vmatpush1.msra.mxu0 0.0
      %5860 = vmatprep.mubr.f32.mxu0 0.0
      %5861 = vmatmul.mubr.f32.gmra.mrb[0].mxu0 %v5791
      %v5862 = vpop.f32.mrb[0].mxu0
      %v5863 = vadd.f32 0.0, %v5862
      %v5864 = vpop.f32.mrb[0].mxu0
      %5865 = vdwg.mxu0
      %v5866 = vadd.f32 %v5595, %v5863
      %vm5867 = vcmp.eq.s32.totalorder %v498, 32
      %vm5868 = vcmp.eq.s32.totalorder %v3689, 32
      %vm5869 = vcmp.eq.s32.totalorder %v3690, 32
      %vm5870 = vcmp.eq.s32.totalorder %v3691, 32
      %vm5871 = vcmp.eq.s32.totalorder %v3692, 32
      %v5872 = vsel %vm5867, 1, 0
      %v5873 = vsel %vm5868, 1, 0
      %v5874 = vsel %vm5869, 1, 0
      %v5875 = vsel %vm5870, 1, 0
      %v5876 = vsel %vm5871, 1, 0
      %v5877 = vcvt.s32.f32 %v5872
      %v5878 = vcvt.s32.f32 %v5873
      %v5879 = vcvt.s32.f32 %v5874
      %v5880 = vcvt.s32.f32 %v5875
      %v5881 = vcvt.s32.f32 %v5876
      %v5882 = vmul.f32 %v3649, %v5877
      %v5883 = vmul.f32 %v3650, %v5878
      %v5884 = vmul.f32 %v3651, %v5879
      %v5885 = vmul.f32 %v3652, %v5880
      %v5886 = vmul.f32 %v3653, %v5881
      %v5887 = vmul.f32 %v3654, %v5877
      %v5888 = vmul.f32 %v3655, %v5878
      %v5889 = vmul.f32 %v3656, %v5879
      %v5890 = vmul.f32 %v3657, %v5880
      %v5891 = vmul.f32 %v3658, %v5881
      %v5892 = vmul.f32 %v3659, %v5877
      %v5893 = vmul.f32 %v3660, %v5878
      %v5894 = vmul.f32 %v3661, %v5879
      %v5895 = vmul.f32 %v3662, %v5880
      %v5896 = vmul.f32 %v3663, %v5881
      %v5897 = vmul.f32 %v3664, %v5877
      %v5898 = vmul.f32 %v3665, %v5878
      %v5899 = vmul.f32 %v3666, %v5879
      %v5900 = vmul.f32 %v3667, %v5880
      %v5901 = vmul.f32 %v3668, %v5881
      %v5902 = vmul.f32 %v3669, %v5877
      %v5903 = vmul.f32 %v3670, %v5878
      %v5904 = vmul.f32 %v3671, %v5879
      %v5905 = vmul.f32 %v3672, %v5880
      %v5906 = vmul.f32 %v3673, %v5881
      %v5907 = vmul.f32 %v3674, %v5877
      %v5908 = vmul.f32 %v3675, %v5878
      %v5909 = vmul.f32 %v3676, %v5879
      %v5910 = vmul.f32 %v3677, %v5880
      %v5911 = vmul.f32 %v3678, %v5881
      %v5912 = vmul.f32 %v3679, %v5877
      %v5913 = vmul.f32 %v3680, %v5878
      %v5914 = vmul.f32 %v3681, %v5879
      %v5915 = vmul.f32 %v3682, %v5880
      %v5916 = vmul.f32 %v3683, %v5881
      %v5917 = vmul.f32 %v3684, %v5877
      %v5918 = vmul.f32 %v3685, %v5878
      %v5919 = vmul.f32 %v3686, %v5879
      %v5920 = vmul.f32 %v3687, %v5880
      %v5921 = vmul.f32 %v3688, %v5881
      %v5922 = vsel %vm3748, %v5882, 0.0
      %v5923 = vsel %vm3748, %v5883, 0.0
      %v5924 = vadd.f32 %v5922, %v5923
      %v5925 = vsel %vm3748, %v5884, 0.0
      %v5926 = vadd.f32 %v5924, %v5925
      %v5927 = vsel %vm3748, %v5885, 0.0
      %v5928 = vadd.f32 %v5926, %v5927
      %v5929 = vsel %vm3748, %v5886, 0.0
      %v5930 = vadd.f32 %v5928, %v5929
      %v5931 = vrot.slane %v5930, 4
      %v5932 = vadd.f32 %v5930, %v5931
      %v5933 = vrot.slane %v5932, 2
      %v5934 = vadd.f32 %v5932, %v5933
      %v5935 = vrot.slane %v5934, 1
      %v5936 = vadd.f32 %v5934, %v5935
      %v5937 = vsel %vm3748, %v5887, 0.0
      %v5938 = vsel %vm3748, %v5888, 0.0
      %v5939 = vadd.f32 %v5937, %v5938
      %v5940 = vsel %vm3748, %v5889, 0.0
      %v5941 = vadd.f32 %v5939, %v5940
      %v5942 = vsel %vm3748, %v5890, 0.0
      %v5943 = vadd.f32 %v5941, %v5942
      %v5944 = vsel %vm3748, %v5891, 0.0
      %v5945 = vadd.f32 %v5943, %v5944
      %v5946 = vrot.slane %v5945, 4
      %v5947 = vadd.f32 %v5945, %v5946
      %v5948 = vrot.slane %v5947, 2
      %v5949 = vadd.f32 %v5947, %v5948
      %v5950 = vrot.slane %v5949, 1
      %v5951 = vadd.f32 %v5949, %v5950
      %v5952 = vsel %vm3748, %v5892, 0.0
      %v5953 = vsel %vm3748, %v5893, 0.0
      %v5954 = vadd.f32 %v5952, %v5953
      %v5955 = vsel %vm3748, %v5894, 0.0
      %v5956 = vadd.f32 %v5954, %v5955
      %v5957 = vsel %vm3748, %v5895, 0.0
      %v5958 = vadd.f32 %v5956, %v5957
      %v5959 = vsel %vm3748, %v5896, 0.0
      %v5960 = vadd.f32 %v5958, %v5959
      %v5961 = vrot.slane %v5960, 4
      %v5962 = vadd.f32 %v5960, %v5961
      %v5963 = vrot.slane %v5962, 2
      %v5964 = vadd.f32 %v5962, %v5963
      %v5965 = vrot.slane %v5964, 1
      %v5966 = vadd.f32 %v5964, %v5965
      %v5967 = vsel %vm3748, %v5897, 0.0
      %v5968 = vsel %vm3748, %v5898, 0.0
      %v5969 = vadd.f32 %v5967, %v5968
      %v5970 = vsel %vm3748, %v5899, 0.0
      %v5971 = vadd.f32 %v5969, %v5970
      %v5972 = vsel %vm3748, %v5900, 0.0
      %v5973 = vadd.f32 %v5971, %v5972
      %v5974 = vsel %vm3748, %v5901, 0.0
      %v5975 = vadd.f32 %v5973, %v5974
      %v5976 = vrot.slane %v5975, 4
      %v5977 = vadd.f32 %v5975, %v5976
      %v5978 = vrot.slane %v5977, 2
      %v5979 = vadd.f32 %v5977, %v5978
      %v5980 = vrot.slane %v5979, 1
      %v5981 = vadd.f32 %v5979, %v5980
      %v5982 = vsel %vm3748, %v5902, 0.0
      %v5983 = vsel %vm3748, %v5903, 0.0
      %v5984 = vadd.f32 %v5982, %v5983
      %v5985 = vsel %vm3748, %v5904, 0.0
      %v5986 = vadd.f32 %v5984, %v5985
      %v5987 = vsel %vm3748, %v5905, 0.0
      %v5988 = vadd.f32 %v5986, %v5987
      %v5989 = vsel %vm3748, %v5906, 0.0
      %v5990 = vadd.f32 %v5988, %v5989
      %v5991 = vrot.slane %v5990, 4
      %v5992 = vadd.f32 %v5990, %v5991
      %v5993 = vrot.slane %v5992, 2
      %v5994 = vadd.f32 %v5992, %v5993
      %v5995 = vrot.slane %v5994, 1
      %v5996 = vadd.f32 %v5994, %v5995
      %v5997 = vsel %vm3748, %v5907, 0.0
      %v5998 = vsel %vm3748, %v5908, 0.0
      %v5999 = vadd.f32 %v5997, %v5998
      %v6000 = vsel %vm3748, %v5909, 0.0
      %v6001 = vadd.f32 %v5999, %v6000
      %v6002 = vsel %vm3748, %v5910, 0.0
      %v6003 = vadd.f32 %v6001, %v6002
      %v6004 = vsel %vm3748, %v5911, 0.0
      %v6005 = vadd.f32 %v6003, %v6004
      %v6006 = vrot.slane %v6005, 4
      %v6007 = vadd.f32 %v6005, %v6006
      %v6008 = vrot.slane %v6007, 2
      %v6009 = vadd.f32 %v6007, %v6008
      %v6010 = vrot.slane %v6009, 1
      %v6011 = vadd.f32 %v6009, %v6010
      %v6012 = vsel %vm3748, %v5912, 0.0
      %v6013 = vsel %vm3748, %v5913, 0.0
      %v6014 = vadd.f32 %v6012, %v6013
      %v6015 = vsel %vm3748, %v5914, 0.0
      %v6016 = vadd.f32 %v6014, %v6015
      %v6017 = vsel %vm3748, %v5915, 0.0
      %v6018 = vadd.f32 %v6016, %v6017
      %v6019 = vsel %vm3748, %v5916, 0.0
      %v6020 = vadd.f32 %v6018, %v6019
      %v6021 = vrot.slane %v6020, 4
      %v6022 = vadd.f32 %v6020, %v6021
      %v6023 = vrot.slane %v6022, 2
      %v6024 = vadd.f32 %v6022, %v6023
      %v6025 = vrot.slane %v6024, 1
      %v6026 = vadd.f32 %v6024, %v6025
      %v6027 = vsel %vm3748, %v5917, 0.0
      %v6028 = vsel %vm3748, %v5918, 0.0
      %v6029 = vadd.f32 %v6027, %v6028
      %v6030 = vsel %vm3748, %v5919, 0.0
      %v6031 = vadd.f32 %v6029, %v6030
      %v6032 = vsel %vm3748, %v5920, 0.0
      %v6033 = vadd.f32 %v6031, %v6032
      %v6034 = vsel %vm3748, %v5921, 0.0
      %v6035 = vadd.f32 %v6033, %v6034
      %v6036 = vrot.slane %v6035, 4
      %v6037 = vadd.f32 %v6035, %v6036
      %v6038 = vrot.slane %v6037, 2
      %v6039 = vadd.f32 %v6037, %v6038
      %v6040 = vrot.slane %v6039, 1
      %v6041 = vadd.f32 %v6039, %v6040
      %s6042 = scalar_lea.vmem %s7, 256
      %v6043 = vld [vmem:[%s6042] sm:$0xff]
      %v6044 = vld [vmem:[%s6042 + $0x8] sm:$0xff]
      %v6045 = vld [vmem:[%s6042 + $0x10] sm:$0xff]
      %v6046 = vld [vmem:[%s6042 + $0x18] sm:$0x7]
      %v6055 = vsel %vm4061, %v5951, %v5936
      %v6056 = vsel %vm4063, %v5966, %v6055
      %v6057 = vsel %vm4065, %v5981, %v6056
      %v6058 = vsel %vm4067, %v5996, %v6057
      %v6059 = vsel %vm4069, %v6011, %v6058
      %v6060 = vsel %vm4071, %v6026, %v6059
      %v6061 = vsel %vm4073, %v6041, %v6060
      %v6062 = vsel %vm3748, %v6061, 0
      %v6065 = vsel %vm4077, %v6046, 0
      %6067 = vmatprep.subr.mxu0 0.0
      %6068 = vmatpush1.msra.mxu0 %v6043
      %6069 = vmatprep.subr.mxu0 0.0
      %6070 = vmatpush1.msra.mxu0 %v6044
      %6071 = vmatprep.subr.mxu0 0.0
      %6072 = vmatpush1.msra.mxu0 %v6045
      %6073 = vmatprep.subr.mxu0 0.0
      %6074 = vmatpush1.msra.mxu0 %v6065
      %6075 = vmatprep.subr.mxu0 0.0
      %6076 = vmatpush1.msra.mxu0 0.0
      %6077 = vmatprep.subr.mxu0 0.0
      %6078 = vmatpush1.msra.mxu0 0.0
      %6079 = vmatprep.subr.mxu0 0.0
      %6080 = vmatpush1.msra.mxu0 0.0
      %6081 = vmatprep.subr.mxu0 0.0
      %6082 = vmatpush1.msra.mxu0 0.0
      %6083 = vmatprep.subr.mxu0 0.0
      %6084 = vmatpush1.msra.mxu0 0.0
      %6085 = vmatprep.subr.mxu0 0.0
      %6086 = vmatpush1.msra.mxu0 0.0
      %6087 = vmatprep.subr.mxu0 0.0
      %6088 = vmatpush1.msra.mxu0 0.0
      %6089 = vmatprep.subr.mxu0 0.0
      %6090 = vmatpush1.msra.mxu0 0.0
      %6091 = vmatprep.subr.mxu0 0.0
      %6092 = vmatpush1.msra.mxu0 0.0
      %6093 = vmatprep.subr.mxu0 0.0
      %6094 = vmatpush1.msra.mxu0 0.0
      %6095 = vmatprep.subr.mxu0 0.0
      %6096 = vmatpush1.msra.mxu0 0.0
      %6097 = vmatprep.subr.mxu0 0.0
      %6098 = vmatpush1.msra.mxu0 0.0
      %6099 = vmatprep.subr.mxu0 0.0
      %6100 = vmatpush1.msra.mxu0 0.0
      %6101 = vmatprep.subr.mxu0 0.0
      %6102 = vmatpush1.msra.mxu0 0.0
      %6103 = vmatprep.subr.mxu0 0.0
      %6104 = vmatpush1.msra.mxu0 0.0
      %6105 = vmatprep.subr.mxu0 0.0
      %6106 = vmatpush1.msra.mxu0 0.0
      %6107 = vmatprep.subr.mxu0 0.0
      %6108 = vmatpush1.msra.mxu0 0.0
      %6109 = vmatprep.subr.mxu0 0.0
      %6110 = vmatpush1.msra.mxu0 0.0
      %6111 = vmatprep.subr.mxu0 0.0
      %6112 = vmatpush1.msra.mxu0 0.0
      %6113 = vmatprep.subr.mxu0 0.0
      %6114 = vmatpush1.msra.mxu0 0.0
      %6115 = vmatprep.subr.mxu0 0.0
      %6116 = vmatpush1.msra.mxu0 0.0
      %6117 = vmatprep.subr.mxu0 0.0
      %6118 = vmatpush1.msra.mxu0 0.0
      %6119 = vmatprep.subr.mxu0 0.0
      %6120 = vmatpush1.msra.mxu0 0.0
      %6121 = vmatprep.subr.mxu0 0.0
      %6122 = vmatpush1.msra.mxu0 0.0
      %6123 = vmatprep.subr.mxu0 0.0
      %6124 = vmatpush1.msra.mxu0 0.0
      %6125 = vmatprep.subr.mxu0 0.0
      %6126 = vmatpush1.msra.mxu0 0.0
      %6127 = vmatprep.subr.mxu0 0.0
      %6128 = vmatpush1.msra.mxu0 0.0
      %6129 = vmatprep.subr.mxu0 0.0
      %6130 = vmatpush1.msra.mxu0 0.0
      %6131 = vmatprep.mubr.f32.mxu0 0.0
      %6132 = vmatmul.mubr.f32.gmra.mrb[0].mxu0 %v6062
      %v6133 = vpop.f32.mrb[0].mxu0
      %v6134 = vadd.f32 0.0, %v6133
      %v6135 = vpop.f32.mrb[0].mxu0
      %6136 = vdwg.mxu0
      %v6137 = vadd.f32 %v5866, %v6134
      %v6138 = vld [vmem:[%s8] sm:$0x1]
      %v6140 = vlaneseq
      %v6141 = vshrl.u32 %v6140, 7
      %v6142 = vsub.s32 0, %v6141
      %v6143 = vrot.slane %v6138, %v6142
      %v6145 = vadd.f32 %v6137, %v6143
      %v6146 = vld [vmem:[%s9] sm:$0xff]
      %v6147 = vld [vmem:[%s9 + $0x8] sm:$0xff]
      %v6148 = vld [vmem:[%s9 + $0x10] sm:$0xff]
      %v6149 = vld [vmem:[%s9 + $0x18] sm:$0xff]
      %v6150 = vld [vmem:[%s9 + $0x20] sm:$0xff]
      %v6151 = vld [vmem:[%s9 + $0x28] sm:$0xff]
      %v6152 = vld [vmem:[%s9 + $0x30] sm:$0xff]
      %v6153 = vld [vmem:[%s9 + $0x38] sm:$0xff]
      %v6154 = vld [vmem:[%s9 + $0x40] sm:$0xff]
      %v6155 = vld [vmem:[%s9 + $0x48] sm:$0xff]
      %v6156 = vld [vmem:[%s9 + $0x50] sm:$0xff]
      %v6157 = vld [vmem:[%s9 + $0x58] sm:$0xff]
      %v6158 = vld [vmem:[%s9 + $0x60] sm:$0xff]
      %v6159 = vld [vmem:[%s9 + $0x68] sm:$0xff]
      %v6160 = vld [vmem:[%s9 + $0x70] sm:$0xff]
      %v6161 = vld [vmem:[%s10] sm:$0x1]
      %v6163 = vlaneseq
      %v6164 = vshrl.u32 %v6163, 7
      %v6165 = vsub.s32 0, %v6164
      %v6166 = vrot.slane %v6161, %v6165
      %v6169 = vsel %vm571, %v6145, 0
      %6171 = vmatprep.subr.mxu0 0.0
      %6172 = vmatpush1.msra.mxu0 %v6146
      %6173 = vmatprep.subr.mxu0 0.0
      %6174 = vmatpush1.msra.mxu0 %v6147
      %6175 = vmatprep.subr.mxu0 0.0
      %6176 = vmatpush1.msra.mxu0 %v6148
      %6177 = vmatprep.subr.mxu0 0.0
      %6178 = vmatpush1.msra.mxu0 %v6149
      %6179 = vmatprep.subr.mxu0 0.0
      %6180 = vmatpush1.msra.mxu0 %v6150
      %6181 = vmatprep.subr.mxu0 0.0
      %6182 = vmatpush1.msra.mxu0 %v6151
      %6183 = vmatprep.subr.mxu0 0.0
      %6184 = vmatpush1.msra.mxu0 %v6152
      %6185 = vmatprep.subr.mxu0 0.0
      %6186 = vmatpush1.msra.mxu0 %v6153
      %6187 = vmatprep.subr.mxu0 0.0
      %6188 = vmatpush1.msra.mxu0 %v6154
      %6189 = vmatprep.subr.mxu0 0.0
      %6190 = vmatpush1.msra.mxu0 %v6155
      %6191 = vmatprep.subr.mxu0 0.0
      %6192 = vmatpush1.msra.mxu0 %v6156
      %6193 = vmatprep.subr.mxu0 0.0
      %6194 = vmatpush1.msra.mxu0 %v6157
      %6195 = vmatprep.subr.mxu0 0.0
      %6196 = vmatpush1.msra.mxu0 %v6158
      %6197 = vmatprep.subr.mxu0 0.0
      %6198 = vmatpush1.msra.mxu0 %v6159
      %6199 = vmatprep.subr.mxu0 0.0
      %6200 = vmatpush1.msra.mxu0 %v6160
      %6201 = vmatprep.subr.mxu0 0.0
      %6202 = vmatpush1.msra.mxu0 0.0
      %6203 = vmatprep.subr.mxu0 0.0
      %6204 = vmatpush1.msra.mxu0 0.0
      %6205 = vmatprep.subr.mxu0 0.0
      %6206 = vmatpush1.msra.mxu0 0.0
      %6207 = vmatprep.subr.mxu0 0.0
      %6208 = vmatpush1.msra.mxu0 0.0
      %6209 = vmatprep.subr.mxu0 0.0
      %6210 = vmatpush1.msra.mxu0 0.0
      %6211 = vmatprep.subr.mxu0 0.0
      %6212 = vmatpush1.msra.mxu0 0.0
      %6213 = vmatprep.subr.mxu0 0.0
      %6214 = vmatpush1.msra.mxu0 0.0
      %6215 = vmatprep.subr.mxu0 0.0
      %6216 = vmatpush1.msra.mxu0 0.0
      %6217 = vmatprep.subr.mxu0 0.0
      %6218 = vmatpush1.msra.mxu0 0.0
      %6219 = vmatprep.subr.mxu0 0.0
      %6220 = vmatpush1.msra.mxu0 0.0
      %6221 = vmatprep.subr.mxu0 0.0
      %6222 = vmatpush1.msra.mxu0 0.0
      %6223 = vmatprep.subr.mxu0 0.0
      %6224 = vmatpush1.msra.mxu0 0.0
      %6225 = vmatprep.subr.mxu0 0.0
      %6226 = vmatpush1.msra.mxu0 0.0
      %6227 = vmatprep.subr.mxu0 0.0
      %6228 = vmatpush1.msra.mxu0 0.0
      %6229 = vmatprep.subr.mxu0 0.0
      %6230 = vmatpush1.msra.mxu0 0.0
      %6231 = vmatprep.subr.mxu0 0.0
      %6232 = vmatpush1.msra.mxu0 0.0
      %6233 = vmatprep.subr.mxu0 0.0
      %6234 = vmatpush1.msra.mxu0 0.0
      %6235 = vmatprep.mubr.f32.mxu0 0.0
      %6236 = vmatmul.mubr.f32.gmra.mrb[0].mxu0 %v6169
      %v6237 = vpop.f32.mrb[0].mxu0
      %v6238 = vadd.f32 %v6166, %v6237
      %v6239 = vpop.f32.mrb[0].mxu0
      %6240 = vdwg.mxu0
      %vm6241 = vcmask 23552
      %6242 = vst.msk [vmem:[%s386] sm:$0xff] %vm6241, %v6238
      %p6243 = scmp.lt.s32.totalorder %s22, 1
      %s6244 = scalar_select %p6243, %s22, 1
      %s6245 = smul.addr %s6244, 8
      %s6246 = scalar_lea.vmem %s11, %s6245
      // Predicated region
      $region65: #{covnet_forward.1} parent=63 // pred_check
        %p6247 = pneg %p276
      $region66: #{covnet_forward.1} parent=63 // pred_check_branch
        %6249 = sbr.rel (%p6247) target = $region68
      $region67: #{covnet_forward.1} parent=63 // pred_region
        _
      $region68: #{covnet_forward.1} parent=63 // pred_fallthru
        _
    $region64: #{covnet_forward.1} parent=5 // pred_fallthru
      _
    %p6250 = scmp.le.s32.totalorder 2, %s17
    // Predicated region
    $region69: #{covnet_forward.1} parent=5 // pred_check
      %p6251 = pneg %p6250
    $region70: #{covnet_forward.1} parent=5 // pred_check_branch
      %6253 = sbr.rel (%p6251) target = $region72
    $region71: #{covnet_forward.1} parent=5 // pred_region
      %s6254 = ssub.s32 %s17, 2
      // Predicated region
      $region73: #{covnet_forward.1} parent=71 // pred_check
        %p6255 = pneg %p282
      $region74: #{covnet_forward.1} parent=71 // pred_check_branch
        %6257 = sbr.rel (%p6255) target = $region76
      $region75: #{covnet_forward.1} parent=71 // pred_region
        %p6258 = scmp.lt.s32.totalorder %s23, 1
        %s6259 = scalar_select %p6258, %s23, 1
        %s6260 = smul.addr %s6259, 8
        %s6261 = scalar_lea.vmem %s11, %s6260
      $region76: #{covnet_forward.1} parent=71 // pred_fallthru
        _
    $region72: #{covnet_forward.1} parent=5 // pred_fallthru
      _
  $region6: #{covnet_forward.1} parent=0 // loop_footer
    %s21 = sadd.s32 1, %s17
  $region7: #{covnet_forward.1} parent=0 // loop_footer_branch
    %16 = sbr.rel target = $region3
  $region8: #{covnet_forward.1} parent=0 // loop_exit
    _

</llo_original>
